<compile_context>
chip_gen: v7x
topology: tpu7x:2x2x1
jax: 0.10.0
libtpu: 0.0.40
codegen_flags: <defaults>
</compile_context>

<pallas_src>
import math

import numpy as np
import jax
import jax.numpy as jnp
from jax.experimental import pallas as pl
from jax.experimental.pallas import tpu as pltpu

# ----------------------- small synthetic SD3-MMDiT config -----------------------
B = 2
IN_CHANNELS = 4
OUT_CHANNELS = 4
PATCH = 2
SAMPLE = 16                       # latent H = W
NUM_HEADS = 2
HEAD_DIM = 16
DIM = NUM_HEADS * HEAD_DIM        # inner dim = 32
JOINT_DIM = 48                    # encoder_hidden_states feature dim (joint_attention_dim)
POOLED_DIM = 64                   # pooled_projection_dim
TXT_LEN = 8
NUM_LAYERS = 2                    # last block has context_pre_only=True (like SD3)
FF_MULT = 4
TIME_EMBED_CH = 256               # sinusoidal timestep feature width (SD3 uses 256)
EPS = 1e-6
N_IMG = (SAMPLE // PATCH) ** 2    # 64 image tokens
S_TOT = N_IMG + TXT_LEN           # 72 joint tokens
PPC = PATCH * PATCH * OUT_CHANNELS

MM_DTYPE = jnp.bfloat16           # matmul operand dtype (f32 accumulation on the MXU)


# ----------------------- stacked modulation-weight column layout -----------------------
def _mod_layout():
    layout = []
    off = 0
    for li in range(NUM_LAYERS):
        pre = li == NUM_LAYERS - 1
        base_x = off
        off += 6 * DIM                       # AdaLayerNormZero (image stream)
        base_c = off
        off += (2 if pre else 6) * DIM       # context: continuous (2) or zero (6)
        layout.append((base_x, base_c))
    out_base = off
    off += 2 * DIM                           # norm_out (AdaLayerNormContinuous)
    return layout, out_base, off


_MOD_LAYOUT, _MOD_OUT_BASE, MOD_TOTAL = _mod_layout()

# ----------------------- canonical flat weight ordering (wrapper <-> kernel) -----------------------
_TOP_NAMES = ("patch_w", "patch_b", "t_w1", "t_b1", "t_w2", "t_b2",
              "p_w1", "p_b1", "p_w2", "p_b2", "ctx_w", "ctx_b",
              "mod_w", "mod_b")
_TAIL_NAMES = ("proj_wT", "proj_bT")


def _block_names(ctx_pre_only):
    names = ["qkv_w", "qkv_b", "add_qkv_w", "add_qkv_b", "o_w", "o_b"]
    if not ctx_pre_only:
        names += ["add_o_w", "add_o_b"]
    names += ["ff_w1", "ff_b1", "ff_w2", "ff_b2"]
    if not ctx_pre_only:
        names += ["ffc_w1", "ffc_b1", "ffc_w2", "ffc_b2"]
    return names


# ================================ in-kernel helpers ================================
def _mm(a, b):
    """2-D a @ b ; activations cast to bf16, weights already bf16, f32 accumulation."""
    return jax.lax.dot_general(
        a.astype(MM_DTYPE), b.astype(MM_DTYPE),
        dimension_numbers=(((1,), (0,)), ((), ())),
        preferred_element_type=jnp.float32)


def _mm_nt(a, b):
    """2-D a @ b.T (contract last dims), bf16 operands, f32 accumulation."""
    return jax.lax.dot_general(
        a.astype(MM_DTYPE), b.astype(MM_DTYPE),
        dimension_numbers=(((1,), (1,)), ((), ())),
        preferred_element_type=jnp.float32)


def _silu(x):
    return x * jax.nn.sigmoid(x)


def _gelu_tanh(x):   # torch GELU(approximate="tanh")
    return 0.5 * x * (1.0 + jnp.tanh(0.7978845608028654 * (x + 0.044715 * x * x * x)))


def _ln(x):          # LayerNorm, no affine, eps=1e-6 (f32 stats)
    mean = jnp.mean(x, axis=-1, keepdims=True)
    var = jnp.mean(jnp.square(x - mean), axis=-1, keepdims=True)
    return (x - mean) * jax.lax.rsqrt(var + EPS)


def _modulate(x_all, rows, shift, scale, nb):
    """x * (1+scale_b) + shift_b applied per batch segment of `rows` sublanes."""
    parts = [x_all[b * rows:(b + 1) * rows] * (1.0 + scale[b:b + 1, :]) + shift[b:b + 1, :]
             for b in range(nb)]
    return parts[0] if nb == 1 else jnp.concatenate(parts, axis=0)


def _gate(y_all, rows, gate, nb):
    parts = [y_all[b * rows:(b + 1) * rows] * gate[b:b + 1, :] for b in range(nb)]
    return parts[0] if nb == 1 else jnp.concatenate(parts, axis=0)


def _joint_block(x_all, c_all, mod_all, w, base_x, base_c, ctx_pre_only, nb):
    """One JointTransformerBlock on batch-merged activations (x_all: (nb*N_IMG, DIM))."""
    def m(base, i):
        return mod_all[:, base + i * DIM: base + (i + 1) * DIM]   # (nb, DIM)

    shift_msa, scale_msa, gate_msa = m(base_x, 0), m(base_x, 1), m(base_x, 2)
    shift_mlp, scale_mlp, gate_mlp = m(base_x, 3), m(base_x, 4), m(base_x, 5)

    norm_x = _modulate(_ln(x_all), N_IMG, shift_msa, scale_msa, nb)
    if ctx_pre_only:     # AdaLayerNormContinuous on the context for the last block
        c_scale, c_shift = m(base_c, 0), m(base_c, 1)
        norm_c = _modulate(_ln(c_all), TXT_LEN, c_shift, c_scale, nb)
    else:                # AdaLayerNormZero
        c_shift_msa, c_scale_msa, c_gate_msa = m(base_c, 0), m(base_c, 1), m(base_c, 2)
        c_shift_mlp, c_scale_mlp, c_gate_mlp = m(base_c, 3), m(base_c, 4), m(base_c, 5)
        norm_c = _modulate(_ln(c_all), TXT_LEN, c_shift_msa, c_scale_msa, nb)

    # fused QKV projections, batch-merged M (1/sqrt(head_dim) pre-folded into the Q columns)
    img_qkv = _mm(norm_x, w["qkv_w"][...]) + w["qkv_b"][...]            # (nb*N_IMG, 3*DIM)
    ctx_qkv = _mm(norm_c, w["add_qkv_w"][...]) + w["add_qkv_b"][...]    # (nb*TXT, 3*DIM)

    # joint attention: static unroll over (batch, head); per-head tensors are 16 lanes wide
    # (unavoidable at head_dim=16), everything stays in registers.
    img_attn_parts, ctx_attn_parts = [], []
    for b in range(nb):
        qkv = jnp.concatenate(
            [img_qkv[b * N_IMG:(b + 1) * N_IMG], ctx_qkv[b * TXT_LEN:(b + 1) * TXT_LEN]],
            axis=0)                                                     # (S_TOT, 3*DIM)
        heads = []
        for h in range(NUM_HEADS):
            lo, hi = h * HEAD_DIM, (h + 1) * HEAD_DIM
            q = qkv[:, lo:hi]
            k = qkv[:, DIM + lo:DIM + hi]
            v = qkv[:, 2 * DIM + lo:2 * DIM + hi]
            s = _mm_nt(q, k)                                            # (S_TOT, S_TOT)
            s_max = jnp.max(s, axis=-1, keepdims=True)
            p = jnp.exp(s - s_max)
            inv = pl.reciprocal(jnp.sum(p, axis=-1, keepdims=True), approx=True)
            heads.append(_mm(p, v) * inv)                               # (S_TOT, HEAD_DIM)
        attn = jnp.concatenate(heads, axis=1)                           # (S_TOT, DIM)
        img_attn_parts.append(attn[0:N_IMG])
        if not ctx_pre_only:
            ctx_attn_parts.append(attn[N_IMG:S_TOT])

    # image stream: batch-merged output projection, gated residual, AdaLN-modulated FF
    img_attn = img_attn_parts[0] if nb == 1 else jnp.concatenate(img_attn_parts, axis=0)
    img_attn = _mm(img_attn, w["o_w"][...]) + w["o_b"][...]
    x_all = x_all + _gate(img_attn, N_IMG, gate_msa, nb)
    norm_x2 = _modulate(_ln(x_all), N_IMG, shift_mlp, scale_mlp, nb)
    ff = _mm(_gelu_tanh(_mm(norm_x2, w["ff_w1"][...]) + w["ff_b1"][...]),
             w["ff_w2"][...]) + w["ff_b2"][...]
    x_all = x_all + _gate(ff, N_IMG, gate_mlp, nb)

    if ctx_pre_only:     # context stream dropped on the last block
        return x_all, c_all

    ctx_attn = ctx_attn_parts[0] if nb == 1 else jnp.concatenate(ctx_attn_parts, axis=0)
    ctx_attn = _mm(ctx_attn, w["add_o_w"][...]) + w["add_o_b"][...]
    c_all = c_all + _gate(ctx_attn, TXT_LEN, c_gate_msa, nb)
    norm_c2 = _modulate(_ln(c_all), TXT_LEN, c_shift_mlp, c_scale_mlp, nb)
    ffc = _mm(_gelu_tanh(_mm(norm_c2, w["ffc_w1"][...]) + w["ffc_b1"][...]),
              w["ffc_w2"][...]) + w["ffc_b2"][...]
    c_all = c_all + _gate(ffc, TXT_LEN, c_gate_mlp, nb)
    return x_all, c_all


# ================================ the fused kernel ================================
def _mmdit_fused_kernel(xp_ref, pos_ref, tf_ref, pool_ref, ctx_ref, *refs):
    o_ref = refs[-1]
    it = iter(refs[:-1])
    # keep *refs* (not loaded values) in the dicts: weights are loaded at their single use site
    W = {n: next(it) for n in _TOP_NAMES}
    blks = []
    for li in range(NUM_LAYERS):
        blks.append({n: next(it) for n in _block_names(li == NUM_LAYERS - 1)})
    T = {n: next(it) for n in _TAIL_NAMES}

    nb = xp_ref.shape[0] // N_IMG

    # ---------------- embeddings (PatchEmbed + pos, context_embedder, time+pooled) ----------------
    x0 = _mm(xp_ref[...], W["patch_w"][...]) + W["patch_b"][...]        # (nb*N_IMG, DIM)
    pos = pos_ref[...]
    if nb == 1:
        x_all = x0 + pos
    else:
        x_all = jnp.concatenate([x0[b * N_IMG:(b + 1) * N_IMG] + pos for b in range(nb)], axis=0)

    c_all = _mm(ctx_ref[...], W["ctx_w"][...]) + W["ctx_b"][...]        # (nb*TXT, DIM)

    t_e = _mm(_silu(_mm(tf_ref[...], W["t_w1"][...]) + W["t_b1"][...]),
              W["t_w2"][...]) + W["t_b2"][...]
    p_e = _mm(_silu(_mm(pool_ref[...], W["p_w1"][...]) + W["p_b1"][...]),
              W["p_w2"][...]) + W["p_b2"][...]
    ts = _silu(t_e + p_e)                                               # (nb, DIM)

    # every block's AdaLN + norm_out modulation in ONE matmul (no M=1 pushes per block)
    mod_all = _mm(ts, W["mod_w"][...]) + W["mod_b"][...]                # (nb, MOD_TOTAL)

    # ---------------- joint transformer blocks (static unroll, all-resident) ----------------
    for li in range(NUM_LAYERS):
        pre = li == NUM_LAYERS - 1
        x_all, c_all = _joint_block(x_all, c_all, mod_all, blks[li],
                                    _MOD_LAYOUT[li][0], _MOD_LAYOUT[li][1], pre, nb)

    # ---------------- norm_out + proj_out, transposed so the store is 128-lane dense ----------------
    out_scale = mod_all[:, _MOD_OUT_BASE:_MOD_OUT_BASE + DIM]
    out_shift = mod_all[:, _MOD_OUT_BASE + DIM:_MOD_OUT_BASE + 2 * DIM]
    y = _modulate(_ln(x_all), N_IMG, out_shift, out_scale, nb)          # (nb*N_IMG, DIM)
    o_ref[...] = _mm_nt(T["proj_wT"][...], y) + T["proj_bT"][...]       # (PPC, nb*N_IMG)


# ================================ glue (plain JAX) ================================
def timestep_embedding(timestep, dim=TIME_EMBED_CH):
    # diffusers Timesteps(256, flip_sin_to_cos=True, downscale_freq_shift=0) -> [cos | sin]
    half = dim // 2
    exponent = -math.log(10000.0) * jnp.arange(half, dtype=jnp.float32) / half
    freqs = jnp.exp(exponent)
    args = timestep.astype(jnp.float32)[:, None] * freqs[None, :]
    return jnp.concatenate([jnp.cos(args), jnp.sin(args)], axis=-1)


def get_2d_sincos_pos_embed(embed_dim, grid_size):
    # TODO(synk): SD3 builds the pos-embed over pos_embed_max_size and center-crops; here it is
    # built directly at the target patch grid (same sincos formula, deterministic buffer).
    grid_h = np.arange(grid_size, dtype=np.float32)
    grid_w = np.arange(grid_size, dtype=np.float32)
    grid = np.meshgrid(grid_w, grid_h)
    grid = np.stack(grid, axis=0).reshape(2, -1)

    def _1d(dim, pos):
        omega = np.arange(dim // 2, dtype=np.float64) / (dim / 2.0)
        omega = 1.0 / 10000 ** omega
        out = np.einsum("m,d->md", pos, omega)
        return np.concatenate([np.sin(out), np.cos(out)], axis=1)

    emb = np.concatenate([_1d(embed_dim // 2, grid[0]), _1d(embed_dim // 2, grid[1])], axis=1)
    return emb.astype(np.float32)                     # (grid*grid, D)


def init_params(key):
    # TODO(synk): the PyTorch wrapper loads pretrained fp16 weights via HF from_pretrained;
    # here parameters are synthetic & deterministic at a small config.
    keys = iter(jax.random.split(key, 512))

    def w(shape, scale=0.02):
        return scale * jax.random.normal(next(keys), shape, dtype=jnp.float32)

    p = {}
    p["patch_w"] = w((IN_CHANNELS * PATCH * PATCH, DIM))      # Conv2d(k=p,s=p) as matmul
    p["patch_b"] = w((1, DIM))
    p["pos_embed"] = jnp.asarray(get_2d_sincos_pos_embed(DIM, SAMPLE // PATCH))   # (N_IMG, DIM)

    p["t_w1"], p["t_b1"] = w((TIME_EMBED_CH, DIM)), w((1, DIM))
    p["t_w2"], p["t_b2"] = w((DIM, DIM)), w((1, DIM))
    p["p_w1"], p["p_b1"] = w((POOLED_DIM, DIM)), w((1, DIM))
    p["p_w2"], p["p_b2"] = w((DIM, DIM)), w((1, DIM))

    p["ctx_w"], p["ctx_b"] = w((JOINT_DIM, DIM)), w((1, DIM))

    blocks = []
    for li in range(NUM_LAYERS):
        pre = li == NUM_LAYERS - 1
        blk = {}
        blk["adaln_w"], blk["adaln_b"] = w((DIM, 6 * DIM)), w((1, 6 * DIM))
        if pre:      # AdaLayerNormContinuous on the context for the last block
            blk["adaln_ctx_w"], blk["adaln_ctx_b"] = w((DIM, 2 * DIM)), w((1, 2 * DIM))
        else:        # AdaLayerNormZero
            blk["adaln_ctx_w"], blk["adaln_ctx_b"] = w((DIM, 6 * DIM)), w((1, 6 * DIM))
        blk["qkv_w"], blk["qkv_b"] = w((DIM, 3 * DIM)), w((1, 3 * DIM))
        blk["add_qkv_w"], blk["add_qkv_b"] = w((DIM, 3 * DIM)), w((1, 3 * DIM))
        blk["o_w"], blk["o_b"] = w((DIM, DIM)), w((1, DIM))
        if not pre:
            blk["add_o_w"], blk["add_o_b"] = w((DIM, DIM)), w((1, DIM))
        blk["ff_w1"], blk["ff_b1"] = w((DIM, FF_MULT * DIM)), w((1, FF_MULT * DIM))
        blk["ff_w2"], blk["ff_b2"] = w((FF_MULT * DIM, DIM)), w((1, DIM))
        if not pre:
            blk["ffc_w1"], blk["ffc_b1"] = w((DIM, FF_MULT * DIM)), w((1, FF_MULT * DIM))
            blk["ffc_w2"], blk["ffc_b2"] = w((FF_MULT * DIM, DIM)), w((1, DIM))
        blocks.append(blk)
    p["blocks"] = blocks

    p["out_norm_w"], p["out_norm_b"] = w((DIM, 2 * DIM)), w((1, 2 * DIM))
    p["proj_out_w"] = w((DIM, PPC))
    p["proj_out_b"] = w((1, PPC))
    return p


def pack_params(p):
    """One-time packing: bf16 matmul weights, stacked modulation matrix, Q-scale folding,
    transposed final projection.  Done once outside the jitted forward."""
    def bf(x):
        return x.astype(jnp.bfloat16)

    f = {"pos_embed": p["pos_embed"]}
    f["patch_w"], f["patch_b"] = bf(p["patch_w"]), p["patch_b"]
    f["t_w1"], f["t_b1"] = bf(p["t_w1"]), p["t_b1"]
    f["t_w2"], f["t_b2"] = bf(p["t_w2"]), p["t_b2"]
    f["p_w1"], f["p_b1"] = bf(p["p_w1"]), p["p_b1"]
    f["p_w2"], f["p_b2"] = bf(p["p_w2"]), p["p_b2"]
    f["ctx_w"], f["ctx_b"] = bf(p["ctx_w"]), p["ctx_b"]

    # stacked modulation weights: [blk0 adaln | blk0 adaln_ctx | blk1 adaln | blk1 adaln_ctx | out_norm]
    mod_ws, mod_bs = [], []
    for blk in p["blocks"]:
        mod_ws += [blk["adaln_w"], blk["adaln_ctx_w"]]
        mod_bs += [blk["adaln_b"], blk["adaln_ctx_b"]]
    mod_ws.append(p["out_norm_w"])
    mod_bs.append(p["out_norm_b"])
    f["mod_w"] = bf(jnp.concatenate(mod_ws, axis=1))            # (DIM, MOD_TOTAL)
    f["mod_b"] = jnp.concatenate(mod_bs, axis=1)                # (1, MOD_TOTAL)
    assert f["mod_w"].shape[1] == MOD_TOTAL

    # fold 1/sqrt(head_dim) into the Q columns of the fused QKV weights/biases
    qscale = jnp.concatenate([jnp.full((DIM,), 1.0 / math.sqrt(HEAD_DIM), jnp.float32),
                              jnp.ones((2 * DIM,), jnp.float32)])[None, :]

    f["blocks"] = []
    for li, blk in enumerate(p["blocks"]):
        pre = li == NUM_LAYERS - 1
        fb = {}
        fb["qkv_w"], fb["qkv_b"] = bf(blk["qkv_w"] * qscale), blk["qkv_b"] * qscale
        fb["add_qkv_w"], fb["add_qkv_b"] = bf(blk["add_qkv_w"] * qscale), blk["add_qkv_b"] * qscale
        fb["o_w"], fb["o_b"] = bf(blk["o_w"]), blk["o_b"]
        if not pre:
            fb["add_o_w"], fb["add_o_b"] = bf(blk["add_o_w"]), blk["add_o_b"]
        fb["ff_w1"], fb["ff_b1"] = bf(blk["ff_w1"]), blk["ff_b1"]
        fb["ff_w2"], fb["ff_b2"] = bf(blk["ff_w2"]), blk["ff_b2"]
        if not pre:
            fb["ffc_w1"], fb["ffc_b1"] = bf(blk["ffc_w1"]), blk["ffc_b1"]
            fb["ffc_w2"], fb["ffc_b2"] = bf(blk["ffc_w2"]), blk["ffc_b2"]
        f["blocks"].append(fb)

    f["proj_wT"] = bf(p["proj_out_w"].T)                        # (PPC, DIM)
    f["proj_bT"] = p["proj_out_b"].T                            # (PPC, 1)
    return f


def mmdit_forward(packed, hidden_states, encoder_hidden_states, pooled_projections, timestep):
    # Note: the PyTorch wrapper's `timestep.expand(B)` result is discarded (no-op); timestep is (B,).
    Bb, C, H, Wd = hidden_states.shape
    pp = PATCH
    h, wd = H // pp, Wd // pp
    n_img = h * wd

    # --- patchify: Conv2d(k=p, s=p) == reshape/transpose + matmul (matmul lives in the kernel) ---
    xp = hidden_states.reshape(Bb, C, h, pp, wd, pp)
    xp = xp.transpose(0, 2, 4, 1, 3, 5).reshape(Bb * n_img, C * pp * pp)

    t_freq = timestep_embedding(timestep)                               # (B, 256)
    ctx_in = encoder_hidden_states.reshape(Bb * TXT_LEN, JOINT_DIM)

    args = [packed[n] for n in _TOP_NAMES]
    for li, fb in enumerate(packed["blocks"]):
        args += [fb[n] for n in _block_names(li == NUM_LAYERS - 1)]
    args += [packed[n] for n in _TAIL_NAMES]

    vmem_spec = pl.BlockSpec(memory_space=pltpu.MemorySpace.VMEM)
    out_t = pl.pallas_call(
        _mmdit_fused_kernel,
        in_specs=[vmem_spec] * (5 + len(args)),
        out_specs=vmem_spec,
        out_shape=jax.ShapeDtypeStruct((PPC, Bb * n_img), jnp.float32),  # lane-dense (16, 128)
    )(xp, packed["pos_embed"], t_freq, pooled_projections, ctx_in, *args)

    # --- un-transpose the lane-dense kernel output, then unpatchify ---
    out = out_t.T.reshape(Bb, n_img, PPC)
    out = out.reshape(Bb, h, wd, pp, pp, OUT_CHANNELS)
    out = jnp.einsum("nhwpqc->nchpwq", out)
    noise_pred = out.reshape(Bb, OUT_CHANNELS, h * pp, wd * pp)
    return noise_pred


if __name__ == "__main__":
    key = jax.random.PRNGKey(0)
    kp, kx, kc, kpool = jax.random.split(key, 4)
    params = init_params(kp)
    packed = pack_params(params)

    hidden_states = jax.random.normal(kx, (B, IN_CHANNELS, SAMPLE, SAMPLE), dtype=jnp.float32)
    encoder_hidden_states = jax.random.normal(kc, (B, TXT_LEN, JOINT_DIM), dtype=jnp.float32)
    pooled_projections = jax.random.normal(kpool, (B, POOLED_DIM), dtype=jnp.float32)
    timestep = jnp.array([999.0, 500.0], dtype=jnp.float32)

    fwd = jax.jit(mmdit_forward)
    noise_pred = fwd(packed, hidden_states, encoder_hidden_states,
                     pooled_projections, timestep)
    noise_pred = jax.block_until_ready(noise_pred)
    assert noise_pred.shape == (B, OUT_CHANNELS, SAMPLE, SAMPLE), noise_pred.shape
    assert bool(jnp.all(jnp.isfinite(noise_pred)))
    print("KERNEL_OK")
</pallas_src>

<mosaic_0001>
module attributes {stable_mosaic.version = 11 : i64} {
  func.func @_mmdit_fused_kernel(%arg0: memref<128x16xf32, #tpu.memory_space<vmem>>, %arg1: memref<64x32xf32, #tpu.memory_space<vmem>>, %arg2: memref<2x256xf32, #tpu.memory_space<vmem>>, %arg3: memref<2x64xf32, #tpu.memory_space<vmem>>, %arg4: memref<16x48xf32, #tpu.memory_space<vmem>>, %arg5: memref<16x32xbf16, #tpu.memory_space<vmem>>, %arg6: memref<1x32xf32, #tpu.memory_space<vmem>>, %arg7: memref<256x32xbf16, #tpu.memory_space<vmem>>, %arg8: memref<1x32xf32, #tpu.memory_space<vmem>>, %arg9: memref<32x32xbf16, #tpu.memory_space<vmem>>, %arg10: memref<1x32xf32, #tpu.memory_space<vmem>>, %arg11: memref<64x32xbf16, #tpu.memory_space<vmem>>, %arg12: memref<1x32xf32, #tpu.memory_space<vmem>>, %arg13: memref<32x32xbf16, #tpu.memory_space<vmem>>, %arg14: memref<1x32xf32, #tpu.memory_space<vmem>>, %arg15: memref<48x32xbf16, #tpu.memory_space<vmem>>, %arg16: memref<1x32xf32, #tpu.memory_space<vmem>>, %arg17: memref<32x704xbf16, #tpu.memory_space<vmem>>, %arg18: memref<1x704xf32, #tpu.memory_space<vmem>>, %arg19: memref<32x96xbf16, #tpu.memory_space<vmem>>, %arg20: memref<1x96xf32, #tpu.memory_space<vmem>>, %arg21: memref<32x96xbf16, #tpu.memory_space<vmem>>, %arg22: memref<1x96xf32, #tpu.memory_space<vmem>>, %arg23: memref<32x32xbf16, #tpu.memory_space<vmem>>, %arg24: memref<1x32xf32, #tpu.memory_space<vmem>>, %arg25: memref<32x32xbf16, #tpu.memory_space<vmem>>, %arg26: memref<1x32xf32, #tpu.memory_space<vmem>>, %arg27: memref<32x128xbf16, #tpu.memory_space<vmem>>, %arg28: memref<1x128xf32, #tpu.memory_space<vmem>>, %arg29: memref<128x32xbf16, #tpu.memory_space<vmem>>, %arg30: memref<1x32xf32, #tpu.memory_space<vmem>>, %arg31: memref<32x128xbf16, #tpu.memory_space<vmem>>, %arg32: memref<1x128xf32, #tpu.memory_space<vmem>>, %arg33: memref<128x32xbf16, #tpu.memory_space<vmem>>, %arg34: memref<1x32xf32, #tpu.memory_space<vmem>>, %arg35: memref<32x96xbf16, #tpu.memory_space<vmem>>, %arg36: memref<1x96xf32, #tpu.memory_space<vmem>>, %arg37: memref<32x96xbf16, #tpu.memory_space<vmem>>, %arg38: memref<1x96xf32, #tpu.memory_space<vmem>>, %arg39: memref<32x32xbf16, #tpu.memory_space<vmem>>, %arg40: memref<1x32xf32, #tpu.memory_space<vmem>>, %arg41: memref<32x128xbf16, #tpu.memory_space<vmem>>, %arg42: memref<1x128xf32, #tpu.memory_space<vmem>>, %arg43: memref<128x32xbf16, #tpu.memory_space<vmem>>, %arg44: memref<1x32xf32, #tpu.memory_space<vmem>>, %arg45: memref<16x32xbf16, #tpu.memory_space<vmem>>, %arg46: memref<16x1xf32, #tpu.memory_space<vmem>>, %arg47: memref<16x128xf32, #tpu.memory_space<vmem>>) attributes {dimension_semantics = [], scalar_prefetch = 0 : i64, scratch_operands = 0 : i64, tpu.core_type = #tpu.core_type<tc>} {
    %c0 = arith.constant 0 : index
    %c0_0 = arith.constant 0 : index
    %0 = vector.load %arg0[%c0, %c0_0] : memref<128x16xf32, #tpu.memory_space<vmem>>, vector<128x16xf32>
    %c0_1 = arith.constant 0 : index
    %c0_2 = arith.constant 0 : index
    %1 = vector.load %arg5[%c0_1, %c0_2] : memref<16x32xbf16, #tpu.memory_space<vmem>>, vector<16x32xbf16>
    %2 = arith.truncf %0 : vector<128x16xf32> to vector<128x16xbf16>
    %cst = arith.constant dense<0.000000e+00> : vector<128x32xf32>
    %3 = tpu.matmul %2, %1, %cst {dimension_numbers = #tpu.dot_dimension_numbers<[1], [0], [0], [1], [0, 0, 1, 1], [], []>} : vector<128x16xbf16>, vector<16x32xbf16>, vector<128x32xf32> -> vector<128x32xf32>
    %c0_3 = arith.constant 0 : index
    %c0_4 = arith.constant 0 : index
    %4 = vector.load %arg6[%c0_3, %c0_4] : memref<1x32xf32, #tpu.memory_space<vmem>>, vector<1x32xf32>
    %5 = vector.broadcast %4 : vector<1x32xf32> to vector<128x32xf32>
    %6 = arith.addf %3, %5 : vector<128x32xf32>
    %c0_5 = arith.constant 0 : index
    %c0_6 = arith.constant 0 : index
    %7 = vector.load %arg1[%c0_5, %c0_6] : memref<64x32xf32, #tpu.memory_space<vmem>>, vector<64x32xf32>
    %8 = vector.extract_strided_slice %6 {offsets = [0, 0], sizes = [64, 32], strides = [1, 1]} : vector<128x32xf32> to vector<64x32xf32>
    %9 = arith.addf %8, %7 : vector<64x32xf32>
    %10 = vector.extract_strided_slice %6 {offsets = [64, 0], sizes = [64, 32], strides = [1, 1]} : vector<128x32xf32> to vector<64x32xf32>
    %11 = arith.addf %10, %7 : vector<64x32xf32>
    %12 = tpu.concatenate %9, %11 in 0 : vector<64x32xf32>, vector<64x32xf32> -> vector<128x32xf32>
    %c0_7 = arith.constant 0 : index
    %c0_8 = arith.constant 0 : index
    %13 = vector.load %arg4[%c0_7, %c0_8] : memref<16x48xf32, #tpu.memory_space<vmem>>, vector<16x48xf32>
    %c0_9 = arith.constant 0 : index
    %c0_10 = arith.constant 0 : index
    %14 = vector.load %arg15[%c0_9, %c0_10] : memref<48x32xbf16, #tpu.memory_space<vmem>>, vector<48x32xbf16>
    %15 = arith.truncf %13 : vector<16x48xf32> to vector<16x48xbf16>
    %cst_11 = arith.constant dense<0.000000e+00> : vector<16x32xf32>
    %16 = tpu.matmul %15, %14, %cst_11 {dimension_numbers = #tpu.dot_dimension_numbers<[1], [0], [0], [1], [0, 0, 1, 1], [], []>} : vector<16x48xbf16>, vector<48x32xbf16>, vector<16x32xf32> -> vector<16x32xf32>
    %c0_12 = arith.constant 0 : index
    %c0_13 = arith.constant 0 : index
    %17 = vector.load %arg16[%c0_12, %c0_13] : memref<1x32xf32, #tpu.memory_space<vmem>>, vector<1x32xf32>
    %18 = vector.broadcast %17 : vector<1x32xf32> to vector<16x32xf32>
    %19 = arith.addf %16, %18 : vector<16x32xf32>
    %c0_14 = arith.constant 0 : index
    %c0_15 = arith.constant 0 : index
    %20 = vector.load %arg2[%c0_14, %c0_15] : memref<2x256xf32, #tpu.memory_space<vmem>>, vector<2x256xf32>
    %c0_16 = arith.constant 0 : index
    %c0_17 = arith.constant 0 : index
    %21 = vector.load %arg7[%c0_16, %c0_17] : memref<256x32xbf16, #tpu.memory_space<vmem>>, vector<256x32xbf16>
    %22 = arith.truncf %20 : vector<2x256xf32> to vector<2x256xbf16>
    %cst_18 = arith.constant dense<0.000000e+00> : vector<2x32xf32>
    %23 = tpu.matmul %22, %21, %cst_18 {dimension_numbers = #tpu.dot_dimension_numbers<[1], [0], [0], [1], [0, 0, 1, 1], [], []>} : vector<2x256xbf16>, vector<256x32xbf16>, vector<2x32xf32> -> vector<2x32xf32>
    %c0_19 = arith.constant 0 : index
    %c0_20 = arith.constant 0 : index
    %24 = vector.load %arg8[%c0_19, %c0_20] : memref<1x32xf32, #tpu.memory_space<vmem>>, vector<1x32xf32>
    %25 = vector.broadcast %24 : vector<1x32xf32> to vector<2x32xf32>
    %26 = arith.addf %23, %25 : vector<2x32xf32>
    %27 = arith.negf %26 : vector<2x32xf32>
    %28 = math.exp %27 : vector<2x32xf32>
    %cst_21 = arith.constant 1.000000e+00 : f32
    %29 = vector.broadcast %cst_21 : f32 to vector<2x32xf32>
    %30 = arith.addf %29, %28 : vector<2x32xf32>
    %31 = arith.divf %29, %30 : vector<2x32xf32>
    %32 = arith.mulf %26, %31 : vector<2x32xf32>
    %c0_22 = arith.constant 0 : index
    %c0_23 = arith.constant 0 : index
    %33 = vector.load %arg9[%c0_22, %c0_23] : memref<32x32xbf16, #tpu.memory_space<vmem>>, vector<32x32xbf16>
    %34 = arith.truncf %32 : vector<2x32xf32> to vector<2x32xbf16>
    %cst_24 = arith.constant dense<0.000000e+00> : vector<2x32xf32>
    %35 = tpu.matmul %34, %33, %cst_24 {dimension_numbers = #tpu.dot_dimension_numbers<[1], [0], [0], [1], [0, 0, 1, 1], [], []>} : vector<2x32xbf16>, vector<32x32xbf16>, vector<2x32xf32> -> vector<2x32xf32>
    %c0_25 = arith.constant 0 : index
    %c0_26 = arith.constant 0 : index
    %36 = vector.load %arg10[%c0_25, %c0_26] : memref<1x32xf32, #tpu.memory_space<vmem>>, vector<1x32xf32>
    %37 = vector.broadcast %36 : vector<1x32xf32> to vector<2x32xf32>
    %38 = arith.addf %35, %37 : vector<2x32xf32>
    %c0_27 = arith.constant 0 : index
    %c0_28 = arith.constant 0 : index
    %39 = vector.load %arg3[%c0_27, %c0_28] : memref<2x64xf32, #tpu.memory_space<vmem>>, vector<2x64xf32>
    %c0_29 = arith.constant 0 : index
    %c0_30 = arith.constant 0 : index
    %40 = vector.load %arg11[%c0_29, %c0_30] : memref<64x32xbf16, #tpu.memory_space<vmem>>, vector<64x32xbf16>
    %41 = arith.truncf %39 : vector<2x64xf32> to vector<2x64xbf16>
    %cst_31 = arith.constant dense<0.000000e+00> : vector<2x32xf32>
    %42 = tpu.matmul %41, %40, %cst_31 {dimension_numbers = #tpu.dot_dimension_numbers<[1], [0], [0], [1], [0, 0, 1, 1], [], []>} : vector<2x64xbf16>, vector<64x32xbf16>, vector<2x32xf32> -> vector<2x32xf32>
    %c0_32 = arith.constant 0 : index
    %c0_33 = arith.constant 0 : index
    %43 = vector.load %arg12[%c0_32, %c0_33] : memref<1x32xf32, #tpu.memory_space<vmem>>, vector<1x32xf32>
    %44 = vector.broadcast %43 : vector<1x32xf32> to vector<2x32xf32>
    %45 = arith.addf %42, %44 : vector<2x32xf32>
    %46 = arith.negf %45 : vector<2x32xf32>
    %47 = math.exp %46 : vector<2x32xf32>
    %cst_34 = arith.constant 1.000000e+00 : f32
    %48 = vector.broadcast %cst_34 : f32 to vector<2x32xf32>
    %49 = arith.addf %48, %47 : vector<2x32xf32>
    %50 = arith.divf %48, %49 : vector<2x32xf32>
    %51 = arith.mulf %45, %50 : vector<2x32xf32>
    %c0_35 = arith.constant 0 : index
    %c0_36 = arith.constant 0 : index
    %52 = vector.load %arg13[%c0_35, %c0_36] : memref<32x32xbf16, #tpu.memory_space<vmem>>, vector<32x32xbf16>
    %53 = arith.truncf %51 : vector<2x32xf32> to vector<2x32xbf16>
    %cst_37 = arith.constant dense<0.000000e+00> : vector<2x32xf32>
    %54 = tpu.matmul %53, %52, %cst_37 {dimension_numbers = #tpu.dot_dimension_numbers<[1], [0], [0], [1], [0, 0, 1, 1], [], []>} : vector<2x32xbf16>, vector<32x32xbf16>, vector<2x32xf32> -> vector<2x32xf32>
    %c0_38 = arith.constant 0 : index
    %c0_39 = arith.constant 0 : index
    %55 = vector.load %arg14[%c0_38, %c0_39] : memref<1x32xf32, #tpu.memory_space<vmem>>, vector<1x32xf32>
    %56 = vector.broadcast %55 : vector<1x32xf32> to vector<2x32xf32>
    %57 = arith.addf %54, %56 : vector<2x32xf32>
    %58 = arith.addf %38, %57 : vector<2x32xf32>
    %59 = arith.negf %58 : vector<2x32xf32>
    %60 = math.exp %59 : vector<2x32xf32>
    %cst_40 = arith.constant 1.000000e+00 : f32
    %61 = vector.broadcast %cst_40 : f32 to vector<2x32xf32>
    %62 = arith.addf %61, %60 : vector<2x32xf32>
    %63 = arith.divf %61, %62 : vector<2x32xf32>
    %64 = arith.mulf %58, %63 : vector<2x32xf32>
    %c0_41 = arith.constant 0 : index
    %c0_42 = arith.constant 0 : index
    %65 = vector.load %arg17[%c0_41, %c0_42] : memref<32x704xbf16, #tpu.memory_space<vmem>>, vector<32x704xbf16>
    %66 = arith.truncf %64 : vector<2x32xf32> to vector<2x32xbf16>
    %cst_43 = arith.constant dense<0.000000e+00> : vector<2x704xf32>
    %67 = tpu.matmul %66, %65, %cst_43 {dimension_numbers = #tpu.dot_dimension_numbers<[1], [0], [0], [1], [0, 0, 1, 1], [], []>} : vector<2x32xbf16>, vector<32x704xbf16>, vector<2x704xf32> -> vector<2x704xf32>
    %c0_44 = arith.constant 0 : index
    %c0_45 = arith.constant 0 : index
    %68 = vector.load %arg18[%c0_44, %c0_45] : memref<1x704xf32, #tpu.memory_space<vmem>>, vector<1x704xf32>
    %69 = vector.broadcast %68 : vector<1x704xf32> to vector<2x704xf32>
    %70 = arith.addf %67, %69 : vector<2x704xf32>
    %71 = vector.extract_strided_slice %70 {offsets = [0, 0], sizes = [2, 32], strides = [1, 1]} : vector<2x704xf32> to vector<2x32xf32>
    %72 = vector.extract_strided_slice %70 {offsets = [0, 32], sizes = [2, 32], strides = [1, 1]} : vector<2x704xf32> to vector<2x32xf32>
    %73 = vector.extract_strided_slice %70 {offsets = [0, 64], sizes = [2, 32], strides = [1, 1]} : vector<2x704xf32> to vector<2x32xf32>
    %74 = vector.extract_strided_slice %70 {offsets = [0, 96], sizes = [2, 32], strides = [1, 1]} : vector<2x704xf32> to vector<2x32xf32>
    %75 = vector.extract_strided_slice %70 {offsets = [0, 128], sizes = [2, 32], strides = [1, 1]} : vector<2x704xf32> to vector<2x32xf32>
    %76 = vector.extract_strided_slice %70 {offsets = [0, 160], sizes = [2, 32], strides = [1, 1]} : vector<2x704xf32> to vector<2x32xf32>
    %cst_46 = arith.constant dense<0.000000e+00> : vector<128xf32>
    %77 = vector.multi_reduction <add>, %12, %cst_46 [1] : vector<128x32xf32> to vector<128xf32>
    %78 = vector.shape_cast %77 : vector<128xf32> to vector<128x1xf32>
    %cst_47 = arith.constant 3.200000e+01 : f32
    %79 = vector.broadcast %cst_47 : f32 to vector<128x1xf32>
    %80 = arith.divf %78, %79 : vector<128x1xf32>
    %81 = vector.broadcast %80 : vector<128x1xf32> to vector<128x32xf32>
    %82 = arith.subf %12, %81 : vector<128x32xf32>
    %83 = arith.mulf %82, %82 : vector<128x32xf32>
    %cst_48 = arith.constant dense<0.000000e+00> : vector<128xf32>
    %84 = vector.multi_reduction <add>, %83, %cst_48 [1] : vector<128x32xf32> to vector<128xf32>
    %85 = vector.shape_cast %84 : vector<128xf32> to vector<128x1xf32>
    %cst_49 = arith.constant 3.200000e+01 : f32
    %86 = vector.broadcast %cst_49 : f32 to vector<128x1xf32>
    %87 = arith.divf %85, %86 : vector<128x1xf32>
    %88 = vector.broadcast %80 : vector<128x1xf32> to vector<128x32xf32>
    %89 = arith.subf %12, %88 : vector<128x32xf32>
    %cst_50 = arith.constant 9.99999997E-7 : f32
    %90 = vector.broadcast %cst_50 : f32 to vector<128x1xf32>
    %91 = arith.addf %87, %90 : vector<128x1xf32>
    %92 = math.rsqrt %91 : vector<128x1xf32>
    %93 = vector.broadcast %92 : vector<128x1xf32> to vector<128x32xf32>
    %94 = arith.mulf %89, %93 : vector<128x32xf32>
    %95 = vector.extract_strided_slice %94 {offsets = [0, 0], sizes = [64, 32], strides = [1, 1]} : vector<128x32xf32> to vector<64x32xf32>
    %96 = vector.extract_strided_slice %72 {offsets = [0, 0], sizes = [1, 32], strides = [1, 1]} : vector<2x32xf32> to vector<1x32xf32>
    %cst_51 = arith.constant 1.000000e+00 : f32
    %97 = vector.broadcast %cst_51 : f32 to vector<1x32xf32>
    %98 = arith.addf %97, %96 : vector<1x32xf32>
    %99 = vector.broadcast %98 : vector<1x32xf32> to vector<64x32xf32>
    %100 = arith.mulf %95, %99 : vector<64x32xf32>
    %101 = vector.extract_strided_slice %71 {offsets = [0, 0], sizes = [1, 32], strides = [1, 1]} : vector<2x32xf32> to vector<1x32xf32>
    %102 = vector.broadcast %101 : vector<1x32xf32> to vector<64x32xf32>
    %103 = arith.addf %100, %102 : vector<64x32xf32>
    %104 = vector.extract_strided_slice %94 {offsets = [64, 0], sizes = [64, 32], strides = [1, 1]} : vector<128x32xf32> to vector<64x32xf32>
    %105 = vector.extract_strided_slice %72 {offsets = [1, 0], sizes = [1, 32], strides = [1, 1]} : vector<2x32xf32> to vector<1x32xf32>
    %cst_52 = arith.constant 1.000000e+00 : f32
    %106 = vector.broadcast %cst_52 : f32 to vector<1x32xf32>
    %107 = arith.addf %106, %105 : vector<1x32xf32>
    %108 = vector.broadcast %107 : vector<1x32xf32> to vector<64x32xf32>
    %109 = arith.mulf %104, %108 : vector<64x32xf32>
    %110 = vector.extract_strided_slice %71 {offsets = [1, 0], sizes = [1, 32], strides = [1, 1]} : vector<2x32xf32> to vector<1x32xf32>
    %111 = vector.broadcast %110 : vector<1x32xf32> to vector<64x32xf32>
    %112 = arith.addf %109, %111 : vector<64x32xf32>
    %113 = tpu.concatenate %103, %112 in 0 : vector<64x32xf32>, vector<64x32xf32> -> vector<128x32xf32>
    %114 = vector.extract_strided_slice %70 {offsets = [0, 192], sizes = [2, 32], strides = [1, 1]} : vector<2x704xf32> to vector<2x32xf32>
    %115 = vector.extract_strided_slice %70 {offsets = [0, 224], sizes = [2, 32], strides = [1, 1]} : vector<2x704xf32> to vector<2x32xf32>
    %116 = vector.extract_strided_slice %70 {offsets = [0, 256], sizes = [2, 32], strides = [1, 1]} : vector<2x704xf32> to vector<2x32xf32>
    %117 = vector.extract_strided_slice %70 {offsets = [0, 288], sizes = [2, 32], strides = [1, 1]} : vector<2x704xf32> to vector<2x32xf32>
    %118 = vector.extract_strided_slice %70 {offsets = [0, 320], sizes = [2, 32], strides = [1, 1]} : vector<2x704xf32> to vector<2x32xf32>
    %119 = vector.extract_strided_slice %70 {offsets = [0, 352], sizes = [2, 32], strides = [1, 1]} : vector<2x704xf32> to vector<2x32xf32>
    %cst_53 = arith.constant dense<0.000000e+00> : vector<16xf32>
    %120 = vector.multi_reduction <add>, %19, %cst_53 [1] : vector<16x32xf32> to vector<16xf32>
    %121 = vector.shape_cast %120 : vector<16xf32> to vector<16x1xf32>
    %cst_54 = arith.constant 3.200000e+01 : f32
    %122 = vector.broadcast %cst_54 : f32 to vector<16x1xf32>
    %123 = arith.divf %121, %122 : vector<16x1xf32>
    %124 = vector.broadcast %123 : vector<16x1xf32> to vector<16x32xf32>
    %125 = arith.subf %19, %124 : vector<16x32xf32>
    %126 = arith.mulf %125, %125 : vector<16x32xf32>
    %cst_55 = arith.constant dense<0.000000e+00> : vector<16xf32>
    %127 = vector.multi_reduction <add>, %126, %cst_55 [1] : vector<16x32xf32> to vector<16xf32>
    %128 = vector.shape_cast %127 : vector<16xf32> to vector<16x1xf32>
    %cst_56 = arith.constant 3.200000e+01 : f32
    %129 = vector.broadcast %cst_56 : f32 to vector<16x1xf32>
    %130 = arith.divf %128, %129 : vector<16x1xf32>
    %131 = vector.broadcast %123 : vector<16x1xf32> to vector<16x32xf32>
    %132 = arith.subf %19, %131 : vector<16x32xf32>
    %cst_57 = arith.constant 9.99999997E-7 : f32
    %133 = vector.broadcast %cst_57 : f32 to vector<16x1xf32>
    %134 = arith.addf %130, %133 : vector<16x1xf32>
    %135 = math.rsqrt %134 : vector<16x1xf32>
    %136 = vector.broadcast %135 : vector<16x1xf32> to vector<16x32xf32>
    %137 = arith.mulf %132, %136 : vector<16x32xf32>
    %138 = vector.extract_strided_slice %137 {offsets = [0, 0], sizes = [8, 32], strides = [1, 1]} : vector<16x32xf32> to vector<8x32xf32>
    %139 = vector.extract_strided_slice %115 {offsets = [0, 0], sizes = [1, 32], strides = [1, 1]} : vector<2x32xf32> to vector<1x32xf32>
    %cst_58 = arith.constant 1.000000e+00 : f32
    %140 = vector.broadcast %cst_58 : f32 to vector<1x32xf32>
    %141 = arith.addf %140, %139 : vector<1x32xf32>
    %142 = vector.broadcast %141 : vector<1x32xf32> to vector<8x32xf32>
    %143 = arith.mulf %138, %142 : vector<8x32xf32>
    %144 = vector.extract_strided_slice %114 {offsets = [0, 0], sizes = [1, 32], strides = [1, 1]} : vector<2x32xf32> to vector<1x32xf32>
    %145 = vector.broadcast %144 : vector<1x32xf32> to vector<8x32xf32>
    %146 = arith.addf %143, %145 : vector<8x32xf32>
    %147 = vector.extract_strided_slice %137 {offsets = [8, 0], sizes = [8, 32], strides = [1, 1]} : vector<16x32xf32> to vector<8x32xf32>
    %148 = vector.extract_strided_slice %115 {offsets = [1, 0], sizes = [1, 32], strides = [1, 1]} : vector<2x32xf32> to vector<1x32xf32>
    %cst_59 = arith.constant 1.000000e+00 : f32
    %149 = vector.broadcast %cst_59 : f32 to vector<1x32xf32>
    %150 = arith.addf %149, %148 : vector<1x32xf32>
    %151 = vector.broadcast %150 : vector<1x32xf32> to vector<8x32xf32>
    %152 = arith.mulf %147, %151 : vector<8x32xf32>
    %153 = vector.extract_strided_slice %114 {offsets = [1, 0], sizes = [1, 32], strides = [1, 1]} : vector<2x32xf32> to vector<1x32xf32>
    %154 = vector.broadcast %153 : vector<1x32xf32> to vector<8x32xf32>
    %155 = arith.addf %152, %154 : vector<8x32xf32>
    %156 = tpu.concatenate %146, %155 in 0 : vector<8x32xf32>, vector<8x32xf32> -> vector<16x32xf32>
    %c0_60 = arith.constant 0 : index
    %c0_61 = arith.constant 0 : index
    %157 = vector.load %arg19[%c0_60, %c0_61] : memref<32x96xbf16, #tpu.memory_space<vmem>>, vector<32x96xbf16>
    %158 = arith.truncf %113 : vector<128x32xf32> to vector<128x32xbf16>
    %cst_62 = arith.constant dense<0.000000e+00> : vector<128x96xf32>
    %159 = tpu.matmul %158, %157, %cst_62 {dimension_numbers = #tpu.dot_dimension_numbers<[1], [0], [0], [1], [0, 0, 1, 1], [], []>} : vector<128x32xbf16>, vector<32x96xbf16>, vector<128x96xf32> -> vector<128x96xf32>
    %c0_63 = arith.constant 0 : index
    %c0_64 = arith.constant 0 : index
    %160 = vector.load %arg20[%c0_63, %c0_64] : memref<1x96xf32, #tpu.memory_space<vmem>>, vector<1x96xf32>
    %161 = vector.broadcast %160 : vector<1x96xf32> to vector<128x96xf32>
    %162 = arith.addf %159, %161 : vector<128x96xf32>
    %c0_65 = arith.constant 0 : index
    %c0_66 = arith.constant 0 : index
    %163 = vector.load %arg21[%c0_65, %c0_66] : memref<32x96xbf16, #tpu.memory_space<vmem>>, vector<32x96xbf16>
    %164 = arith.truncf %156 : vector<16x32xf32> to vector<16x32xbf16>
    %cst_67 = arith.constant dense<0.000000e+00> : vector<16x96xf32>
    %165 = tpu.matmul %164, %163, %cst_67 {dimension_numbers = #tpu.dot_dimension_numbers<[1], [0], [0], [1], [0, 0, 1, 1], [], []>} : vector<16x32xbf16>, vector<32x96xbf16>, vector<16x96xf32> -> vector<16x96xf32>
    %c0_68 = arith.constant 0 : index
    %c0_69 = arith.constant 0 : index
    %166 = vector.load %arg22[%c0_68, %c0_69] : memref<1x96xf32, #tpu.memory_space<vmem>>, vector<1x96xf32>
    %167 = vector.broadcast %166 : vector<1x96xf32> to vector<16x96xf32>
    %168 = arith.addf %165, %167 : vector<16x96xf32>
    %169 = vector.extract_strided_slice %162 {offsets = [0, 0], sizes = [64, 96], strides = [1, 1]} : vector<128x96xf32> to vector<64x96xf32>
    %170 = vector.extract_strided_slice %168 {offsets = [0, 0], sizes = [8, 96], strides = [1, 1]} : vector<16x96xf32> to vector<8x96xf32>
    %171 = tpu.concatenate %169, %170 in 0 : vector<64x96xf32>, vector<8x96xf32> -> vector<72x96xf32>
    %172 = vector.extract_strided_slice %171 {offsets = [0, 0], sizes = [72, 16], strides = [1, 1]} : vector<72x96xf32> to vector<72x16xf32>
    %173 = vector.extract_strided_slice %171 {offsets = [0, 32], sizes = [72, 16], strides = [1, 1]} : vector<72x96xf32> to vector<72x16xf32>
    %174 = vector.extract_strided_slice %171 {offsets = [0, 64], sizes = [72, 16], strides = [1, 1]} : vector<72x96xf32> to vector<72x16xf32>
    %175 = arith.truncf %172 : vector<72x16xf32> to vector<72x16xbf16>
    %176 = arith.truncf %173 : vector<72x16xf32> to vector<72x16xbf16>
    %cst_70 = arith.constant dense<0.000000e+00> : vector<72x72xf32>
    %177 = tpu.matmul %175, %176, %cst_70 {dimension_numbers = #tpu.dot_dimension_numbers<[1], [1], [0], [0], [0, 0, 1, 0], [], []>} : vector<72x16xbf16>, vector<72x16xbf16>, vector<72x72xf32> -> vector<72x72xf32>
    %cst_71 = arith.constant dense<0xFF800000> : vector<72xf32>
    %178 = vector.multi_reduction <maximumf>, %177, %cst_71 [1] : vector<72x72xf32> to vector<72xf32>
    %179 = vector.shape_cast %178 : vector<72xf32> to vector<72x1xf32>
    %180 = vector.broadcast %179 : vector<72x1xf32> to vector<72x72xf32>
    %181 = arith.subf %177, %180 : vector<72x72xf32>
    %182 = math.exp %181 : vector<72x72xf32>
    %cst_72 = arith.constant dense<0.000000e+00> : vector<72xf32>
    %183 = vector.multi_reduction <add>, %182, %cst_72 [1] : vector<72x72xf32> to vector<72xf32>
    %184 = vector.shape_cast %183 : vector<72xf32> to vector<72x1xf32>
    %185 = tpu.reciprocal %184 {approx = true} : vector<72x1xf32> -> vector<72x1xf32>
    %186 = arith.truncf %182 : vector<72x72xf32> to vector<72x72xbf16>
    %187 = arith.truncf %174 : vector<72x16xf32> to vector<72x16xbf16>
    %cst_73 = arith.constant dense<0.000000e+00> : vector<72x16xf32>
    %188 = tpu.matmul %186, %187, %cst_73 {dimension_numbers = #tpu.dot_dimension_numbers<[1], [0], [0], [1], [0, 0, 1, 1], [], []>} : vector<72x72xbf16>, vector<72x16xbf16>, vector<72x16xf32> -> vector<72x16xf32>
    %189 = vector.broadcast %185 : vector<72x1xf32> to vector<72x16xf32>
    %190 = arith.mulf %188, %189 : vector<72x16xf32>
    %191 = vector.extract_strided_slice %171 {offsets = [0, 16], sizes = [72, 16], strides = [1, 1]} : vector<72x96xf32> to vector<72x16xf32>
    %192 = vector.extract_strided_slice %171 {offsets = [0, 48], sizes = [72, 16], strides = [1, 1]} : vector<72x96xf32> to vector<72x16xf32>
    %193 = vector.extract_strided_slice %171 {offsets = [0, 80], sizes = [72, 16], strides = [1, 1]} : vector<72x96xf32> to vector<72x16xf32>
    %194 = arith.truncf %191 : vector<72x16xf32> to vector<72x16xbf16>
    %195 = arith.truncf %192 : vector<72x16xf32> to vector<72x16xbf16>
    %cst_74 = arith.constant dense<0.000000e+00> : vector<72x72xf32>
    %196 = tpu.matmul %194, %195, %cst_74 {dimension_numbers = #tpu.dot_dimension_numbers<[1], [1], [0], [0], [0, 0, 1, 0], [], []>} : vector<72x16xbf16>, vector<72x16xbf16>, vector<72x72xf32> -> vector<72x72xf32>
    %cst_75 = arith.constant dense<0xFF800000> : vector<72xf32>
    %197 = vector.multi_reduction <maximumf>, %196, %cst_75 [1] : vector<72x72xf32> to vector<72xf32>
    %198 = vector.shape_cast %197 : vector<72xf32> to vector<72x1xf32>
    %199 = vector.broadcast %198 : vector<72x1xf32> to vector<72x72xf32>
    %200 = arith.subf %196, %199 : vector<72x72xf32>
    %201 = math.exp %200 : vector<72x72xf32>
    %cst_76 = arith.constant dense<0.000000e+00> : vector<72xf32>
    %202 = vector.multi_reduction <add>, %201, %cst_76 [1] : vector<72x72xf32> to vector<72xf32>
    %203 = vector.shape_cast %202 : vector<72xf32> to vector<72x1xf32>
    %204 = tpu.reciprocal %203 {approx = true} : vector<72x1xf32> -> vector<72x1xf32>
    %205 = arith.truncf %201 : vector<72x72xf32> to vector<72x72xbf16>
    %206 = arith.truncf %193 : vector<72x16xf32> to vector<72x16xbf16>
    %cst_77 = arith.constant dense<0.000000e+00> : vector<72x16xf32>
    %207 = tpu.matmul %205, %206, %cst_77 {dimension_numbers = #tpu.dot_dimension_numbers<[1], [0], [0], [1], [0, 0, 1, 1], [], []>} : vector<72x72xbf16>, vector<72x16xbf16>, vector<72x16xf32> -> vector<72x16xf32>
    %208 = vector.broadcast %204 : vector<72x1xf32> to vector<72x16xf32>
    %209 = arith.mulf %207, %208 : vector<72x16xf32>
    %210 = tpu.concatenate %190, %209 in 1 : vector<72x16xf32>, vector<72x16xf32> -> vector<72x32xf32>
    %211 = vector.extract_strided_slice %210 {offsets = [0, 0], sizes = [64, 32], strides = [1, 1]} : vector<72x32xf32> to vector<64x32xf32>
    %212 = vector.extract_strided_slice %210 {offsets = [64, 0], sizes = [8, 32], strides = [1, 1]} : vector<72x32xf32> to vector<8x32xf32>
    %213 = vector.extract_strided_slice %162 {offsets = [64, 0], sizes = [64, 96], strides = [1, 1]} : vector<128x96xf32> to vector<64x96xf32>
    %214 = vector.extract_strided_slice %168 {offsets = [8, 0], sizes = [8, 96], strides = [1, 1]} : vector<16x96xf32> to vector<8x96xf32>
    %215 = tpu.concatenate %213, %214 in 0 : vector<64x96xf32>, vector<8x96xf32> -> vector<72x96xf32>
    %216 = vector.extract_strided_slice %215 {offsets = [0, 0], sizes = [72, 16], strides = [1, 1]} : vector<72x96xf32> to vector<72x16xf32>
    %217 = vector.extract_strided_slice %215 {offsets = [0, 32], sizes = [72, 16], strides = [1, 1]} : vector<72x96xf32> to vector<72x16xf32>
    %218 = vector.extract_strided_slice %215 {offsets = [0, 64], sizes = [72, 16], strides = [1, 1]} : vector<72x96xf32> to vector<72x16xf32>
    %219 = arith.truncf %216 : vector<72x16xf32> to vector<72x16xbf16>
    %220 = arith.truncf %217 : vector<72x16xf32> to vector<72x16xbf16>
    %cst_78 = arith.constant dense<0.000000e+00> : vector<72x72xf32>
    %221 = tpu.matmul %219, %220, %cst_78 {dimension_numbers = #tpu.dot_dimension_numbers<[1], [1], [0], [0], [0, 0, 1, 0], [], []>} : vector<72x16xbf16>, vector<72x16xbf16>, vector<72x72xf32> -> vector<72x72xf32>
    %cst_79 = arith.constant dense<0xFF800000> : vector<72xf32>
    %222 = vector.multi_reduction <maximumf>, %221, %cst_79 [1] : vector<72x72xf32> to vector<72xf32>
    %223 = vector.shape_cast %222 : vector<72xf32> to vector<72x1xf32>
    %224 = vector.broadcast %223 : vector<72x1xf32> to vector<72x72xf32>
    %225 = arith.subf %221, %224 : vector<72x72xf32>
    %226 = math.exp %225 : vector<72x72xf32>
    %cst_80 = arith.constant dense<0.000000e+00> : vector<72xf32>
    %227 = vector.multi_reduction <add>, %226, %cst_80 [1] : vector<72x72xf32> to vector<72xf32>
    %228 = vector.shape_cast %227 : vector<72xf32> to vector<72x1xf32>
    %229 = tpu.reciprocal %228 {approx = true} : vector<72x1xf32> -> vector<72x1xf32>
    %230 = arith.truncf %226 : vector<72x72xf32> to vector<72x72xbf16>
    %231 = arith.truncf %218 : vector<72x16xf32> to vector<72x16xbf16>
    %cst_81 = arith.constant dense<0.000000e+00> : vector<72x16xf32>
    %232 = tpu.matmul %230, %231, %cst_81 {dimension_numbers = #tpu.dot_dimension_numbers<[1], [0], [0], [1], [0, 0, 1, 1], [], []>} : vector<72x72xbf16>, vector<72x16xbf16>, vector<72x16xf32> -> vector<72x16xf32>
    %233 = vector.broadcast %229 : vector<72x1xf32> to vector<72x16xf32>
    %234 = arith.mulf %232, %233 : vector<72x16xf32>
    %235 = vector.extract_strided_slice %215 {offsets = [0, 16], sizes = [72, 16], strides = [1, 1]} : vector<72x96xf32> to vector<72x16xf32>
    %236 = vector.extract_strided_slice %215 {offsets = [0, 48], sizes = [72, 16], strides = [1, 1]} : vector<72x96xf32> to vector<72x16xf32>
    %237 = vector.extract_strided_slice %215 {offsets = [0, 80], sizes = [72, 16], strides = [1, 1]} : vector<72x96xf32> to vector<72x16xf32>
    %238 = arith.truncf %235 : vector<72x16xf32> to vector<72x16xbf16>
    %239 = arith.truncf %236 : vector<72x16xf32> to vector<72x16xbf16>
    %cst_82 = arith.constant dense<0.000000e+00> : vector<72x72xf32>
    %240 = tpu.matmul %238, %239, %cst_82 {dimension_numbers = #tpu.dot_dimension_numbers<[1], [1], [0], [0], [0, 0, 1, 0], [], []>} : vector<72x16xbf16>, vector<72x16xbf16>, vector<72x72xf32> -> vector<72x72xf32>
    %cst_83 = arith.constant dense<0xFF800000> : vector<72xf32>
    %241 = vector.multi_reduction <maximumf>, %240, %cst_83 [1] : vector<72x72xf32> to vector<72xf32>
    %242 = vector.shape_cast %241 : vector<72xf32> to vector<72x1xf32>
    %243 = vector.broadcast %242 : vector<72x1xf32> to vector<72x72xf32>
    %244 = arith.subf %240, %243 : vector<72x72xf32>
    %245 = math.exp %244 : vector<72x72xf32>
    %cst_84 = arith.constant dense<0.000000e+00> : vector<72xf32>
    %246 = vector.multi_reduction <add>, %245, %cst_84 [1] : vector<72x72xf32> to vector<72xf32>
    %247 = vector.shape_cast %246 : vector<72xf32> to vector<72x1xf32>
    %248 = tpu.reciprocal %247 {approx = true} : vector<72x1xf32> -> vector<72x1xf32>
    %249 = arith.truncf %245 : vector<72x72xf32> to vector<72x72xbf16>
    %250 = arith.truncf %237 : vector<72x16xf32> to vector<72x16xbf16>
    %cst_85 = arith.constant dense<0.000000e+00> : vector<72x16xf32>
    %251 = tpu.matmul %249, %250, %cst_85 {dimension_numbers = #tpu.dot_dimension_numbers<[1], [0], [0], [1], [0, 0, 1, 1], [], []>} : vector<72x72xbf16>, vector<72x16xbf16>, vector<72x16xf32> -> vector<72x16xf32>
    %252 = vector.broadcast %248 : vector<72x1xf32> to vector<72x16xf32>
    %253 = arith.mulf %251, %252 : vector<72x16xf32>
    %254 = tpu.concatenate %234, %253 in 1 : vector<72x16xf32>, vector<72x16xf32> -> vector<72x32xf32>
    %255 = vector.extract_strided_slice %254 {offsets = [0, 0], sizes = [64, 32], strides = [1, 1]} : vector<72x32xf32> to vector<64x32xf32>
    %256 = vector.extract_strided_slice %254 {offsets = [64, 0], sizes = [8, 32], strides = [1, 1]} : vector<72x32xf32> to vector<8x32xf32>
    %257 = tpu.concatenate %211, %255 in 0 : vector<64x32xf32>, vector<64x32xf32> -> vector<128x32xf32>
    %c0_86 = arith.constant 0 : index
    %c0_87 = arith.constant 0 : index
    %258 = vector.load %arg23[%c0_86, %c0_87] : memref<32x32xbf16, #tpu.memory_space<vmem>>, vector<32x32xbf16>
    %259 = arith.truncf %257 : vector<128x32xf32> to vector<128x32xbf16>
    %cst_88 = arith.constant dense<0.000000e+00> : vector<128x32xf32>
    %260 = tpu.matmul %259, %258, %cst_88 {dimension_numbers = #tpu.dot_dimension_numbers<[1], [0], [0], [1], [0, 0, 1, 1], [], []>} : vector<128x32xbf16>, vector<32x32xbf16>, vector<128x32xf32> -> vector<128x32xf32>
    %c0_89 = arith.constant 0 : index
    %c0_90 = arith.constant 0 : index
    %261 = vector.load %arg24[%c0_89, %c0_90] : memref<1x32xf32, #tpu.memory_space<vmem>>, vector<1x32xf32>
    %262 = vector.broadcast %261 : vector<1x32xf32> to vector<128x32xf32>
    %263 = arith.addf %260, %262 : vector<128x32xf32>
    %264 = vector.extract_strided_slice %263 {offsets = [0, 0], sizes = [64, 32], strides = [1, 1]} : vector<128x32xf32> to vector<64x32xf32>
    %265 = vector.extract_strided_slice %73 {offsets = [0, 0], sizes = [1, 32], strides = [1, 1]} : vector<2x32xf32> to vector<1x32xf32>
    %266 = vector.broadcast %265 : vector<1x32xf32> to vector<64x32xf32>
    %267 = arith.mulf %264, %266 : vector<64x32xf32>
    %268 = vector.extract_strided_slice %263 {offsets = [64, 0], sizes = [64, 32], strides = [1, 1]} : vector<128x32xf32> to vector<64x32xf32>
    %269 = vector.extract_strided_slice %73 {offsets = [1, 0], sizes = [1, 32], strides = [1, 1]} : vector<2x32xf32> to vector<1x32xf32>
    %270 = vector.broadcast %269 : vector<1x32xf32> to vector<64x32xf32>
    %271 = arith.mulf %268, %270 : vector<64x32xf32>
    %272 = tpu.concatenate %267, %271 in 0 : vector<64x32xf32>, vector<64x32xf32> -> vector<128x32xf32>
    %273 = arith.addf %12, %272 : vector<128x32xf32>
    %cst_91 = arith.constant dense<0.000000e+00> : vector<128xf32>
    %274 = vector.multi_reduction <add>, %273, %cst_91 [1] : vector<128x32xf32> to vector<128xf32>
    %275 = vector.shape_cast %274 : vector<128xf32> to vector<128x1xf32>
    %cst_92 = arith.constant 3.200000e+01 : f32
    %276 = vector.broadcast %cst_92 : f32 to vector<128x1xf32>
    %277 = arith.divf %275, %276 : vector<128x1xf32>
    %278 = vector.broadcast %277 : vector<128x1xf32> to vector<128x32xf32>
    %279 = arith.subf %273, %278 : vector<128x32xf32>
    %280 = arith.mulf %279, %279 : vector<128x32xf32>
    %cst_93 = arith.constant dense<0.000000e+00> : vector<128xf32>
    %281 = vector.multi_reduction <add>, %280, %cst_93 [1] : vector<128x32xf32> to vector<128xf32>
    %282 = vector.shape_cast %281 : vector<128xf32> to vector<128x1xf32>
    %cst_94 = arith.constant 3.200000e+01 : f32
    %283 = vector.broadcast %cst_94 : f32 to vector<128x1xf32>
    %284 = arith.divf %282, %283 : vector<128x1xf32>
    %285 = vector.broadcast %277 : vector<128x1xf32> to vector<128x32xf32>
    %286 = arith.subf %273, %285 : vector<128x32xf32>
    %cst_95 = arith.constant 9.99999997E-7 : f32
    %287 = vector.broadcast %cst_95 : f32 to vector<128x1xf32>
    %288 = arith.addf %284, %287 : vector<128x1xf32>
    %289 = math.rsqrt %288 : vector<128x1xf32>
    %290 = vector.broadcast %289 : vector<128x1xf32> to vector<128x32xf32>
    %291 = arith.mulf %286, %290 : vector<128x32xf32>
    %292 = vector.extract_strided_slice %291 {offsets = [0, 0], sizes = [64, 32], strides = [1, 1]} : vector<128x32xf32> to vector<64x32xf32>
    %293 = vector.extract_strided_slice %75 {offsets = [0, 0], sizes = [1, 32], strides = [1, 1]} : vector<2x32xf32> to vector<1x32xf32>
    %cst_96 = arith.constant 1.000000e+00 : f32
    %294 = vector.broadcast %cst_96 : f32 to vector<1x32xf32>
    %295 = arith.addf %294, %293 : vector<1x32xf32>
    %296 = vector.broadcast %295 : vector<1x32xf32> to vector<64x32xf32>
    %297 = arith.mulf %292, %296 : vector<64x32xf32>
    %298 = vector.extract_strided_slice %74 {offsets = [0, 0], sizes = [1, 32], strides = [1, 1]} : vector<2x32xf32> to vector<1x32xf32>
    %299 = vector.broadcast %298 : vector<1x32xf32> to vector<64x32xf32>
    %300 = arith.addf %297, %299 : vector<64x32xf32>
    %301 = vector.extract_strided_slice %291 {offsets = [64, 0], sizes = [64, 32], strides = [1, 1]} : vector<128x32xf32> to vector<64x32xf32>
    %302 = vector.extract_strided_slice %75 {offsets = [1, 0], sizes = [1, 32], strides = [1, 1]} : vector<2x32xf32> to vector<1x32xf32>
    %cst_97 = arith.constant 1.000000e+00 : f32
    %303 = vector.broadcast %cst_97 : f32 to vector<1x32xf32>
    %304 = arith.addf %303, %302 : vector<1x32xf32>
    %305 = vector.broadcast %304 : vector<1x32xf32> to vector<64x32xf32>
    %306 = arith.mulf %301, %305 : vector<64x32xf32>
    %307 = vector.extract_strided_slice %74 {offsets = [1, 0], sizes = [1, 32], strides = [1, 1]} : vector<2x32xf32> to vector<1x32xf32>
    %308 = vector.broadcast %307 : vector<1x32xf32> to vector<64x32xf32>
    %309 = arith.addf %306, %308 : vector<64x32xf32>
    %310 = tpu.concatenate %300, %309 in 0 : vector<64x32xf32>, vector<64x32xf32> -> vector<128x32xf32>
    %c0_98 = arith.constant 0 : index
    %c0_99 = arith.constant 0 : index
    %311 = vector.load %arg27[%c0_98, %c0_99] : memref<32x128xbf16, #tpu.memory_space<vmem>>, vector<32x128xbf16>
    %312 = arith.truncf %310 : vector<128x32xf32> to vector<128x32xbf16>
    %cst_100 = arith.constant dense<0.000000e+00> : vector<128x128xf32>
    %313 = tpu.matmul %312, %311, %cst_100 {dimension_numbers = #tpu.dot_dimension_numbers<[1], [0], [0], [1], [0, 0, 1, 1], [], []>} : vector<128x32xbf16>, vector<32x128xbf16>, vector<128x128xf32> -> vector<128x128xf32>
    %c0_101 = arith.constant 0 : index
    %c0_102 = arith.constant 0 : index
    %314 = vector.load %arg28[%c0_101, %c0_102] : memref<1x128xf32, #tpu.memory_space<vmem>>, vector<1x128xf32>
    %315 = vector.broadcast %314 : vector<1x128xf32> to vector<128x128xf32>
    %316 = arith.addf %313, %315 : vector<128x128xf32>
    %cst_103 = arith.constant 5.000000e-01 : f32
    %317 = vector.broadcast %cst_103 : f32 to vector<128x128xf32>
    %318 = arith.mulf %317, %316 : vector<128x128xf32>
    %cst_104 = arith.constant 4.471500e-02 : f32
    %319 = vector.broadcast %cst_104 : f32 to vector<128x128xf32>
    %320 = arith.mulf %319, %316 : vector<128x128xf32>
    %321 = arith.mulf %320, %316 : vector<128x128xf32>
    %322 = arith.mulf %321, %316 : vector<128x128xf32>
    %323 = arith.addf %316, %322 : vector<128x128xf32>
    %cst_105 = arith.constant 0.797884583 : f32
    %324 = vector.broadcast %cst_105 : f32 to vector<128x128xf32>
    %325 = arith.mulf %324, %323 : vector<128x128xf32>
    %326 = math.tanh %325 : vector<128x128xf32>
    %cst_106 = arith.constant 1.000000e+00 : f32
    %327 = vector.broadcast %cst_106 : f32 to vector<128x128xf32>
    %328 = arith.addf %327, %326 : vector<128x128xf32>
    %329 = arith.mulf %318, %328 : vector<128x128xf32>
    %c0_107 = arith.constant 0 : index
    %c0_108 = arith.constant 0 : index
    %330 = vector.load %arg29[%c0_107, %c0_108] : memref<128x32xbf16, #tpu.memory_space<vmem>>, vector<128x32xbf16>
    %331 = arith.truncf %329 : vector<128x128xf32> to vector<128x128xbf16>
    %cst_109 = arith.constant dense<0.000000e+00> : vector<128x32xf32>
    %332 = tpu.matmul %331, %330, %cst_109 {dimension_numbers = #tpu.dot_dimension_numbers<[1], [0], [0], [1], [0, 0, 1, 1], [], []>} : vector<128x128xbf16>, vector<128x32xbf16>, vector<128x32xf32> -> vector<128x32xf32>
    %c0_110 = arith.constant 0 : index
    %c0_111 = arith.constant 0 : index
    %333 = vector.load %arg30[%c0_110, %c0_111] : memref<1x32xf32, #tpu.memory_space<vmem>>, vector<1x32xf32>
    %334 = vector.broadcast %333 : vector<1x32xf32> to vector<128x32xf32>
    %335 = arith.addf %332, %334 : vector<128x32xf32>
    %336 = vector.extract_strided_slice %335 {offsets = [0, 0], sizes = [64, 32], strides = [1, 1]} : vector<128x32xf32> to vector<64x32xf32>
    %337 = vector.extract_strided_slice %76 {offsets = [0, 0], sizes = [1, 32], strides = [1, 1]} : vector<2x32xf32> to vector<1x32xf32>
    %338 = vector.broadcast %337 : vector<1x32xf32> to vector<64x32xf32>
    %339 = arith.mulf %336, %338 : vector<64x32xf32>
    %340 = vector.extract_strided_slice %335 {offsets = [64, 0], sizes = [64, 32], strides = [1, 1]} : vector<128x32xf32> to vector<64x32xf32>
    %341 = vector.extract_strided_slice %76 {offsets = [1, 0], sizes = [1, 32], strides = [1, 1]} : vector<2x32xf32> to vector<1x32xf32>
    %342 = vector.broadcast %341 : vector<1x32xf32> to vector<64x32xf32>
    %343 = arith.mulf %340, %342 : vector<64x32xf32>
    %344 = tpu.concatenate %339, %343 in 0 : vector<64x32xf32>, vector<64x32xf32> -> vector<128x32xf32>
    %345 = arith.addf %273, %344 : vector<128x32xf32>
    %346 = tpu.concatenate %212, %256 in 0 : vector<8x32xf32>, vector<8x32xf32> -> vector<16x32xf32>
    %c0_112 = arith.constant 0 : index
    %c0_113 = arith.constant 0 : index
    %347 = vector.load %arg25[%c0_112, %c0_113] : memref<32x32xbf16, #tpu.memory_space<vmem>>, vector<32x32xbf16>
    %348 = arith.truncf %346 : vector<16x32xf32> to vector<16x32xbf16>
    %cst_114 = arith.constant dense<0.000000e+00> : vector<16x32xf32>
    %349 = tpu.matmul %348, %347, %cst_114 {dimension_numbers = #tpu.dot_dimension_numbers<[1], [0], [0], [1], [0, 0, 1, 1], [], []>} : vector<16x32xbf16>, vector<32x32xbf16>, vector<16x32xf32> -> vector<16x32xf32>
    %c0_115 = arith.constant 0 : index
    %c0_116 = arith.constant 0 : index
    %350 = vector.load %arg26[%c0_115, %c0_116] : memref<1x32xf32, #tpu.memory_space<vmem>>, vector<1x32xf32>
    %351 = vector.broadcast %350 : vector<1x32xf32> to vector<16x32xf32>
    %352 = arith.addf %349, %351 : vector<16x32xf32>
    %353 = vector.extract_strided_slice %352 {offsets = [0, 0], sizes = [8, 32], strides = [1, 1]} : vector<16x32xf32> to vector<8x32xf32>
    %354 = vector.extract_strided_slice %116 {offsets = [0, 0], sizes = [1, 32], strides = [1, 1]} : vector<2x32xf32> to vector<1x32xf32>
    %355 = vector.broadcast %354 : vector<1x32xf32> to vector<8x32xf32>
    %356 = arith.mulf %353, %355 : vector<8x32xf32>
    %357 = vector.extract_strided_slice %352 {offsets = [8, 0], sizes = [8, 32], strides = [1, 1]} : vector<16x32xf32> to vector<8x32xf32>
    %358 = vector.extract_strided_slice %116 {offsets = [1, 0], sizes = [1, 32], strides = [1, 1]} : vector<2x32xf32> to vector<1x32xf32>
    %359 = vector.broadcast %358 : vector<1x32xf32> to vector<8x32xf32>
    %360 = arith.mulf %357, %359 : vector<8x32xf32>
    %361 = tpu.concatenate %356, %360 in 0 : vector<8x32xf32>, vector<8x32xf32> -> vector<16x32xf32>
    %362 = arith.addf %19, %361 : vector<16x32xf32>
    %cst_117 = arith.constant dense<0.000000e+00> : vector<16xf32>
    %363 = vector.multi_reduction <add>, %362, %cst_117 [1] : vector<16x32xf32> to vector<16xf32>
    %364 = vector.shape_cast %363 : vector<16xf32> to vector<16x1xf32>
    %cst_118 = arith.constant 3.200000e+01 : f32
    %365 = vector.broadcast %cst_118 : f32 to vector<16x1xf32>
    %366 = arith.divf %364, %365 : vector<16x1xf32>
    %367 = vector.broadcast %366 : vector<16x1xf32> to vector<16x32xf32>
    %368 = arith.subf %362, %367 : vector<16x32xf32>
    %369 = arith.mulf %368, %368 : vector<16x32xf32>
    %cst_119 = arith.constant dense<0.000000e+00> : vector<16xf32>
    %370 = vector.multi_reduction <add>, %369, %cst_119 [1] : vector<16x32xf32> to vector<16xf32>
    %371 = vector.shape_cast %370 : vector<16xf32> to vector<16x1xf32>
    %cst_120 = arith.constant 3.200000e+01 : f32
    %372 = vector.broadcast %cst_120 : f32 to vector<16x1xf32>
    %373 = arith.divf %371, %372 : vector<16x1xf32>
    %374 = vector.broadcast %366 : vector<16x1xf32> to vector<16x32xf32>
    %375 = arith.subf %362, %374 : vector<16x32xf32>
    %cst_121 = arith.constant 9.99999997E-7 : f32
    %376 = vector.broadcast %cst_121 : f32 to vector<16x1xf32>
    %377 = arith.addf %373, %376 : vector<16x1xf32>
    %378 = math.rsqrt %377 : vector<16x1xf32>
    %379 = vector.broadcast %378 : vector<16x1xf32> to vector<16x32xf32>
    %380 = arith.mulf %375, %379 : vector<16x32xf32>
    %381 = vector.extract_strided_slice %380 {offsets = [0, 0], sizes = [8, 32], strides = [1, 1]} : vector<16x32xf32> to vector<8x32xf32>
    %382 = vector.extract_strided_slice %118 {offsets = [0, 0], sizes = [1, 32], strides = [1, 1]} : vector<2x32xf32> to vector<1x32xf32>
    %cst_122 = arith.constant 1.000000e+00 : f32
    %383 = vector.broadcast %cst_122 : f32 to vector<1x32xf32>
    %384 = arith.addf %383, %382 : vector<1x32xf32>
    %385 = vector.broadcast %384 : vector<1x32xf32> to vector<8x32xf32>
    %386 = arith.mulf %381, %385 : vector<8x32xf32>
    %387 = vector.extract_strided_slice %117 {offsets = [0, 0], sizes = [1, 32], strides = [1, 1]} : vector<2x32xf32> to vector<1x32xf32>
    %388 = vector.broadcast %387 : vector<1x32xf32> to vector<8x32xf32>
    %389 = arith.addf %386, %388 : vector<8x32xf32>
    %390 = vector.extract_strided_slice %380 {offsets = [8, 0], sizes = [8, 32], strides = [1, 1]} : vector<16x32xf32> to vector<8x32xf32>
    %391 = vector.extract_strided_slice %118 {offsets = [1, 0], sizes = [1, 32], strides = [1, 1]} : vector<2x32xf32> to vector<1x32xf32>
    %cst_123 = arith.constant 1.000000e+00 : f32
    %392 = vector.broadcast %cst_123 : f32 to vector<1x32xf32>
    %393 = arith.addf %392, %391 : vector<1x32xf32>
    %394 = vector.broadcast %393 : vector<1x32xf32> to vector<8x32xf32>
    %395 = arith.mulf %390, %394 : vector<8x32xf32>
    %396 = vector.extract_strided_slice %117 {offsets = [1, 0], sizes = [1, 32], strides = [1, 1]} : vector<2x32xf32> to vector<1x32xf32>
    %397 = vector.broadcast %396 : vector<1x32xf32> to vector<8x32xf32>
    %398 = arith.addf %395, %397 : vector<8x32xf32>
    %399 = tpu.concatenate %389, %398 in 0 : vector<8x32xf32>, vector<8x32xf32> -> vector<16x32xf32>
    %c0_124 = arith.constant 0 : index
    %c0_125 = arith.constant 0 : index
    %400 = vector.load %arg31[%c0_124, %c0_125] : memref<32x128xbf16, #tpu.memory_space<vmem>>, vector<32x128xbf16>
    %401 = arith.truncf %399 : vector<16x32xf32> to vector<16x32xbf16>
    %cst_126 = arith.constant dense<0.000000e+00> : vector<16x128xf32>
    %402 = tpu.matmul %401, %400, %cst_126 {dimension_numbers = #tpu.dot_dimension_numbers<[1], [0], [0], [1], [0, 0, 1, 1], [], []>} : vector<16x32xbf16>, vector<32x128xbf16>, vector<16x128xf32> -> vector<16x128xf32>
    %c0_127 = arith.constant 0 : index
    %c0_128 = arith.constant 0 : index
    %403 = vector.load %arg32[%c0_127, %c0_128] : memref<1x128xf32, #tpu.memory_space<vmem>>, vector<1x128xf32>
    %404 = vector.broadcast %403 : vector<1x128xf32> to vector<16x128xf32>
    %405 = arith.addf %402, %404 : vector<16x128xf32>
    %cst_129 = arith.constant 5.000000e-01 : f32
    %406 = vector.broadcast %cst_129 : f32 to vector<16x128xf32>
    %407 = arith.mulf %406, %405 : vector<16x128xf32>
    %cst_130 = arith.constant 4.471500e-02 : f32
    %408 = vector.broadcast %cst_130 : f32 to vector<16x128xf32>
    %409 = arith.mulf %408, %405 : vector<16x128xf32>
    %410 = arith.mulf %409, %405 : vector<16x128xf32>
    %411 = arith.mulf %410, %405 : vector<16x128xf32>
    %412 = arith.addf %405, %411 : vector<16x128xf32>
    %cst_131 = arith.constant 0.797884583 : f32
    %413 = vector.broadcast %cst_131 : f32 to vector<16x128xf32>
    %414 = arith.mulf %413, %412 : vector<16x128xf32>
    %415 = math.tanh %414 : vector<16x128xf32>
    %cst_132 = arith.constant 1.000000e+00 : f32
    %416 = vector.broadcast %cst_132 : f32 to vector<16x128xf32>
    %417 = arith.addf %416, %415 : vector<16x128xf32>
    %418 = arith.mulf %407, %417 : vector<16x128xf32>
    %c0_133 = arith.constant 0 : index
    %c0_134 = arith.constant 0 : index
    %419 = vector.load %arg33[%c0_133, %c0_134] : memref<128x32xbf16, #tpu.memory_space<vmem>>, vector<128x32xbf16>
    %420 = arith.truncf %418 : vector<16x128xf32> to vector<16x128xbf16>
    %cst_135 = arith.constant dense<0.000000e+00> : vector<16x32xf32>
    %421 = tpu.matmul %420, %419, %cst_135 {dimension_numbers = #tpu.dot_dimension_numbers<[1], [0], [0], [1], [0, 0, 1, 1], [], []>} : vector<16x128xbf16>, vector<128x32xbf16>, vector<16x32xf32> -> vector<16x32xf32>
    %c0_136 = arith.constant 0 : index
    %c0_137 = arith.constant 0 : index
    %422 = vector.load %arg34[%c0_136, %c0_137] : memref<1x32xf32, #tpu.memory_space<vmem>>, vector<1x32xf32>
    %423 = vector.broadcast %422 : vector<1x32xf32> to vector<16x32xf32>
    %424 = arith.addf %421, %423 : vector<16x32xf32>
    %425 = vector.extract_strided_slice %424 {offsets = [0, 0], sizes = [8, 32], strides = [1, 1]} : vector<16x32xf32> to vector<8x32xf32>
    %426 = vector.extract_strided_slice %119 {offsets = [0, 0], sizes = [1, 32], strides = [1, 1]} : vector<2x32xf32> to vector<1x32xf32>
    %427 = vector.broadcast %426 : vector<1x32xf32> to vector<8x32xf32>
    %428 = arith.mulf %425, %427 : vector<8x32xf32>
    %429 = vector.extract_strided_slice %424 {offsets = [8, 0], sizes = [8, 32], strides = [1, 1]} : vector<16x32xf32> to vector<8x32xf32>
    %430 = vector.extract_strided_slice %119 {offsets = [1, 0], sizes = [1, 32], strides = [1, 1]} : vector<2x32xf32> to vector<1x32xf32>
    %431 = vector.broadcast %430 : vector<1x32xf32> to vector<8x32xf32>
    %432 = arith.mulf %429, %431 : vector<8x32xf32>
    %433 = tpu.concatenate %428, %432 in 0 : vector<8x32xf32>, vector<8x32xf32> -> vector<16x32xf32>
    %434 = arith.addf %362, %433 : vector<16x32xf32>
    %435 = vector.extract_strided_slice %70 {offsets = [0, 384], sizes = [2, 32], strides = [1, 1]} : vector<2x704xf32> to vector<2x32xf32>
    %436 = vector.extract_strided_slice %70 {offsets = [0, 416], sizes = [2, 32], strides = [1, 1]} : vector<2x704xf32> to vector<2x32xf32>
    %437 = vector.extract_strided_slice %70 {offsets = [0, 448], sizes = [2, 32], strides = [1, 1]} : vector<2x704xf32> to vector<2x32xf32>
    %438 = vector.extract_strided_slice %70 {offsets = [0, 480], sizes = [2, 32], strides = [1, 1]} : vector<2x704xf32> to vector<2x32xf32>
    %439 = vector.extract_strided_slice %70 {offsets = [0, 512], sizes = [2, 32], strides = [1, 1]} : vector<2x704xf32> to vector<2x32xf32>
    %440 = vector.extract_strided_slice %70 {offsets = [0, 544], sizes = [2, 32], strides = [1, 1]} : vector<2x704xf32> to vector<2x32xf32>
    %cst_138 = arith.constant dense<0.000000e+00> : vector<128xf32>
    %441 = vector.multi_reduction <add>, %345, %cst_138 [1] : vector<128x32xf32> to vector<128xf32>
    %442 = vector.shape_cast %441 : vector<128xf32> to vector<128x1xf32>
    %cst_139 = arith.constant 3.200000e+01 : f32
    %443 = vector.broadcast %cst_139 : f32 to vector<128x1xf32>
    %444 = arith.divf %442, %443 : vector<128x1xf32>
    %445 = vector.broadcast %444 : vector<128x1xf32> to vector<128x32xf32>
    %446 = arith.subf %345, %445 : vector<128x32xf32>
    %447 = arith.mulf %446, %446 : vector<128x32xf32>
    %cst_140 = arith.constant dense<0.000000e+00> : vector<128xf32>
    %448 = vector.multi_reduction <add>, %447, %cst_140 [1] : vector<128x32xf32> to vector<128xf32>
    %449 = vector.shape_cast %448 : vector<128xf32> to vector<128x1xf32>
    %cst_141 = arith.constant 3.200000e+01 : f32
    %450 = vector.broadcast %cst_141 : f32 to vector<128x1xf32>
    %451 = arith.divf %449, %450 : vector<128x1xf32>
    %452 = vector.broadcast %444 : vector<128x1xf32> to vector<128x32xf32>
    %453 = arith.subf %345, %452 : vector<128x32xf32>
    %cst_142 = arith.constant 9.99999997E-7 : f32
    %454 = vector.broadcast %cst_142 : f32 to vector<128x1xf32>
    %455 = arith.addf %451, %454 : vector<128x1xf32>
    %456 = math.rsqrt %455 : vector<128x1xf32>
    %457 = vector.broadcast %456 : vector<128x1xf32> to vector<128x32xf32>
    %458 = arith.mulf %453, %457 : vector<128x32xf32>
    %459 = vector.extract_strided_slice %458 {offsets = [0, 0], sizes = [64, 32], strides = [1, 1]} : vector<128x32xf32> to vector<64x32xf32>
    %460 = vector.extract_strided_slice %436 {offsets = [0, 0], sizes = [1, 32], strides = [1, 1]} : vector<2x32xf32> to vector<1x32xf32>
    %cst_143 = arith.constant 1.000000e+00 : f32
    %461 = vector.broadcast %cst_143 : f32 to vector<1x32xf32>
    %462 = arith.addf %461, %460 : vector<1x32xf32>
    %463 = vector.broadcast %462 : vector<1x32xf32> to vector<64x32xf32>
    %464 = arith.mulf %459, %463 : vector<64x32xf32>
    %465 = vector.extract_strided_slice %435 {offsets = [0, 0], sizes = [1, 32], strides = [1, 1]} : vector<2x32xf32> to vector<1x32xf32>
    %466 = vector.broadcast %465 : vector<1x32xf32> to vector<64x32xf32>
    %467 = arith.addf %464, %466 : vector<64x32xf32>
    %468 = vector.extract_strided_slice %458 {offsets = [64, 0], sizes = [64, 32], strides = [1, 1]} : vector<128x32xf32> to vector<64x32xf32>
    %469 = vector.extract_strided_slice %436 {offsets = [1, 0], sizes = [1, 32], strides = [1, 1]} : vector<2x32xf32> to vector<1x32xf32>
    %cst_144 = arith.constant 1.000000e+00 : f32
    %470 = vector.broadcast %cst_144 : f32 to vector<1x32xf32>
    %471 = arith.addf %470, %469 : vector<1x32xf32>
    %472 = vector.broadcast %471 : vector<1x32xf32> to vector<64x32xf32>
    %473 = arith.mulf %468, %472 : vector<64x32xf32>
    %474 = vector.extract_strided_slice %435 {offsets = [1, 0], sizes = [1, 32], strides = [1, 1]} : vector<2x32xf32> to vector<1x32xf32>
    %475 = vector.broadcast %474 : vector<1x32xf32> to vector<64x32xf32>
    %476 = arith.addf %473, %475 : vector<64x32xf32>
    %477 = tpu.concatenate %467, %476 in 0 : vector<64x32xf32>, vector<64x32xf32> -> vector<128x32xf32>
    %478 = vector.extract_strided_slice %70 {offsets = [0, 576], sizes = [2, 32], strides = [1, 1]} : vector<2x704xf32> to vector<2x32xf32>
    %479 = vector.extract_strided_slice %70 {offsets = [0, 608], sizes = [2, 32], strides = [1, 1]} : vector<2x704xf32> to vector<2x32xf32>
    %cst_145 = arith.constant dense<0.000000e+00> : vector<16xf32>
    %480 = vector.multi_reduction <add>, %434, %cst_145 [1] : vector<16x32xf32> to vector<16xf32>
    %481 = vector.shape_cast %480 : vector<16xf32> to vector<16x1xf32>
    %cst_146 = arith.constant 3.200000e+01 : f32
    %482 = vector.broadcast %cst_146 : f32 to vector<16x1xf32>
    %483 = arith.divf %481, %482 : vector<16x1xf32>
    %484 = vector.broadcast %483 : vector<16x1xf32> to vector<16x32xf32>
    %485 = arith.subf %434, %484 : vector<16x32xf32>
    %486 = arith.mulf %485, %485 : vector<16x32xf32>
    %cst_147 = arith.constant dense<0.000000e+00> : vector<16xf32>
    %487 = vector.multi_reduction <add>, %486, %cst_147 [1] : vector<16x32xf32> to vector<16xf32>
    %488 = vector.shape_cast %487 : vector<16xf32> to vector<16x1xf32>
    %cst_148 = arith.constant 3.200000e+01 : f32
    %489 = vector.broadcast %cst_148 : f32 to vector<16x1xf32>
    %490 = arith.divf %488, %489 : vector<16x1xf32>
    %491 = vector.broadcast %483 : vector<16x1xf32> to vector<16x32xf32>
    %492 = arith.subf %434, %491 : vector<16x32xf32>
    %cst_149 = arith.constant 9.99999997E-7 : f32
    %493 = vector.broadcast %cst_149 : f32 to vector<16x1xf32>
    %494 = arith.addf %490, %493 : vector<16x1xf32>
    %495 = math.rsqrt %494 : vector<16x1xf32>
    %496 = vector.broadcast %495 : vector<16x1xf32> to vector<16x32xf32>
    %497 = arith.mulf %492, %496 : vector<16x32xf32>
    %498 = vector.extract_strided_slice %497 {offsets = [0, 0], sizes = [8, 32], strides = [1, 1]} : vector<16x32xf32> to vector<8x32xf32>
    %499 = vector.extract_strided_slice %478 {offsets = [0, 0], sizes = [1, 32], strides = [1, 1]} : vector<2x32xf32> to vector<1x32xf32>
    %cst_150 = arith.constant 1.000000e+00 : f32
    %500 = vector.broadcast %cst_150 : f32 to vector<1x32xf32>
    %501 = arith.addf %500, %499 : vector<1x32xf32>
    %502 = vector.broadcast %501 : vector<1x32xf32> to vector<8x32xf32>
    %503 = arith.mulf %498, %502 : vector<8x32xf32>
    %504 = vector.extract_strided_slice %479 {offsets = [0, 0], sizes = [1, 32], strides = [1, 1]} : vector<2x32xf32> to vector<1x32xf32>
    %505 = vector.broadcast %504 : vector<1x32xf32> to vector<8x32xf32>
    %506 = arith.addf %503, %505 : vector<8x32xf32>
    %507 = vector.extract_strided_slice %497 {offsets = [8, 0], sizes = [8, 32], strides = [1, 1]} : vector<16x32xf32> to vector<8x32xf32>
    %508 = vector.extract_strided_slice %478 {offsets = [1, 0], sizes = [1, 32], strides = [1, 1]} : vector<2x32xf32> to vector<1x32xf32>
    %cst_151 = arith.constant 1.000000e+00 : f32
    %509 = vector.broadcast %cst_151 : f32 to vector<1x32xf32>
    %510 = arith.addf %509, %508 : vector<1x32xf32>
    %511 = vector.broadcast %510 : vector<1x32xf32> to vector<8x32xf32>
    %512 = arith.mulf %507, %511 : vector<8x32xf32>
    %513 = vector.extract_strided_slice %479 {offsets = [1, 0], sizes = [1, 32], strides = [1, 1]} : vector<2x32xf32> to vector<1x32xf32>
    %514 = vector.broadcast %513 : vector<1x32xf32> to vector<8x32xf32>
    %515 = arith.addf %512, %514 : vector<8x32xf32>
    %516 = tpu.concatenate %506, %515 in 0 : vector<8x32xf32>, vector<8x32xf32> -> vector<16x32xf32>
    %c0_152 = arith.constant 0 : index
    %c0_153 = arith.constant 0 : index
    %517 = vector.load %arg35[%c0_152, %c0_153] : memref<32x96xbf16, #tpu.memory_space<vmem>>, vector<32x96xbf16>
    %518 = arith.truncf %477 : vector<128x32xf32> to vector<128x32xbf16>
    %cst_154 = arith.constant dense<0.000000e+00> : vector<128x96xf32>
    %519 = tpu.matmul %518, %517, %cst_154 {dimension_numbers = #tpu.dot_dimension_numbers<[1], [0], [0], [1], [0, 0, 1, 1], [], []>} : vector<128x32xbf16>, vector<32x96xbf16>, vector<128x96xf32> -> vector<128x96xf32>
    %c0_155 = arith.constant 0 : index
    %c0_156 = arith.constant 0 : index
    %520 = vector.load %arg36[%c0_155, %c0_156] : memref<1x96xf32, #tpu.memory_space<vmem>>, vector<1x96xf32>
    %521 = vector.broadcast %520 : vector<1x96xf32> to vector<128x96xf32>
    %522 = arith.addf %519, %521 : vector<128x96xf32>
    %c0_157 = arith.constant 0 : index
    %c0_158 = arith.constant 0 : index
    %523 = vector.load %arg37[%c0_157, %c0_158] : memref<32x96xbf16, #tpu.memory_space<vmem>>, vector<32x96xbf16>
    %524 = arith.truncf %516 : vector<16x32xf32> to vector<16x32xbf16>
    %cst_159 = arith.constant dense<0.000000e+00> : vector<16x96xf32>
    %525 = tpu.matmul %524, %523, %cst_159 {dimension_numbers = #tpu.dot_dimension_numbers<[1], [0], [0], [1], [0, 0, 1, 1], [], []>} : vector<16x32xbf16>, vector<32x96xbf16>, vector<16x96xf32> -> vector<16x96xf32>
    %c0_160 = arith.constant 0 : index
    %c0_161 = arith.constant 0 : index
    %526 = vector.load %arg38[%c0_160, %c0_161] : memref<1x96xf32, #tpu.memory_space<vmem>>, vector<1x96xf32>
    %527 = vector.broadcast %526 : vector<1x96xf32> to vector<16x96xf32>
    %528 = arith.addf %525, %527 : vector<16x96xf32>
    %529 = vector.extract_strided_slice %522 {offsets = [0, 0], sizes = [64, 96], strides = [1, 1]} : vector<128x96xf32> to vector<64x96xf32>
    %530 = vector.extract_strided_slice %528 {offsets = [0, 0], sizes = [8, 96], strides = [1, 1]} : vector<16x96xf32> to vector<8x96xf32>
    %531 = tpu.concatenate %529, %530 in 0 : vector<64x96xf32>, vector<8x96xf32> -> vector<72x96xf32>
    %532 = vector.extract_strided_slice %531 {offsets = [0, 0], sizes = [72, 16], strides = [1, 1]} : vector<72x96xf32> to vector<72x16xf32>
    %533 = vector.extract_strided_slice %531 {offsets = [0, 32], sizes = [72, 16], strides = [1, 1]} : vector<72x96xf32> to vector<72x16xf32>
    %534 = vector.extract_strided_slice %531 {offsets = [0, 64], sizes = [72, 16], strides = [1, 1]} : vector<72x96xf32> to vector<72x16xf32>
    %535 = arith.truncf %532 : vector<72x16xf32> to vector<72x16xbf16>
    %536 = arith.truncf %533 : vector<72x16xf32> to vector<72x16xbf16>
    %cst_162 = arith.constant dense<0.000000e+00> : vector<72x72xf32>
    %537 = tpu.matmul %535, %536, %cst_162 {dimension_numbers = #tpu.dot_dimension_numbers<[1], [1], [0], [0], [0, 0, 1, 0], [], []>} : vector<72x16xbf16>, vector<72x16xbf16>, vector<72x72xf32> -> vector<72x72xf32>
    %cst_163 = arith.constant dense<0xFF800000> : vector<72xf32>
    %538 = vector.multi_reduction <maximumf>, %537, %cst_163 [1] : vector<72x72xf32> to vector<72xf32>
    %539 = vector.shape_cast %538 : vector<72xf32> to vector<72x1xf32>
    %540 = vector.broadcast %539 : vector<72x1xf32> to vector<72x72xf32>
    %541 = arith.subf %537, %540 : vector<72x72xf32>
    %542 = math.exp %541 : vector<72x72xf32>
    %cst_164 = arith.constant dense<0.000000e+00> : vector<72xf32>
    %543 = vector.multi_reduction <add>, %542, %cst_164 [1] : vector<72x72xf32> to vector<72xf32>
    %544 = vector.shape_cast %543 : vector<72xf32> to vector<72x1xf32>
    %545 = tpu.reciprocal %544 {approx = true} : vector<72x1xf32> -> vector<72x1xf32>
    %546 = arith.truncf %542 : vector<72x72xf32> to vector<72x72xbf16>
    %547 = arith.truncf %534 : vector<72x16xf32> to vector<72x16xbf16>
    %cst_165 = arith.constant dense<0.000000e+00> : vector<72x16xf32>
    %548 = tpu.matmul %546, %547, %cst_165 {dimension_numbers = #tpu.dot_dimension_numbers<[1], [0], [0], [1], [0, 0, 1, 1], [], []>} : vector<72x72xbf16>, vector<72x16xbf16>, vector<72x16xf32> -> vector<72x16xf32>
    %549 = vector.broadcast %545 : vector<72x1xf32> to vector<72x16xf32>
    %550 = arith.mulf %548, %549 : vector<72x16xf32>
    %551 = vector.extract_strided_slice %531 {offsets = [0, 16], sizes = [72, 16], strides = [1, 1]} : vector<72x96xf32> to vector<72x16xf32>
    %552 = vector.extract_strided_slice %531 {offsets = [0, 48], sizes = [72, 16], strides = [1, 1]} : vector<72x96xf32> to vector<72x16xf32>
    %553 = vector.extract_strided_slice %531 {offsets = [0, 80], sizes = [72, 16], strides = [1, 1]} : vector<72x96xf32> to vector<72x16xf32>
    %554 = arith.truncf %551 : vector<72x16xf32> to vector<72x16xbf16>
    %555 = arith.truncf %552 : vector<72x16xf32> to vector<72x16xbf16>
    %cst_166 = arith.constant dense<0.000000e+00> : vector<72x72xf32>
    %556 = tpu.matmul %554, %555, %cst_166 {dimension_numbers = #tpu.dot_dimension_numbers<[1], [1], [0], [0], [0, 0, 1, 0], [], []>} : vector<72x16xbf16>, vector<72x16xbf16>, vector<72x72xf32> -> vector<72x72xf32>
    %cst_167 = arith.constant dense<0xFF800000> : vector<72xf32>
    %557 = vector.multi_reduction <maximumf>, %556, %cst_167 [1] : vector<72x72xf32> to vector<72xf32>
    %558 = vector.shape_cast %557 : vector<72xf32> to vector<72x1xf32>
    %559 = vector.broadcast %558 : vector<72x1xf32> to vector<72x72xf32>
    %560 = arith.subf %556, %559 : vector<72x72xf32>
    %561 = math.exp %560 : vector<72x72xf32>
    %cst_168 = arith.constant dense<0.000000e+00> : vector<72xf32>
    %562 = vector.multi_reduction <add>, %561, %cst_168 [1] : vector<72x72xf32> to vector<72xf32>
    %563 = vector.shape_cast %562 : vector<72xf32> to vector<72x1xf32>
    %564 = tpu.reciprocal %563 {approx = true} : vector<72x1xf32> -> vector<72x1xf32>
    %565 = arith.truncf %561 : vector<72x72xf32> to vector<72x72xbf16>
    %566 = arith.truncf %553 : vector<72x16xf32> to vector<72x16xbf16>
    %cst_169 = arith.constant dense<0.000000e+00> : vector<72x16xf32>
    %567 = tpu.matmul %565, %566, %cst_169 {dimension_numbers = #tpu.dot_dimension_numbers<[1], [0], [0], [1], [0, 0, 1, 1], [], []>} : vector<72x72xbf16>, vector<72x16xbf16>, vector<72x16xf32> -> vector<72x16xf32>
    %568 = vector.broadcast %564 : vector<72x1xf32> to vector<72x16xf32>
    %569 = arith.mulf %567, %568 : vector<72x16xf32>
    %570 = tpu.concatenate %550, %569 in 1 : vector<72x16xf32>, vector<72x16xf32> -> vector<72x32xf32>
    %571 = vector.extract_strided_slice %570 {offsets = [0, 0], sizes = [64, 32], strides = [1, 1]} : vector<72x32xf32> to vector<64x32xf32>
    %572 = vector.extract_strided_slice %522 {offsets = [64, 0], sizes = [64, 96], strides = [1, 1]} : vector<128x96xf32> to vector<64x96xf32>
    %573 = vector.extract_strided_slice %528 {offsets = [8, 0], sizes = [8, 96], strides = [1, 1]} : vector<16x96xf32> to vector<8x96xf32>
    %574 = tpu.concatenate %572, %573 in 0 : vector<64x96xf32>, vector<8x96xf32> -> vector<72x96xf32>
    %575 = vector.extract_strided_slice %574 {offsets = [0, 0], sizes = [72, 16], strides = [1, 1]} : vector<72x96xf32> to vector<72x16xf32>
    %576 = vector.extract_strided_slice %574 {offsets = [0, 32], sizes = [72, 16], strides = [1, 1]} : vector<72x96xf32> to vector<72x16xf32>
    %577 = vector.extract_strided_slice %574 {offsets = [0, 64], sizes = [72, 16], strides = [1, 1]} : vector<72x96xf32> to vector<72x16xf32>
    %578 = arith.truncf %575 : vector<72x16xf32> to vector<72x16xbf16>
    %579 = arith.truncf %576 : vector<72x16xf32> to vector<72x16xbf16>
    %cst_170 = arith.constant dense<0.000000e+00> : vector<72x72xf32>
    %580 = tpu.matmul %578, %579, %cst_170 {dimension_numbers = #tpu.dot_dimension_numbers<[1], [1], [0], [0], [0, 0, 1, 0], [], []>} : vector<72x16xbf16>, vector<72x16xbf16>, vector<72x72xf32> -> vector<72x72xf32>
    %cst_171 = arith.constant dense<0xFF800000> : vector<72xf32>
    %581 = vector.multi_reduction <maximumf>, %580, %cst_171 [1] : vector<72x72xf32> to vector<72xf32>
    %582 = vector.shape_cast %581 : vector<72xf32> to vector<72x1xf32>
    %583 = vector.broadcast %582 : vector<72x1xf32> to vector<72x72xf32>
    %584 = arith.subf %580, %583 : vector<72x72xf32>
    %585 = math.exp %584 : vector<72x72xf32>
    %cst_172 = arith.constant dense<0.000000e+00> : vector<72xf32>
    %586 = vector.multi_reduction <add>, %585, %cst_172 [1] : vector<72x72xf32> to vector<72xf32>
    %587 = vector.shape_cast %586 : vector<72xf32> to vector<72x1xf32>
    %588 = tpu.reciprocal %587 {approx = true} : vector<72x1xf32> -> vector<72x1xf32>
    %589 = arith.truncf %585 : vector<72x72xf32> to vector<72x72xbf16>
    %590 = arith.truncf %577 : vector<72x16xf32> to vector<72x16xbf16>
    %cst_173 = arith.constant dense<0.000000e+00> : vector<72x16xf32>
    %591 = tpu.matmul %589, %590, %cst_173 {dimension_numbers = #tpu.dot_dimension_numbers<[1], [0], [0], [1], [0, 0, 1, 1], [], []>} : vector<72x72xbf16>, vector<72x16xbf16>, vector<72x16xf32> -> vector<72x16xf32>
    %592 = vector.broadcast %588 : vector<72x1xf32> to vector<72x16xf32>
    %593 = arith.mulf %591, %592 : vector<72x16xf32>
    %594 = vector.extract_strided_slice %574 {offsets = [0, 16], sizes = [72, 16], strides = [1, 1]} : vector<72x96xf32> to vector<72x16xf32>
    %595 = vector.extract_strided_slice %574 {offsets = [0, 48], sizes = [72, 16], strides = [1, 1]} : vector<72x96xf32> to vector<72x16xf32>
    %596 = vector.extract_strided_slice %574 {offsets = [0, 80], sizes = [72, 16], strides = [1, 1]} : vector<72x96xf32> to vector<72x16xf32>
    %597 = arith.truncf %594 : vector<72x16xf32> to vector<72x16xbf16>
    %598 = arith.truncf %595 : vector<72x16xf32> to vector<72x16xbf16>
    %cst_174 = arith.constant dense<0.000000e+00> : vector<72x72xf32>
    %599 = tpu.matmul %597, %598, %cst_174 {dimension_numbers = #tpu.dot_dimension_numbers<[1], [1], [0], [0], [0, 0, 1, 0], [], []>} : vector<72x16xbf16>, vector<72x16xbf16>, vector<72x72xf32> -> vector<72x72xf32>
    %cst_175 = arith.constant dense<0xFF800000> : vector<72xf32>
    %600 = vector.multi_reduction <maximumf>, %599, %cst_175 [1] : vector<72x72xf32> to vector<72xf32>
    %601 = vector.shape_cast %600 : vector<72xf32> to vector<72x1xf32>
    %602 = vector.broadcast %601 : vector<72x1xf32> to vector<72x72xf32>
    %603 = arith.subf %599, %602 : vector<72x72xf32>
    %604 = math.exp %603 : vector<72x72xf32>
    %cst_176 = arith.constant dense<0.000000e+00> : vector<72xf32>
    %605 = vector.multi_reduction <add>, %604, %cst_176 [1] : vector<72x72xf32> to vector<72xf32>
    %606 = vector.shape_cast %605 : vector<72xf32> to vector<72x1xf32>
    %607 = tpu.reciprocal %606 {approx = true} : vector<72x1xf32> -> vector<72x1xf32>
    %608 = arith.truncf %604 : vector<72x72xf32> to vector<72x72xbf16>
    %609 = arith.truncf %596 : vector<72x16xf32> to vector<72x16xbf16>
    %cst_177 = arith.constant dense<0.000000e+00> : vector<72x16xf32>
    %610 = tpu.matmul %608, %609, %cst_177 {dimension_numbers = #tpu.dot_dimension_numbers<[1], [0], [0], [1], [0, 0, 1, 1], [], []>} : vector<72x72xbf16>, vector<72x16xbf16>, vector<72x16xf32> -> vector<72x16xf32>
    %611 = vector.broadcast %607 : vector<72x1xf32> to vector<72x16xf32>
    %612 = arith.mulf %610, %611 : vector<72x16xf32>
    %613 = tpu.concatenate %593, %612 in 1 : vector<72x16xf32>, vector<72x16xf32> -> vector<72x32xf32>
    %614 = vector.extract_strided_slice %613 {offsets = [0, 0], sizes = [64, 32], strides = [1, 1]} : vector<72x32xf32> to vector<64x32xf32>
    %615 = tpu.concatenate %571, %614 in 0 : vector<64x32xf32>, vector<64x32xf32> -> vector<128x32xf32>
    %c0_178 = arith.constant 0 : index
    %c0_179 = arith.constant 0 : index
    %616 = vector.load %arg39[%c0_178, %c0_179] : memref<32x32xbf16, #tpu.memory_space<vmem>>, vector<32x32xbf16>
    %617 = arith.truncf %615 : vector<128x32xf32> to vector<128x32xbf16>
    %cst_180 = arith.constant dense<0.000000e+00> : vector<128x32xf32>
    %618 = tpu.matmul %617, %616, %cst_180 {dimension_numbers = #tpu.dot_dimension_numbers<[1], [0], [0], [1], [0, 0, 1, 1], [], []>} : vector<128x32xbf16>, vector<32x32xbf16>, vector<128x32xf32> -> vector<128x32xf32>
    %c0_181 = arith.constant 0 : index
    %c0_182 = arith.constant 0 : index
    %619 = vector.load %arg40[%c0_181, %c0_182] : memref<1x32xf32, #tpu.memory_space<vmem>>, vector<1x32xf32>
    %620 = vector.broadcast %619 : vector<1x32xf32> to vector<128x32xf32>
    %621 = arith.addf %618, %620 : vector<128x32xf32>
    %622 = vector.extract_strided_slice %621 {offsets = [0, 0], sizes = [64, 32], strides = [1, 1]} : vector<128x32xf32> to vector<64x32xf32>
    %623 = vector.extract_strided_slice %437 {offsets = [0, 0], sizes = [1, 32], strides = [1, 1]} : vector<2x32xf32> to vector<1x32xf32>
    %624 = vector.broadcast %623 : vector<1x32xf32> to vector<64x32xf32>
    %625 = arith.mulf %622, %624 : vector<64x32xf32>
    %626 = vector.extract_strided_slice %621 {offsets = [64, 0], sizes = [64, 32], strides = [1, 1]} : vector<128x32xf32> to vector<64x32xf32>
    %627 = vector.extract_strided_slice %437 {offsets = [1, 0], sizes = [1, 32], strides = [1, 1]} : vector<2x32xf32> to vector<1x32xf32>
    %628 = vector.broadcast %627 : vector<1x32xf32> to vector<64x32xf32>
    %629 = arith.mulf %626, %628 : vector<64x32xf32>
    %630 = tpu.concatenate %625, %629 in 0 : vector<64x32xf32>, vector<64x32xf32> -> vector<128x32xf32>
    %631 = arith.addf %345, %630 : vector<128x32xf32>
    %cst_183 = arith.constant dense<0.000000e+00> : vector<128xf32>
    %632 = vector.multi_reduction <add>, %631, %cst_183 [1] : vector<128x32xf32> to vector<128xf32>
    %633 = vector.shape_cast %632 : vector<128xf32> to vector<128x1xf32>
    %cst_184 = arith.constant 3.200000e+01 : f32
    %634 = vector.broadcast %cst_184 : f32 to vector<128x1xf32>
    %635 = arith.divf %633, %634 : vector<128x1xf32>
    %636 = vector.broadcast %635 : vector<128x1xf32> to vector<128x32xf32>
    %637 = arith.subf %631, %636 : vector<128x32xf32>
    %638 = arith.mulf %637, %637 : vector<128x32xf32>
    %cst_185 = arith.constant dense<0.000000e+00> : vector<128xf32>
    %639 = vector.multi_reduction <add>, %638, %cst_185 [1] : vector<128x32xf32> to vector<128xf32>
    %640 = vector.shape_cast %639 : vector<128xf32> to vector<128x1xf32>
    %cst_186 = arith.constant 3.200000e+01 : f32
    %641 = vector.broadcast %cst_186 : f32 to vector<128x1xf32>
    %642 = arith.divf %640, %641 : vector<128x1xf32>
    %643 = vector.broadcast %635 : vector<128x1xf32> to vector<128x32xf32>
    %644 = arith.subf %631, %643 : vector<128x32xf32>
    %cst_187 = arith.constant 9.99999997E-7 : f32
    %645 = vector.broadcast %cst_187 : f32 to vector<128x1xf32>
    %646 = arith.addf %642, %645 : vector<128x1xf32>
    %647 = math.rsqrt %646 : vector<128x1xf32>
    %648 = vector.broadcast %647 : vector<128x1xf32> to vector<128x32xf32>
    %649 = arith.mulf %644, %648 : vector<128x32xf32>
    %650 = vector.extract_strided_slice %649 {offsets = [0, 0], sizes = [64, 32], strides = [1, 1]} : vector<128x32xf32> to vector<64x32xf32>
    %651 = vector.extract_strided_slice %439 {offsets = [0, 0], sizes = [1, 32], strides = [1, 1]} : vector<2x32xf32> to vector<1x32xf32>
    %cst_188 = arith.constant 1.000000e+00 : f32
    %652 = vector.broadcast %cst_188 : f32 to vector<1x32xf32>
    %653 = arith.addf %652, %651 : vector<1x32xf32>
    %654 = vector.broadcast %653 : vector<1x32xf32> to vector<64x32xf32>
    %655 = arith.mulf %650, %654 : vector<64x32xf32>
    %656 = vector.extract_strided_slice %438 {offsets = [0, 0], sizes = [1, 32], strides = [1, 1]} : vector<2x32xf32> to vector<1x32xf32>
    %657 = vector.broadcast %656 : vector<1x32xf32> to vector<64x32xf32>
    %658 = arith.addf %655, %657 : vector<64x32xf32>
    %659 = vector.extract_strided_slice %649 {offsets = [64, 0], sizes = [64, 32], strides = [1, 1]} : vector<128x32xf32> to vector<64x32xf32>
    %660 = vector.extract_strided_slice %439 {offsets = [1, 0], sizes = [1, 32], strides = [1, 1]} : vector<2x32xf32> to vector<1x32xf32>
    %cst_189 = arith.constant 1.000000e+00 : f32
    %661 = vector.broadcast %cst_189 : f32 to vector<1x32xf32>
    %662 = arith.addf %661, %660 : vector<1x32xf32>
    %663 = vector.broadcast %662 : vector<1x32xf32> to vector<64x32xf32>
    %664 = arith.mulf %659, %663 : vector<64x32xf32>
    %665 = vector.extract_strided_slice %438 {offsets = [1, 0], sizes = [1, 32], strides = [1, 1]} : vector<2x32xf32> to vector<1x32xf32>
    %666 = vector.broadcast %665 : vector<1x32xf32> to vector<64x32xf32>
    %667 = arith.addf %664, %666 : vector<64x32xf32>
    %668 = tpu.concatenate %658, %667 in 0 : vector<64x32xf32>, vector<64x32xf32> -> vector<128x32xf32>
    %c0_190 = arith.constant 0 : index
    %c0_191 = arith.constant 0 : index
    %669 = vector.load %arg41[%c0_190, %c0_191] : memref<32x128xbf16, #tpu.memory_space<vmem>>, vector<32x128xbf16>
    %670 = arith.truncf %668 : vector<128x32xf32> to vector<128x32xbf16>
    %cst_192 = arith.constant dense<0.000000e+00> : vector<128x128xf32>
    %671 = tpu.matmul %670, %669, %cst_192 {dimension_numbers = #tpu.dot_dimension_numbers<[1], [0], [0], [1], [0, 0, 1, 1], [], []>} : vector<128x32xbf16>, vector<32x128xbf16>, vector<128x128xf32> -> vector<128x128xf32>
    %c0_193 = arith.constant 0 : index
    %c0_194 = arith.constant 0 : index
    %672 = vector.load %arg42[%c0_193, %c0_194] : memref<1x128xf32, #tpu.memory_space<vmem>>, vector<1x128xf32>
    %673 = vector.broadcast %672 : vector<1x128xf32> to vector<128x128xf32>
    %674 = arith.addf %671, %673 : vector<128x128xf32>
    %cst_195 = arith.constant 5.000000e-01 : f32
    %675 = vector.broadcast %cst_195 : f32 to vector<128x128xf32>
    %676 = arith.mulf %675, %674 : vector<128x128xf32>
    %cst_196 = arith.constant 4.471500e-02 : f32
    %677 = vector.broadcast %cst_196 : f32 to vector<128x128xf32>
    %678 = arith.mulf %677, %674 : vector<128x128xf32>
    %679 = arith.mulf %678, %674 : vector<128x128xf32>
    %680 = arith.mulf %679, %674 : vector<128x128xf32>
    %681 = arith.addf %674, %680 : vector<128x128xf32>
    %cst_197 = arith.constant 0.797884583 : f32
    %682 = vector.broadcast %cst_197 : f32 to vector<128x128xf32>
    %683 = arith.mulf %682, %681 : vector<128x128xf32>
    %684 = math.tanh %683 : vector<128x128xf32>
    %cst_198 = arith.constant 1.000000e+00 : f32
    %685 = vector.broadcast %cst_198 : f32 to vector<128x128xf32>
    %686 = arith.addf %685, %684 : vector<128x128xf32>
    %687 = arith.mulf %676, %686 : vector<128x128xf32>
    %c0_199 = arith.constant 0 : index
    %c0_200 = arith.constant 0 : index
    %688 = vector.load %arg43[%c0_199, %c0_200] : memref<128x32xbf16, #tpu.memory_space<vmem>>, vector<128x32xbf16>
    %689 = arith.truncf %687 : vector<128x128xf32> to vector<128x128xbf16>
    %cst_201 = arith.constant dense<0.000000e+00> : vector<128x32xf32>
    %690 = tpu.matmul %689, %688, %cst_201 {dimension_numbers = #tpu.dot_dimension_numbers<[1], [0], [0], [1], [0, 0, 1, 1], [], []>} : vector<128x128xbf16>, vector<128x32xbf16>, vector<128x32xf32> -> vector<128x32xf32>
    %c0_202 = arith.constant 0 : index
    %c0_203 = arith.constant 0 : index
    %691 = vector.load %arg44[%c0_202, %c0_203] : memref<1x32xf32, #tpu.memory_space<vmem>>, vector<1x32xf32>
    %692 = vector.broadcast %691 : vector<1x32xf32> to vector<128x32xf32>
    %693 = arith.addf %690, %692 : vector<128x32xf32>
    %694 = vector.extract_strided_slice %693 {offsets = [0, 0], sizes = [64, 32], strides = [1, 1]} : vector<128x32xf32> to vector<64x32xf32>
    %695 = vector.extract_strided_slice %440 {offsets = [0, 0], sizes = [1, 32], strides = [1, 1]} : vector<2x32xf32> to vector<1x32xf32>
    %696 = vector.broadcast %695 : vector<1x32xf32> to vector<64x32xf32>
    %697 = arith.mulf %694, %696 : vector<64x32xf32>
    %698 = vector.extract_strided_slice %693 {offsets = [64, 0], sizes = [64, 32], strides = [1, 1]} : vector<128x32xf32> to vector<64x32xf32>
    %699 = vector.extract_strided_slice %440 {offsets = [1, 0], sizes = [1, 32], strides = [1, 1]} : vector<2x32xf32> to vector<1x32xf32>
    %700 = vector.broadcast %699 : vector<1x32xf32> to vector<64x32xf32>
    %701 = arith.mulf %698, %700 : vector<64x32xf32>
    %702 = tpu.concatenate %697, %701 in 0 : vector<64x32xf32>, vector<64x32xf32> -> vector<128x32xf32>
    %703 = arith.addf %631, %702 : vector<128x32xf32>
    %704 = vector.extract_strided_slice %70 {offsets = [0, 640], sizes = [2, 32], strides = [1, 1]} : vector<2x704xf32> to vector<2x32xf32>
    %705 = vector.extract_strided_slice %70 {offsets = [0, 672], sizes = [2, 32], strides = [1, 1]} : vector<2x704xf32> to vector<2x32xf32>
    %cst_204 = arith.constant dense<0.000000e+00> : vector<128xf32>
    %706 = vector.multi_reduction <add>, %703, %cst_204 [1] : vector<128x32xf32> to vector<128xf32>
    %707 = vector.shape_cast %706 : vector<128xf32> to vector<128x1xf32>
    %cst_205 = arith.constant 3.200000e+01 : f32
    %708 = vector.broadcast %cst_205 : f32 to vector<128x1xf32>
    %709 = arith.divf %707, %708 : vector<128x1xf32>
    %710 = vector.broadcast %709 : vector<128x1xf32> to vector<128x32xf32>
    %711 = arith.subf %703, %710 : vector<128x32xf32>
    %712 = arith.mulf %711, %711 : vector<128x32xf32>
    %cst_206 = arith.constant dense<0.000000e+00> : vector<128xf32>
    %713 = vector.multi_reduction <add>, %712, %cst_206 [1] : vector<128x32xf32> to vector<128xf32>
    %714 = vector.shape_cast %713 : vector<128xf32> to vector<128x1xf32>
    %cst_207 = arith.constant 3.200000e+01 : f32
    %715 = vector.broadcast %cst_207 : f32 to vector<128x1xf32>
    %716 = arith.divf %714, %715 : vector<128x1xf32>
    %717 = vector.broadcast %709 : vector<128x1xf32> to vector<128x32xf32>
    %718 = arith.subf %703, %717 : vector<128x32xf32>
    %cst_208 = arith.constant 9.99999997E-7 : f32
    %719 = vector.broadcast %cst_208 : f32 to vector<128x1xf32>
    %720 = arith.addf %716, %719 : vector<128x1xf32>
    %721 = math.rsqrt %720 : vector<128x1xf32>
    %722 = vector.broadcast %721 : vector<128x1xf32> to vector<128x32xf32>
    %723 = arith.mulf %718, %722 : vector<128x32xf32>
    %724 = vector.extract_strided_slice %723 {offsets = [0, 0], sizes = [64, 32], strides = [1, 1]} : vector<128x32xf32> to vector<64x32xf32>
    %725 = vector.extract_strided_slice %704 {offsets = [0, 0], sizes = [1, 32], strides = [1, 1]} : vector<2x32xf32> to vector<1x32xf32>
    %cst_209 = arith.constant 1.000000e+00 : f32
    %726 = vector.broadcast %cst_209 : f32 to vector<1x32xf32>
    %727 = arith.addf %726, %725 : vector<1x32xf32>
    %728 = vector.broadcast %727 : vector<1x32xf32> to vector<64x32xf32>
    %729 = arith.mulf %724, %728 : vector<64x32xf32>
    %730 = vector.extract_strided_slice %705 {offsets = [0, 0], sizes = [1, 32], strides = [1, 1]} : vector<2x32xf32> to vector<1x32xf32>
    %731 = vector.broadcast %730 : vector<1x32xf32> to vector<64x32xf32>
    %732 = arith.addf %729, %731 : vector<64x32xf32>
    %733 = vector.extract_strided_slice %723 {offsets = [64, 0], sizes = [64, 32], strides = [1, 1]} : vector<128x32xf32> to vector<64x32xf32>
    %734 = vector.extract_strided_slice %704 {offsets = [1, 0], sizes = [1, 32], strides = [1, 1]} : vector<2x32xf32> to vector<1x32xf32>
    %cst_210 = arith.constant 1.000000e+00 : f32
    %735 = vector.broadcast %cst_210 : f32 to vector<1x32xf32>
    %736 = arith.addf %735, %734 : vector<1x32xf32>
    %737 = vector.broadcast %736 : vector<1x32xf32> to vector<64x32xf32>
    %738 = arith.mulf %733, %737 : vector<64x32xf32>
    %739 = vector.extract_strided_slice %705 {offsets = [1, 0], sizes = [1, 32], strides = [1, 1]} : vector<2x32xf32> to vector<1x32xf32>
    %740 = vector.broadcast %739 : vector<1x32xf32> to vector<64x32xf32>
    %741 = arith.addf %738, %740 : vector<64x32xf32>
    %742 = tpu.concatenate %732, %741 in 0 : vector<64x32xf32>, vector<64x32xf32> -> vector<128x32xf32>
    %c0_211 = arith.constant 0 : index
    %c0_212 = arith.constant 0 : index
    %743 = vector.load %arg45[%c0_211, %c0_212] : memref<16x32xbf16, #tpu.memory_space<vmem>>, vector<16x32xbf16>
    %744 = arith.truncf %742 : vector<128x32xf32> to vector<128x32xbf16>
    %cst_213 = arith.constant dense<0.000000e+00> : vector<16x128xf32>
    %745 = tpu.matmul %743, %744, %cst_213 {dimension_numbers = #tpu.dot_dimension_numbers<[1], [1], [0], [0], [0, 0, 1, 0], [], []>} : vector<16x32xbf16>, vector<128x32xbf16>, vector<16x128xf32> -> vector<16x128xf32>
    %c0_214 = arith.constant 0 : index
    %c0_215 = arith.constant 0 : index
    %746 = vector.load %arg46[%c0_214, %c0_215] : memref<16x1xf32, #tpu.memory_space<vmem>>, vector<16x1xf32>
    %747 = vector.broadcast %746 : vector<16x1xf32> to vector<16x128xf32>
    %748 = arith.addf %745, %747 : vector<16x128xf32>
    %c0_216 = arith.constant 0 : index
    %c0_217 = arith.constant 0 : index
    %749 = vector.load %arg47[%c0_216, %c0_217] : memref<16x128xf32, #tpu.memory_space<vmem>>, vector<16x128xf32>
    tpu.vector_store %arg47[%c0_216, %c0_217], %748 {strides = array<i32>} : memref<16x128xf32, #tpu.memory_space<vmem>>, vector<16x128xf32>,
    return
  }
}

</mosaic_0001>

<llo_original>
// kernel: mmdit_forward.1
$region0: #{mmdit_forward.1}
  #allocation0 [shape = 'u32[]', space=smem, size = 0x4, offset = 0x4, fixed_abs, tag = 'smem constant byte address 0x4 - core index']
  #allocation1 [shape = 'u32[144,128]{1,0:T(1,128)}', space=vmem, size = 0x12000, scoped, tag = 'internal scratch']
  %s0 = inlined_call_operand.smem [shape: u32[48], index: -1, kind: input, shape index: {}]
  %s1 = sld [smem:[%s0]]
  %s2 = scalar_lea.smem %s0, 1
  %s3 = sld [smem:[%s2]]
  %s4 = scalar_lea.smem %s0, 2
  %s5 = sld [smem:[%s4]]
  %s6 = scalar_lea.smem %s0, 3
  %s7 = sld [smem:[%s6]]
  %s8 = scalar_lea.smem %s0, 4
  %s9 = sld [smem:[%s8]]
  %s10 = scalar_lea.smem %s0, 5
  %s11 = sld [smem:[%s10]]
  %s12 = scalar_lea.smem %s0, 6
  %s13 = sld [smem:[%s12]]
  %s14 = scalar_lea.smem %s0, 7
  %s15 = sld [smem:[%s14]]
  %s16 = scalar_lea.smem %s0, 8
  %s17 = sld [smem:[%s16]]
  %s18 = scalar_lea.smem %s0, 9
  %s19 = sld [smem:[%s18]]
  %s20 = scalar_lea.smem %s0, 10
  %s21 = sld [smem:[%s20]]
  %s22 = scalar_lea.smem %s0, 11
  %s23 = sld [smem:[%s22]]
  %s24 = scalar_lea.smem %s0, 12
  %s25 = sld [smem:[%s24]]
  %s26 = scalar_lea.smem %s0, 13
  %s27 = sld [smem:[%s26]]
  %s28 = scalar_lea.smem %s0, 14
  %s29 = sld [smem:[%s28]]
  %s30 = scalar_lea.smem %s0, 15
  %s31 = sld [smem:[%s30]]
  %s32 = scalar_lea.smem %s0, 16
  %s33 = sld [smem:[%s32]]
  %s34 = scalar_lea.smem %s0, 17
  %s35 = sld [smem:[%s34]]
  %s36 = scalar_lea.smem %s0, 18
  %s37 = sld [smem:[%s36]]
  %s38 = scalar_lea.smem %s0, 19
  %s39 = sld [smem:[%s38]]
  %s40 = scalar_lea.smem %s0, 20
  %s41 = sld [smem:[%s40]]
  %s42 = scalar_lea.smem %s0, 21
  %s43 = sld [smem:[%s42]]
  %s44 = scalar_lea.smem %s0, 22
  %s45 = sld [smem:[%s44]]
  %s46 = scalar_lea.smem %s0, 23
  %s47 = sld [smem:[%s46]]
  %s48 = scalar_lea.smem %s0, 24
  %s49 = sld [smem:[%s48]]
  %s50 = scalar_lea.smem %s0, 25
  %s51 = sld [smem:[%s50]]
  %s52 = scalar_lea.smem %s0, 26
  %s53 = sld [smem:[%s52]]
  %s54 = scalar_lea.smem %s0, 27
  %s55 = sld [smem:[%s54]]
  %s56 = scalar_lea.smem %s0, 28
  %s57 = sld [smem:[%s56]]
  %s58 = scalar_lea.smem %s0, 29
  %s59 = sld [smem:[%s58]]
  %s60 = scalar_lea.smem %s0, 30
  %s61 = sld [smem:[%s60]]
  %s62 = scalar_lea.smem %s0, 31
  %s63 = sld [smem:[%s62]]
  %s64 = scalar_lea.smem %s0, 32
  %s65 = sld [smem:[%s64]]
  %s66 = scalar_lea.smem %s0, 33
  %s67 = sld [smem:[%s66]]
  %s68 = scalar_lea.smem %s0, 34
  %s69 = sld [smem:[%s68]]
  %s70 = scalar_lea.smem %s0, 35
  %s71 = sld [smem:[%s70]]
  %s72 = scalar_lea.smem %s0, 36
  %s73 = sld [smem:[%s72]]
  %s74 = scalar_lea.smem %s0, 37
  %s75 = sld [smem:[%s74]]
  %s76 = scalar_lea.smem %s0, 38
  %s77 = sld [smem:[%s76]]
  %s78 = scalar_lea.smem %s0, 39
  %s79 = sld [smem:[%s78]]
  %s80 = scalar_lea.smem %s0, 40
  %s81 = sld [smem:[%s80]]
  %s82 = scalar_lea.smem %s0, 41
  %s83 = sld [smem:[%s82]]
  %s84 = scalar_lea.smem %s0, 42
  %s85 = sld [smem:[%s84]]
  %s86 = scalar_lea.smem %s0, 43
  %s87 = sld [smem:[%s86]]
  %s88 = scalar_lea.smem %s0, 44
  %s89 = sld [smem:[%s88]]
  %s90 = scalar_lea.smem %s0, 45
  %s91 = sld [smem:[%s90]]
  %s92 = scalar_lea.smem %s0, 46
  %s93 = sld [smem:[%s92]]
  %s94 = scalar_lea.smem %s0, 47
  %s95 = sld [smem:[%s94]]
  %s96 = sld [smem:[#allocation0]]
  $region210: #{mmdit_forward.1} parent=0
    _
  %s98 = ssub.s32 1, %s96
  %s99 = scalar_select 0, %s98, %s96
  $region1: #{mmdit_forward.1} parent=0
    #allocation2 [shape = 'u8[512]{0}', space=vmem, size = 0x400, scoped, tag = 'input window, operand 40, single buffered']
    #allocation3 [shape = 's32[1]{0}', space=sflag, size = 0x4, scoped, tag = 'scoped memory for mmdit_forward.1']
    #allocation4 [shape = 'u8[512]{0}', space=vmem, size = 0x400, scoped, tag = 'input window, operand 42, single buffered']
    #allocation5 [shape = 's32[1]{0}', space=sflag, size = 0x4, scoped, tag = 'scoped memory for mmdit_forward.1']
    #allocation6 [shape = 'u8[512]{0}', space=vmem, size = 0x400, scoped, tag = 'input window, operand 44, single buffered']
    %100 = vsyncpa [#allocation3], 0
    %101 = vsyncpa [#allocation5], 0
    // Predicated region
    $region2: #{mmdit_forward.1} parent=1 // pred_check
      _
    $region3: #{mmdit_forward.1} parent=1 // pred_check_branch
      %103 = sbr.rel (0) target = $region5
    $region4: #{mmdit_forward.1} parent=1 // pred_region
      _
    $region5: #{mmdit_forward.1} parent=1 // pred_fallthru
      _
    // Predicated region
    $region6: #{mmdit_forward.1} parent=1 // pred_check
      _
    $region7: #{mmdit_forward.1} parent=1 // pred_check_branch
      %105 = sbr.rel (0) target = $region9
    $region8: #{mmdit_forward.1} parent=1 // pred_region
      _
    $region9: #{mmdit_forward.1} parent=1 // pred_fallthru
      _
    // Predicated region
    $region10: #{mmdit_forward.1} parent=1 // pred_check
      _
    $region11: #{mmdit_forward.1} parent=1 // pred_check_branch
      %107 = sbr.rel (0) target = $region13
    $region12: #{mmdit_forward.1} parent=1 // pred_region
      _
    $region13: #{mmdit_forward.1} parent=1 // pred_fallthru
      _
    // Predicated region
    $region14: #{mmdit_forward.1} parent=1 // pred_check
      _
    $region15: #{mmdit_forward.1} parent=1 // pred_check_branch
      %109 = sbr.rel (0) target = $region17
    $region16: #{mmdit_forward.1} parent=1 // pred_region
      _
    $region17: #{mmdit_forward.1} parent=1 // pred_fallthru
      _
    // Predicated region
    $region18: #{mmdit_forward.1} parent=1 // pred_check
      _
    $region19: #{mmdit_forward.1} parent=1 // pred_check_branch
      %111 = sbr.rel (0) target = $region21
    $region20: #{mmdit_forward.1} parent=1 // pred_region
      _
    $region21: #{mmdit_forward.1} parent=1 // pred_fallthru
      _
    // Predicated region
    $region22: #{mmdit_forward.1} parent=1 // pred_check
      _
    $region23: #{mmdit_forward.1} parent=1 // pred_check_branch
      %113 = sbr.rel (0) target = $region25
    $region24: #{mmdit_forward.1} parent=1 // pred_region
      _
    $region25: #{mmdit_forward.1} parent=1 // pred_fallthru
      _
    // Predicated region
    $region26: #{mmdit_forward.1} parent=1 // pred_check
      _
    $region27: #{mmdit_forward.1} parent=1 // pred_check_branch
      %115 = sbr.rel (0) target = $region29
    $region28: #{mmdit_forward.1} parent=1 // pred_region
      _
    $region29: #{mmdit_forward.1} parent=1 // pred_fallthru
      _
    // Predicated region
    $region30: #{mmdit_forward.1} parent=1 // pred_check
      _
    $region31: #{mmdit_forward.1} parent=1 // pred_check_branch
      %117 = sbr.rel (0) target = $region33
    $region32: #{mmdit_forward.1} parent=1 // pred_region
      _
    $region33: #{mmdit_forward.1} parent=1 // pred_fallthru
      _
    // Predicated region
    $region34: #{mmdit_forward.1} parent=1 // pred_check
      _
    $region35: #{mmdit_forward.1} parent=1 // pred_check_branch
      %119 = sbr.rel (0) target = $region37
    $region36: #{mmdit_forward.1} parent=1 // pred_region
      _
    $region37: #{mmdit_forward.1} parent=1 // pred_fallthru
      _
    // Predicated region
    $region38: #{mmdit_forward.1} parent=1 // pred_check
      _
    $region39: #{mmdit_forward.1} parent=1 // pred_check_branch
      %121 = sbr.rel (0) target = $region41
    $region40: #{mmdit_forward.1} parent=1 // pred_region
      _
    $region41: #{mmdit_forward.1} parent=1 // pred_fallthru
      _
    // Predicated region
    $region42: #{mmdit_forward.1} parent=1 // pred_check
      _
    $region43: #{mmdit_forward.1} parent=1 // pred_check_branch
      %123 = sbr.rel (0) target = $region45
    $region44: #{mmdit_forward.1} parent=1 // pred_region
      _
    $region45: #{mmdit_forward.1} parent=1 // pred_fallthru
      _
    // Predicated region
    $region46: #{mmdit_forward.1} parent=1 // pred_check
      _
    $region47: #{mmdit_forward.1} parent=1 // pred_check_branch
      %125 = sbr.rel (0) target = $region49
    $region48: #{mmdit_forward.1} parent=1 // pred_region
      _
    $region49: #{mmdit_forward.1} parent=1 // pred_fallthru
      _
    // Predicated region
    $region50: #{mmdit_forward.1} parent=1 // pred_check
      _
    $region51: #{mmdit_forward.1} parent=1 // pred_check_branch
      %127 = sbr.rel (0) target = $region53
    $region52: #{mmdit_forward.1} parent=1 // pred_region
      _
    $region53: #{mmdit_forward.1} parent=1 // pred_fallthru
      _
    // Predicated region
    $region54: #{mmdit_forward.1} parent=1 // pred_check
      _
    $region55: #{mmdit_forward.1} parent=1 // pred_check_branch
      %129 = sbr.rel (0) target = $region57
    $region56: #{mmdit_forward.1} parent=1 // pred_region
      _
    $region57: #{mmdit_forward.1} parent=1 // pred_fallthru
      _
    // Predicated region
    $region58: #{mmdit_forward.1} parent=1 // pred_check
      _
    $region59: #{mmdit_forward.1} parent=1 // pred_check_branch
      %131 = sbr.rel (0) target = $region61
    $region60: #{mmdit_forward.1} parent=1 // pred_region
      _
    $region61: #{mmdit_forward.1} parent=1 // pred_fallthru
      _
    // Predicated region
    $region62: #{mmdit_forward.1} parent=1 // pred_check
      _
    $region63: #{mmdit_forward.1} parent=1 // pred_check_branch
      %133 = sbr.rel (0) target = $region65
    $region64: #{mmdit_forward.1} parent=1 // pred_region
      _
    $region65: #{mmdit_forward.1} parent=1 // pred_fallthru
      _
    // Predicated region
    $region66: #{mmdit_forward.1} parent=1 // pred_check
      _
    $region67: #{mmdit_forward.1} parent=1 // pred_check_branch
      %135 = sbr.rel (0) target = $region69
    $region68: #{mmdit_forward.1} parent=1 // pred_region
      _
    $region69: #{mmdit_forward.1} parent=1 // pred_fallthru
      _
    // Predicated region
    $region70: #{mmdit_forward.1} parent=1 // pred_check
      _
    $region71: #{mmdit_forward.1} parent=1 // pred_check_branch
      %137 = sbr.rel (0) target = $region73
    $region72: #{mmdit_forward.1} parent=1 // pred_region
      _
    $region73: #{mmdit_forward.1} parent=1 // pred_fallthru
      _
    // Predicated region
    $region74: #{mmdit_forward.1} parent=1 // pred_check
      _
    $region75: #{mmdit_forward.1} parent=1 // pred_check_branch
      %139 = sbr.rel (0) target = $region77
    $region76: #{mmdit_forward.1} parent=1 // pred_region
      _
    $region77: #{mmdit_forward.1} parent=1 // pred_fallthru
      _
    // Predicated region
    $region78: #{mmdit_forward.1} parent=1 // pred_check
      _
    $region79: #{mmdit_forward.1} parent=1 // pred_check_branch
      %141 = sbr.rel (0) target = $region81
    $region80: #{mmdit_forward.1} parent=1 // pred_region
      _
    $region81: #{mmdit_forward.1} parent=1 // pred_fallthru
      _
    // Predicated region
    $region82: #{mmdit_forward.1} parent=1 // pred_check
      _
    $region83: #{mmdit_forward.1} parent=1 // pred_check_branch
      %143 = sbr.rel (0) target = $region85
    $region84: #{mmdit_forward.1} parent=1 // pred_region
      _
    $region85: #{mmdit_forward.1} parent=1 // pred_fallthru
      _
    // Predicated region
    $region86: #{mmdit_forward.1} parent=1 // pred_check
      _
    $region87: #{mmdit_forward.1} parent=1 // pred_check_branch
      %145 = sbr.rel (0) target = $region89
    $region88: #{mmdit_forward.1} parent=1 // pred_region
      _
    $region89: #{mmdit_forward.1} parent=1 // pred_fallthru
      _
    // Predicated region
    $region90: #{mmdit_forward.1} parent=1 // pred_check
      _
    $region91: #{mmdit_forward.1} parent=1 // pred_check_branch
      %147 = sbr.rel (0) target = $region93
    $region92: #{mmdit_forward.1} parent=1 // pred_region
      _
    $region93: #{mmdit_forward.1} parent=1 // pred_fallthru
      _
    // Predicated region
    $region94: #{mmdit_forward.1} parent=1 // pred_check
      _
    $region95: #{mmdit_forward.1} parent=1 // pred_check_branch
      %149 = sbr.rel (0) target = $region97
    $region96: #{mmdit_forward.1} parent=1 // pred_region
      _
    $region97: #{mmdit_forward.1} parent=1 // pred_fallthru
      _
    // Predicated region
    $region98: #{mmdit_forward.1} parent=1 // pred_check
      _
    $region99: #{mmdit_forward.1} parent=1 // pred_check_branch
      %151 = sbr.rel (0) target = $region101
    $region100: #{mmdit_forward.1} parent=1 // pred_region
      _
    $region101: #{mmdit_forward.1} parent=1 // pred_fallthru
      _
    // Predicated region
    $region102: #{mmdit_forward.1} parent=1 // pred_check
      _
    $region103: #{mmdit_forward.1} parent=1 // pred_check_branch
      %153 = sbr.rel (0) target = $region105
    $region104: #{mmdit_forward.1} parent=1 // pred_region
      _
    $region105: #{mmdit_forward.1} parent=1 // pred_fallthru
      _
    // Predicated region
    $region106: #{mmdit_forward.1} parent=1 // pred_check
      _
    $region107: #{mmdit_forward.1} parent=1 // pred_check_branch
      %155 = sbr.rel (0) target = $region109
    $region108: #{mmdit_forward.1} parent=1 // pred_region
      _
    $region109: #{mmdit_forward.1} parent=1 // pred_fallthru
      _
    // Predicated region
    $region110: #{mmdit_forward.1} parent=1 // pred_check
      _
    $region111: #{mmdit_forward.1} parent=1 // pred_check_branch
      %157 = sbr.rel (0) target = $region113
    $region112: #{mmdit_forward.1} parent=1 // pred_region
      _
    $region113: #{mmdit_forward.1} parent=1 // pred_fallthru
      _
    // Predicated region
    $region114: #{mmdit_forward.1} parent=1 // pred_check
      _
    $region115: #{mmdit_forward.1} parent=1 // pred_check_branch
      %159 = sbr.rel (0) target = $region117
    $region116: #{mmdit_forward.1} parent=1 // pred_region
      _
    $region117: #{mmdit_forward.1} parent=1 // pred_fallthru
      _
    // Predicated region
    $region118: #{mmdit_forward.1} parent=1 // pred_check
      _
    $region119: #{mmdit_forward.1} parent=1 // pred_check_branch
      %161 = sbr.rel (0) target = $region121
    $region120: #{mmdit_forward.1} parent=1 // pred_region
      _
    $region121: #{mmdit_forward.1} parent=1 // pred_fallthru
      _
    // Predicated region
    $region122: #{mmdit_forward.1} parent=1 // pred_check
      _
    $region123: #{mmdit_forward.1} parent=1 // pred_check_branch
      %163 = sbr.rel (0) target = $region125
    $region124: #{mmdit_forward.1} parent=1 // pred_region
      _
    $region125: #{mmdit_forward.1} parent=1 // pred_fallthru
      _
    // Predicated region
    $region126: #{mmdit_forward.1} parent=1 // pred_check
      _
    $region127: #{mmdit_forward.1} parent=1 // pred_check_branch
      %165 = sbr.rel (0) target = $region129
    $region128: #{mmdit_forward.1} parent=1 // pred_region
      _
    $region129: #{mmdit_forward.1} parent=1 // pred_fallthru
      _
    // Predicated region
    $region130: #{mmdit_forward.1} parent=1 // pred_check
      _
    $region131: #{mmdit_forward.1} parent=1 // pred_check_branch
      %167 = sbr.rel (0) target = $region133
    $region132: #{mmdit_forward.1} parent=1 // pred_region
      _
    $region133: #{mmdit_forward.1} parent=1 // pred_fallthru
      _
    // Predicated region
    $region134: #{mmdit_forward.1} parent=1 // pred_check
      _
    $region135: #{mmdit_forward.1} parent=1 // pred_check_branch
      %169 = sbr.rel (0) target = $region137
    $region136: #{mmdit_forward.1} parent=1 // pred_region
      _
    $region137: #{mmdit_forward.1} parent=1 // pred_fallthru
      _
    // Predicated region
    $region138: #{mmdit_forward.1} parent=1 // pred_check
      _
    $region139: #{mmdit_forward.1} parent=1 // pred_check_branch
      %171 = sbr.rel (0) target = $region141
    $region140: #{mmdit_forward.1} parent=1 // pred_region
      _
    $region141: #{mmdit_forward.1} parent=1 // pred_fallthru
      _
    // Predicated region
    $region142: #{mmdit_forward.1} parent=1 // pred_check
      _
    $region143: #{mmdit_forward.1} parent=1 // pred_check_branch
      %173 = sbr.rel (0) target = $region145
    $region144: #{mmdit_forward.1} parent=1 // pred_region
      _
    $region145: #{mmdit_forward.1} parent=1 // pred_fallthru
      _
    // Predicated region
    $region146: #{mmdit_forward.1} parent=1 // pred_check
      _
    $region147: #{mmdit_forward.1} parent=1 // pred_check_branch
      %175 = sbr.rel (0) target = $region149
    $region148: #{mmdit_forward.1} parent=1 // pred_region
      _
    $region149: #{mmdit_forward.1} parent=1 // pred_fallthru
      _
    // Predicated region
    $region150: #{mmdit_forward.1} parent=1 // pred_check
      _
    $region151: #{mmdit_forward.1} parent=1 // pred_check_branch
      %177 = sbr.rel (0) target = $region153
    $region152: #{mmdit_forward.1} parent=1 // pred_region
      _
    $region153: #{mmdit_forward.1} parent=1 // pred_fallthru
      _
    // Predicated region
    $region154: #{mmdit_forward.1} parent=1 // pred_check
      _
    $region155: #{mmdit_forward.1} parent=1 // pred_check_branch
      %179 = sbr.rel (0) target = $region157
    $region156: #{mmdit_forward.1} parent=1 // pred_region
      _
    $region157: #{mmdit_forward.1} parent=1 // pred_fallthru
      _
    // Predicated region
    $region158: #{mmdit_forward.1} parent=1 // pred_check
      _
    $region159: #{mmdit_forward.1} parent=1 // pred_check_branch
      %181 = sbr.rel (0) target = $region161
    $region160: #{mmdit_forward.1} parent=1 // pred_region
      _
    $region161: #{mmdit_forward.1} parent=1 // pred_fallthru
      _
    // Predicated region
    $region162: #{mmdit_forward.1} parent=1 // pred_check
      _
    $region163: #{mmdit_forward.1} parent=1 // pred_check_branch
      %183 = sbr.rel (0) target = $region165
    $region164: #{mmdit_forward.1} parent=1 // pred_region
      %s185 = ssub.s32 16, 16
      %186 = vsyncadd [#allocation3], %s185
      %s188 = sshll.u32 [#allocation2], 4
      %s189 = int_to_ptr.vmem [resolvable:$true] %s188
      %191 = dma.hbm_to_vmem [thread:$0]  %s81, 16, %s189, [#allocation3]
    $region165: #{mmdit_forward.1} parent=1 // pred_fallthru
      _
    // Predicated region
    $region166: #{mmdit_forward.1} parent=1 // pred_check
      _
    $region167: #{mmdit_forward.1} parent=1 // pred_check_branch
      %193 = sbr.rel (0) target = $region169
    $region168: #{mmdit_forward.1} parent=1 // pred_region
      _
    $region169: #{mmdit_forward.1} parent=1 // pred_fallthru
      _
    // Predicated region
    $region170: #{mmdit_forward.1} parent=1 // pred_check
      _
    $region171: #{mmdit_forward.1} parent=1 // pred_check_branch
      %195 = sbr.rel (0) target = $region173
    $region172: #{mmdit_forward.1} parent=1 // pred_region
      %s197 = ssub.s32 16, 16
      %198 = vsyncadd [#allocation5], %s197
      %s200 = sshll.u32 [#allocation4], 4
      %s201 = int_to_ptr.vmem [resolvable:$true] %s200
      %203 = dma.hbm_to_vmem [thread:$0]  %s85, 16, %s201, [#allocation5]
    $region173: #{mmdit_forward.1} parent=1 // pred_fallthru
      _
    // Predicated region
    $region174: #{mmdit_forward.1} parent=1 // pred_check
      _
    $region175: #{mmdit_forward.1} parent=1 // pred_check_branch
      %205 = sbr.rel (0) target = $region177
    $region176: #{mmdit_forward.1} parent=1 // pred_region
      _
    $region177: #{mmdit_forward.1} parent=1 // pred_fallthru
      _
    // Predicated region
    $region178: #{mmdit_forward.1} parent=1 // pred_check
      _
    $region179: #{mmdit_forward.1} parent=1 // pred_check_branch
      %207 = sbr.rel (0) target = $region181
    $region180: #{mmdit_forward.1} parent=1 // pred_region
      %s209 = ssub.s32 16, 16
      %210 = vsyncadd [#allocation5], %s209
      %s212 = sshll.u32 [#allocation6], 4
      %s213 = int_to_ptr.vmem [resolvable:$true] %s212
      %215 = dma.hbm_to_vmem [thread:$0]  %s89, 16, %s213, [#allocation5]
    $region181: #{mmdit_forward.1} parent=1 // pred_fallthru
      _
    // Predicated region
    $region182: #{mmdit_forward.1} parent=1 // pred_check
      _
    $region183: #{mmdit_forward.1} parent=1 // pred_check_branch
      %217 = sbr.rel (0) target = $region185
    $region184: #{mmdit_forward.1} parent=1 // pred_region
      _
    $region185: #{mmdit_forward.1} parent=1 // pred_fallthru
      _
    // Predicated region
    $region186: #{mmdit_forward.1} parent=1 // pred_check
      _
    $region187: #{mmdit_forward.1} parent=1 // pred_check_branch
      %219 = sbr.rel (0) target = $region189
    $region188: #{mmdit_forward.1} parent=1 // pred_region
      _
    $region189: #{mmdit_forward.1} parent=1 // pred_fallthru
      _
    // Predicated region
    $region190: #{mmdit_forward.1} parent=1 // pred_check
      _
    $region191: #{mmdit_forward.1} parent=1 // pred_check_branch
      %221 = sbr.rel (0) target = $region193
    $region192: #{mmdit_forward.1} parent=1 // pred_region
      %222 = dma.done [#allocation3], 16
    $region193: #{mmdit_forward.1} parent=1 // pred_fallthru
      _
    // Predicated region
    $region194: #{mmdit_forward.1} parent=1 // pred_check
      _
    $region195: #{mmdit_forward.1} parent=1 // pred_check_branch
      %224 = sbr.rel (0) target = $region197
    $region196: #{mmdit_forward.1} parent=1 // pred_region
      %225 = dma.done [#allocation5], 16
    $region197: #{mmdit_forward.1} parent=1 // pred_fallthru
      _
    // Predicated region
    $region198: #{mmdit_forward.1} parent=1 // pred_check
      _
    $region199: #{mmdit_forward.1} parent=1 // pred_check_branch
      %227 = sbr.rel (0) target = $region201
    $region200: #{mmdit_forward.1} parent=1 // pred_region
      %228 = dma.done [#allocation5], 16
    $region201: #{mmdit_forward.1} parent=1 // pred_fallthru
      _
    %v230 = vld [vmem:[%s1] sm:$0xff]
    %v231 = vld [vmem:[%s1 + $0x8] sm:$0xff]
    %v232 = vld [vmem:[%s1 + $0x10] sm:$0xff]
    %v233 = vld [vmem:[%s1 + $0x18] sm:$0xff]
    %v234 = vld [vmem:[%s1 + $0x20] sm:$0xff]
    %v235 = vld [vmem:[%s1 + $0x28] sm:$0xff]
    %v236 = vld [vmem:[%s1 + $0x30] sm:$0xff]
    %v237 = vld [vmem:[%s1 + $0x38] sm:$0xff]
    %v238 = vld [vmem:[%s1 + $0x40] sm:$0xff]
    %v239 = vld [vmem:[%s1 + $0x48] sm:$0xff]
    %v240 = vld [vmem:[%s1 + $0x50] sm:$0xff]
    %v241 = vld [vmem:[%s1 + $0x58] sm:$0xff]
    %v242 = vld [vmem:[%s1 + $0x60] sm:$0xff]
    %v243 = vld [vmem:[%s1 + $0x68] sm:$0xff]
    %v244 = vld [vmem:[%s1 + $0x70] sm:$0xff]
    %v245 = vld [vmem:[%s1 + $0x78] sm:$0xff]
    %v246 = vld [vmem:[%s11] sm:$0xf]
    %v247 = vld [vmem:[%s11 + $0x4] sm:$0xf]
    %v248 = vpack.c.bf16 %v231, %v230
    %v249 = vpack.c.bf16 %v233, %v232
    %v250 = vpack.c.bf16 %v235, %v234
    %v251 = vpack.c.bf16 %v237, %v236
    %v252 = vpack.c.bf16 %v239, %v238
    %v253 = vpack.c.bf16 %v241, %v240
    %v254 = vpack.c.bf16 %v243, %v242
    %v255 = vpack.c.bf16 %v245, %v244
    %v256 = vld [vmem:[%s13] sm:$0x1]
    %v258 = vlaneseq
    %v259 = vshrl.u32 %v258, 7
    %v260 = vsub.s32 0, %v259
    %v261 = vrot.slane %v256, %v260
    %v265 = vunpack.c.l.b16 %v246
    %v266 = vunpack.c.l.b16 %v247
    %v267 = vpack.c.b16 %v266, %v265
    %vm269 = vcmask 130048
    %v271 = vsel %vm269, %v248, 0
    %v274 = vsel %vm269, %v249, 0
    %v277 = vsel %vm269, %v250, 0
    %v280 = vsel %vm269, %v251, 0
    %v283 = vsel %vm269, %v252, 0
    %v286 = vsel %vm269, %v253, 0
    %v289 = vsel %vm269, %v254, 0
    %v292 = vsel %vm269, %v255, 0
    %294 = vmatprep.subr.bf16.mxu0 0
    %295 = vmatpush1.bf16.msra.mxu0 %v267
    %296 = vmatprep.subr.bf16.mxu0 0
    %297 = vmatpush1.bf16.msra.mxu0 0
    %298 = vmatprep.subr.bf16.mxu0 0
    %299 = vmatpush1.bf16.msra.mxu0 0
    %300 = vmatprep.subr.bf16.mxu0 0
    %301 = vmatpush1.bf16.msra.mxu0 0
    %302 = vmatprep.subr.bf16.mxu0 0
    %303 = vmatpush1.bf16.msra.mxu0 0
    %304 = vmatprep.subr.bf16.mxu0 0
    %305 = vmatpush1.bf16.msra.mxu0 0
    %306 = vmatprep.subr.bf16.mxu0 0
    %307 = vmatpush1.bf16.msra.mxu0 0
    %308 = vmatprep.subr.bf16.mxu0 0
    %309 = vmatpush1.bf16.msra.mxu0 0
    %310 = vmatprep.subr.bf16.mxu0 0
    %311 = vmatpush1.bf16.msra.mxu0 0
    %312 = vmatprep.subr.bf16.mxu0 0
    %313 = vmatpush1.bf16.msra.mxu0 0
    %314 = vmatprep.subr.bf16.mxu0 0
    %315 = vmatpush1.bf16.msra.mxu0 0
    %316 = vmatprep.subr.bf16.mxu0 0
    %317 = vmatpush1.bf16.msra.mxu0 0
    %318 = vmatprep.subr.bf16.mxu0 0
    %319 = vmatpush1.bf16.msra.mxu0 0
    %320 = vmatprep.subr.bf16.mxu0 0
    %321 = vmatpush1.bf16.msra.mxu0 0
    %322 = vmatprep.subr.bf16.mxu0 0
    %323 = vmatpush1.bf16.msra.mxu0 0
    %324 = vmatprep.subr.bf16.mxu0 0
    %325 = vmatpush1.bf16.msra.mxu0 0
    %326 = vmatprep.mubr.bf16.mxu0 0
    %327 = vmatmul.mubr.bf16.gmra.mrb[0].mxu0 %v271
    %v328 = vpop.f32.mrb[0].mxu0
    %v329 = vadd.f32 %v261, %v328
    %v330 = vpop.f32.mrb[0].mxu0
    %v331 = vpop.f32.mrb[0].mxu0
    %v332 = vadd.f32 %v261, %v331
    %v333 = vpop.f32.mrb[0].mxu0
    %334 = vmatprep.mubr.bf16.mxu0 0
    %335 = vmatmul.mubr.bf16.gmra.mrb[0].mxu0 %v274
    %v336 = vpop.f32.mrb[0].mxu0
    %v337 = vadd.f32 %v261, %v336
    %v338 = vpop.f32.mrb[0].mxu0
    %v339 = vpop.f32.mrb[0].mxu0
    %v340 = vadd.f32 %v261, %v339
    %v341 = vpop.f32.mrb[0].mxu0
    %342 = vmatprep.mubr.bf16.mxu0 0
    %343 = vmatmul.mubr.bf16.gmra.mrb[0].mxu0 %v277
    %v344 = vpop.f32.mrb[0].mxu0
    %v345 = vadd.f32 %v261, %v344
    %v346 = vpop.f32.mrb[0].mxu0
    %v347 = vpop.f32.mrb[0].mxu0
    %v348 = vadd.f32 %v261, %v347
    %v349 = vpop.f32.mrb[0].mxu0
    %350 = vmatprep.mubr.bf16.mxu0 0
    %351 = vmatmul.mubr.bf16.gmra.mrb[0].mxu0 %v280
    %v352 = vpop.f32.mrb[0].mxu0
    %v353 = vadd.f32 %v261, %v352
    %v354 = vpop.f32.mrb[0].mxu0
    %v355 = vpop.f32.mrb[0].mxu0
    %v356 = vadd.f32 %v261, %v355
    %v357 = vpop.f32.mrb[0].mxu0
    %358 = vmatprep.mubr.bf16.mxu0 0
    %359 = vmatmul.mubr.bf16.gmra.mrb[0].mxu0 %v283
    %v360 = vpop.f32.mrb[0].mxu0
    %v361 = vadd.f32 %v261, %v360
    %v362 = vpop.f32.mrb[0].mxu0
    %v363 = vpop.f32.mrb[0].mxu0
    %v364 = vadd.f32 %v261, %v363
    %v365 = vpop.f32.mrb[0].mxu0
    %366 = vmatprep.mubr.bf16.mxu0 0
    %367 = vmatmul.mubr.bf16.gmra.mrb[0].mxu0 %v286
    %v368 = vpop.f32.mrb[0].mxu0
    %v369 = vadd.f32 %v261, %v368
    %v370 = vpop.f32.mrb[0].mxu0
    %v371 = vpop.f32.mrb[0].mxu0
    %v372 = vadd.f32 %v261, %v371
    %v373 = vpop.f32.mrb[0].mxu0
    %374 = vmatprep.mubr.bf16.mxu0 0
    %375 = vmatmul.mubr.bf16.gmra.mrb[0].mxu0 %v289
    %v376 = vpop.f32.mrb[0].mxu0
    %v377 = vadd.f32 %v261, %v376
    %v378 = vpop.f32.mrb[0].mxu0
    %v379 = vpop.f32.mrb[0].mxu0
    %v380 = vadd.f32 %v261, %v379
    %v381 = vpop.f32.mrb[0].mxu0
    %382 = vmatprep.mubr.bf16.mxu0 0
    %383 = vmatmul.mubr.bf16.gmra.mrb[0].mxu0 %v292
    %v384 = vpop.f32.mrb[0].mxu0
    %v385 = vadd.f32 %v261, %v384
    %v386 = vpop.f32.mrb[0].mxu0
    %v387 = vpop.f32.mrb[0].mxu0
    %v388 = vadd.f32 %v261, %v387
    %v389 = vpop.f32.mrb[0].mxu0
    %390 = vdwg.mxu0
    %v391 = vld [vmem:[%s3] sm:$0xff]
    %v392 = vld [vmem:[%s3 + $0x8] sm:$0xff]
    %v393 = vld [vmem:[%s3 + $0x10] sm:$0xff]
    %v394 = vld [vmem:[%s3 + $0x18] sm:$0xff]
    %v395 = vld [vmem:[%s3 + $0x20] sm:$0xff]
    %v396 = vld [vmem:[%s3 + $0x28] sm:$0xff]
    %v397 = vld [vmem:[%s3 + $0x30] sm:$0xff]
    %v398 = vld [vmem:[%s3 + $0x38] sm:$0xff]
    %v399 = vadd.f32 %v329, %v391
    %v400 = vadd.f32 %v332, %v392
    %v401 = vadd.f32 %v337, %v393
    %v402 = vadd.f32 %v340, %v394
    %v403 = vadd.f32 %v345, %v395
    %v404 = vadd.f32 %v348, %v396
    %v405 = vadd.f32 %v353, %v397
    %v406 = vadd.f32 %v356, %v398
    %v407 = vadd.f32 %v361, %v391
    %v408 = vadd.f32 %v364, %v392
    %v409 = vadd.f32 %v369, %v393
    %v410 = vadd.f32 %v372, %v394
    %v411 = vadd.f32 %v377, %v395
    %v412 = vadd.f32 %v380, %v396
    %v413 = vadd.f32 %v385, %v397
    %v414 = vadd.f32 %v388, %v398
    %v415 = vld [vmem:[%s9] sm:$0xff]
    %v416 = vld [vmem:[%s9 + $0x8] sm:$0xff]
    %v417 = vld [vmem:[%s31] sm:$0xf]
    %v418 = vld [vmem:[%s31 + $0x4] sm:$0xf]
    %v419 = vld [vmem:[%s31 + $0x8] sm:$0xf]
    %v420 = vld [vmem:[%s31 + $0xc] sm:$0xf]
    %v421 = vld [vmem:[%s31 + $0x10] sm:$0xf]
    %v422 = vld [vmem:[%s31 + $0x14] sm:$0xf]
    %v423 = vpack.c.bf16 %v416, %v415
    %v424 = vld [vmem:[%s33] sm:$0x1]
    %v426 = vlaneseq
    %v427 = vshrl.u32 %v426, 7
    %v428 = vsub.s32 0, %v427
    %v429 = vrot.slane %v424, %v428
    %v437 = vunpack.c.l.b16 %v417
    %v438 = vunpack.c.l.b16 %v418
    %v439 = vunpack.c.l.b16 %v419
    %v440 = vunpack.c.l.b16 %v420
    %v441 = vunpack.c.l.b16 %v421
    %v442 = vunpack.c.l.b16 %v422
    %v443 = vpack.c.b16 %v438, %v437
    %v444 = vpack.c.b16 %v440, %v439
    %v445 = vpack.c.b16 %v442, %v441
    %vm449 = vcmask 392192
    %v451 = vsel %vm449, %v423, 0
    %453 = vmatprep.subr.bf16.mxu0 0
    %454 = vmatpush1.bf16.msra.mxu0 %v443
    %455 = vmatprep.subr.bf16.mxu0 0
    %456 = vmatpush1.bf16.msra.mxu0 %v444
    %457 = vmatprep.subr.bf16.mxu0 0
    %458 = vmatpush1.bf16.msra.mxu0 %v445
    %459 = vmatprep.subr.bf16.mxu0 0
    %460 = vmatpush1.bf16.msra.mxu0 0
    %461 = vmatprep.subr.bf16.mxu0 0
    %462 = vmatpush1.bf16.msra.mxu0 0
    %463 = vmatprep.subr.bf16.mxu0 0
    %464 = vmatpush1.bf16.msra.mxu0 0
    %465 = vmatprep.subr.bf16.mxu0 0
    %466 = vmatpush1.bf16.msra.mxu0 0
    %467 = vmatprep.subr.bf16.mxu0 0
    %468 = vmatpush1.bf16.msra.mxu0 0
    %469 = vmatprep.subr.bf16.mxu0 0
    %470 = vmatpush1.bf16.msra.mxu0 0
    %471 = vmatprep.subr.bf16.mxu0 0
    %472 = vmatpush1.bf16.msra.mxu0 0
    %473 = vmatprep.subr.bf16.mxu0 0
    %474 = vmatpush1.bf16.msra.mxu0 0
    %475 = vmatprep.subr.bf16.mxu0 0
    %476 = vmatpush1.bf16.msra.mxu0 0
    %477 = vmatprep.subr.bf16.mxu0 0
    %478 = vmatpush1.bf16.msra.mxu0 0
    %479 = vmatprep.subr.bf16.mxu0 0
    %480 = vmatpush1.bf16.msra.mxu0 0
    %481 = vmatprep.subr.bf16.mxu0 0
    %482 = vmatpush1.bf16.msra.mxu0 0
    %483 = vmatprep.subr.bf16.mxu0 0
    %484 = vmatpush1.bf16.msra.mxu0 0
    %485 = vmatprep.mubr.bf16.mxu0 0
    %486 = vmatmul.mubr.bf16.gmra.mrb[0].mxu0 %v451
    %v487 = vpop.f32.mrb[0].mxu0
    %v488 = vadd.f32 %v429, %v487
    %v489 = vpop.f32.mrb[0].mxu0
    %v490 = vpop.f32.mrb[0].mxu0
    %v491 = vadd.f32 %v429, %v490
    %v492 = vpop.f32.mrb[0].mxu0
    %493 = vdwg.mxu0
    %v494 = vld [vmem:[%s5] sm:$0xf]
    %v495 = vld [vmem:[%s15] sm:$0xf]
    %v496 = vld [vmem:[%s15 + $0x4] sm:$0xf]
    %v497 = vld [vmem:[%s15 + $0x8] sm:$0xf]
    %v498 = vld [vmem:[%s15 + $0xc] sm:$0xf]
    %v499 = vld [vmem:[%s15 + $0x10] sm:$0xf]
    %v500 = vld [vmem:[%s15 + $0x14] sm:$0xf]
    %v501 = vld [vmem:[%s15 + $0x18] sm:$0xf]
    %v502 = vld [vmem:[%s15 + $0x1c] sm:$0xf]
    %v503 = vld [vmem:[%s15 + $0x20] sm:$0xf]
    %v504 = vld [vmem:[%s15 + $0x24] sm:$0xf]
    %v505 = vld [vmem:[%s15 + $0x28] sm:$0xf]
    %v506 = vld [vmem:[%s15 + $0x2c] sm:$0xf]
    %v507 = vld [vmem:[%s15 + $0x30] sm:$0xf]
    %v508 = vld [vmem:[%s15 + $0x34] sm:$0xf]
    %v509 = vld [vmem:[%s15 + $0x38] sm:$0xf]
    %v510 = vld [vmem:[%s15 + $0x3c] sm:$0xf]
    %v511 = vld [vmem:[%s15 + $0x40] sm:$0xf]
    %v512 = vld [vmem:[%s15 + $0x44] sm:$0xf]
    %v513 = vld [vmem:[%s15 + $0x48] sm:$0xf]
    %v514 = vld [vmem:[%s15 + $0x4c] sm:$0xf]
    %v515 = vld [vmem:[%s15 + $0x50] sm:$0xf]
    %v516 = vld [vmem:[%s15 + $0x54] sm:$0xf]
    %v517 = vld [vmem:[%s15 + $0x58] sm:$0xf]
    %v518 = vld [vmem:[%s15 + $0x5c] sm:$0xf]
    %v519 = vld [vmem:[%s15 + $0x60] sm:$0xf]
    %v520 = vld [vmem:[%s15 + $0x64] sm:$0xf]
    %v521 = vld [vmem:[%s15 + $0x68] sm:$0xf]
    %v522 = vld [vmem:[%s15 + $0x6c] sm:$0xf]
    %v523 = vld [vmem:[%s15 + $0x70] sm:$0xf]
    %v524 = vld [vmem:[%s15 + $0x74] sm:$0xf]
    %v525 = vld [vmem:[%s15 + $0x78] sm:$0xf]
    %v526 = vld [vmem:[%s15 + $0x7c] sm:$0xf]
    %v529 = vunpack.c.l.s4 1983009808
    %v530 = vunpack.c.0.s8 %v529
    %v531 = vlaneseq
    %v532 = vshrl.u32 %v531, 7
    %v533 = vsub.s32 %v530, %v532
    %v534 = vrot.slane %v494, %v533
    %v535 = vcombine.high %v534, %v534
    %v538 = vpack.c.bf16 %v534, %v534
    %v539 = vpack.c.bf16 %v535, %v535
    %v540 = vld [vmem:[%s17] sm:$0x1]
    %v542 = vlaneseq
    %v543 = vshrl.u32 %v542, 7
    %v544 = vsub.s32 0, %v543
    %v545 = vrot.slane %v540, %v544
    %v579 = vunpack.c.l.b16 %v495
    %v580 = vunpack.c.l.b16 %v496
    %v581 = vunpack.c.l.b16 %v497
    %v582 = vunpack.c.l.b16 %v498
    %v583 = vunpack.c.l.b16 %v499
    %v584 = vunpack.c.l.b16 %v500
    %v585 = vunpack.c.l.b16 %v501
    %v586 = vunpack.c.l.b16 %v502
    %v587 = vunpack.c.l.b16 %v503
    %v588 = vunpack.c.l.b16 %v504
    %v589 = vunpack.c.l.b16 %v505
    %v590 = vunpack.c.l.b16 %v506
    %v591 = vunpack.c.l.b16 %v507
    %v592 = vunpack.c.l.b16 %v508
    %v593 = vunpack.c.l.b16 %v509
    %v594 = vunpack.c.l.b16 %v510
    %v595 = vunpack.c.l.b16 %v511
    %v596 = vunpack.c.l.b16 %v512
    %v597 = vunpack.c.l.b16 %v513
    %v598 = vunpack.c.l.b16 %v514
    %v599 = vunpack.c.l.b16 %v515
    %v600 = vunpack.c.l.b16 %v516
    %v601 = vunpack.c.l.b16 %v517
    %v602 = vunpack.c.l.b16 %v518
    %v603 = vunpack.c.l.b16 %v519
    %v604 = vunpack.c.l.b16 %v520
    %v605 = vunpack.c.l.b16 %v521
    %v606 = vunpack.c.l.b16 %v522
    %v607 = vunpack.c.l.b16 %v523
    %v608 = vunpack.c.l.b16 %v524
    %v609 = vunpack.c.l.b16 %v525
    %v610 = vunpack.c.l.b16 %v526
    %v611 = vpack.c.b16 %v580, %v579
    %v612 = vpack.c.b16 %v582, %v581
    %v613 = vpack.c.b16 %v584, %v583
    %v614 = vpack.c.b16 %v586, %v585
    %v615 = vpack.c.b16 %v588, %v587
    %v616 = vpack.c.b16 %v590, %v589
    %v617 = vpack.c.b16 %v592, %v591
    %v618 = vpack.c.b16 %v594, %v593
    %v619 = vpack.c.b16 %v596, %v595
    %v620 = vpack.c.b16 %v598, %v597
    %v621 = vpack.c.b16 %v600, %v599
    %v622 = vpack.c.b16 %v602, %v601
    %v623 = vpack.c.b16 %v604, %v603
    %v624 = vpack.c.b16 %v606, %v605
    %v625 = vpack.c.b16 %v608, %v607
    %v626 = vpack.c.b16 %v610, %v609
    %643 = vmatprep.subr.bf16.mxu0 0
    %644 = vmatpush1.bf16.msra.mxu0 %v611
    %645 = vmatprep.subr.bf16.mxu0 0
    %646 = vmatpush1.bf16.msra.mxu0 %v612
    %647 = vmatprep.subr.bf16.mxu0 0
    %648 = vmatpush1.bf16.msra.mxu0 %v613
    %649 = vmatprep.subr.bf16.mxu0 0
    %650 = vmatpush1.bf16.msra.mxu0 %v614
    %651 = vmatprep.subr.bf16.mxu0 0
    %652 = vmatpush1.bf16.msra.mxu0 %v615
    %653 = vmatprep.subr.bf16.mxu0 0
    %654 = vmatpush1.bf16.msra.mxu0 %v616
    %655 = vmatprep.subr.bf16.mxu0 0
    %656 = vmatpush1.bf16.msra.mxu0 %v617
    %657 = vmatprep.subr.bf16.mxu0 0
    %658 = vmatpush1.bf16.msra.mxu0 %v618
    %659 = vmatprep.subr.bf16.mxu0 0
    %660 = vmatpush1.bf16.msra.mxu0 %v619
    %661 = vmatprep.subr.bf16.mxu0 0
    %662 = vmatpush1.bf16.msra.mxu0 %v620
    %663 = vmatprep.subr.bf16.mxu0 0
    %664 = vmatpush1.bf16.msra.mxu0 %v621
    %665 = vmatprep.subr.bf16.mxu0 0
    %666 = vmatpush1.bf16.msra.mxu0 %v622
    %667 = vmatprep.subr.bf16.mxu0 0
    %668 = vmatpush1.bf16.msra.mxu0 %v623
    %669 = vmatprep.subr.bf16.mxu0 0
    %670 = vmatpush1.bf16.msra.mxu0 %v624
    %671 = vmatprep.subr.bf16.mxu0 0
    %672 = vmatpush1.bf16.msra.mxu0 %v625
    %673 = vmatprep.subr.bf16.mxu0 0
    %674 = vmatpush1.bf16.msra.mxu0 %v626
    %675 = vmatprep.mubr.bf16.mxu0 %v539
    %676 = vmatmul.mubr.bf16.gmra.mrb[0].mxu0 %v538
    %v677 = vpop.f32.mrb[0].mxu0
    %v678 = vadd.f32 %v545, %v677
    %v679 = vpop.f32.mrb[0].mxu0
    %v680 = vpop.f32.mrb[0].mxu0
    %v681 = vpop.f32.mrb[0].mxu0
    %682 = vdwg.mxu0
    %v683 = vxor.u32 %v678, 2147483648
    %v684 = vmul.f32 %v683, 1.442695
    %v685 = vpow.pop %v684
    %v686 = vadd.f32 %v685, 1.0
    %v687 = vrcp.pop %v686
    %v688 = vmul.f32 1.0, %v687
    %v689 = vmul.f32 %v678, %v688
    %v690 = vld [vmem:[%s19] sm:$0xf]
    %v691 = vld [vmem:[%s19 + $0x4] sm:$0xf]
    %v692 = vld [vmem:[%s19 + $0x8] sm:$0xf]
    %v693 = vld [vmem:[%s19 + $0xc] sm:$0xf]
    %v694 = vpack.c.bf16 %v689, %v689
    %v695 = vld [vmem:[%s21] sm:$0x1]
    %v697 = vlaneseq
    %v698 = vshrl.u32 %v697, 7
    %v699 = vsub.s32 0, %v698
    %v700 = vrot.slane %v695, %v699
    %v706 = vunpack.c.l.b16 %v690
    %v707 = vunpack.c.l.b16 %v691
    %v708 = vunpack.c.l.b16 %v692
    %v709 = vunpack.c.l.b16 %v693
    %v710 = vpack.c.b16 %v707, %v706
    %v711 = vpack.c.b16 %v709, %v708
    %vm714 = vcmask 261120
    %v716 = vsel %vm714, %v694, 0
    %718 = vmatprep.subr.bf16.mxu0 0
    %719 = vmatpush1.bf16.msra.mxu0 %v710
    %720 = vmatprep.subr.bf16.mxu0 0
    %721 = vmatpush1.bf16.msra.mxu0 %v711
    %722 = vmatprep.subr.bf16.mxu0 0
    %723 = vmatpush1.bf16.msra.mxu0 0
    %724 = vmatprep.subr.bf16.mxu0 0
    %725 = vmatpush1.bf16.msra.mxu0 0
    %726 = vmatprep.subr.bf16.mxu0 0
    %727 = vmatpush1.bf16.msra.mxu0 0
    %728 = vmatprep.subr.bf16.mxu0 0
    %729 = vmatpush1.bf16.msra.mxu0 0
    %730 = vmatprep.subr.bf16.mxu0 0
    %731 = vmatpush1.bf16.msra.mxu0 0
    %732 = vmatprep.subr.bf16.mxu0 0
    %733 = vmatpush1.bf16.msra.mxu0 0
    %734 = vmatprep.subr.bf16.mxu0 0
    %735 = vmatpush1.bf16.msra.mxu0 0
    %736 = vmatprep.subr.bf16.mxu0 0
    %737 = vmatpush1.bf16.msra.mxu0 0
    %738 = vmatprep.subr.bf16.mxu0 0
    %739 = vmatpush1.bf16.msra.mxu0 0
    %740 = vmatprep.subr.bf16.mxu0 0
    %741 = vmatpush1.bf16.msra.mxu0 0
    %742 = vmatprep.subr.bf16.mxu0 0
    %743 = vmatpush1.bf16.msra.mxu0 0
    %744 = vmatprep.subr.bf16.mxu0 0
    %745 = vmatpush1.bf16.msra.mxu0 0
    %746 = vmatprep.subr.bf16.mxu0 0
    %747 = vmatpush1.bf16.msra.mxu0 0
    %748 = vmatprep.subr.bf16.mxu0 0
    %749 = vmatpush1.bf16.msra.mxu0 0
    %750 = vmatprep.mubr.bf16.mxu0 0
    %751 = vmatmul.mubr.bf16.gmra.mrb[0].mxu0 %v716
    %v752 = vpop.f32.mrb[0].mxu0
    %v753 = vadd.f32 %v700, %v752
    %v754 = vpop.f32.mrb[0].mxu0
    %v755 = vpop.f32.mrb[0].mxu0
    %v756 = vpop.f32.mrb[0].mxu0
    %757 = vdwg.mxu0
    %v758 = vld [vmem:[%s7] sm:$0x3]
    %v759 = vld [vmem:[%s23] sm:$0xf]
    %v760 = vld [vmem:[%s23 + $0x4] sm:$0xf]
    %v761 = vld [vmem:[%s23 + $0x8] sm:$0xf]
    %v762 = vld [vmem:[%s23 + $0xc] sm:$0xf]
    %v763 = vld [vmem:[%s23 + $0x10] sm:$0xf]
    %v764 = vld [vmem:[%s23 + $0x14] sm:$0xf]
    %v765 = vld [vmem:[%s23 + $0x18] sm:$0xf]
    %v766 = vld [vmem:[%s23 + $0x1c] sm:$0xf]
    %v767 = vpack.c.bf16 %v758, %v758
    %v768 = vld [vmem:[%s25] sm:$0x1]
    %v770 = vlaneseq
    %v771 = vshrl.u32 %v770, 7
    %v772 = vsub.s32 0, %v771
    %v773 = vrot.slane %v768, %v772
    %v783 = vunpack.c.l.b16 %v759
    %v784 = vunpack.c.l.b16 %v760
    %v785 = vunpack.c.l.b16 %v761
    %v786 = vunpack.c.l.b16 %v762
    %v787 = vunpack.c.l.b16 %v763
    %v788 = vunpack.c.l.b16 %v764
    %v789 = vunpack.c.l.b16 %v765
    %v790 = vunpack.c.l.b16 %v766
    %v791 = vpack.c.b16 %v784, %v783
    %v792 = vpack.c.b16 %v786, %v785
    %v793 = vpack.c.b16 %v788, %v787
    %v794 = vpack.c.b16 %v790, %v789
    %vm799 = vcmask 523264
    %v801 = vsel %vm799, %v767, 0
    %803 = vmatprep.subr.bf16.mxu0 0
    %804 = vmatpush1.bf16.msra.mxu0 %v791
    %805 = vmatprep.subr.bf16.mxu0 0
    %806 = vmatpush1.bf16.msra.mxu0 %v792
    %807 = vmatprep.subr.bf16.mxu0 0
    %808 = vmatpush1.bf16.msra.mxu0 %v793
    %809 = vmatprep.subr.bf16.mxu0 0
    %810 = vmatpush1.bf16.msra.mxu0 %v794
    %811 = vmatprep.subr.bf16.mxu0 0
    %812 = vmatpush1.bf16.msra.mxu0 0
    %813 = vmatprep.subr.bf16.mxu0 0
    %814 = vmatpush1.bf16.msra.mxu0 0
    %815 = vmatprep.subr.bf16.mxu0 0
    %816 = vmatpush1.bf16.msra.mxu0 0
    %817 = vmatprep.subr.bf16.mxu0 0
    %818 = vmatpush1.bf16.msra.mxu0 0
    %819 = vmatprep.subr.bf16.mxu0 0
    %820 = vmatpush1.bf16.msra.mxu0 0
    %821 = vmatprep.subr.bf16.mxu0 0
    %822 = vmatpush1.bf16.msra.mxu0 0
    %823 = vmatprep.subr.bf16.mxu0 0
    %824 = vmatpush1.bf16.msra.mxu0 0
    %825 = vmatprep.subr.bf16.mxu0 0
    %826 = vmatpush1.bf16.msra.mxu0 0
    %827 = vmatprep.subr.bf16.mxu0 0
    %828 = vmatpush1.bf16.msra.mxu0 0
    %829 = vmatprep.subr.bf16.mxu0 0
    %830 = vmatpush1.bf16.msra.mxu0 0
    %831 = vmatprep.subr.bf16.mxu0 0
    %832 = vmatpush1.bf16.msra.mxu0 0
    %833 = vmatprep.subr.bf16.mxu0 0
    %834 = vmatpush1.bf16.msra.mxu0 0
    %835 = vmatprep.mubr.bf16.mxu0 0
    %836 = vmatmul.mubr.bf16.gmra.mrb[0].mxu0 %v801
    %v837 = vpop.f32.mrb[0].mxu0
    %v838 = vadd.f32 %v773, %v837
    %v839 = vpop.f32.mrb[0].mxu0
    %v840 = vpop.f32.mrb[0].mxu0
    %v841 = vpop.f32.mrb[0].mxu0
    %842 = vdwg.mxu0
    %v843 = vxor.u32 %v838, 2147483648
    %v844 = vmul.f32 %v843, 1.442695
    %v845 = vpow.pop %v844
    %v846 = vadd.f32 %v845, 1.0
    %v847 = vrcp.pop %v846
    %v848 = vmul.f32 1.0, %v847
    %v849 = vmul.f32 %v838, %v848
    %v850 = vld [vmem:[%s27] sm:$0xf]
    %v851 = vld [vmem:[%s27 + $0x4] sm:$0xf]
    %v852 = vld [vmem:[%s27 + $0x8] sm:$0xf]
    %v853 = vld [vmem:[%s27 + $0xc] sm:$0xf]
    %v854 = vpack.c.bf16 %v849, %v849
    %v855 = vld [vmem:[%s29] sm:$0x1]
    %v857 = vlaneseq
    %v858 = vshrl.u32 %v857, 7
    %v859 = vsub.s32 0, %v858
    %v860 = vrot.slane %v855, %v859
    %v866 = vunpack.c.l.b16 %v850
    %v867 = vunpack.c.l.b16 %v851
    %v868 = vunpack.c.l.b16 %v852
    %v869 = vunpack.c.l.b16 %v853
    %v870 = vpack.c.b16 %v867, %v866
    %v871 = vpack.c.b16 %v869, %v868
    %v875 = vsel %vm714, %v854, 0
    %877 = vmatprep.subr.bf16.mxu0 0
    %878 = vmatpush1.bf16.msra.mxu0 %v870
    %879 = vmatprep.subr.bf16.mxu0 0
    %880 = vmatpush1.bf16.msra.mxu0 %v871
    %881 = vmatprep.subr.bf16.mxu0 0
    %882 = vmatpush1.bf16.msra.mxu0 0
    %883 = vmatprep.subr.bf16.mxu0 0
    %884 = vmatpush1.bf16.msra.mxu0 0
    %885 = vmatprep.subr.bf16.mxu0 0
    %886 = vmatpush1.bf16.msra.mxu0 0
    %887 = vmatprep.subr.bf16.mxu0 0
    %888 = vmatpush1.bf16.msra.mxu0 0
    %889 = vmatprep.subr.bf16.mxu0 0
    %890 = vmatpush1.bf16.msra.mxu0 0
    %891 = vmatprep.subr.bf16.mxu0 0
    %892 = vmatpush1.bf16.msra.mxu0 0
    %893 = vmatprep.subr.bf16.mxu0 0
    %894 = vmatpush1.bf16.msra.mxu0 0
    %895 = vmatprep.subr.bf16.mxu0 0
    %896 = vmatpush1.bf16.msra.mxu0 0
    %897 = vmatprep.subr.bf16.mxu0 0
    %898 = vmatpush1.bf16.msra.mxu0 0
    %899 = vmatprep.subr.bf16.mxu0 0
    %900 = vmatpush1.bf16.msra.mxu0 0
    %901 = vmatprep.subr.bf16.mxu0 0
    %902 = vmatpush1.bf16.msra.mxu0 0
    %903 = vmatprep.subr.bf16.mxu0 0
    %904 = vmatpush1.bf16.msra.mxu0 0
    %905 = vmatprep.subr.bf16.mxu0 0
    %906 = vmatpush1.bf16.msra.mxu0 0
    %907 = vmatprep.subr.bf16.mxu0 0
    %908 = vmatpush1.bf16.msra.mxu0 0
    %909 = vmatprep.mubr.bf16.mxu0 0
    %910 = vmatmul.mubr.bf16.gmra.mrb[0].mxu0 %v875
    %v911 = vpop.f32.mrb[0].mxu0
    %v912 = vadd.f32 %v860, %v911
    %v913 = vpop.f32.mrb[0].mxu0
    %v914 = vpop.f32.mrb[0].mxu0
    %v915 = vpop.f32.mrb[0].mxu0
    %916 = vdwg.mxu0
    %v917 = vadd.f32 %v753, %v912
    %v918 = vxor.u32 %v917, 2147483648
    %v919 = vmul.f32 %v918, 1.442695
    %v920 = vpow.pop %v919
    %v921 = vadd.f32 %v920, 1.0
    %v922 = vrcp.pop %v921
    %v923 = vmul.f32 1.0, %v922
    %v924 = vmul.f32 %v917, %v923
    %v925 = vld [vmem:[%s35] sm:$0xff]
    %v926 = vld [vmem:[%s35 + $0x8] sm:$0xff]
    %v927 = vld [vmem:[%s35 + $0x10] sm:$0xff]
    %v928 = vld [vmem:[%s35 + $0x18] sm:$0xff]
    %v929 = vld [vmem:[%s35 + $0x20] sm:$0xff]
    %v930 = vld [vmem:[%s35 + $0x28] sm:$0xff]
    %v931 = vld [vmem:[%s35 + $0x30] sm:$0xff]
    %v932 = vld [vmem:[%s35 + $0x38] sm:$0xff]
    %v933 = vld [vmem:[%s35 + $0x40] sm:$0xff]
    %v934 = vld [vmem:[%s35 + $0x48] sm:$0xff]
    %v935 = vld [vmem:[%s35 + $0x50] sm:$0xff]
    %v936 = vld [vmem:[%s35 + $0x58] sm:$0xff]
    %v937 = vpack.c.bf16 %v924, %v924
    %v938 = vld [vmem:[%s37] sm:$0x3f]
    %v940 = vlaneseq
    %v941 = vshrl.u32 %v940, 7
    %v942 = vsub.s32 0, %v941
    %v943 = vrot.slane %v938, %v942
    %v944 = vlaneseq
    %v945 = vshrl.u32 %v944, 7
    %v946 = vsub.s32 1, %v945
    %v947 = vrot.slane %v938, %v946
    %v948 = vlaneseq
    %v949 = vshrl.u32 %v948, 7
    %v950 = vsub.s32 2, %v949
    %v951 = vrot.slane %v938, %v950
    %v952 = vlaneseq
    %v953 = vshrl.u32 %v952, 7
    %v954 = vsub.s32 3, %v953
    %v955 = vrot.slane %v938, %v954
    %v956 = vlaneseq
    %v957 = vshrl.u32 %v956, 7
    %v958 = vsub.s32 4, %v957
    %v959 = vrot.slane %v938, %v958
    %v960 = vlaneseq
    %v961 = vshrl.u32 %v960, 7
    %v962 = vsub.s32 5, %v961
    %v963 = vrot.slane %v938, %v962
    %v982 = vunpack.c.l.b16 %v925
    %v983 = vunpack.c.h.b16 %v925
    %v984 = vunpack.c.l.b16 %v926
    %v985 = vunpack.c.h.b16 %v926
    %v986 = vunpack.c.l.b16 %v927
    %v987 = vunpack.c.h.b16 %v927
    %v988 = vunpack.c.l.b16 %v928
    %v989 = vunpack.c.h.b16 %v928
    %v990 = vunpack.c.l.b16 %v929
    %v991 = vunpack.c.h.b16 %v929
    %v992 = vunpack.c.l.b16 %v930
    %v993 = vunpack.c.h.b16 %v930
    %v994 = vunpack.c.l.b16 %v931
    %v995 = vunpack.c.h.b16 %v931
    %v996 = vunpack.c.l.b16 %v932
    %v997 = vunpack.c.h.b16 %v932
    %v998 = vunpack.c.l.b16 %v933
    %v999 = vunpack.c.h.b16 %v933
    %v1000 = vunpack.c.l.b16 %v934
    %v1001 = vunpack.c.h.b16 %v934
    %v1002 = vunpack.c.l.b16 %v935
    %v1003 = vunpack.c.h.b16 %v935
    %v1004 = vunpack.c.l.b16 %v936
    %v1005 = vunpack.c.h.b16 %v936
    %v1006 = vpack.c.b16 %v988, %v982
    %v1007 = vpack.c.b16 %v989, %v983
    %v1008 = vpack.c.b16 %v990, %v984
    %v1009 = vpack.c.b16 %v991, %v985
    %v1010 = vpack.c.b16 %v992, %v986
    %v1011 = vpack.c.b16 %v993, %v987
    %v1012 = vpack.c.b16 %v1000, %v994
    %v1013 = vpack.c.b16 %v1001, %v995
    %v1014 = vpack.c.b16 %v1002, %v996
    %v1015 = vpack.c.b16 %v1003, %v997
    %v1016 = vpack.c.b16 %v1004, %v998
    %v1017 = vpack.c.b16 %v1005, %v999
    %v1031 = vsel %vm714, %v937, 0
    %1033 = vmatprep.subr.bf16.mxu0 %v1007
    %1034 = vmatpush1.bf16.msra.mxu0 %v1006
    %1035 = vmatprep.subr.bf16.mxu0 %v1013
    %1036 = vmatpush1.bf16.msra.mxu0 %v1012
    %1037 = vmatprep.subr.bf16.mxu0 0
    %1038 = vmatpush1.bf16.msra.mxu0 0
    %1039 = vmatprep.subr.bf16.mxu0 0
    %1040 = vmatpush1.bf16.msra.mxu0 0
    %1041 = vmatprep.subr.bf16.mxu0 0
    %1042 = vmatpush1.bf16.msra.mxu0 0
    %1043 = vmatprep.subr.bf16.mxu0 0
    %1044 = vmatpush1.bf16.msra.mxu0 0
    %1045 = vmatprep.subr.bf16.mxu0 0
    %1046 = vmatpush1.bf16.msra.mxu0 0
    %1047 = vmatprep.subr.bf16.mxu0 0
    %1048 = vmatpush1.bf16.msra.mxu0 0
    %1049 = vmatprep.subr.bf16.mxu0 0
    %1050 = vmatpush1.bf16.msra.mxu0 0
    %1051 = vmatprep.subr.bf16.mxu0 0
    %1052 = vmatpush1.bf16.msra.mxu0 0
    %1053 = vmatprep.subr.bf16.mxu0 0
    %1054 = vmatpush1.bf16.msra.mxu0 0
    %1055 = vmatprep.subr.bf16.mxu0 0
    %1056 = vmatpush1.bf16.msra.mxu0 0
    %1057 = vmatprep.subr.bf16.mxu0 0
    %1058 = vmatpush1.bf16.msra.mxu0 0
    %1059 = vmatprep.subr.bf16.mxu0 0
    %1060 = vmatpush1.bf16.msra.mxu0 0
    %1061 = vmatprep.subr.bf16.mxu0 0
    %1062 = vmatpush1.bf16.msra.mxu0 0
    %1063 = vmatprep.subr.bf16.mxu0 0
    %1064 = vmatpush1.bf16.msra.mxu0 0
    %1065 = vmatprep.mubr.bf16.mxu0 0
    %1066 = vmatmul.mubr.bf16.gmra.mrb[0].mxu0 %v1031
    %v1067 = vpop.f32.mrb[0].mxu0
    %v1068 = vadd.f32 %v943, %v1067
    %v1069 = vpop.f32.mrb[0].mxu0
    %v1070 = vadd.f32 %v947, %v1069
    %v1071 = vpop.f32.mrb[0].mxu0
    %v1072 = vpop.f32.mrb[0].mxu0
    %1073 = vdwg.mxu0
    %1074 = vmatprep.subr.bf16.mxu0 %v1009
    %1075 = vmatpush1.bf16.msra.mxu0 %v1008
    %1076 = vmatprep.subr.bf16.mxu0 %v1015
    %1077 = vmatpush1.bf16.msra.mxu0 %v1014
    %1078 = vmatprep.subr.bf16.mxu0 0
    %1079 = vmatpush1.bf16.msra.mxu0 0
    %1080 = vmatprep.subr.bf16.mxu0 0
    %1081 = vmatpush1.bf16.msra.mxu0 0
    %1082 = vmatprep.subr.bf16.mxu0 0
    %1083 = vmatpush1.bf16.msra.mxu0 0
    %1084 = vmatprep.subr.bf16.mxu0 0
    %1085 = vmatpush1.bf16.msra.mxu0 0
    %1086 = vmatprep.subr.bf16.mxu0 0
    %1087 = vmatpush1.bf16.msra.mxu0 0
    %1088 = vmatprep.subr.bf16.mxu0 0
    %1089 = vmatpush1.bf16.msra.mxu0 0
    %1090 = vmatprep.subr.bf16.mxu0 0
    %1091 = vmatpush1.bf16.msra.mxu0 0
    %1092 = vmatprep.subr.bf16.mxu0 0
    %1093 = vmatpush1.bf16.msra.mxu0 0
    %1094 = vmatprep.subr.bf16.mxu0 0
    %1095 = vmatpush1.bf16.msra.mxu0 0
    %1096 = vmatprep.subr.bf16.mxu0 0
    %1097 = vmatpush1.bf16.msra.mxu0 0
    %1098 = vmatprep.subr.bf16.mxu0 0
    %1099 = vmatpush1.bf16.msra.mxu0 0
    %1100 = vmatprep.subr.bf16.mxu0 0
    %1101 = vmatpush1.bf16.msra.mxu0 0
    %1102 = vmatprep.subr.bf16.mxu0 0
    %1103 = vmatpush1.bf16.msra.mxu0 0
    %1104 = vmatprep.subr.bf16.mxu0 0
    %1105 = vmatpush1.bf16.msra.mxu0 0
    %1106 = vmatprep.mubr.bf16.mxu0 0
    %1107 = vmatmul.mubr.bf16.gmra.mrb[0].mxu0 %v1031
    %v1108 = vpop.f32.mrb[0].mxu0
    %v1109 = vadd.f32 %v951, %v1108
    %v1110 = vpop.f32.mrb[0].mxu0
    %v1111 = vadd.f32 %v955, %v1110
    %v1112 = vpop.f32.mrb[0].mxu0
    %v1113 = vpop.f32.mrb[0].mxu0
    %1114 = vdwg.mxu0
    %1115 = vmatprep.subr.bf16.mxu0 %v1011
    %1116 = vmatpush1.bf16.msra.mxu0 %v1010
    %1117 = vmatprep.subr.bf16.mxu0 %v1017
    %1118 = vmatpush1.bf16.msra.mxu0 %v1016
    %1119 = vmatprep.subr.bf16.mxu0 0
    %1120 = vmatpush1.bf16.msra.mxu0 0
    %1121 = vmatprep.subr.bf16.mxu0 0
    %1122 = vmatpush1.bf16.msra.mxu0 0
    %1123 = vmatprep.subr.bf16.mxu0 0
    %1124 = vmatpush1.bf16.msra.mxu0 0
    %1125 = vmatprep.subr.bf16.mxu0 0
    %1126 = vmatpush1.bf16.msra.mxu0 0
    %1127 = vmatprep.subr.bf16.mxu0 0
    %1128 = vmatpush1.bf16.msra.mxu0 0
    %1129 = vmatprep.subr.bf16.mxu0 0
    %1130 = vmatpush1.bf16.msra.mxu0 0
    %1131 = vmatprep.subr.bf16.mxu0 0
    %1132 = vmatpush1.bf16.msra.mxu0 0
    %1133 = vmatprep.subr.bf16.mxu0 0
    %1134 = vmatpush1.bf16.msra.mxu0 0
    %1135 = vmatprep.subr.bf16.mxu0 0
    %1136 = vmatpush1.bf16.msra.mxu0 0
    %1137 = vmatprep.subr.bf16.mxu0 0
    %1138 = vmatpush1.bf16.msra.mxu0 0
    %1139 = vmatprep.subr.bf16.mxu0 0
    %1140 = vmatpush1.bf16.msra.mxu0 0
    %1141 = vmatprep.subr.bf16.mxu0 0
    %1142 = vmatpush1.bf16.msra.mxu0 0
    %1143 = vmatprep.subr.bf16.mxu0 0
    %1144 = vmatpush1.bf16.msra.mxu0 0
    %1145 = vmatprep.subr.bf16.mxu0 0
    %1146 = vmatpush1.bf16.msra.mxu0 0
    %1147 = vmatprep.mubr.bf16.mxu0 0
    %1148 = vmatmul.mubr.bf16.gmra.mrb[0].mxu0 %v1031
    %v1149 = vpop.f32.mrb[0].mxu0
    %v1150 = vadd.f32 %v959, %v1149
    %v1151 = vpop.f32.mrb[0].mxu0
    %v1152 = vadd.f32 %v963, %v1151
    %v1153 = vpop.f32.mrb[0].mxu0
    %v1154 = vpop.f32.mrb[0].mxu0
    %1155 = vdwg.mxu0
    %v1156 = vsel %vm714, %v399, 0.0
    %1157 = vadd.xlane.f32.xlu0 %v1156
    %v1158 = vpop.xlane.xlu0 %1157
    %v1159 = vsel %vm714, %v400, 0.0
    %1160 = vadd.xlane.f32.xlu0 %v1159
    %v1161 = vpop.xlane.xlu0 %1160
    %v1162 = vsel %vm714, %v401, 0.0
    %1163 = vadd.xlane.f32.xlu0 %v1162
    %v1164 = vpop.xlane.xlu0 %1163
    %v1165 = vsel %vm714, %v402, 0.0
    %1166 = vadd.xlane.f32.xlu0 %v1165
    %v1167 = vpop.xlane.xlu0 %1166
    %v1168 = vsel %vm714, %v403, 0.0
    %1169 = vadd.xlane.f32.xlu0 %v1168
    %v1170 = vpop.xlane.xlu0 %1169
    %v1171 = vsel %vm714, %v404, 0.0
    %1172 = vadd.xlane.f32.xlu0 %v1171
    %v1173 = vpop.xlane.xlu0 %1172
    %v1174 = vsel %vm714, %v405, 0.0
    %1175 = vadd.xlane.f32.xlu0 %v1174
    %v1176 = vpop.xlane.xlu0 %1175
    %v1177 = vsel %vm714, %v406, 0.0
    %1178 = vadd.xlane.f32.xlu0 %v1177
    %v1179 = vpop.xlane.xlu0 %1178
    %v1180 = vsel %vm714, %v407, 0.0
    %1181 = vadd.xlane.f32.xlu0 %v1180
    %v1182 = vpop.xlane.xlu0 %1181
    %v1183 = vsel %vm714, %v408, 0.0
    %1184 = vadd.xlane.f32.xlu0 %v1183
    %v1185 = vpop.xlane.xlu0 %1184
    %v1186 = vsel %vm714, %v409, 0.0
    %1187 = vadd.xlane.f32.xlu0 %v1186
    %v1188 = vpop.xlane.xlu0 %1187
    %v1189 = vsel %vm714, %v410, 0.0
    %1190 = vadd.xlane.f32.xlu0 %v1189
    %v1191 = vpop.xlane.xlu0 %1190
    %v1192 = vsel %vm714, %v411, 0.0
    %1193 = vadd.xlane.f32.xlu0 %v1192
    %v1194 = vpop.xlane.xlu0 %1193
    %v1195 = vsel %vm714, %v412, 0.0
    %1196 = vadd.xlane.f32.xlu0 %v1195
    %v1197 = vpop.xlane.xlu0 %1196
    %v1198 = vsel %vm714, %v413, 0.0
    %1199 = vadd.xlane.f32.xlu0 %v1198
    %v1200 = vpop.xlane.xlu0 %1199
    %v1201 = vsel %vm714, %v414, 0.0
    %1202 = vadd.xlane.f32.xlu0 %v1201
    %v1203 = vpop.xlane.xlu0 %1202
    %v1204 = vrcp.pop 32.0
    %v1205 = vmul.f32 %v1158, %v1204
    %v1206 = vmul.f32 %v1161, %v1204
    %v1207 = vmul.f32 %v1164, %v1204
    %v1208 = vmul.f32 %v1167, %v1204
    %v1209 = vmul.f32 %v1170, %v1204
    %v1210 = vmul.f32 %v1173, %v1204
    %v1211 = vmul.f32 %v1176, %v1204
    %v1212 = vmul.f32 %v1179, %v1204
    %v1213 = vmul.f32 %v1182, %v1204
    %v1214 = vmul.f32 %v1185, %v1204
    %v1215 = vmul.f32 %v1188, %v1204
    %v1216 = vmul.f32 %v1191, %v1204
    %v1217 = vmul.f32 %v1194, %v1204
    %v1218 = vmul.f32 %v1197, %v1204
    %v1219 = vmul.f32 %v1200, %v1204
    %v1220 = vmul.f32 %v1203, %v1204
    %v1221 = vsub.f32 %v399, %v1205
    %v1222 = vsub.f32 %v400, %v1206
    %v1223 = vsub.f32 %v401, %v1207
    %v1224 = vsub.f32 %v402, %v1208
    %v1225 = vsub.f32 %v403, %v1209
    %v1226 = vsub.f32 %v404, %v1210
    %v1227 = vsub.f32 %v405, %v1211
    %v1228 = vsub.f32 %v406, %v1212
    %v1229 = vsub.f32 %v407, %v1213
    %v1230 = vsub.f32 %v408, %v1214
    %v1231 = vsub.f32 %v409, %v1215
    %v1232 = vsub.f32 %v410, %v1216
    %v1233 = vsub.f32 %v411, %v1217
    %v1234 = vsub.f32 %v412, %v1218
    %v1235 = vsub.f32 %v413, %v1219
    %v1236 = vsub.f32 %v414, %v1220
    %v1237 = vmul.f32 %v1221, %v1221
    %v1238 = vmul.f32 %v1222, %v1222
    %v1239 = vmul.f32 %v1223, %v1223
    %v1240 = vmul.f32 %v1224, %v1224
    %v1241 = vmul.f32 %v1225, %v1225
    %v1242 = vmul.f32 %v1226, %v1226
    %v1243 = vmul.f32 %v1227, %v1227
    %v1244 = vmul.f32 %v1228, %v1228
    %v1245 = vmul.f32 %v1229, %v1229
    %v1246 = vmul.f32 %v1230, %v1230
    %v1247 = vmul.f32 %v1231, %v1231
    %v1248 = vmul.f32 %v1232, %v1232
    %v1249 = vmul.f32 %v1233, %v1233
    %v1250 = vmul.f32 %v1234, %v1234
    %v1251 = vmul.f32 %v1235, %v1235
    %v1252 = vmul.f32 %v1236, %v1236
    %v1253 = vsel %vm714, %v1237, 0.0
    %1254 = vadd.xlane.f32.xlu0 %v1253
    %v1255 = vpop.xlane.xlu0 %1254
    %v1256 = vsel %vm714, %v1238, 0.0
    %1257 = vadd.xlane.f32.xlu0 %v1256
    %v1258 = vpop.xlane.xlu0 %1257
    %v1259 = vsel %vm714, %v1239, 0.0
    %1260 = vadd.xlane.f32.xlu0 %v1259
    %v1261 = vpop.xlane.xlu0 %1260
    %v1262 = vsel %vm714, %v1240, 0.0
    %1263 = vadd.xlane.f32.xlu0 %v1262
    %v1264 = vpop.xlane.xlu0 %1263
    %v1265 = vsel %vm714, %v1241, 0.0
    %1266 = vadd.xlane.f32.xlu0 %v1265
    %v1267 = vpop.xlane.xlu0 %1266
    %v1268 = vsel %vm714, %v1242, 0.0
    %1269 = vadd.xlane.f32.xlu0 %v1268
    %v1270 = vpop.xlane.xlu0 %1269
    %v1271 = vsel %vm714, %v1243, 0.0
    %1272 = vadd.xlane.f32.xlu0 %v1271
    %v1273 = vpop.xlane.xlu0 %1272
    %v1274 = vsel %vm714, %v1244, 0.0
    %1275 = vadd.xlane.f32.xlu0 %v1274
    %v1276 = vpop.xlane.xlu0 %1275
    %v1277 = vsel %vm714, %v1245, 0.0
    %1278 = vadd.xlane.f32.xlu0 %v1277
    %v1279 = vpop.xlane.xlu0 %1278
    %v1280 = vsel %vm714, %v1246, 0.0
    %1281 = vadd.xlane.f32.xlu0 %v1280
    %v1282 = vpop.xlane.xlu0 %1281
    %v1283 = vsel %vm714, %v1247, 0.0
    %1284 = vadd.xlane.f32.xlu0 %v1283
    %v1285 = vpop.xlane.xlu0 %1284
    %v1286 = vsel %vm714, %v1248, 0.0
    %1287 = vadd.xlane.f32.xlu0 %v1286
    %v1288 = vpop.xlane.xlu0 %1287
    %v1289 = vsel %vm714, %v1249, 0.0
    %1290 = vadd.xlane.f32.xlu0 %v1289
    %v1291 = vpop.xlane.xlu0 %1290
    %v1292 = vsel %vm714, %v1250, 0.0
    %1293 = vadd.xlane.f32.xlu0 %v1292
    %v1294 = vpop.xlane.xlu0 %1293
    %v1295 = vsel %vm714, %v1251, 0.0
    %1296 = vadd.xlane.f32.xlu0 %v1295
    %v1297 = vpop.xlane.xlu0 %1296
    %v1298 = vsel %vm714, %v1252, 0.0
    %1299 = vadd.xlane.f32.xlu0 %v1298
    %v1300 = vpop.xlane.xlu0 %1299
    %v1301 = vmul.f32 %v1255, %v1204
    %v1302 = vmul.f32 %v1258, %v1204
    %v1303 = vmul.f32 %v1261, %v1204
    %v1304 = vmul.f32 %v1264, %v1204
    %v1305 = vmul.f32 %v1267, %v1204
    %v1306 = vmul.f32 %v1270, %v1204
    %v1307 = vmul.f32 %v1273, %v1204
    %v1308 = vmul.f32 %v1276, %v1204
    %v1309 = vmul.f32 %v1279, %v1204
    %v1310 = vmul.f32 %v1282, %v1204
    %v1311 = vmul.f32 %v1285, %v1204
    %v1312 = vmul.f32 %v1288, %v1204
    %v1313 = vmul.f32 %v1291, %v1204
    %v1314 = vmul.f32 %v1294, %v1204
    %v1315 = vmul.f32 %v1297, %v1204
    %v1316 = vmul.f32 %v1300, %v1204
    %v1317 = vadd.f32 %v1301, 1e-06
    %v1318 = vadd.f32 %v1302, 1e-06
    %v1319 = vadd.f32 %v1303, 1e-06
    %v1320 = vadd.f32 %v1304, 1e-06
    %v1321 = vadd.f32 %v1305, 1e-06
    %v1322 = vadd.f32 %v1306, 1e-06
    %v1323 = vadd.f32 %v1307, 1e-06
    %v1324 = vadd.f32 %v1308, 1e-06
    %v1325 = vadd.f32 %v1309, 1e-06
    %v1326 = vadd.f32 %v1310, 1e-06
    %v1327 = vadd.f32 %v1311, 1e-06
    %v1328 = vadd.f32 %v1312, 1e-06
    %v1329 = vadd.f32 %v1313, 1e-06
    %v1330 = vadd.f32 %v1314, 1e-06
    %v1331 = vadd.f32 %v1315, 1e-06
    %v1332 = vadd.f32 %v1316, 1e-06
    %v1333 = vrsqrt.pop %v1317
    %v1334 = vrsqrt.pop %v1318
    %v1335 = vrsqrt.pop %v1319
    %v1336 = vrsqrt.pop %v1320
    %v1337 = vrsqrt.pop %v1321
    %v1338 = vrsqrt.pop %v1322
    %v1339 = vrsqrt.pop %v1323
    %v1340 = vrsqrt.pop %v1324
    %v1341 = vrsqrt.pop %v1325
    %v1342 = vrsqrt.pop %v1326
    %v1343 = vrsqrt.pop %v1327
    %v1344 = vrsqrt.pop %v1328
    %v1345 = vrsqrt.pop %v1329
    %v1346 = vrsqrt.pop %v1330
    %v1347 = vrsqrt.pop %v1331
    %v1348 = vrsqrt.pop %v1332
    %v1349 = vmul.f32 %v1221, %v1333
    %v1350 = vmul.f32 %v1222, %v1334
    %v1351 = vmul.f32 %v1223, %v1335
    %v1352 = vmul.f32 %v1224, %v1336
    %v1353 = vmul.f32 %v1225, %v1337
    %v1354 = vmul.f32 %v1226, %v1338
    %v1355 = vmul.f32 %v1227, %v1339
    %v1356 = vmul.f32 %v1228, %v1340
    %v1357 = vmul.f32 %v1229, %v1341
    %v1358 = vmul.f32 %v1230, %v1342
    %v1359 = vmul.f32 %v1231, %v1343
    %v1360 = vmul.f32 %v1232, %v1344
    %v1361 = vmul.f32 %v1233, %v1345
    %v1362 = vmul.f32 %v1234, %v1346
    %v1363 = vmul.f32 %v1235, %v1347
    %v1364 = vmul.f32 %v1236, %v1348
    %v1365 = vadd.f32 %v1068, 1.0
    %v1366 = vlaneseq
    %v1367 = vshrl.u32 %v1366, 7
    %v1368 = vsub.s32 0, %v1367
    %v1369 = vrot.slane %v1365, %v1368
    %1371 = vrot.lane.b32.xlu0 %v1369, 96
    %v1372 = vpop.permute.xlu0 %1371
    %v1374 = vmul.f32 %v1349, %v1372
    %v1375 = vmul.f32 %v1350, %v1372
    %v1376 = vmul.f32 %v1351, %v1372
    %v1377 = vmul.f32 %v1352, %v1372
    %v1378 = vmul.f32 %v1353, %v1372
    %v1379 = vmul.f32 %v1354, %v1372
    %v1380 = vmul.f32 %v1355, %v1372
    %v1381 = vmul.f32 %v1356, %v1372
    %v1382 = vlaneseq
    %v1383 = vshrl.u32 %v1382, 7
    %v1384 = vsub.s32 0, %v1383
    %v1385 = vrot.slane %v1068, %v1384
    %v1386 = vadd.f32 %v1374, %v1385
    %v1387 = vadd.f32 %v1375, %v1385
    %v1388 = vadd.f32 %v1376, %v1385
    %v1389 = vadd.f32 %v1377, %v1385
    %v1390 = vadd.f32 %v1378, %v1385
    %v1391 = vadd.f32 %v1379, %v1385
    %v1392 = vadd.f32 %v1380, %v1385
    %v1393 = vadd.f32 %v1381, %v1385
    %v1394 = vlaneseq
    %v1395 = vshrl.u32 %v1394, 7
    %v1396 = vsub.s32 1, %v1395
    %v1397 = vrot.slane %v1365, %v1396
    %1399 = vrot.lane.b32.xlu0 %v1397, 96
    %v1400 = vpop.permute.xlu0 %1399
    %v1402 = vmul.f32 %v1357, %v1400
    %v1403 = vmul.f32 %v1358, %v1400
    %v1404 = vmul.f32 %v1359, %v1400
    %v1405 = vmul.f32 %v1360, %v1400
    %v1406 = vmul.f32 %v1361, %v1400
    %v1407 = vmul.f32 %v1362, %v1400
    %v1408 = vmul.f32 %v1363, %v1400
    %v1409 = vmul.f32 %v1364, %v1400
    %v1410 = vlaneseq
    %v1411 = vshrl.u32 %v1410, 7
    %v1412 = vsub.s32 1, %v1411
    %v1413 = vrot.slane %v1068, %v1412
    %v1414 = vadd.f32 %v1402, %v1413
    %v1415 = vadd.f32 %v1403, %v1413
    %v1416 = vadd.f32 %v1404, %v1413
    %v1417 = vadd.f32 %v1405, %v1413
    %v1418 = vadd.f32 %v1406, %v1413
    %v1419 = vadd.f32 %v1407, %v1413
    %v1420 = vadd.f32 %v1408, %v1413
    %v1421 = vadd.f32 %v1409, %v1413
    %v1422 = vsel %vm714, %v488, 0.0
    %1423 = vadd.xlane.f32.xlu0 %v1422
    %v1424 = vpop.xlane.xlu0 %1423
    %v1425 = vsel %vm714, %v491, 0.0
    %1426 = vadd.xlane.f32.xlu0 %v1425
    %v1427 = vpop.xlane.xlu0 %1426
    %v1428 = vmul.f32 %v1424, %v1204
    %v1429 = vmul.f32 %v1427, %v1204
    %v1430 = vsub.f32 %v488, %v1428
    %v1431 = vsub.f32 %v491, %v1429
    %v1432 = vmul.f32 %v1430, %v1430
    %v1433 = vmul.f32 %v1431, %v1431
    %v1434 = vsel %vm714, %v1432, 0.0
    %1435 = vadd.xlane.f32.xlu0 %v1434
    %v1436 = vpop.xlane.xlu0 %1435
    %v1437 = vsel %vm714, %v1433, 0.0
    %1438 = vadd.xlane.f32.xlu0 %v1437
    %v1439 = vpop.xlane.xlu0 %1438
    %v1440 = vmul.f32 %v1436, %v1204
    %v1441 = vmul.f32 %v1439, %v1204
    %v1442 = vadd.f32 %v1440, 1e-06
    %v1443 = vadd.f32 %v1441, 1e-06
    %v1444 = vrsqrt.pop %v1442
    %v1445 = vrsqrt.pop %v1443
    %v1446 = vmul.f32 %v1430, %v1444
    %v1447 = vmul.f32 %v1431, %v1445
    %v1448 = vadd.f32 %v1070, 1.0
    %v1449 = vlaneseq
    %v1450 = vshrl.u32 %v1449, 7
    %v1451 = vsub.s32 0, %v1450
    %v1452 = vrot.slane %v1448, %v1451
    %1454 = vrot.lane.b32.xlu0 %v1452, 32
    %v1455 = vpop.permute.xlu0 %1454
    %v1457 = vmul.f32 %v1446, %v1455
    %v1458 = vlaneseq
    %v1459 = vshrl.u32 %v1458, 7
    %v1460 = vsub.s32 0, %v1459
    %v1461 = vrot.slane %v1070, %v1460
    %1463 = vrot.lane.b32.xlu0 %v1461, 64
    %v1464 = vpop.permute.xlu0 %1463
    %v1466 = vadd.f32 %v1457, %v1464
    %v1467 = vlaneseq
    %v1468 = vshrl.u32 %v1467, 7
    %v1469 = vsub.s32 1, %v1468
    %v1470 = vrot.slane %v1448, %v1469
    %1472 = vrot.lane.b32.xlu0 %v1470, 32
    %v1473 = vpop.permute.xlu0 %1472
    %v1475 = vmul.f32 %v1447, %v1473
    %v1476 = vlaneseq
    %v1477 = vshrl.u32 %v1476, 7
    %v1478 = vsub.s32 1, %v1477
    %v1479 = vrot.slane %v1070, %v1478
    %1481 = vrot.lane.b32.xlu0 %v1479, 64
    %v1482 = vpop.permute.xlu0 %1481
    %v1484 = vadd.f32 %v1475, %v1482
    %v1485 = vld [vmem:[%s39] sm:$0xf]
    %v1486 = vld [vmem:[%s39 + $0x4] sm:$0xf]
    %v1487 = vld [vmem:[%s39 + $0x8] sm:$0xf]
    %v1488 = vld [vmem:[%s39 + $0xc] sm:$0xf]
    %v1489 = vpack.c.bf16 %v1387, %v1386
    %v1490 = vpack.c.bf16 %v1389, %v1388
    %v1491 = vpack.c.bf16 %v1391, %v1390
    %v1492 = vpack.c.bf16 %v1393, %v1392
    %v1493 = vpack.c.bf16 %v1415, %v1414
    %v1494 = vpack.c.bf16 %v1417, %v1416
    %v1495 = vpack.c.bf16 %v1419, %v1418
    %v1496 = vpack.c.bf16 %v1421, %v1420
    %v1497 = vld [vmem:[%s41] sm:$0x1]
    %v1499 = vlaneseq
    %v1500 = vshrl.u32 %v1499, 7
    %v1501 = vsub.s32 0, %v1500
    %v1502 = vrot.slane %v1497, %v1501
    %v1508 = vunpack.c.l.b16 %v1485
    %v1509 = vunpack.c.l.b16 %v1486
    %v1510 = vunpack.c.l.b16 %v1487
    %v1511 = vunpack.c.l.b16 %v1488
    %v1512 = vpack.c.b16 %v1509, %v1508
    %v1513 = vpack.c.b16 %v1511, %v1510
    %v1517 = vsel %vm714, %v1489, 0
    %v1520 = vsel %vm714, %v1490, 0
    %v1523 = vsel %vm714, %v1491, 0
    %v1526 = vsel %vm714, %v1492, 0
    %v1529 = vsel %vm714, %v1493, 0
    %v1532 = vsel %vm714, %v1494, 0
    %v1535 = vsel %vm714, %v1495, 0
    %v1538 = vsel %vm714, %v1496, 0
    %1540 = vmatprep.subr.bf16.mxu0 0
    %1541 = vmatpush1.bf16.msra.mxu0 %v1512
    %1542 = vmatprep.subr.bf16.mxu0 0
    %1543 = vmatpush1.bf16.msra.mxu0 %v1513
    %1544 = vmatprep.subr.bf16.mxu0 0
    %1545 = vmatpush1.bf16.msra.mxu0 0
    %1546 = vmatprep.subr.bf16.mxu0 0
    %1547 = vmatpush1.bf16.msra.mxu0 0
    %1548 = vmatprep.subr.bf16.mxu0 0
    %1549 = vmatpush1.bf16.msra.mxu0 0
    %1550 = vmatprep.subr.bf16.mxu0 0
    %1551 = vmatpush1.bf16.msra.mxu0 0
    %1552 = vmatprep.subr.bf16.mxu0 0
    %1553 = vmatpush1.bf16.msra.mxu0 0
    %1554 = vmatprep.subr.bf16.mxu0 0
    %1555 = vmatpush1.bf16.msra.mxu0 0
    %1556 = vmatprep.subr.bf16.mxu0 0
    %1557 = vmatpush1.bf16.msra.mxu0 0
    %1558 = vmatprep.subr.bf16.mxu0 0
    %1559 = vmatpush1.bf16.msra.mxu0 0
    %1560 = vmatprep.subr.bf16.mxu0 0
    %1561 = vmatpush1.bf16.msra.mxu0 0
    %1562 = vmatprep.subr.bf16.mxu0 0
    %1563 = vmatpush1.bf16.msra.mxu0 0
    %1564 = vmatprep.subr.bf16.mxu0 0
    %1565 = vmatpush1.bf16.msra.mxu0 0
    %1566 = vmatprep.subr.bf16.mxu0 0
    %1567 = vmatpush1.bf16.msra.mxu0 0
    %1568 = vmatprep.subr.bf16.mxu0 0
    %1569 = vmatpush1.bf16.msra.mxu0 0
    %1570 = vmatprep.subr.bf16.mxu0 0
    %1571 = vmatpush1.bf16.msra.mxu0 0
    %1572 = vmatprep.mubr.bf16.mxu0 0
    %1573 = vmatmul.mubr.bf16.gmra.mrb[0].mxu0 %v1517
    %v1574 = vpop.f32.mrb[0].mxu0
    %v1575 = vadd.f32 %v1502, %v1574
    %v1576 = vpop.f32.mrb[0].mxu0
    %v1577 = vpop.f32.mrb[0].mxu0
    %v1578 = vadd.f32 %v1502, %v1577
    %v1579 = vpop.f32.mrb[0].mxu0
    %1580 = vmatprep.mubr.bf16.mxu0 0
    %1581 = vmatmul.mubr.bf16.gmra.mrb[0].mxu0 %v1520
    %v1582 = vpop.f32.mrb[0].mxu0
    %v1583 = vadd.f32 %v1502, %v1582
    %v1584 = vpop.f32.mrb[0].mxu0
    %v1585 = vpop.f32.mrb[0].mxu0
    %v1586 = vadd.f32 %v1502, %v1585
    %v1587 = vpop.f32.mrb[0].mxu0
    %1588 = vmatprep.mubr.bf16.mxu0 0
    %1589 = vmatmul.mubr.bf16.gmra.mrb[0].mxu0 %v1523
    %v1590 = vpop.f32.mrb[0].mxu0
    %v1591 = vadd.f32 %v1502, %v1590
    %v1592 = vpop.f32.mrb[0].mxu0
    %v1593 = vpop.f32.mrb[0].mxu0
    %v1594 = vadd.f32 %v1502, %v1593
    %v1595 = vpop.f32.mrb[0].mxu0
    %1596 = vmatprep.mubr.bf16.mxu0 0
    %1597 = vmatmul.mubr.bf16.gmra.mrb[0].mxu0 %v1526
    %v1598 = vpop.f32.mrb[0].mxu0
    %v1599 = vadd.f32 %v1502, %v1598
    %v1600 = vpop.f32.mrb[0].mxu0
    %v1601 = vpop.f32.mrb[0].mxu0
    %v1602 = vadd.f32 %v1502, %v1601
    %v1603 = vpop.f32.mrb[0].mxu0
    %1604 = vmatprep.mubr.bf16.mxu0 0
    %1605 = vmatmul.mubr.bf16.gmra.mrb[0].mxu0 %v1529
    %v1606 = vpop.f32.mrb[0].mxu0
    %v1607 = vadd.f32 %v1502, %v1606
    %v1608 = vpop.f32.mrb[0].mxu0
    %v1609 = vpop.f32.mrb[0].mxu0
    %v1610 = vadd.f32 %v1502, %v1609
    %v1611 = vpop.f32.mrb[0].mxu0
    %1612 = vmatprep.mubr.bf16.mxu0 0
    %1613 = vmatmul.mubr.bf16.gmra.mrb[0].mxu0 %v1532
    %v1614 = vpop.f32.mrb[0].mxu0
    %v1615 = vadd.f32 %v1502, %v1614
    %v1616 = vpop.f32.mrb[0].mxu0
    %v1617 = vpop.f32.mrb[0].mxu0
    %v1618 = vadd.f32 %v1502, %v1617
    %v1619 = vpop.f32.mrb[0].mxu0
    %1620 = vmatprep.mubr.bf16.mxu0 0
    %1621 = vmatmul.mubr.bf16.gmra.mrb[0].mxu0 %v1535
    %v1622 = vpop.f32.mrb[0].mxu0
    %v1623 = vadd.f32 %v1502, %v1622
    %v1624 = vpop.f32.mrb[0].mxu0
    %v1625 = vpop.f32.mrb[0].mxu0
    %v1626 = vadd.f32 %v1502, %v1625
    %v1627 = vpop.f32.mrb[0].mxu0
    %1628 = vmatprep.mubr.bf16.mxu0 0
    %1629 = vmatmul.mubr.bf16.gmra.mrb[0].mxu0 %v1538
    %v1630 = vpop.f32.mrb[0].mxu0
    %v1631 = vadd.f32 %v1502, %v1630
    %v1632 = vpop.f32.mrb[0].mxu0
    %v1633 = vpop.f32.mrb[0].mxu0
    %v1634 = vadd.f32 %v1502, %v1633
    %v1635 = vpop.f32.mrb[0].mxu0
    %1636 = vdwg.mxu0
    %v1637 = vld [vmem:[%s43] sm:$0xf]
    %v1638 = vld [vmem:[%s43 + $0x4] sm:$0xf]
    %v1639 = vld [vmem:[%s43 + $0x8] sm:$0xf]
    %v1640 = vld [vmem:[%s43 + $0xc] sm:$0xf]
    %v1641 = vpack.c.bf16 %v1484, %v1466
    %v1642 = vld [vmem:[%s45] sm:$0x1]
    %v1644 = vlaneseq
    %v1645 = vshrl.u32 %v1644, 7
    %v1646 = vsub.s32 0, %v1645
    %v1647 = vrot.slane %v1642, %v1646
    %v1653 = vunpack.c.l.b16 %v1637
    %v1654 = vunpack.c.l.b16 %v1638
    %v1655 = vunpack.c.l.b16 %v1639
    %v1656 = vunpack.c.l.b16 %v1640
    %v1657 = vpack.c.b16 %v1654, %v1653
    %v1658 = vpack.c.b16 %v1656, %v1655
    %v1662 = vsel %vm714, %v1641, 0
    %1664 = vmatprep.subr.bf16.mxu0 0
    %1665 = vmatpush1.bf16.msra.mxu0 %v1657
    %1666 = vmatprep.subr.bf16.mxu0 0
    %1667 = vmatpush1.bf16.msra.mxu0 %v1658
    %1668 = vmatprep.subr.bf16.mxu0 0
    %1669 = vmatpush1.bf16.msra.mxu0 0
    %1670 = vmatprep.subr.bf16.mxu0 0
    %1671 = vmatpush1.bf16.msra.mxu0 0
    %1672 = vmatprep.subr.bf16.mxu0 0
    %1673 = vmatpush1.bf16.msra.mxu0 0
    %1674 = vmatprep.subr.bf16.mxu0 0
    %1675 = vmatpush1.bf16.msra.mxu0 0
    %1676 = vmatprep.subr.bf16.mxu0 0
    %1677 = vmatpush1.bf16.msra.mxu0 0
    %1678 = vmatprep.subr.bf16.mxu0 0
    %1679 = vmatpush1.bf16.msra.mxu0 0
    %1680 = vmatprep.subr.bf16.mxu0 0
    %1681 = vmatpush1.bf16.msra.mxu0 0
    %1682 = vmatprep.subr.bf16.mxu0 0
    %1683 = vmatpush1.bf16.msra.mxu0 0
    %1684 = vmatprep.subr.bf16.mxu0 0
    %1685 = vmatpush1.bf16.msra.mxu0 0
    %1686 = vmatprep.subr.bf16.mxu0 0
    %1687 = vmatpush1.bf16.msra.mxu0 0
    %1688 = vmatprep.subr.bf16.mxu0 0
    %1689 = vmatpush1.bf16.msra.mxu0 0
    %1690 = vmatprep.subr.bf16.mxu0 0
    %1691 = vmatpush1.bf16.msra.mxu0 0
    %1692 = vmatprep.subr.bf16.mxu0 0
    %1693 = vmatpush1.bf16.msra.mxu0 0
    %1694 = vmatprep.subr.bf16.mxu0 0
    %1695 = vmatpush1.bf16.msra.mxu0 0
    %1696 = vmatprep.mubr.bf16.mxu0 0
    %1697 = vmatmul.mubr.bf16.gmra.mrb[0].mxu0 %v1662
    %v1698 = vpop.f32.mrb[0].mxu0
    %v1699 = vadd.f32 %v1647, %v1698
    %v1700 = vpop.f32.mrb[0].mxu0
    %v1701 = vpop.f32.mrb[0].mxu0
    %v1702 = vadd.f32 %v1647, %v1701
    %v1703 = vpop.f32.mrb[0].mxu0
    %1704 = vdwg.mxu0
    %v1705 = vpack.c.bf16 %v1578, %v1575
    %v1706 = vpack.c.bf16 %v1586, %v1583
    %v1707 = vpack.c.bf16 %v1594, %v1591
    %v1708 = vpack.c.bf16 %v1602, %v1599
    %v1709 = vpack.c.bf16 %v1699, %v1699
    %1715 = vrot.lane.b32.xlu0 %v1705, 96
    %v1716 = vpop.permute.xlu0 %1715
    %1717 = vrot.lane.b32.xlu0 %v1706, 96
    %v1718 = vpop.permute.xlu0 %1717
    %1719 = vrot.lane.b32.xlu0 %v1707, 96
    %v1720 = vpop.permute.xlu0 %1719
    %1721 = vrot.lane.b32.xlu0 %v1708, 96
    %v1722 = vpop.permute.xlu0 %1721
    %1723 = vrot.lane.b32.xlu0 %v1709, 96
    %v1724 = vpop.permute.xlu0 %1723
    %v1726 = vsel %vm269, %v1705, 0
    %v1729 = vsel %vm269, %v1706, 0
    %v1732 = vsel %vm269, %v1707, 0
    %v1735 = vsel %vm269, %v1708, 0
    %v1738 = vsel %vm269, %v1709, 0
    %v1741 = vsel %vm269, %v1716, 0
    %v1744 = vsel %vm269, %v1718, 0
    %v1747 = vsel %vm269, %v1720, 0
    %v1750 = vsel %vm269, %v1722, 0
    %v1753 = vsel %vm269, %v1724, 0
    %1755 = vmatprep.subr.bf16.mxu0 0
    %1756 = vmatpush1.bf16.xpose.msra.mxu0 %v1741
    %1757 = vmatprep.subr.bf16.mxu0 0
    %1758 = vmatpush1.bf16.xpose.msra.mxu0 %v1744
    %1759 = vmatprep.subr.bf16.mxu0 0
    %1760 = vmatpush1.bf16.xpose.msra.mxu0 %v1747
    %1761 = vmatprep.subr.bf16.mxu0 0
    %1762 = vmatpush1.bf16.xpose.msra.mxu0 %v1750
    %1763 = vmatprep.subr.bf16.mxu0 0
    %1764 = vmatpush1.bf16.xpose.msra.mxu0 %v1753
    %1765 = vmatprep.subr.bf16.mxu0 0
    %1766 = vmatpush1.bf16.xpose.msra.mxu0 0
    %1767 = vmatprep.subr.bf16.mxu0 0
    %1768 = vmatpush1.bf16.xpose.msra.mxu0 0
    %1769 = vmatprep.subr.bf16.mxu0 0
    %1770 = vmatpush1.bf16.xpose.msra.mxu0 0
    %1771 = vmatprep.subr.bf16.mxu0 0
    %1772 = vmatpush1.bf16.xpose.msra.mxu0 0
    %1773 = vmatprep.subr.bf16.mxu0 0
    %1774 = vmatpush1.bf16.xpose.msra.mxu0 0
    %1775 = vmatprep.subr.bf16.mxu0 0
    %1776 = vmatpush1.bf16.xpose.msra.mxu0 0
    %1777 = vmatprep.subr.bf16.mxu0 0
    %1778 = vmatpush1.bf16.xpose.msra.mxu0 0
    %1779 = vmatprep.subr.bf16.mxu0 0
    %1780 = vmatpush1.bf16.xpose.msra.mxu0 0
    %1781 = vmatprep.subr.bf16.mxu0 0
    %1782 = vmatpush1.bf16.xpose.msra.mxu0 0
    %1783 = vmatprep.subr.bf16.mxu0 0
    %1784 = vmatpush1.bf16.xpose.msra.mxu0 0
    %1785 = vmatprep.subr.bf16.mxu0 0
    %1786 = vmatpush1.bf16.xpose.msra.mxu0 0
    %1787 = vmatprep.mubr.bf16.mxu0 0
    %1788 = vmatmul.mubr.bf16.gmra.mrb[0].mxu0 %v1726
    %v1789 = vpop.f32.mrb[0].mxu0
    %v1790 = vadd.f32 0.0, %v1789
    %v1791 = vpop.f32.mrb[0].mxu0
    %v1792 = vpop.f32.mrb[0].mxu0
    %v1793 = vadd.f32 0.0, %v1792
    %v1794 = vpop.f32.mrb[0].mxu0
    %1795 = vmatprep.mubr.bf16.mxu0 0
    %1796 = vmatmul.mubr.bf16.gmra.mrb[0].mxu0 %v1729
    %v1797 = vpop.f32.mrb[0].mxu0
    %v1798 = vadd.f32 0.0, %v1797
    %v1799 = vpop.f32.mrb[0].mxu0
    %v1800 = vpop.f32.mrb[0].mxu0
    %v1801 = vadd.f32 0.0, %v1800
    %v1802 = vpop.f32.mrb[0].mxu0
    %1803 = vmatprep.mubr.bf16.mxu0 0
    %1804 = vmatmul.mubr.bf16.gmra.mrb[0].mxu0 %v1732
    %v1805 = vpop.f32.mrb[0].mxu0
    %v1806 = vadd.f32 0.0, %v1805
    %v1807 = vpop.f32.mrb[0].mxu0
    %v1808 = vpop.f32.mrb[0].mxu0
    %v1809 = vadd.f32 0.0, %v1808
    %v1810 = vpop.f32.mrb[0].mxu0
    %1811 = vmatprep.mubr.bf16.mxu0 0
    %1812 = vmatmul.mubr.bf16.gmra.mrb[0].mxu0 %v1735
    %v1813 = vpop.f32.mrb[0].mxu0
    %v1814 = vadd.f32 0.0, %v1813
    %v1815 = vpop.f32.mrb[0].mxu0
    %v1816 = vpop.f32.mrb[0].mxu0
    %v1817 = vadd.f32 0.0, %v1816
    %v1818 = vpop.f32.mrb[0].mxu0
    %1819 = vmatprep.mubr.bf16.mxu0 0
    %1820 = vmatmul.mubr.bf16.gmra.mrb[0].mxu0 %v1738
    %v1821 = vpop.f32.mrb[0].mxu0
    %v1822 = vadd.f32 0.0, %v1821
    %v1823 = vpop.f32.mrb[0].mxu0
    %v1824 = vpop.f32.mrb[0].mxu0
    %v1825 = vpop.f32.mrb[0].mxu0
    %1826 = vdwg.mxu0
    %vm1827 = vcmask 588800
    %v1828 = vsel %vm1827, %v1790, -inf
    %1829 = vmax.xlane.f32.xlu0 %v1828
    %v1830 = vpop.xlane.xlu0 %1829
    %v1831 = vsel %vm1827, %v1793, -inf
    %1832 = vmax.xlane.f32.xlu0 %v1831
    %v1833 = vpop.xlane.xlu0 %1832
    %v1834 = vsel %vm1827, %v1798, -inf
    %1835 = vmax.xlane.f32.xlu0 %v1834
    %v1836 = vpop.xlane.xlu0 %1835
    %v1837 = vsel %vm1827, %v1801, -inf
    %1838 = vmax.xlane.f32.xlu0 %v1837
    %v1839 = vpop.xlane.xlu0 %1838
    %v1840 = vsel %vm1827, %v1806, -inf
    %1841 = vmax.xlane.f32.xlu0 %v1840
    %v1842 = vpop.xlane.xlu0 %1841
    %v1843 = vsel %vm1827, %v1809, -inf
    %1844 = vmax.xlane.f32.xlu0 %v1843
    %v1845 = vpop.xlane.xlu0 %1844
    %v1846 = vsel %vm1827, %v1814, -inf
    %1847 = vmax.xlane.f32.xlu0 %v1846
    %v1848 = vpop.xlane.xlu0 %1847
    %v1849 = vsel %vm1827, %v1817, -inf
    %1850 = vmax.xlane.f32.xlu0 %v1849
    %v1851 = vpop.xlane.xlu0 %1850
    %v1852 = vsel %vm1827, %v1822, -inf
    %1853 = vmax.xlane.f32.xlu0 %v1852
    %v1854 = vpop.xlane.xlu0 %1853
    %v1855 = vsub.f32 %v1790, %v1830
    %v1856 = vsub.f32 %v1793, %v1833
    %v1857 = vsub.f32 %v1798, %v1836
    %v1858 = vsub.f32 %v1801, %v1839
    %v1859 = vsub.f32 %v1806, %v1842
    %v1860 = vsub.f32 %v1809, %v1845
    %v1861 = vsub.f32 %v1814, %v1848
    %v1862 = vsub.f32 %v1817, %v1851
    %v1863 = vsub.f32 %v1822, %v1854
    %v1864 = vmul.f32 %v1855, 1.442695
    %v1865 = vpow.pop %v1864
    %v1866 = vmul.f32 %v1856, 1.442695
    %v1867 = vpow.pop %v1866
    %v1868 = vmul.f32 %v1857, 1.442695
    %v1869 = vpow.pop %v1868
    %v1870 = vmul.f32 %v1858, 1.442695
    %v1871 = vpow.pop %v1870
    %v1872 = vmul.f32 %v1859, 1.442695
    %v1873 = vpow.pop %v1872
    %v1874 = vmul.f32 %v1860, 1.442695
    %v1875 = vpow.pop %v1874
    %v1876 = vmul.f32 %v1861, 1.442695
    %v1877 = vpow.pop %v1876
    %v1878 = vmul.f32 %v1862, 1.442695
    %v1879 = vpow.pop %v1878
    %v1880 = vmul.f32 %v1863, 1.442695
    %v1881 = vpow.pop %v1880
    %v1882 = vsel %vm1827, %v1865, 0.0
    %1883 = vadd.xlane.f32.xlu0 %v1882
    %v1884 = vpop.xlane.xlu0 %1883
    %v1885 = vsel %vm1827, %v1867, 0.0
    %1886 = vadd.xlane.f32.xlu0 %v1885
    %v1887 = vpop.xlane.xlu0 %1886
    %v1888 = vsel %vm1827, %v1869, 0.0
    %1889 = vadd.xlane.f32.xlu0 %v1888
    %v1890 = vpop.xlane.xlu0 %1889
    %v1891 = vsel %vm1827, %v1871, 0.0
    %1892 = vadd.xlane.f32.xlu0 %v1891
    %v1893 = vpop.xlane.xlu0 %1892
    %v1894 = vsel %vm1827, %v1873, 0.0
    %1895 = vadd.xlane.f32.xlu0 %v1894
    %v1896 = vpop.xlane.xlu0 %1895
    %v1897 = vsel %vm1827, %v1875, 0.0
    %1898 = vadd.xlane.f32.xlu0 %v1897
    %v1899 = vpop.xlane.xlu0 %1898
    %v1900 = vsel %vm1827, %v1877, 0.0
    %1901 = vadd.xlane.f32.xlu0 %v1900
    %v1902 = vpop.xlane.xlu0 %1901
    %v1903 = vsel %vm1827, %v1879, 0.0
    %1904 = vadd.xlane.f32.xlu0 %v1903
    %v1905 = vpop.xlane.xlu0 %1904
    %v1906 = vsel %vm1827, %v1881, 0.0
    %1907 = vadd.xlane.f32.xlu0 %v1906
    %v1908 = vpop.xlane.xlu0 %1907
    %v1909 = vrcp.pop %v1884
    %v1910 = vrcp.pop %v1887
    %v1911 = vrcp.pop %v1890
    %v1912 = vrcp.pop %v1893
    %v1913 = vrcp.pop %v1896
    %v1914 = vrcp.pop %v1899
    %v1915 = vrcp.pop %v1902
    %v1916 = vrcp.pop %v1905
    %v1917 = vrcp.pop %v1908
    %v1918 = vpack.c.bf16 %v1867, %v1865
    %v1919 = vpack.c.bf16 %v1871, %v1869
    %v1920 = vpack.c.bf16 %v1875, %v1873
    %v1921 = vpack.c.bf16 %v1879, %v1877
    %v1922 = vpack.c.bf16 %v1881, %v1881
    %1923 = vrot.lane.b32.xlu0 %v1705, 64
    %v1924 = vpop.permute.xlu0 %1923
    %1925 = vrot.lane.b32.xlu0 %v1706, 64
    %v1926 = vpop.permute.xlu0 %1925
    %1927 = vrot.lane.b32.xlu0 %v1707, 64
    %v1928 = vpop.permute.xlu0 %1927
    %1929 = vrot.lane.b32.xlu0 %v1708, 64
    %v1930 = vpop.permute.xlu0 %1929
    %1931 = vrot.lane.b32.xlu0 %v1709, 64
    %v1932 = vpop.permute.xlu0 %1931
    %v1938 = vsel %vm1827, %v1918, 0
    %v1941 = vsel %vm1827, %v1919, 0
    %v1944 = vsel %vm1827, %v1920, 0
    %v1947 = vsel %vm1827, %v1921, 0
    %v1950 = vsel %vm1827, %v1922, 0
    %vm1952 = vcmask 1043456
    %v1954 = vsel %vm1952, %v1932, 0
    %1956 = vmatprep.subr.bf16.mxu0 0
    %1957 = vmatpush1.bf16.msra.mxu0 %v1924
    %1958 = vmatprep.subr.bf16.mxu0 0
    %1959 = vmatpush1.bf16.msra.mxu0 %v1926
    %1960 = vmatprep.subr.bf16.mxu0 0
    %1961 = vmatpush1.bf16.msra.mxu0 %v1928
    %1962 = vmatprep.subr.bf16.mxu0 0
    %1963 = vmatpush1.bf16.msra.mxu0 %v1930
    %1964 = vmatprep.subr.bf16.mxu0 0
    %1965 = vmatpush1.bf16.msra.mxu0 %v1954
    %1966 = vmatprep.subr.bf16.mxu0 0
    %1967 = vmatpush1.bf16.msra.mxu0 0
    %1968 = vmatprep.subr.bf16.mxu0 0
    %1969 = vmatpush1.bf16.msra.mxu0 0
    %1970 = vmatprep.subr.bf16.mxu0 0
    %1971 = vmatpush1.bf16.msra.mxu0 0
    %1972 = vmatprep.subr.bf16.mxu0 0
    %1973 = vmatpush1.bf16.msra.mxu0 0
    %1974 = vmatprep.subr.bf16.mxu0 0
    %1975 = vmatpush1.bf16.msra.mxu0 0
    %1976 = vmatprep.subr.bf16.mxu0 0
    %1977 = vmatpush1.bf16.msra.mxu0 0
    %1978 = vmatprep.subr.bf16.mxu0 0
    %1979 = vmatpush1.bf16.msra.mxu0 0
    %1980 = vmatprep.subr.bf16.mxu0 0
    %1981 = vmatpush1.bf16.msra.mxu0 0
    %1982 = vmatprep.subr.bf16.mxu0 0
    %1983 = vmatpush1.bf16.msra.mxu0 0
    %1984 = vmatprep.subr.bf16.mxu0 0
    %1985 = vmatpush1.bf16.msra.mxu0 0
    %1986 = vmatprep.subr.bf16.mxu0 0
    %1987 = vmatpush1.bf16.msra.mxu0 0
    %1988 = vmatprep.mubr.bf16.mxu0 0
    %1989 = vmatmul.mubr.bf16.gmra.mrb[0].mxu0 %v1938
    %v1990 = vpop.f32.mrb[0].mxu0
    %v1991 = vadd.f32 0.0, %v1990
    %v1992 = vpop.f32.mrb[0].mxu0
    %v1993 = vpop.f32.mrb[0].mxu0
    %v1994 = vadd.f32 0.0, %v1993
    %v1995 = vpop.f32.mrb[0].mxu0
    %1996 = vmatprep.mubr.bf16.mxu0 0
    %1997 = vmatmul.mubr.bf16.gmra.mrb[0].mxu0 %v1941
    %v1998 = vpop.f32.mrb[0].mxu0
    %v1999 = vadd.f32 0.0, %v1998
    %v2000 = vpop.f32.mrb[0].mxu0
    %v2001 = vpop.f32.mrb[0].mxu0
    %v2002 = vadd.f32 0.0, %v2001
    %v2003 = vpop.f32.mrb[0].mxu0
    %2004 = vmatprep.mubr.bf16.mxu0 0
    %2005 = vmatmul.mubr.bf16.gmra.mrb[0].mxu0 %v1944
    %v2006 = vpop.f32.mrb[0].mxu0
    %v2007 = vadd.f32 0.0, %v2006
    %v2008 = vpop.f32.mrb[0].mxu0
    %v2009 = vpop.f32.mrb[0].mxu0
    %v2010 = vadd.f32 0.0, %v2009
    %v2011 = vpop.f32.mrb[0].mxu0
    %2012 = vmatprep.mubr.bf16.mxu0 0
    %2013 = vmatmul.mubr.bf16.gmra.mrb[0].mxu0 %v1947
    %v2014 = vpop.f32.mrb[0].mxu0
    %v2015 = vadd.f32 0.0, %v2014
    %v2016 = vpop.f32.mrb[0].mxu0
    %v2017 = vpop.f32.mrb[0].mxu0
    %v2018 = vadd.f32 0.0, %v2017
    %v2019 = vpop.f32.mrb[0].mxu0
    %2020 = vmatprep.mubr.bf16.mxu0 0
    %2021 = vmatmul.mubr.bf16.gmra.mrb[0].mxu0 %v1950
    %v2022 = vpop.f32.mrb[0].mxu0
    %v2023 = vadd.f32 0.0, %v2022
    %v2024 = vpop.f32.mrb[0].mxu0
    %v2025 = vpop.f32.mrb[0].mxu0
    %v2026 = vpop.f32.mrb[0].mxu0
    %2027 = vdwg.mxu0
    %v2028 = vmul.f32 %v1991, %v1909
    %v2029 = vmul.f32 %v1994, %v1910
    %v2030 = vmul.f32 %v1999, %v1911
    %v2031 = vmul.f32 %v2002, %v1912
    %v2032 = vmul.f32 %v2007, %v1913
    %v2033 = vmul.f32 %v2010, %v1914
    %v2034 = vmul.f32 %v2015, %v1915
    %v2035 = vmul.f32 %v2018, %v1916
    %v2036 = vmul.f32 %v2023, %v1917
    %2037 = vrot.lane.b32.xlu0 %v1705, 112
    %v2038 = vpop.permute.xlu0 %2037
    %2039 = vrot.lane.b32.xlu0 %v1706, 112
    %v2040 = vpop.permute.xlu0 %2039
    %2041 = vrot.lane.b32.xlu0 %v1707, 112
    %v2042 = vpop.permute.xlu0 %2041
    %2043 = vrot.lane.b32.xlu0 %v1708, 112
    %v2044 = vpop.permute.xlu0 %2043
    %2045 = vrot.lane.b32.xlu0 %v1709, 112
    %v2046 = vpop.permute.xlu0 %2045
    %2047 = vrot.lane.b32.xlu0 %v1705, 80
    %v2048 = vpop.permute.xlu0 %2047
    %2049 = vrot.lane.b32.xlu0 %v1706, 80
    %v2050 = vpop.permute.xlu0 %2049
    %2051 = vrot.lane.b32.xlu0 %v1707, 80
    %v2052 = vpop.permute.xlu0 %2051
    %2053 = vrot.lane.b32.xlu0 %v1708, 80
    %v2054 = vpop.permute.xlu0 %2053
    %2055 = vrot.lane.b32.xlu0 %v1709, 80
    %v2056 = vpop.permute.xlu0 %2055
    %v2058 = vsel %vm269, %v2038, 0
    %v2061 = vsel %vm269, %v2040, 0
    %v2064 = vsel %vm269, %v2042, 0
    %v2067 = vsel %vm269, %v2044, 0
    %v2070 = vsel %vm269, %v2046, 0
    %v2073 = vsel %vm269, %v2048, 0
    %v2076 = vsel %vm269, %v2050, 0
    %v2079 = vsel %vm269, %v2052, 0
    %v2082 = vsel %vm269, %v2054, 0
    %v2085 = vsel %vm269, %v2056, 0
    %2087 = vmatprep.subr.bf16.mxu0 0
    %2088 = vmatpush1.bf16.xpose.msra.mxu0 %v2073
    %2089 = vmatprep.subr.bf16.mxu0 0
    %2090 = vmatpush1.bf16.xpose.msra.mxu0 %v2076
    %2091 = vmatprep.subr.bf16.mxu0 0
    %2092 = vmatpush1.bf16.xpose.msra.mxu0 %v2079
    %2093 = vmatprep.subr.bf16.mxu0 0
    %2094 = vmatpush1.bf16.xpose.msra.mxu0 %v2082
    %2095 = vmatprep.subr.bf16.mxu0 0
    %2096 = vmatpush1.bf16.xpose.msra.mxu0 %v2085
    %2097 = vmatprep.subr.bf16.mxu0 0
    %2098 = vmatpush1.bf16.xpose.msra.mxu0 0
    %2099 = vmatprep.subr.bf16.mxu0 0
    %2100 = vmatpush1.bf16.xpose.msra.mxu0 0
    %2101 = vmatprep.subr.bf16.mxu0 0
    %2102 = vmatpush1.bf16.xpose.msra.mxu0 0
    %2103 = vmatprep.subr.bf16.mxu0 0
    %2104 = vmatpush1.bf16.xpose.msra.mxu0 0
    %2105 = vmatprep.subr.bf16.mxu0 0
    %2106 = vmatpush1.bf16.xpose.msra.mxu0 0
    %2107 = vmatprep.subr.bf16.mxu0 0
    %2108 = vmatpush1.bf16.xpose.msra.mxu0 0
    %2109 = vmatprep.subr.bf16.mxu0 0
    %2110 = vmatpush1.bf16.xpose.msra.mxu0 0
    %2111 = vmatprep.subr.bf16.mxu0 0
    %2112 = vmatpush1.bf16.xpose.msra.mxu0 0
    %2113 = vmatprep.subr.bf16.mxu0 0
    %2114 = vmatpush1.bf16.xpose.msra.mxu0 0
    %2115 = vmatprep.subr.bf16.mxu0 0
    %2116 = vmatpush1.bf16.xpose.msra.mxu0 0
    %2117 = vmatprep.subr.bf16.mxu0 0
    %2118 = vmatpush1.bf16.xpose.msra.mxu0 0
    %2119 = vmatprep.mubr.bf16.mxu0 0
    %2120 = vmatmul.mubr.bf16.gmra.mrb[0].mxu0 %v2058
    %v2121 = vpop.f32.mrb[0].mxu0
    %v2122 = vadd.f32 0.0, %v2121
    %v2123 = vpop.f32.mrb[0].mxu0
    %v2124 = vpop.f32.mrb[0].mxu0
    %v2125 = vadd.f32 0.0, %v2124
    %v2126 = vpop.f32.mrb[0].mxu0
    %2127 = vmatprep.mubr.bf16.mxu0 0
    %2128 = vmatmul.mubr.bf16.gmra.mrb[0].mxu0 %v2061
    %v2129 = vpop.f32.mrb[0].mxu0
    %v2130 = vadd.f32 0.0, %v2129
    %v2131 = vpop.f32.mrb[0].mxu0
    %v2132 = vpop.f32.mrb[0].mxu0
    %v2133 = vadd.f32 0.0, %v2132
    %v2134 = vpop.f32.mrb[0].mxu0
    %2135 = vmatprep.mubr.bf16.mxu0 0
    %2136 = vmatmul.mubr.bf16.gmra.mrb[0].mxu0 %v2064
    %v2137 = vpop.f32.mrb[0].mxu0
    %v2138 = vadd.f32 0.0, %v2137
    %v2139 = vpop.f32.mrb[0].mxu0
    %v2140 = vpop.f32.mrb[0].mxu0
    %v2141 = vadd.f32 0.0, %v2140
    %v2142 = vpop.f32.mrb[0].mxu0
    %2143 = vmatprep.mubr.bf16.mxu0 0
    %2144 = vmatmul.mubr.bf16.gmra.mrb[0].mxu0 %v2067
    %v2145 = vpop.f32.mrb[0].mxu0
    %v2146 = vadd.f32 0.0, %v2145
    %v2147 = vpop.f32.mrb[0].mxu0
    %v2148 = vpop.f32.mrb[0].mxu0
    %v2149 = vadd.f32 0.0, %v2148
    %v2150 = vpop.f32.mrb[0].mxu0
    %2151 = vmatprep.mubr.bf16.mxu0 0
    %2152 = vmatmul.mubr.bf16.gmra.mrb[0].mxu0 %v2070
    %v2153 = vpop.f32.mrb[0].mxu0
    %v2154 = vadd.f32 0.0, %v2153
    %v2155 = vpop.f32.mrb[0].mxu0
    %v2156 = vpop.f32.mrb[0].mxu0
    %v2157 = vpop.f32.mrb[0].mxu0
    %2158 = vdwg.mxu0
    %v2159 = vsel %vm1827, %v2122, -inf
    %2160 = vmax.xlane.f32.xlu0 %v2159
    %v2161 = vpop.xlane.xlu0 %2160
    %v2162 = vsel %vm1827, %v2125, -inf
    %2163 = vmax.xlane.f32.xlu0 %v2162
    %v2164 = vpop.xlane.xlu0 %2163
    %v2165 = vsel %vm1827, %v2130, -inf
    %2166 = vmax.xlane.f32.xlu0 %v2165
    %v2167 = vpop.xlane.xlu0 %2166
    %v2168 = vsel %vm1827, %v2133, -inf
    %2169 = vmax.xlane.f32.xlu0 %v2168
    %v2170 = vpop.xlane.xlu0 %2169
    %v2171 = vsel %vm1827, %v2138, -inf
    %2172 = vmax.xlane.f32.xlu0 %v2171
    %v2173 = vpop.xlane.xlu0 %2172
    %v2174 = vsel %vm1827, %v2141, -inf
    %2175 = vmax.xlane.f32.xlu0 %v2174
    %v2176 = vpop.xlane.xlu0 %2175
    %v2177 = vsel %vm1827, %v2146, -inf
    %2178 = vmax.xlane.f32.xlu0 %v2177
    %v2179 = vpop.xlane.xlu0 %2178
    %v2180 = vsel %vm1827, %v2149, -inf
    %2181 = vmax.xlane.f32.xlu0 %v2180
    %v2182 = vpop.xlane.xlu0 %2181
    %v2183 = vsel %vm1827, %v2154, -inf
    %2184 = vmax.xlane.f32.xlu0 %v2183
    %v2185 = vpop.xlane.xlu0 %2184
    %v2186 = vsub.f32 %v2122, %v2161
    %v2187 = vsub.f32 %v2125, %v2164
    %v2188 = vsub.f32 %v2130, %v2167
    %v2189 = vsub.f32 %v2133, %v2170
    %v2190 = vsub.f32 %v2138, %v2173
    %v2191 = vsub.f32 %v2141, %v2176
    %v2192 = vsub.f32 %v2146, %v2179
    %v2193 = vsub.f32 %v2149, %v2182
    %v2194 = vsub.f32 %v2154, %v2185
    %v2195 = vmul.f32 %v2186, 1.442695
    %v2196 = vpow.pop %v2195
    %v2197 = vmul.f32 %v2187, 1.442695
    %v2198 = vpow.pop %v2197
    %v2199 = vmul.f32 %v2188, 1.442695
    %v2200 = vpow.pop %v2199
    %v2201 = vmul.f32 %v2189, 1.442695
    %v2202 = vpow.pop %v2201
    %v2203 = vmul.f32 %v2190, 1.442695
    %v2204 = vpow.pop %v2203
    %v2205 = vmul.f32 %v2191, 1.442695
    %v2206 = vpow.pop %v2205
    %v2207 = vmul.f32 %v2192, 1.442695
    %v2208 = vpow.pop %v2207
    %v2209 = vmul.f32 %v2193, 1.442695
    %v2210 = vpow.pop %v2209
    %v2211 = vmul.f32 %v2194, 1.442695
    %v2212 = vpow.pop %v2211
    %v2213 = vsel %vm1827, %v2196, 0.0
    %2214 = vadd.xlane.f32.xlu0 %v2213
    %v2215 = vpop.xlane.xlu0 %2214
    %v2216 = vsel %vm1827, %v2198, 0.0
    %2217 = vadd.xlane.f32.xlu0 %v2216
    %v2218 = vpop.xlane.xlu0 %2217
    %v2219 = vsel %vm1827, %v2200, 0.0
    %2220 = vadd.xlane.f32.xlu0 %v2219
    %v2221 = vpop.xlane.xlu0 %2220
    %v2222 = vsel %vm1827, %v2202, 0.0
    %2223 = vadd.xlane.f32.xlu0 %v2222
    %v2224 = vpop.xlane.xlu0 %2223
    %v2225 = vsel %vm1827, %v2204, 0.0
    %2226 = vadd.xlane.f32.xlu0 %v2225
    %v2227 = vpop.xlane.xlu0 %2226
    %v2228 = vsel %vm1827, %v2206, 0.0
    %2229 = vadd.xlane.f32.xlu0 %v2228
    %v2230 = vpop.xlane.xlu0 %2229
    %v2231 = vsel %vm1827, %v2208, 0.0
    %2232 = vadd.xlane.f32.xlu0 %v2231
    %v2233 = vpop.xlane.xlu0 %2232
    %v2234 = vsel %vm1827, %v2210, 0.0
    %2235 = vadd.xlane.f32.xlu0 %v2234
    %v2236 = vpop.xlane.xlu0 %2235
    %v2237 = vsel %vm1827, %v2212, 0.0
    %2238 = vadd.xlane.f32.xlu0 %v2237
    %v2239 = vpop.xlane.xlu0 %2238
    %v2240 = vrcp.pop %v2215
    %v2241 = vrcp.pop %v2218
    %v2242 = vrcp.pop %v2221
    %v2243 = vrcp.pop %v2224
    %v2244 = vrcp.pop %v2227
    %v2245 = vrcp.pop %v2230
    %v2246 = vrcp.pop %v2233
    %v2247 = vrcp.pop %v2236
    %v2248 = vrcp.pop %v2239
    %v2249 = vpack.c.bf16 %v2198, %v2196
    %v2250 = vpack.c.bf16 %v2202, %v2200
    %v2251 = vpack.c.bf16 %v2206, %v2204
    %v2252 = vpack.c.bf16 %v2210, %v2208
    %v2253 = vpack.c.bf16 %v2212, %v2212
    %2254 = vrot.lane.b32.xlu0 %v1705, 48
    %v2255 = vpop.permute.xlu0 %2254
    %2256 = vrot.lane.b32.xlu0 %v1706, 48
    %v2257 = vpop.permute.xlu0 %2256
    %2258 = vrot.lane.b32.xlu0 %v1707, 48
    %v2259 = vpop.permute.xlu0 %2258
    %2260 = vrot.lane.b32.xlu0 %v1708, 48
    %v2261 = vpop.permute.xlu0 %2260
    %2262 = vrot.lane.b32.xlu0 %v1709, 48
    %v2263 = vpop.permute.xlu0 %2262
    %v2269 = vsel %vm1827, %v2249, 0
    %v2272 = vsel %vm1827, %v2250, 0
    %v2275 = vsel %vm1827, %v2251, 0
    %v2278 = vsel %vm1827, %v2252, 0
    %v2281 = vsel %vm1827, %v2253, 0
    %v2284 = vsel %vm1952, %v2263, 0
    %2286 = vmatprep.subr.bf16.mxu0 0
    %2287 = vmatpush1.bf16.msra.mxu0 %v2255
    %2288 = vmatprep.subr.bf16.mxu0 0
    %2289 = vmatpush1.bf16.msra.mxu0 %v2257
    %2290 = vmatprep.subr.bf16.mxu0 0
    %2291 = vmatpush1.bf16.msra.mxu0 %v2259
    %2292 = vmatprep.subr.bf16.mxu0 0
    %2293 = vmatpush1.bf16.msra.mxu0 %v2261
    %2294 = vmatprep.subr.bf16.mxu0 0
    %2295 = vmatpush1.bf16.msra.mxu0 %v2284
    %2296 = vmatprep.subr.bf16.mxu0 0
    %2297 = vmatpush1.bf16.msra.mxu0 0
    %2298 = vmatprep.subr.bf16.mxu0 0
    %2299 = vmatpush1.bf16.msra.mxu0 0
    %2300 = vmatprep.subr.bf16.mxu0 0
    %2301 = vmatpush1.bf16.msra.mxu0 0
    %2302 = vmatprep.subr.bf16.mxu0 0
    %2303 = vmatpush1.bf16.msra.mxu0 0
    %2304 = vmatprep.subr.bf16.mxu0 0
    %2305 = vmatpush1.bf16.msra.mxu0 0
    %2306 = vmatprep.subr.bf16.mxu0 0
    %2307 = vmatpush1.bf16.msra.mxu0 0
    %2308 = vmatprep.subr.bf16.mxu0 0
    %2309 = vmatpush1.bf16.msra.mxu0 0
    %2310 = vmatprep.subr.bf16.mxu0 0
    %2311 = vmatpush1.bf16.msra.mxu0 0
    %2312 = vmatprep.subr.bf16.mxu0 0
    %2313 = vmatpush1.bf16.msra.mxu0 0
    %2314 = vmatprep.subr.bf16.mxu0 0
    %2315 = vmatpush1.bf16.msra.mxu0 0
    %2316 = vmatprep.subr.bf16.mxu0 0
    %2317 = vmatpush1.bf16.msra.mxu0 0
    %2318 = vmatprep.mubr.bf16.mxu0 0
    %2319 = vmatmul.mubr.bf16.gmra.mrb[0].mxu0 %v2269
    %v2320 = vpop.f32.mrb[0].mxu0
    %v2321 = vadd.f32 0.0, %v2320
    %v2322 = vpop.f32.mrb[0].mxu0
    %v2323 = vpop.f32.mrb[0].mxu0
    %v2324 = vadd.f32 0.0, %v2323
    %v2325 = vpop.f32.mrb[0].mxu0
    %2326 = vmatprep.mubr.bf16.mxu0 0
    %2327 = vmatmul.mubr.bf16.gmra.mrb[0].mxu0 %v2272
    %v2328 = vpop.f32.mrb[0].mxu0
    %v2329 = vadd.f32 0.0, %v2328
    %v2330 = vpop.f32.mrb[0].mxu0
    %v2331 = vpop.f32.mrb[0].mxu0
    %v2332 = vadd.f32 0.0, %v2331
    %v2333 = vpop.f32.mrb[0].mxu0
    %2334 = vmatprep.mubr.bf16.mxu0 0
    %2335 = vmatmul.mubr.bf16.gmra.mrb[0].mxu0 %v2275
    %v2336 = vpop.f32.mrb[0].mxu0
    %v2337 = vadd.f32 0.0, %v2336
    %v2338 = vpop.f32.mrb[0].mxu0
    %v2339 = vpop.f32.mrb[0].mxu0
    %v2340 = vadd.f32 0.0, %v2339
    %v2341 = vpop.f32.mrb[0].mxu0
    %2342 = vmatprep.mubr.bf16.mxu0 0
    %2343 = vmatmul.mubr.bf16.gmra.mrb[0].mxu0 %v2278
    %v2344 = vpop.f32.mrb[0].mxu0
    %v2345 = vadd.f32 0.0, %v2344
    %v2346 = vpop.f32.mrb[0].mxu0
    %v2347 = vpop.f32.mrb[0].mxu0
    %v2348 = vadd.f32 0.0, %v2347
    %v2349 = vpop.f32.mrb[0].mxu0
    %2350 = vmatprep.mubr.bf16.mxu0 0
    %2351 = vmatmul.mubr.bf16.gmra.mrb[0].mxu0 %v2281
    %v2352 = vpop.f32.mrb[0].mxu0
    %v2353 = vadd.f32 0.0, %v2352
    %v2354 = vpop.f32.mrb[0].mxu0
    %v2355 = vpop.f32.mrb[0].mxu0
    %v2356 = vpop.f32.mrb[0].mxu0
    %2357 = vdwg.mxu0
    %v2358 = vmul.f32 %v2321, %v2240
    %v2359 = vmul.f32 %v2324, %v2241
    %v2360 = vmul.f32 %v2329, %v2242
    %v2361 = vmul.f32 %v2332, %v2243
    %v2362 = vmul.f32 %v2337, %v2244
    %v2363 = vmul.f32 %v2340, %v2245
    %v2364 = vmul.f32 %v2345, %v2246
    %v2365 = vmul.f32 %v2348, %v2247
    %v2366 = vmul.f32 %v2353, %v2248
    %2376 = vrot.lane.b32.xlu0 %v2358, 16
    %v2377 = vpop.permute.xlu0 %2376
    %2378 = vrot.lane.b32.xlu0 %v2359, 16
    %v2379 = vpop.permute.xlu0 %2378
    %2380 = vrot.lane.b32.xlu0 %v2360, 16
    %v2381 = vpop.permute.xlu0 %2380
    %2382 = vrot.lane.b32.xlu0 %v2361, 16
    %v2383 = vpop.permute.xlu0 %2382
    %2384 = vrot.lane.b32.xlu0 %v2362, 16
    %v2385 = vpop.permute.xlu0 %2384
    %2386 = vrot.lane.b32.xlu0 %v2363, 16
    %v2387 = vpop.permute.xlu0 %2386
    %2388 = vrot.lane.b32.xlu0 %v2364, 16
    %v2389 = vpop.permute.xlu0 %2388
    %2390 = vrot.lane.b32.xlu0 %v2365, 16
    %v2391 = vpop.permute.xlu0 %2390
    %2392 = vrot.lane.b32.xlu0 %v2366, 16
    %v2393 = vpop.permute.xlu0 %2392
    %v2403 = vsel %vm269, %v2028, %v2377
    %v2404 = vsel %vm269, %v2029, %v2379
    %v2405 = vsel %vm269, %v2030, %v2381
    %v2406 = vsel %vm269, %v2031, %v2383
    %v2407 = vsel %vm269, %v2032, %v2385
    %v2408 = vsel %vm269, %v2033, %v2387
    %v2409 = vsel %vm269, %v2034, %v2389
    %v2410 = vsel %vm269, %v2035, %v2391
    %v2411 = vsel %vm269, %v2036, %v2393
    %v2412 = vpack.c.bf16 %v1610, %v1607
    %v2413 = vpack.c.bf16 %v1618, %v1615
    %v2414 = vpack.c.bf16 %v1626, %v1623
    %v2415 = vpack.c.bf16 %v1634, %v1631
    %v2416 = vpack.c.bf16 %v1702, %v1702
    %2422 = vrot.lane.b32.xlu0 %v2412, 96
    %v2423 = vpop.permute.xlu0 %2422
    %2424 = vrot.lane.b32.xlu0 %v2413, 96
    %v2425 = vpop.permute.xlu0 %2424
    %2426 = vrot.lane.b32.xlu0 %v2414, 96
    %v2427 = vpop.permute.xlu0 %2426
    %2428 = vrot.lane.b32.xlu0 %v2415, 96
    %v2429 = vpop.permute.xlu0 %2428
    %2430 = vrot.lane.b32.xlu0 %v2416, 96
    %v2431 = vpop.permute.xlu0 %2430
    %v2433 = vsel %vm269, %v2412, 0
    %v2436 = vsel %vm269, %v2413, 0
    %v2439 = vsel %vm269, %v2414, 0
    %v2442 = vsel %vm269, %v2415, 0
    %v2445 = vsel %vm269, %v2416, 0
    %v2448 = vsel %vm269, %v2423, 0
    %v2451 = vsel %vm269, %v2425, 0
    %v2454 = vsel %vm269, %v2427, 0
    %v2457 = vsel %vm269, %v2429, 0
    %v2460 = vsel %vm269, %v2431, 0
    %2462 = vmatprep.subr.bf16.mxu0 0
    %2463 = vmatpush1.bf16.xpose.msra.mxu0 %v2448
    %2464 = vmatprep.subr.bf16.mxu0 0
    %2465 = vmatpush1.bf16.xpose.msra.mxu0 %v2451
    %2466 = vmatprep.subr.bf16.mxu0 0
    %2467 = vmatpush1.bf16.xpose.msra.mxu0 %v2454
    %2468 = vmatprep.subr.bf16.mxu0 0
    %2469 = vmatpush1.bf16.xpose.msra.mxu0 %v2457
    %2470 = vmatprep.subr.bf16.mxu0 0
    %2471 = vmatpush1.bf16.xpose.msra.mxu0 %v2460
    %2472 = vmatprep.subr.bf16.mxu0 0
    %2473 = vmatpush1.bf16.xpose.msra.mxu0 0
    %2474 = vmatprep.subr.bf16.mxu0 0
    %2475 = vmatpush1.bf16.xpose.msra.mxu0 0
    %2476 = vmatprep.subr.bf16.mxu0 0
    %2477 = vmatpush1.bf16.xpose.msra.mxu0 0
    %2478 = vmatprep.subr.bf16.mxu0 0
    %2479 = vmatpush1.bf16.xpose.msra.mxu0 0
    %2480 = vmatprep.subr.bf16.mxu0 0
    %2481 = vmatpush1.bf16.xpose.msra.mxu0 0
    %2482 = vmatprep.subr.bf16.mxu0 0
    %2483 = vmatpush1.bf16.xpose.msra.mxu0 0
    %2484 = vmatprep.subr.bf16.mxu0 0
    %2485 = vmatpush1.bf16.xpose.msra.mxu0 0
    %2486 = vmatprep.subr.bf16.mxu0 0
    %2487 = vmatpush1.bf16.xpose.msra.mxu0 0
    %2488 = vmatprep.subr.bf16.mxu0 0
    %2489 = vmatpush1.bf16.xpose.msra.mxu0 0
    %2490 = vmatprep.subr.bf16.mxu0 0
    %2491 = vmatpush1.bf16.xpose.msra.mxu0 0
    %2492 = vmatprep.subr.bf16.mxu0 0
    %2493 = vmatpush1.bf16.xpose.msra.mxu0 0
    %2494 = vmatprep.mubr.bf16.mxu0 0
    %2495 = vmatmul.mubr.bf16.gmra.mrb[0].mxu0 %v2433
    %v2496 = vpop.f32.mrb[0].mxu0
    %v2497 = vadd.f32 0.0, %v2496
    %v2498 = vpop.f32.mrb[0].mxu0
    %v2499 = vpop.f32.mrb[0].mxu0
    %v2500 = vadd.f32 0.0, %v2499
    %v2501 = vpop.f32.mrb[0].mxu0
    %2502 = vmatprep.mubr.bf16.mxu0 0
    %2503 = vmatmul.mubr.bf16.gmra.mrb[0].mxu0 %v2436
    %v2504 = vpop.f32.mrb[0].mxu0
    %v2505 = vadd.f32 0.0, %v2504
    %v2506 = vpop.f32.mrb[0].mxu0
    %v2507 = vpop.f32.mrb[0].mxu0
    %v2508 = vadd.f32 0.0, %v2507
    %v2509 = vpop.f32.mrb[0].mxu0
    %2510 = vmatprep.mubr.bf16.mxu0 0
    %2511 = vmatmul.mubr.bf16.gmra.mrb[0].mxu0 %v2439
    %v2512 = vpop.f32.mrb[0].mxu0
    %v2513 = vadd.f32 0.0, %v2512
    %v2514 = vpop.f32.mrb[0].mxu0
    %v2515 = vpop.f32.mrb[0].mxu0
    %v2516 = vadd.f32 0.0, %v2515
    %v2517 = vpop.f32.mrb[0].mxu0
    %2518 = vmatprep.mubr.bf16.mxu0 0
    %2519 = vmatmul.mubr.bf16.gmra.mrb[0].mxu0 %v2442
    %v2520 = vpop.f32.mrb[0].mxu0
    %v2521 = vadd.f32 0.0, %v2520
    %v2522 = vpop.f32.mrb[0].mxu0
    %v2523 = vpop.f32.mrb[0].mxu0
    %v2524 = vadd.f32 0.0, %v2523
    %v2525 = vpop.f32.mrb[0].mxu0
    %2526 = vmatprep.mubr.bf16.mxu0 0
    %2527 = vmatmul.mubr.bf16.gmra.mrb[0].mxu0 %v2445
    %v2528 = vpop.f32.mrb[0].mxu0
    %v2529 = vadd.f32 0.0, %v2528
    %v2530 = vpop.f32.mrb[0].mxu0
    %v2531 = vpop.f32.mrb[0].mxu0
    %v2532 = vpop.f32.mrb[0].mxu0
    %2533 = vdwg.mxu0
    %v2534 = vsel %vm1827, %v2497, -inf
    %2535 = vmax.xlane.f32.xlu0 %v2534
    %v2536 = vpop.xlane.xlu0 %2535
    %v2537 = vsel %vm1827, %v2500, -inf
    %2538 = vmax.xlane.f32.xlu0 %v2537
    %v2539 = vpop.xlane.xlu0 %2538
    %v2540 = vsel %vm1827, %v2505, -inf
    %2541 = vmax.xlane.f32.xlu0 %v2540
    %v2542 = vpop.xlane.xlu0 %2541
    %v2543 = vsel %vm1827, %v2508, -inf
    %2544 = vmax.xlane.f32.xlu0 %v2543
    %v2545 = vpop.xlane.xlu0 %2544
    %v2546 = vsel %vm1827, %v2513, -inf
    %2547 = vmax.xlane.f32.xlu0 %v2546
    %v2548 = vpop.xlane.xlu0 %2547
    %v2549 = vsel %vm1827, %v2516, -inf
    %2550 = vmax.xlane.f32.xlu0 %v2549
    %v2551 = vpop.xlane.xlu0 %2550
    %v2552 = vsel %vm1827, %v2521, -inf
    %2553 = vmax.xlane.f32.xlu0 %v2552
    %v2554 = vpop.xlane.xlu0 %2553
    %v2555 = vsel %vm1827, %v2524, -inf
    %2556 = vmax.xlane.f32.xlu0 %v2555
    %v2557 = vpop.xlane.xlu0 %2556
    %v2558 = vsel %vm1827, %v2529, -inf
    %2559 = vmax.xlane.f32.xlu0 %v2558
    %v2560 = vpop.xlane.xlu0 %2559
    %v2561 = vsub.f32 %v2497, %v2536
    %v2562 = vsub.f32 %v2500, %v2539
    %v2563 = vsub.f32 %v2505, %v2542
    %v2564 = vsub.f32 %v2508, %v2545
    %v2565 = vsub.f32 %v2513, %v2548
    %v2566 = vsub.f32 %v2516, %v2551
    %v2567 = vsub.f32 %v2521, %v2554
    %v2568 = vsub.f32 %v2524, %v2557
    %v2569 = vsub.f32 %v2529, %v2560
    %v2570 = vmul.f32 %v2561, 1.442695
    %v2571 = vpow.pop %v2570
    %v2572 = vmul.f32 %v2562, 1.442695
    %v2573 = vpow.pop %v2572
    %v2574 = vmul.f32 %v2563, 1.442695
    %v2575 = vpow.pop %v2574
    %v2576 = vmul.f32 %v2564, 1.442695
    %v2577 = vpow.pop %v2576
    %v2578 = vmul.f32 %v2565, 1.442695
    %v2579 = vpow.pop %v2578
    %v2580 = vmul.f32 %v2566, 1.442695
    %v2581 = vpow.pop %v2580
    %v2582 = vmul.f32 %v2567, 1.442695
    %v2583 = vpow.pop %v2582
    %v2584 = vmul.f32 %v2568, 1.442695
    %v2585 = vpow.pop %v2584
    %v2586 = vmul.f32 %v2569, 1.442695
    %v2587 = vpow.pop %v2586
    %v2588 = vsel %vm1827, %v2571, 0.0
    %2589 = vadd.xlane.f32.xlu0 %v2588
    %v2590 = vpop.xlane.xlu0 %2589
    %v2591 = vsel %vm1827, %v2573, 0.0
    %2592 = vadd.xlane.f32.xlu0 %v2591
    %v2593 = vpop.xlane.xlu0 %2592
    %v2594 = vsel %vm1827, %v2575, 0.0
    %2595 = vadd.xlane.f32.xlu0 %v2594
    %v2596 = vpop.xlane.xlu0 %2595
    %v2597 = vsel %vm1827, %v2577, 0.0
    %2598 = vadd.xlane.f32.xlu0 %v2597
    %v2599 = vpop.xlane.xlu0 %2598
    %v2600 = vsel %vm1827, %v2579, 0.0
    %2601 = vadd.xlane.f32.xlu0 %v2600
    %v2602 = vpop.xlane.xlu0 %2601
    %v2603 = vsel %vm1827, %v2581, 0.0
    %2604 = vadd.xlane.f32.xlu0 %v2603
    %v2605 = vpop.xlane.xlu0 %2604
    %v2606 = vsel %vm1827, %v2583, 0.0
    %2607 = vadd.xlane.f32.xlu0 %v2606
    %v2608 = vpop.xlane.xlu0 %2607
    %v2609 = vsel %vm1827, %v2585, 0.0
    %2610 = vadd.xlane.f32.xlu0 %v2609
    %v2611 = vpop.xlane.xlu0 %2610
    %v2612 = vsel %vm1827, %v2587, 0.0
    %2613 = vadd.xlane.f32.xlu0 %v2612
    %v2614 = vpop.xlane.xlu0 %2613
    %v2615 = vrcp.pop %v2590
    %v2616 = vrcp.pop %v2593
    %v2617 = vrcp.pop %v2596
    %v2618 = vrcp.pop %v2599
    %v2619 = vrcp.pop %v2602
    %v2620 = vrcp.pop %v2605
    %v2621 = vrcp.pop %v2608
    %v2622 = vrcp.pop %v2611
    %v2623 = vrcp.pop %v2614
    %v2624 = vpack.c.bf16 %v2573, %v2571
    %v2625 = vpack.c.bf16 %v2577, %v2575
    %v2626 = vpack.c.bf16 %v2581, %v2579
    %v2627 = vpack.c.bf16 %v2585, %v2583
    %v2628 = vpack.c.bf16 %v2587, %v2587
    %2629 = vrot.lane.b32.xlu0 %v2412, 64
    %v2630 = vpop.permute.xlu0 %2629
    %2631 = vrot.lane.b32.xlu0 %v2413, 64
    %v2632 = vpop.permute.xlu0 %2631
    %2633 = vrot.lane.b32.xlu0 %v2414, 64
    %v2634 = vpop.permute.xlu0 %2633
    %2635 = vrot.lane.b32.xlu0 %v2415, 64
    %v2636 = vpop.permute.xlu0 %2635
    %2637 = vrot.lane.b32.xlu0 %v2416, 64
    %v2638 = vpop.permute.xlu0 %2637
    %v2644 = vsel %vm1827, %v2624, 0
    %v2647 = vsel %vm1827, %v2625, 0
    %v2650 = vsel %vm1827, %v2626, 0
    %v2653 = vsel %vm1827, %v2627, 0
    %v2656 = vsel %vm1827, %v2628, 0
    %v2659 = vsel %vm1952, %v2638, 0
    %2661 = vmatprep.subr.bf16.mxu0 0
    %2662 = vmatpush1.bf16.msra.mxu0 %v2630
    %2663 = vmatprep.subr.bf16.mxu0 0
    %2664 = vmatpush1.bf16.msra.mxu0 %v2632
    %2665 = vmatprep.subr.bf16.mxu0 0
    %2666 = vmatpush1.bf16.msra.mxu0 %v2634
    %2667 = vmatprep.subr.bf16.mxu0 0
    %2668 = vmatpush1.bf16.msra.mxu0 %v2636
    %2669 = vmatprep.subr.bf16.mxu0 0
    %2670 = vmatpush1.bf16.msra.mxu0 %v2659
    %2671 = vmatprep.subr.bf16.mxu0 0
    %2672 = vmatpush1.bf16.msra.mxu0 0
    %2673 = vmatprep.subr.bf16.mxu0 0
    %2674 = vmatpush1.bf16.msra.mxu0 0
    %2675 = vmatprep.subr.bf16.mxu0 0
    %2676 = vmatpush1.bf16.msra.mxu0 0
    %2677 = vmatprep.subr.bf16.mxu0 0
    %2678 = vmatpush1.bf16.msra.mxu0 0
    %2679 = vmatprep.subr.bf16.mxu0 0
    %2680 = vmatpush1.bf16.msra.mxu0 0
    %2681 = vmatprep.subr.bf16.mxu0 0
    %2682 = vmatpush1.bf16.msra.mxu0 0
    %2683 = vmatprep.subr.bf16.mxu0 0
    %2684 = vmatpush1.bf16.msra.mxu0 0
    %2685 = vmatprep.subr.bf16.mxu0 0
    %2686 = vmatpush1.bf16.msra.mxu0 0
    %2687 = vmatprep.subr.bf16.mxu0 0
    %2688 = vmatpush1.bf16.msra.mxu0 0
    %2689 = vmatprep.subr.bf16.mxu0 0
    %2690 = vmatpush1.bf16.msra.mxu0 0
    %2691 = vmatprep.subr.bf16.mxu0 0
    %2692 = vmatpush1.bf16.msra.mxu0 0
    %2693 = vmatprep.mubr.bf16.mxu0 0
    %2694 = vmatmul.mubr.bf16.gmra.mrb[0].mxu0 %v2644
    %v2695 = vpop.f32.mrb[0].mxu0
    %v2696 = vadd.f32 0.0, %v2695
    %v2697 = vpop.f32.mrb[0].mxu0
    %v2698 = vpop.f32.mrb[0].mxu0
    %v2699 = vadd.f32 0.0, %v2698
    %v2700 = vpop.f32.mrb[0].mxu0
    %2701 = vmatprep.mubr.bf16.mxu0 0
    %2702 = vmatmul.mubr.bf16.gmra.mrb[0].mxu0 %v2647
    %v2703 = vpop.f32.mrb[0].mxu0
    %v2704 = vadd.f32 0.0, %v2703
    %v2705 = vpop.f32.mrb[0].mxu0
    %v2706 = vpop.f32.mrb[0].mxu0
    %v2707 = vadd.f32 0.0, %v2706
    %v2708 = vpop.f32.mrb[0].mxu0
    %2709 = vmatprep.mubr.bf16.mxu0 0
    %2710 = vmatmul.mubr.bf16.gmra.mrb[0].mxu0 %v2650
    %v2711 = vpop.f32.mrb[0].mxu0
    %v2712 = vadd.f32 0.0, %v2711
    %v2713 = vpop.f32.mrb[0].mxu0
    %v2714 = vpop.f32.mrb[0].mxu0
    %v2715 = vadd.f32 0.0, %v2714
    %v2716 = vpop.f32.mrb[0].mxu0
    %2717 = vmatprep.mubr.bf16.mxu0 0
    %2718 = vmatmul.mubr.bf16.gmra.mrb[0].mxu0 %v2653
    %v2719 = vpop.f32.mrb[0].mxu0
    %v2720 = vadd.f32 0.0, %v2719
    %v2721 = vpop.f32.mrb[0].mxu0
    %v2722 = vpop.f32.mrb[0].mxu0
    %v2723 = vadd.f32 0.0, %v2722
    %v2724 = vpop.f32.mrb[0].mxu0
    %2725 = vmatprep.mubr.bf16.mxu0 0
    %2726 = vmatmul.mubr.bf16.gmra.mrb[0].mxu0 %v2656
    %v2727 = vpop.f32.mrb[0].mxu0
    %v2728 = vadd.f32 0.0, %v2727
    %v2729 = vpop.f32.mrb[0].mxu0
    %v2730 = vpop.f32.mrb[0].mxu0
    %v2731 = vpop.f32.mrb[0].mxu0
    %2732 = vdwg.mxu0
    %v2733 = vmul.f32 %v2696, %v2615
    %v2734 = vmul.f32 %v2699, %v2616
    %v2735 = vmul.f32 %v2704, %v2617
    %v2736 = vmul.f32 %v2707, %v2618
    %v2737 = vmul.f32 %v2712, %v2619
    %v2738 = vmul.f32 %v2715, %v2620
    %v2739 = vmul.f32 %v2720, %v2621
    %v2740 = vmul.f32 %v2723, %v2622
    %v2741 = vmul.f32 %v2728, %v2623
    %2742 = vrot.lane.b32.xlu0 %v2412, 112
    %v2743 = vpop.permute.xlu0 %2742
    %2744 = vrot.lane.b32.xlu0 %v2413, 112
    %v2745 = vpop.permute.xlu0 %2744
    %2746 = vrot.lane.b32.xlu0 %v2414, 112
    %v2747 = vpop.permute.xlu0 %2746
    %2748 = vrot.lane.b32.xlu0 %v2415, 112
    %v2749 = vpop.permute.xlu0 %2748
    %2750 = vrot.lane.b32.xlu0 %v2416, 112
    %v2751 = vpop.permute.xlu0 %2750
    %2752 = vrot.lane.b32.xlu0 %v2412, 80
    %v2753 = vpop.permute.xlu0 %2752
    %2754 = vrot.lane.b32.xlu0 %v2413, 80
    %v2755 = vpop.permute.xlu0 %2754
    %2756 = vrot.lane.b32.xlu0 %v2414, 80
    %v2757 = vpop.permute.xlu0 %2756
    %2758 = vrot.lane.b32.xlu0 %v2415, 80
    %v2759 = vpop.permute.xlu0 %2758
    %2760 = vrot.lane.b32.xlu0 %v2416, 80
    %v2761 = vpop.permute.xlu0 %2760
    %v2763 = vsel %vm269, %v2743, 0
    %v2766 = vsel %vm269, %v2745, 0
    %v2769 = vsel %vm269, %v2747, 0
    %v2772 = vsel %vm269, %v2749, 0
    %v2775 = vsel %vm269, %v2751, 0
    %v2778 = vsel %vm269, %v2753, 0
    %v2781 = vsel %vm269, %v2755, 0
    %v2784 = vsel %vm269, %v2757, 0
    %v2787 = vsel %vm269, %v2759, 0
    %v2790 = vsel %vm269, %v2761, 0
    %2792 = vmatprep.subr.bf16.mxu0 0
    %2793 = vmatpush1.bf16.xpose.msra.mxu0 %v2778
    %2794 = vmatprep.subr.bf16.mxu0 0
    %2795 = vmatpush1.bf16.xpose.msra.mxu0 %v2781
    %2796 = vmatprep.subr.bf16.mxu0 0
    %2797 = vmatpush1.bf16.xpose.msra.mxu0 %v2784
    %2798 = vmatprep.subr.bf16.mxu0 0
    %2799 = vmatpush1.bf16.xpose.msra.mxu0 %v2787
    %2800 = vmatprep.subr.bf16.mxu0 0
    %2801 = vmatpush1.bf16.xpose.msra.mxu0 %v2790
    %2802 = vmatprep.subr.bf16.mxu0 0
    %2803 = vmatpush1.bf16.xpose.msra.mxu0 0
    %2804 = vmatprep.subr.bf16.mxu0 0
    %2805 = vmatpush1.bf16.xpose.msra.mxu0 0
    %2806 = vmatprep.subr.bf16.mxu0 0
    %2807 = vmatpush1.bf16.xpose.msra.mxu0 0
    %2808 = vmatprep.subr.bf16.mxu0 0
    %2809 = vmatpush1.bf16.xpose.msra.mxu0 0
    %2810 = vmatprep.subr.bf16.mxu0 0
    %2811 = vmatpush1.bf16.xpose.msra.mxu0 0
    %2812 = vmatprep.subr.bf16.mxu0 0
    %2813 = vmatpush1.bf16.xpose.msra.mxu0 0
    %2814 = vmatprep.subr.bf16.mxu0 0
    %2815 = vmatpush1.bf16.xpose.msra.mxu0 0
    %2816 = vmatprep.subr.bf16.mxu0 0
    %2817 = vmatpush1.bf16.xpose.msra.mxu0 0
    %2818 = vmatprep.subr.bf16.mxu0 0
    %2819 = vmatpush1.bf16.xpose.msra.mxu0 0
    %2820 = vmatprep.subr.bf16.mxu0 0
    %2821 = vmatpush1.bf16.xpose.msra.mxu0 0
    %2822 = vmatprep.subr.bf16.mxu0 0
    %2823 = vmatpush1.bf16.xpose.msra.mxu0 0
    %2824 = vmatprep.mubr.bf16.mxu0 0
    %2825 = vmatmul.mubr.bf16.gmra.mrb[0].mxu0 %v2763
    %v2826 = vpop.f32.mrb[0].mxu0
    %v2827 = vadd.f32 0.0, %v2826
    %v2828 = vpop.f32.mrb[0].mxu0
    %v2829 = vpop.f32.mrb[0].mxu0
    %v2830 = vadd.f32 0.0, %v2829
    %v2831 = vpop.f32.mrb[0].mxu0
    %2832 = vmatprep.mubr.bf16.mxu0 0
    %2833 = vmatmul.mubr.bf16.gmra.mrb[0].mxu0 %v2766
    %v2834 = vpop.f32.mrb[0].mxu0
    %v2835 = vadd.f32 0.0, %v2834
    %v2836 = vpop.f32.mrb[0].mxu0
    %v2837 = vpop.f32.mrb[0].mxu0
    %v2838 = vadd.f32 0.0, %v2837
    %v2839 = vpop.f32.mrb[0].mxu0
    %2840 = vmatprep.mubr.bf16.mxu0 0
    %2841 = vmatmul.mubr.bf16.gmra.mrb[0].mxu0 %v2769
    %v2842 = vpop.f32.mrb[0].mxu0
    %v2843 = vadd.f32 0.0, %v2842
    %v2844 = vpop.f32.mrb[0].mxu0
    %v2845 = vpop.f32.mrb[0].mxu0
    %v2846 = vadd.f32 0.0, %v2845
    %v2847 = vpop.f32.mrb[0].mxu0
    %2848 = vmatprep.mubr.bf16.mxu0 0
    %2849 = vmatmul.mubr.bf16.gmra.mrb[0].mxu0 %v2772
    %v2850 = vpop.f32.mrb[0].mxu0
    %v2851 = vadd.f32 0.0, %v2850
    %v2852 = vpop.f32.mrb[0].mxu0
    %v2853 = vpop.f32.mrb[0].mxu0
    %v2854 = vadd.f32 0.0, %v2853
    %v2855 = vpop.f32.mrb[0].mxu0
    %2856 = vmatprep.mubr.bf16.mxu0 0
    %2857 = vmatmul.mubr.bf16.gmra.mrb[0].mxu0 %v2775
    %v2858 = vpop.f32.mrb[0].mxu0
    %v2859 = vadd.f32 0.0, %v2858
    %v2860 = vpop.f32.mrb[0].mxu0
    %v2861 = vpop.f32.mrb[0].mxu0
    %v2862 = vpop.f32.mrb[0].mxu0
    %2863 = vdwg.mxu0
    %v2864 = vsel %vm1827, %v2827, -inf
    %2865 = vmax.xlane.f32.xlu0 %v2864
    %v2866 = vpop.xlane.xlu0 %2865
    %v2867 = vsel %vm1827, %v2830, -inf
    %2868 = vmax.xlane.f32.xlu0 %v2867
    %v2869 = vpop.xlane.xlu0 %2868
    %v2870 = vsel %vm1827, %v2835, -inf
    %2871 = vmax.xlane.f32.xlu0 %v2870
    %v2872 = vpop.xlane.xlu0 %2871
    %v2873 = vsel %vm1827, %v2838, -inf
    %2874 = vmax.xlane.f32.xlu0 %v2873
    %v2875 = vpop.xlane.xlu0 %2874
    %v2876 = vsel %vm1827, %v2843, -inf
    %2877 = vmax.xlane.f32.xlu0 %v2876
    %v2878 = vpop.xlane.xlu0 %2877
    %v2879 = vsel %vm1827, %v2846, -inf
    %2880 = vmax.xlane.f32.xlu0 %v2879
    %v2881 = vpop.xlane.xlu0 %2880
    %v2882 = vsel %vm1827, %v2851, -inf
    %2883 = vmax.xlane.f32.xlu0 %v2882
    %v2884 = vpop.xlane.xlu0 %2883
    %v2885 = vsel %vm1827, %v2854, -inf
    %2886 = vmax.xlane.f32.xlu0 %v2885
    %v2887 = vpop.xlane.xlu0 %2886
    %v2888 = vsel %vm1827, %v2859, -inf
    %2889 = vmax.xlane.f32.xlu0 %v2888
    %v2890 = vpop.xlane.xlu0 %2889
    %v2891 = vsub.f32 %v2827, %v2866
    %v2892 = vsub.f32 %v2830, %v2869
    %v2893 = vsub.f32 %v2835, %v2872
    %v2894 = vsub.f32 %v2838, %v2875
    %v2895 = vsub.f32 %v2843, %v2878
    %v2896 = vsub.f32 %v2846, %v2881
    %v2897 = vsub.f32 %v2851, %v2884
    %v2898 = vsub.f32 %v2854, %v2887
    %v2899 = vsub.f32 %v2859, %v2890
    %v2900 = vmul.f32 %v2891, 1.442695
    %v2901 = vpow.pop %v2900
    %v2902 = vmul.f32 %v2892, 1.442695
    %v2903 = vpow.pop %v2902
    %v2904 = vmul.f32 %v2893, 1.442695
    %v2905 = vpow.pop %v2904
    %v2906 = vmul.f32 %v2894, 1.442695
    %v2907 = vpow.pop %v2906
    %v2908 = vmul.f32 %v2895, 1.442695
    %v2909 = vpow.pop %v2908
    %v2910 = vmul.f32 %v2896, 1.442695
    %v2911 = vpow.pop %v2910
    %v2912 = vmul.f32 %v2897, 1.442695
    %v2913 = vpow.pop %v2912
    %v2914 = vmul.f32 %v2898, 1.442695
    %v2915 = vpow.pop %v2914
    %v2916 = vmul.f32 %v2899, 1.442695
    %v2917 = vpow.pop %v2916
    %v2918 = vsel %vm1827, %v2901, 0.0
    %2919 = vadd.xlane.f32.xlu0 %v2918
    %v2920 = vpop.xlane.xlu0 %2919
    %v2921 = vsel %vm1827, %v2903, 0.0
    %2922 = vadd.xlane.f32.xlu0 %v2921
    %v2923 = vpop.xlane.xlu0 %2922
    %v2924 = vsel %vm1827, %v2905, 0.0
    %2925 = vadd.xlane.f32.xlu0 %v2924
    %v2926 = vpop.xlane.xlu0 %2925
    %v2927 = vsel %vm1827, %v2907, 0.0
    %2928 = vadd.xlane.f32.xlu0 %v2927
    %v2929 = vpop.xlane.xlu0 %2928
    %v2930 = vsel %vm1827, %v2909, 0.0
    %2931 = vadd.xlane.f32.xlu0 %v2930
    %v2932 = vpop.xlane.xlu0 %2931
    %v2933 = vsel %vm1827, %v2911, 0.0
    %2934 = vadd.xlane.f32.xlu0 %v2933
    %v2935 = vpop.xlane.xlu0 %2934
    %v2936 = vsel %vm1827, %v2913, 0.0
    %2937 = vadd.xlane.f32.xlu0 %v2936
    %v2938 = vpop.xlane.xlu0 %2937
    %v2939 = vsel %vm1827, %v2915, 0.0
    %2940 = vadd.xlane.f32.xlu0 %v2939
    %v2941 = vpop.xlane.xlu0 %2940
    %v2942 = vsel %vm1827, %v2917, 0.0
    %2943 = vadd.xlane.f32.xlu0 %v2942
    %v2944 = vpop.xlane.xlu0 %2943
    %v2945 = vrcp.pop %v2920
    %v2946 = vrcp.pop %v2923
    %v2947 = vrcp.pop %v2926
    %v2948 = vrcp.pop %v2929
    %v2949 = vrcp.pop %v2932
    %v2950 = vrcp.pop %v2935
    %v2951 = vrcp.pop %v2938
    %v2952 = vrcp.pop %v2941
    %v2953 = vrcp.pop %v2944
    %v2954 = vpack.c.bf16 %v2903, %v2901
    %v2955 = vpack.c.bf16 %v2907, %v2905
    %v2956 = vpack.c.bf16 %v2911, %v2909
    %v2957 = vpack.c.bf16 %v2915, %v2913
    %v2958 = vpack.c.bf16 %v2917, %v2917
    %2959 = vrot.lane.b32.xlu0 %v2412, 48
    %v2960 = vpop.permute.xlu0 %2959
    %2961 = vrot.lane.b32.xlu0 %v2413, 48
    %v2962 = vpop.permute.xlu0 %2961
    %2963 = vrot.lane.b32.xlu0 %v2414, 48
    %v2964 = vpop.permute.xlu0 %2963
    %2965 = vrot.lane.b32.xlu0 %v2415, 48
    %v2966 = vpop.permute.xlu0 %2965
    %2967 = vrot.lane.b32.xlu0 %v2416, 48
    %v2968 = vpop.permute.xlu0 %2967
    %v2974 = vsel %vm1827, %v2954, 0
    %v2977 = vsel %vm1827, %v2955, 0
    %v2980 = vsel %vm1827, %v2956, 0
    %v2983 = vsel %vm1827, %v2957, 0
    %v2986 = vsel %vm1827, %v2958, 0
    %v2989 = vsel %vm1952, %v2968, 0
    %2991 = vmatprep.subr.bf16.mxu0 0
    %2992 = vmatpush1.bf16.msra.mxu0 %v2960
    %2993 = vmatprep.subr.bf16.mxu0 0
    %2994 = vmatpush1.bf16.msra.mxu0 %v2962
    %2995 = vmatprep.subr.bf16.mxu0 0
    %2996 = vmatpush1.bf16.msra.mxu0 %v2964
    %2997 = vmatprep.subr.bf16.mxu0 0
    %2998 = vmatpush1.bf16.msra.mxu0 %v2966
    %2999 = vmatprep.subr.bf16.mxu0 0
    %3000 = vmatpush1.bf16.msra.mxu0 %v2989
    %3001 = vmatprep.subr.bf16.mxu0 0
    %3002 = vmatpush1.bf16.msra.mxu0 0
    %3003 = vmatprep.subr.bf16.mxu0 0
    %3004 = vmatpush1.bf16.msra.mxu0 0
    %3005 = vmatprep.subr.bf16.mxu0 0
    %3006 = vmatpush1.bf16.msra.mxu0 0
    %3007 = vmatprep.subr.bf16.mxu0 0
    %3008 = vmatpush1.bf16.msra.mxu0 0
    %3009 = vmatprep.subr.bf16.mxu0 0
    %3010 = vmatpush1.bf16.msra.mxu0 0
    %3011 = vmatprep.subr.bf16.mxu0 0
    %3012 = vmatpush1.bf16.msra.mxu0 0
    %3013 = vmatprep.subr.bf16.mxu0 0
    %3014 = vmatpush1.bf16.msra.mxu0 0
    %3015 = vmatprep.subr.bf16.mxu0 0
    %3016 = vmatpush1.bf16.msra.mxu0 0
    %3017 = vmatprep.subr.bf16.mxu0 0
    %3018 = vmatpush1.bf16.msra.mxu0 0
    %3019 = vmatprep.subr.bf16.mxu0 0
    %3020 = vmatpush1.bf16.msra.mxu0 0
    %3021 = vmatprep.subr.bf16.mxu0 0
    %3022 = vmatpush1.bf16.msra.mxu0 0
    %3023 = vmatprep.mubr.bf16.mxu0 0
    %3024 = vmatmul.mubr.bf16.gmra.mrb[0].mxu0 %v2974
    %v3025 = vpop.f32.mrb[0].mxu0
    %v3026 = vadd.f32 0.0, %v3025
    %v3027 = vpop.f32.mrb[0].mxu0
    %v3028 = vpop.f32.mrb[0].mxu0
    %v3029 = vadd.f32 0.0, %v3028
    %v3030 = vpop.f32.mrb[0].mxu0
    %3031 = vmatprep.mubr.bf16.mxu0 0
    %3032 = vmatmul.mubr.bf16.gmra.mrb[0].mxu0 %v2977
    %v3033 = vpop.f32.mrb[0].mxu0
    %v3034 = vadd.f32 0.0, %v3033
    %v3035 = vpop.f32.mrb[0].mxu0
    %v3036 = vpop.f32.mrb[0].mxu0
    %v3037 = vadd.f32 0.0, %v3036
    %v3038 = vpop.f32.mrb[0].mxu0
    %3039 = vmatprep.mubr.bf16.mxu0 0
    %3040 = vmatmul.mubr.bf16.gmra.mrb[0].mxu0 %v2980
    %v3041 = vpop.f32.mrb[0].mxu0
    %v3042 = vadd.f32 0.0, %v3041
    %v3043 = vpop.f32.mrb[0].mxu0
    %v3044 = vpop.f32.mrb[0].mxu0
    %v3045 = vadd.f32 0.0, %v3044
    %v3046 = vpop.f32.mrb[0].mxu0
    %3047 = vmatprep.mubr.bf16.mxu0 0
    %3048 = vmatmul.mubr.bf16.gmra.mrb[0].mxu0 %v2983
    %v3049 = vpop.f32.mrb[0].mxu0
    %v3050 = vadd.f32 0.0, %v3049
    %v3051 = vpop.f32.mrb[0].mxu0
    %v3052 = vpop.f32.mrb[0].mxu0
    %v3053 = vadd.f32 0.0, %v3052
    %v3054 = vpop.f32.mrb[0].mxu0
    %3055 = vmatprep.mubr.bf16.mxu0 0
    %3056 = vmatmul.mubr.bf16.gmra.mrb[0].mxu0 %v2986
    %v3057 = vpop.f32.mrb[0].mxu0
    %v3058 = vadd.f32 0.0, %v3057
    %v3059 = vpop.f32.mrb[0].mxu0
    %v3060 = vpop.f32.mrb[0].mxu0
    %v3061 = vpop.f32.mrb[0].mxu0
    %3062 = vdwg.mxu0
    %v3063 = vmul.f32 %v3026, %v2945
    %v3064 = vmul.f32 %v3029, %v2946
    %v3065 = vmul.f32 %v3034, %v2947
    %v3066 = vmul.f32 %v3037, %v2948
    %v3067 = vmul.f32 %v3042, %v2949
    %v3068 = vmul.f32 %v3045, %v2950
    %v3069 = vmul.f32 %v3050, %v2951
    %v3070 = vmul.f32 %v3053, %v2952
    %v3071 = vmul.f32 %v3058, %v2953
    %3081 = vrot.lane.b32.xlu0 %v3063, 16
    %v3082 = vpop.permute.xlu0 %3081
    %3083 = vrot.lane.b32.xlu0 %v3064, 16
    %v3084 = vpop.permute.xlu0 %3083
    %3085 = vrot.lane.b32.xlu0 %v3065, 16
    %v3086 = vpop.permute.xlu0 %3085
    %3087 = vrot.lane.b32.xlu0 %v3066, 16
    %v3088 = vpop.permute.xlu0 %3087
    %3089 = vrot.lane.b32.xlu0 %v3067, 16
    %v3090 = vpop.permute.xlu0 %3089
    %3091 = vrot.lane.b32.xlu0 %v3068, 16
    %v3092 = vpop.permute.xlu0 %3091
    %3093 = vrot.lane.b32.xlu0 %v3069, 16
    %v3094 = vpop.permute.xlu0 %3093
    %3095 = vrot.lane.b32.xlu0 %v3070, 16
    %v3096 = vpop.permute.xlu0 %3095
    %3097 = vrot.lane.b32.xlu0 %v3071, 16
    %v3098 = vpop.permute.xlu0 %3097
    %v3108 = vsel %vm269, %v2733, %v3082
    %v3109 = vsel %vm269, %v2734, %v3084
    %v3110 = vsel %vm269, %v2735, %v3086
    %v3111 = vsel %vm269, %v2736, %v3088
    %v3112 = vsel %vm269, %v2737, %v3090
    %v3113 = vsel %vm269, %v2738, %v3092
    %v3114 = vsel %vm269, %v2739, %v3094
    %v3115 = vsel %vm269, %v2740, %v3096
    %v3116 = vsel %vm269, %v2741, %v3098
    %v3117 = vld [vmem:[%s47] sm:$0xf]
    %v3118 = vld [vmem:[%s47 + $0x4] sm:$0xf]
    %v3119 = vld [vmem:[%s47 + $0x8] sm:$0xf]
    %v3120 = vld [vmem:[%s47 + $0xc] sm:$0xf]
    %v3121 = vpack.c.bf16 %v2404, %v2403
    %v3122 = vpack.c.bf16 %v2406, %v2405
    %v3123 = vpack.c.bf16 %v2408, %v2407
    %v3124 = vpack.c.bf16 %v2410, %v2409
    %v3125 = vpack.c.bf16 %v3109, %v3108
    %v3126 = vpack.c.bf16 %v3111, %v3110
    %v3127 = vpack.c.bf16 %v3113, %v3112
    %v3128 = vpack.c.bf16 %v3115, %v3114
    %v3129 = vld [vmem:[%s49] sm:$0x1]
    %v3131 = vlaneseq
    %v3132 = vshrl.u32 %v3131, 7
    %v3133 = vsub.s32 0, %v3132
    %v3134 = vrot.slane %v3129, %v3133
    %v3140 = vunpack.c.l.b16 %v3117
    %v3141 = vunpack.c.l.b16 %v3118
    %v3142 = vunpack.c.l.b16 %v3119
    %v3143 = vunpack.c.l.b16 %v3120
    %v3144 = vpack.c.b16 %v3141, %v3140
    %v3145 = vpack.c.b16 %v3143, %v3142
    %v3149 = vsel %vm714, %v3121, 0
    %v3152 = vsel %vm714, %v3122, 0
    %v3155 = vsel %vm714, %v3123, 0
    %v3158 = vsel %vm714, %v3124, 0
    %v3161 = vsel %vm714, %v3125, 0
    %v3164 = vsel %vm714, %v3126, 0
    %v3167 = vsel %vm714, %v3127, 0
    %v3170 = vsel %vm714, %v3128, 0
    %3172 = vmatprep.subr.bf16.mxu0 0
    %3173 = vmatpush1.bf16.msra.mxu0 %v3144
    %3174 = vmatprep.subr.bf16.mxu0 0
    %3175 = vmatpush1.bf16.msra.mxu0 %v3145
    %3176 = vmatprep.subr.bf16.mxu0 0
    %3177 = vmatpush1.bf16.msra.mxu0 0
    %3178 = vmatprep.subr.bf16.mxu0 0
    %3179 = vmatpush1.bf16.msra.mxu0 0
    %3180 = vmatprep.subr.bf16.mxu0 0
    %3181 = vmatpush1.bf16.msra.mxu0 0
    %3182 = vmatprep.subr.bf16.mxu0 0
    %3183 = vmatpush1.bf16.msra.mxu0 0
    %3184 = vmatprep.subr.bf16.mxu0 0
    %3185 = vmatpush1.bf16.msra.mxu0 0
    %3186 = vmatprep.subr.bf16.mxu0 0
    %3187 = vmatpush1.bf16.msra.mxu0 0
    %3188 = vmatprep.subr.bf16.mxu0 0
    %3189 = vmatpush1.bf16.msra.mxu0 0
    %3190 = vmatprep.subr.bf16.mxu0 0
    %3191 = vmatpush1.bf16.msra.mxu0 0
    %3192 = vmatprep.subr.bf16.mxu0 0
    %3193 = vmatpush1.bf16.msra.mxu0 0
    %3194 = vmatprep.subr.bf16.mxu0 0
    %3195 = vmatpush1.bf16.msra.mxu0 0
    %3196 = vmatprep.subr.bf16.mxu0 0
    %3197 = vmatpush1.bf16.msra.mxu0 0
    %3198 = vmatprep.subr.bf16.mxu0 0
    %3199 = vmatpush1.bf16.msra.mxu0 0
    %3200 = vmatprep.subr.bf16.mxu0 0
    %3201 = vmatpush1.bf16.msra.mxu0 0
    %3202 = vmatprep.subr.bf16.mxu0 0
    %3203 = vmatpush1.bf16.msra.mxu0 0
    %3204 = vmatprep.mubr.bf16.mxu0 0
    %3205 = vmatmul.mubr.bf16.gmra.mrb[0].mxu0 %v3149
    %v3206 = vpop.f32.mrb[0].mxu0
    %v3207 = vadd.f32 %v3134, %v3206
    %v3208 = vpop.f32.mrb[0].mxu0
    %v3209 = vpop.f32.mrb[0].mxu0
    %v3210 = vadd.f32 %v3134, %v3209
    %v3211 = vpop.f32.mrb[0].mxu0
    %3212 = vmatprep.mubr.bf16.mxu0 0
    %3213 = vmatmul.mubr.bf16.gmra.mrb[0].mxu0 %v3152
    %v3214 = vpop.f32.mrb[0].mxu0
    %v3215 = vadd.f32 %v3134, %v3214
    %v3216 = vpop.f32.mrb[0].mxu0
    %v3217 = vpop.f32.mrb[0].mxu0
    %v3218 = vadd.f32 %v3134, %v3217
    %v3219 = vpop.f32.mrb[0].mxu0
    %3220 = vmatprep.mubr.bf16.mxu0 0
    %3221 = vmatmul.mubr.bf16.gmra.mrb[0].mxu0 %v3155
    %v3222 = vpop.f32.mrb[0].mxu0
    %v3223 = vadd.f32 %v3134, %v3222
    %v3224 = vpop.f32.mrb[0].mxu0
    %v3225 = vpop.f32.mrb[0].mxu0
    %v3226 = vadd.f32 %v3134, %v3225
    %v3227 = vpop.f32.mrb[0].mxu0
    %3228 = vmatprep.mubr.bf16.mxu0 0
    %3229 = vmatmul.mubr.bf16.gmra.mrb[0].mxu0 %v3158
    %v3230 = vpop.f32.mrb[0].mxu0
    %v3231 = vadd.f32 %v3134, %v3230
    %v3232 = vpop.f32.mrb[0].mxu0
    %v3233 = vpop.f32.mrb[0].mxu0
    %v3234 = vadd.f32 %v3134, %v3233
    %v3235 = vpop.f32.mrb[0].mxu0
    %3236 = vmatprep.mubr.bf16.mxu0 0
    %3237 = vmatmul.mubr.bf16.gmra.mrb[0].mxu0 %v3161
    %v3238 = vpop.f32.mrb[0].mxu0
    %v3239 = vadd.f32 %v3134, %v3238
    %v3240 = vpop.f32.mrb[0].mxu0
    %v3241 = vpop.f32.mrb[0].mxu0
    %v3242 = vadd.f32 %v3134, %v3241
    %v3243 = vpop.f32.mrb[0].mxu0
    %3244 = vmatprep.mubr.bf16.mxu0 0
    %3245 = vmatmul.mubr.bf16.gmra.mrb[0].mxu0 %v3164
    %v3246 = vpop.f32.mrb[0].mxu0
    %v3247 = vadd.f32 %v3134, %v3246
    %v3248 = vpop.f32.mrb[0].mxu0
    %v3249 = vpop.f32.mrb[0].mxu0
    %v3250 = vadd.f32 %v3134, %v3249
    %v3251 = vpop.f32.mrb[0].mxu0
    %3252 = vmatprep.mubr.bf16.mxu0 0
    %3253 = vmatmul.mubr.bf16.gmra.mrb[0].mxu0 %v3167
    %v3254 = vpop.f32.mrb[0].mxu0
    %v3255 = vadd.f32 %v3134, %v3254
    %v3256 = vpop.f32.mrb[0].mxu0
    %v3257 = vpop.f32.mrb[0].mxu0
    %v3258 = vadd.f32 %v3134, %v3257
    %v3259 = vpop.f32.mrb[0].mxu0
    %3260 = vmatprep.mubr.bf16.mxu0 0
    %3261 = vmatmul.mubr.bf16.gmra.mrb[0].mxu0 %v3170
    %v3262 = vpop.f32.mrb[0].mxu0
    %v3263 = vadd.f32 %v3134, %v3262
    %v3264 = vpop.f32.mrb[0].mxu0
    %v3265 = vpop.f32.mrb[0].mxu0
    %v3266 = vadd.f32 %v3134, %v3265
    %v3267 = vpop.f32.mrb[0].mxu0
    %3268 = vdwg.mxu0
    %3270 = vrot.lane.b32.xlu0 %v1385, 64
    %v3271 = vpop.permute.xlu0 %3270
    %v3273 = vmul.f32 %v3207, %v3271
    %v3274 = vmul.f32 %v3210, %v3271
    %v3275 = vmul.f32 %v3215, %v3271
    %v3276 = vmul.f32 %v3218, %v3271
    %v3277 = vmul.f32 %v3223, %v3271
    %v3278 = vmul.f32 %v3226, %v3271
    %v3279 = vmul.f32 %v3231, %v3271
    %v3280 = vmul.f32 %v3234, %v3271
    %3282 = vrot.lane.b32.xlu0 %v1413, 64
    %v3283 = vpop.permute.xlu0 %3282
    %v3285 = vmul.f32 %v3239, %v3283
    %v3286 = vmul.f32 %v3242, %v3283
    %v3287 = vmul.f32 %v3247, %v3283
    %v3288 = vmul.f32 %v3250, %v3283
    %v3289 = vmul.f32 %v3255, %v3283
    %v3290 = vmul.f32 %v3258, %v3283
    %v3291 = vmul.f32 %v3263, %v3283
    %v3292 = vmul.f32 %v3266, %v3283
    %v3293 = vadd.f32 %v399, %v3273
    %v3294 = vadd.f32 %v400, %v3274
    %v3295 = vadd.f32 %v401, %v3275
    %v3296 = vadd.f32 %v402, %v3276
    %v3297 = vadd.f32 %v403, %v3277
    %v3298 = vadd.f32 %v404, %v3278
    %v3299 = vadd.f32 %v405, %v3279
    %v3300 = vadd.f32 %v406, %v3280
    %v3301 = vadd.f32 %v407, %v3285
    %v3302 = vadd.f32 %v408, %v3286
    %v3303 = vadd.f32 %v409, %v3287
    %v3304 = vadd.f32 %v410, %v3288
    %v3305 = vadd.f32 %v411, %v3289
    %v3306 = vadd.f32 %v412, %v3290
    %v3307 = vadd.f32 %v413, %v3291
    %v3308 = vadd.f32 %v414, %v3292
    %v3309 = vsel %vm714, %v3293, 0.0
    %3310 = vadd.xlane.f32.xlu0 %v3309
    %v3311 = vpop.xlane.xlu0 %3310
    %v3312 = vsel %vm714, %v3294, 0.0
    %3313 = vadd.xlane.f32.xlu0 %v3312
    %v3314 = vpop.xlane.xlu0 %3313
    %v3315 = vsel %vm714, %v3295, 0.0
    %3316 = vadd.xlane.f32.xlu0 %v3315
    %v3317 = vpop.xlane.xlu0 %3316
    %v3318 = vsel %vm714, %v3296, 0.0
    %3319 = vadd.xlane.f32.xlu0 %v3318
    %v3320 = vpop.xlane.xlu0 %3319
    %v3321 = vsel %vm714, %v3297, 0.0
    %3322 = vadd.xlane.f32.xlu0 %v3321
    %v3323 = vpop.xlane.xlu0 %3322
    %v3324 = vsel %vm714, %v3298, 0.0
    %3325 = vadd.xlane.f32.xlu0 %v3324
    %v3326 = vpop.xlane.xlu0 %3325
    %v3327 = vsel %vm714, %v3299, 0.0
    %3328 = vadd.xlane.f32.xlu0 %v3327
    %v3329 = vpop.xlane.xlu0 %3328
    %v3330 = vsel %vm714, %v3300, 0.0
    %3331 = vadd.xlane.f32.xlu0 %v3330
    %v3332 = vpop.xlane.xlu0 %3331
    %v3333 = vsel %vm714, %v3301, 0.0
    %3334 = vadd.xlane.f32.xlu0 %v3333
    %v3335 = vpop.xlane.xlu0 %3334
    %v3336 = vsel %vm714, %v3302, 0.0
    %3337 = vadd.xlane.f32.xlu0 %v3336
    %v3338 = vpop.xlane.xlu0 %3337
    %v3339 = vsel %vm714, %v3303, 0.0
    %3340 = vadd.xlane.f32.xlu0 %v3339
    %v3341 = vpop.xlane.xlu0 %3340
    %v3342 = vsel %vm714, %v3304, 0.0
    %3343 = vadd.xlane.f32.xlu0 %v3342
    %v3344 = vpop.xlane.xlu0 %3343
    %v3345 = vsel %vm714, %v3305, 0.0
    %3346 = vadd.xlane.f32.xlu0 %v3345
    %v3347 = vpop.xlane.xlu0 %3346
    %v3348 = vsel %vm714, %v3306, 0.0
    %3349 = vadd.xlane.f32.xlu0 %v3348
    %v3350 = vpop.xlane.xlu0 %3349
    %v3351 = vsel %vm714, %v3307, 0.0
    %3352 = vadd.xlane.f32.xlu0 %v3351
    %v3353 = vpop.xlane.xlu0 %3352
    %v3354 = vsel %vm714, %v3308, 0.0
    %3355 = vadd.xlane.f32.xlu0 %v3354
    %v3356 = vpop.xlane.xlu0 %3355
    %v3357 = vmul.f32 %v3311, %v1204
    %v3358 = vmul.f32 %v3314, %v1204
    %v3359 = vmul.f32 %v3317, %v1204
    %v3360 = vmul.f32 %v3320, %v1204
    %v3361 = vmul.f32 %v3323, %v1204
    %v3362 = vmul.f32 %v3326, %v1204
    %v3363 = vmul.f32 %v3329, %v1204
    %v3364 = vmul.f32 %v3332, %v1204
    %v3365 = vmul.f32 %v3335, %v1204
    %v3366 = vmul.f32 %v3338, %v1204
    %v3367 = vmul.f32 %v3341, %v1204
    %v3368 = vmul.f32 %v3344, %v1204
    %v3369 = vmul.f32 %v3347, %v1204
    %v3370 = vmul.f32 %v3350, %v1204
    %v3371 = vmul.f32 %v3353, %v1204
    %v3372 = vmul.f32 %v3356, %v1204
    %v3373 = vsub.f32 %v3293, %v3357
    %v3374 = vsub.f32 %v3294, %v3358
    %v3375 = vsub.f32 %v3295, %v3359
    %v3376 = vsub.f32 %v3296, %v3360
    %v3377 = vsub.f32 %v3297, %v3361
    %v3378 = vsub.f32 %v3298, %v3362
    %v3379 = vsub.f32 %v3299, %v3363
    %v3380 = vsub.f32 %v3300, %v3364
    %v3381 = vsub.f32 %v3301, %v3365
    %v3382 = vsub.f32 %v3302, %v3366
    %v3383 = vsub.f32 %v3303, %v3367
    %v3384 = vsub.f32 %v3304, %v3368
    %v3385 = vsub.f32 %v3305, %v3369
    %v3386 = vsub.f32 %v3306, %v3370
    %v3387 = vsub.f32 %v3307, %v3371
    %v3388 = vsub.f32 %v3308, %v3372
    %v3389 = vmul.f32 %v3373, %v3373
    %v3390 = vmul.f32 %v3374, %v3374
    %v3391 = vmul.f32 %v3375, %v3375
    %v3392 = vmul.f32 %v3376, %v3376
    %v3393 = vmul.f32 %v3377, %v3377
    %v3394 = vmul.f32 %v3378, %v3378
    %v3395 = vmul.f32 %v3379, %v3379
    %v3396 = vmul.f32 %v3380, %v3380
    %v3397 = vmul.f32 %v3381, %v3381
    %v3398 = vmul.f32 %v3382, %v3382
    %v3399 = vmul.f32 %v3383, %v3383
    %v3400 = vmul.f32 %v3384, %v3384
    %v3401 = vmul.f32 %v3385, %v3385
    %v3402 = vmul.f32 %v3386, %v3386
    %v3403 = vmul.f32 %v3387, %v3387
    %v3404 = vmul.f32 %v3388, %v3388
    %v3405 = vsel %vm714, %v3389, 0.0
    %3406 = vadd.xlane.f32.xlu0 %v3405
    %v3407 = vpop.xlane.xlu0 %3406
    %v3408 = vsel %vm714, %v3390, 0.0
    %3409 = vadd.xlane.f32.xlu0 %v3408
    %v3410 = vpop.xlane.xlu0 %3409
    %v3411 = vsel %vm714, %v3391, 0.0
    %3412 = vadd.xlane.f32.xlu0 %v3411
    %v3413 = vpop.xlane.xlu0 %3412
    %v3414 = vsel %vm714, %v3392, 0.0
    %3415 = vadd.xlane.f32.xlu0 %v3414
    %v3416 = vpop.xlane.xlu0 %3415
    %v3417 = vsel %vm714, %v3393, 0.0
    %3418 = vadd.xlane.f32.xlu0 %v3417
    %v3419 = vpop.xlane.xlu0 %3418
    %v3420 = vsel %vm714, %v3394, 0.0
    %3421 = vadd.xlane.f32.xlu0 %v3420
    %v3422 = vpop.xlane.xlu0 %3421
    %v3423 = vsel %vm714, %v3395, 0.0
    %3424 = vadd.xlane.f32.xlu0 %v3423
    %v3425 = vpop.xlane.xlu0 %3424
    %v3426 = vsel %vm714, %v3396, 0.0
    %3427 = vadd.xlane.f32.xlu0 %v3426
    %v3428 = vpop.xlane.xlu0 %3427
    %v3429 = vsel %vm714, %v3397, 0.0
    %3430 = vadd.xlane.f32.xlu0 %v3429
    %v3431 = vpop.xlane.xlu0 %3430
    %v3432 = vsel %vm714, %v3398, 0.0
    %3433 = vadd.xlane.f32.xlu0 %v3432
    %v3434 = vpop.xlane.xlu0 %3433
    %v3435 = vsel %vm714, %v3399, 0.0
    %3436 = vadd.xlane.f32.xlu0 %v3435
    %v3437 = vpop.xlane.xlu0 %3436
    %v3438 = vsel %vm714, %v3400, 0.0
    %3439 = vadd.xlane.f32.xlu0 %v3438
    %v3440 = vpop.xlane.xlu0 %3439
    %v3441 = vsel %vm714, %v3401, 0.0
    %3442 = vadd.xlane.f32.xlu0 %v3441
    %v3443 = vpop.xlane.xlu0 %3442
    %v3444 = vsel %vm714, %v3402, 0.0
    %3445 = vadd.xlane.f32.xlu0 %v3444
    %v3446 = vpop.xlane.xlu0 %3445
    %v3447 = vsel %vm714, %v3403, 0.0
    %3448 = vadd.xlane.f32.xlu0 %v3447
    %v3449 = vpop.xlane.xlu0 %3448
    %v3450 = vsel %vm714, %v3404, 0.0
    %3451 = vadd.xlane.f32.xlu0 %v3450
    %v3452 = vpop.xlane.xlu0 %3451
    %v3453 = vmul.f32 %v3407, %v1204
    %v3454 = vmul.f32 %v3410, %v1204
    %v3455 = vmul.f32 %v3413, %v1204
    %v3456 = vmul.f32 %v3416, %v1204
    %v3457 = vmul.f32 %v3419, %v1204
    %v3458 = vmul.f32 %v3422, %v1204
    %v3459 = vmul.f32 %v3425, %v1204
    %v3460 = vmul.f32 %v3428, %v1204
    %v3461 = vmul.f32 %v3431, %v1204
    %v3462 = vmul.f32 %v3434, %v1204
    %v3463 = vmul.f32 %v3437, %v1204
    %v3464 = vmul.f32 %v3440, %v1204
    %v3465 = vmul.f32 %v3443, %v1204
    %v3466 = vmul.f32 %v3446, %v1204
    %v3467 = vmul.f32 %v3449, %v1204
    %v3468 = vmul.f32 %v3452, %v1204
    %v3469 = vadd.f32 %v3453, 1e-06
    %v3470 = vadd.f32 %v3454, 1e-06
    %v3471 = vadd.f32 %v3455, 1e-06
    %v3472 = vadd.f32 %v3456, 1e-06
    %v3473 = vadd.f32 %v3457, 1e-06
    %v3474 = vadd.f32 %v3458, 1e-06
    %v3475 = vadd.f32 %v3459, 1e-06
    %v3476 = vadd.f32 %v3460, 1e-06
    %v3477 = vadd.f32 %v3461, 1e-06
    %v3478 = vadd.f32 %v3462, 1e-06
    %v3479 = vadd.f32 %v3463, 1e-06
    %v3480 = vadd.f32 %v3464, 1e-06
    %v3481 = vadd.f32 %v3465, 1e-06
    %v3482 = vadd.f32 %v3466, 1e-06
    %v3483 = vadd.f32 %v3467, 1e-06
    %v3484 = vadd.f32 %v3468, 1e-06
    %v3485 = vrsqrt.pop %v3469
    %v3486 = vrsqrt.pop %v3470
    %v3487 = vrsqrt.pop %v3471
    %v3488 = vrsqrt.pop %v3472
    %v3489 = vrsqrt.pop %v3473
    %v3490 = vrsqrt.pop %v3474
    %v3491 = vrsqrt.pop %v3475
    %v3492 = vrsqrt.pop %v3476
    %v3493 = vrsqrt.pop %v3477
    %v3494 = vrsqrt.pop %v3478
    %v3495 = vrsqrt.pop %v3479
    %v3496 = vrsqrt.pop %v3480
    %v3497 = vrsqrt.pop %v3481
    %v3498 = vrsqrt.pop %v3482
    %v3499 = vrsqrt.pop %v3483
    %v3500 = vrsqrt.pop %v3484
    %v3501 = vmul.f32 %v3373, %v3485
    %v3502 = vmul.f32 %v3374, %v3486
    %v3503 = vmul.f32 %v3375, %v3487
    %v3504 = vmul.f32 %v3376, %v3488
    %v3505 = vmul.f32 %v3377, %v3489
    %v3506 = vmul.f32 %v3378, %v3490
    %v3507 = vmul.f32 %v3379, %v3491
    %v3508 = vmul.f32 %v3380, %v3492
    %v3509 = vmul.f32 %v3381, %v3493
    %v3510 = vmul.f32 %v3382, %v3494
    %v3511 = vmul.f32 %v3383, %v3495
    %v3512 = vmul.f32 %v3384, %v3496
    %v3513 = vmul.f32 %v3385, %v3497
    %v3514 = vmul.f32 %v3386, %v3498
    %v3515 = vmul.f32 %v3387, %v3499
    %v3516 = vmul.f32 %v3388, %v3500
    %v3517 = vmul.f32 %v3501, %v1452
    %v3518 = vmul.f32 %v3502, %v1452
    %v3519 = vmul.f32 %v3503, %v1452
    %v3520 = vmul.f32 %v3504, %v1452
    %v3521 = vmul.f32 %v3505, %v1452
    %v3522 = vmul.f32 %v3506, %v1452
    %v3523 = vmul.f32 %v3507, %v1452
    %v3524 = vmul.f32 %v3508, %v1452
    %3525 = vrot.lane.b32.xlu0 %v1385, 32
    %v3526 = vpop.permute.xlu0 %3525
    %v3528 = vadd.f32 %v3517, %v3526
    %v3529 = vadd.f32 %v3518, %v3526
    %v3530 = vadd.f32 %v3519, %v3526
    %v3531 = vadd.f32 %v3520, %v3526
    %v3532 = vadd.f32 %v3521, %v3526
    %v3533 = vadd.f32 %v3522, %v3526
    %v3534 = vadd.f32 %v3523, %v3526
    %v3535 = vadd.f32 %v3524, %v3526
    %v3536 = vmul.f32 %v3509, %v1470
    %v3537 = vmul.f32 %v3510, %v1470
    %v3538 = vmul.f32 %v3511, %v1470
    %v3539 = vmul.f32 %v3512, %v1470
    %v3540 = vmul.f32 %v3513, %v1470
    %v3541 = vmul.f32 %v3514, %v1470
    %v3542 = vmul.f32 %v3515, %v1470
    %v3543 = vmul.f32 %v3516, %v1470
    %3544 = vrot.lane.b32.xlu0 %v1413, 32
    %v3545 = vpop.permute.xlu0 %3544
    %v3547 = vadd.f32 %v3536, %v3545
    %v3548 = vadd.f32 %v3537, %v3545
    %v3549 = vadd.f32 %v3538, %v3545
    %v3550 = vadd.f32 %v3539, %v3545
    %v3551 = vadd.f32 %v3540, %v3545
    %v3552 = vadd.f32 %v3541, %v3545
    %v3553 = vadd.f32 %v3542, %v3545
    %v3554 = vadd.f32 %v3543, %v3545
    %v3555 = vld [vmem:[%s55] sm:$0xf]
    %v3556 = vld [vmem:[%s55 + $0x4] sm:$0xf]
    %v3557 = vld [vmem:[%s55 + $0x8] sm:$0xf]
    %v3558 = vld [vmem:[%s55 + $0xc] sm:$0xf]
    %v3559 = vpack.c.bf16 %v3529, %v3528
    %v3560 = vpack.c.bf16 %v3531, %v3530
    %v3561 = vpack.c.bf16 %v3533, %v3532
    %v3562 = vpack.c.bf16 %v3535, %v3534
    %v3563 = vpack.c.bf16 %v3548, %v3547
    %v3564 = vpack.c.bf16 %v3550, %v3549
    %v3565 = vpack.c.bf16 %v3552, %v3551
    %v3566 = vpack.c.bf16 %v3554, %v3553
    %v3567 = vld [vmem:[%s57] sm:$0x1]
    %v3569 = vlaneseq
    %v3570 = vshrl.u32 %v3569, 7
    %v3571 = vsub.s32 0, %v3570
    %v3572 = vrot.slane %v3567, %v3571
    %v3578 = vunpack.c.l.b16 %v3555
    %v3579 = vunpack.c.l.b16 %v3556
    %v3580 = vunpack.c.l.b16 %v3557
    %v3581 = vunpack.c.l.b16 %v3558
    %v3582 = vpack.c.b16 %v3579, %v3578
    %v3583 = vpack.c.b16 %v3581, %v3580
    %v3587 = vsel %vm714, %v3559, 0
    %v3590 = vsel %vm714, %v3560, 0
    %v3593 = vsel %vm714, %v3561, 0
    %v3596 = vsel %vm714, %v3562, 0
    %v3599 = vsel %vm714, %v3563, 0
    %v3602 = vsel %vm714, %v3564, 0
    %v3605 = vsel %vm714, %v3565, 0
    %v3608 = vsel %vm714, %v3566, 0
    %3610 = vmatprep.subr.bf16.mxu0 0
    %3611 = vmatpush1.bf16.msra.mxu0 %v3582
    %3612 = vmatprep.subr.bf16.mxu0 0
    %3613 = vmatpush1.bf16.msra.mxu0 %v3583
    %3614 = vmatprep.subr.bf16.mxu0 0
    %3615 = vmatpush1.bf16.msra.mxu0 0
    %3616 = vmatprep.subr.bf16.mxu0 0
    %3617 = vmatpush1.bf16.msra.mxu0 0
    %3618 = vmatprep.subr.bf16.mxu0 0
    %3619 = vmatpush1.bf16.msra.mxu0 0
    %3620 = vmatprep.subr.bf16.mxu0 0
    %3621 = vmatpush1.bf16.msra.mxu0 0
    %3622 = vmatprep.subr.bf16.mxu0 0
    %3623 = vmatpush1.bf16.msra.mxu0 0
    %3624 = vmatprep.subr.bf16.mxu0 0
    %3625 = vmatpush1.bf16.msra.mxu0 0
    %3626 = vmatprep.subr.bf16.mxu0 0
    %3627 = vmatpush1.bf16.msra.mxu0 0
    %3628 = vmatprep.subr.bf16.mxu0 0
    %3629 = vmatpush1.bf16.msra.mxu0 0
    %3630 = vmatprep.subr.bf16.mxu0 0
    %3631 = vmatpush1.bf16.msra.mxu0 0
    %3632 = vmatprep.subr.bf16.mxu0 0
    %3633 = vmatpush1.bf16.msra.mxu0 0
    %3634 = vmatprep.subr.bf16.mxu0 0
    %3635 = vmatpush1.bf16.msra.mxu0 0
    %3636 = vmatprep.subr.bf16.mxu0 0
    %3637 = vmatpush1.bf16.msra.mxu0 0
    %3638 = vmatprep.subr.bf16.mxu0 0
    %3639 = vmatpush1.bf16.msra.mxu0 0
    %3640 = vmatprep.subr.bf16.mxu0 0
    %3641 = vmatpush1.bf16.msra.mxu0 0
    %3642 = vmatprep.mubr.bf16.mxu0 0
    %3643 = vmatmul.mubr.bf16.gmra.mrb[0].mxu0 %v3587
    %v3644 = vpop.f32.mrb[0].mxu0
    %v3645 = vadd.f32 %v3572, %v3644
    %v3646 = vpop.f32.mrb[0].mxu0
    %v3647 = vpop.f32.mrb[0].mxu0
    %v3648 = vadd.f32 %v3572, %v3647
    %v3649 = vpop.f32.mrb[0].mxu0
    %3650 = vmatprep.mubr.bf16.mxu0 0
    %3651 = vmatmul.mubr.bf16.gmra.mrb[0].mxu0 %v3590
    %v3652 = vpop.f32.mrb[0].mxu0
    %v3653 = vadd.f32 %v3572, %v3652
    %v3654 = vpop.f32.mrb[0].mxu0
    %v3655 = vpop.f32.mrb[0].mxu0
    %v3656 = vadd.f32 %v3572, %v3655
    %v3657 = vpop.f32.mrb[0].mxu0
    %3658 = vmatprep.mubr.bf16.mxu0 0
    %3659 = vmatmul.mubr.bf16.gmra.mrb[0].mxu0 %v3593
    %v3660 = vpop.f32.mrb[0].mxu0
    %v3661 = vadd.f32 %v3572, %v3660
    %v3662 = vpop.f32.mrb[0].mxu0
    %v3663 = vpop.f32.mrb[0].mxu0
    %v3664 = vadd.f32 %v3572, %v3663
    %v3665 = vpop.f32.mrb[0].mxu0
    %3666 = vmatprep.mubr.bf16.mxu0 0
    %3667 = vmatmul.mubr.bf16.gmra.mrb[0].mxu0 %v3596
    %v3668 = vpop.f32.mrb[0].mxu0
    %v3669 = vadd.f32 %v3572, %v3668
    %v3670 = vpop.f32.mrb[0].mxu0
    %v3671 = vpop.f32.mrb[0].mxu0
    %v3672 = vadd.f32 %v3572, %v3671
    %v3673 = vpop.f32.mrb[0].mxu0
    %3674 = vmatprep.mubr.bf16.mxu0 0
    %3675 = vmatmul.mubr.bf16.gmra.mrb[0].mxu0 %v3599
    %v3676 = vpop.f32.mrb[0].mxu0
    %v3677 = vadd.f32 %v3572, %v3676
    %v3678 = vpop.f32.mrb[0].mxu0
    %v3679 = vpop.f32.mrb[0].mxu0
    %v3680 = vadd.f32 %v3572, %v3679
    %v3681 = vpop.f32.mrb[0].mxu0
    %3682 = vmatprep.mubr.bf16.mxu0 0
    %3683 = vmatmul.mubr.bf16.gmra.mrb[0].mxu0 %v3602
    %v3684 = vpop.f32.mrb[0].mxu0
    %v3685 = vadd.f32 %v3572, %v3684
    %v3686 = vpop.f32.mrb[0].mxu0
    %v3687 = vpop.f32.mrb[0].mxu0
    %v3688 = vadd.f32 %v3572, %v3687
    %v3689 = vpop.f32.mrb[0].mxu0
    %3690 = vmatprep.mubr.bf16.mxu0 0
    %3691 = vmatmul.mubr.bf16.gmra.mrb[0].mxu0 %v3605
    %v3692 = vpop.f32.mrb[0].mxu0
    %v3693 = vadd.f32 %v3572, %v3692
    %v3694 = vpop.f32.mrb[0].mxu0
    %v3695 = vpop.f32.mrb[0].mxu0
    %v3696 = vadd.f32 %v3572, %v3695
    %v3697 = vpop.f32.mrb[0].mxu0
    %3698 = vmatprep.mubr.bf16.mxu0 0
    %3699 = vmatmul.mubr.bf16.gmra.mrb[0].mxu0 %v3608
    %v3700 = vpop.f32.mrb[0].mxu0
    %v3701 = vadd.f32 %v3572, %v3700
    %v3702 = vpop.f32.mrb[0].mxu0
    %v3703 = vpop.f32.mrb[0].mxu0
    %v3704 = vadd.f32 %v3572, %v3703
    %v3705 = vpop.f32.mrb[0].mxu0
    %3706 = vdwg.mxu0
    %v3707 = vmul.f32 %v3645, 0.5
    %v3708 = vmul.f32 %v3648, 0.5
    %v3709 = vmul.f32 %v3653, 0.5
    %v3710 = vmul.f32 %v3656, 0.5
    %v3711 = vmul.f32 %v3661, 0.5
    %v3712 = vmul.f32 %v3664, 0.5
    %v3713 = vmul.f32 %v3669, 0.5
    %v3714 = vmul.f32 %v3672, 0.5
    %v3715 = vmul.f32 %v3677, 0.5
    %v3716 = vmul.f32 %v3680, 0.5
    %v3717 = vmul.f32 %v3685, 0.5
    %v3718 = vmul.f32 %v3688, 0.5
    %v3719 = vmul.f32 %v3693, 0.5
    %v3720 = vmul.f32 %v3696, 0.5
    %v3721 = vmul.f32 %v3701, 0.5
    %v3722 = vmul.f32 %v3704, 0.5
    %v3723 = vmul.f32 %v3645, 0.044715
    %v3724 = vmul.f32 %v3648, 0.044715
    %v3725 = vmul.f32 %v3653, 0.044715
    %v3726 = vmul.f32 %v3656, 0.044715
    %v3727 = vmul.f32 %v3661, 0.044715
    %v3728 = vmul.f32 %v3664, 0.044715
    %v3729 = vmul.f32 %v3669, 0.044715
    %v3730 = vmul.f32 %v3672, 0.044715
    %v3731 = vmul.f32 %v3677, 0.044715
    %v3732 = vmul.f32 %v3680, 0.044715
    %v3733 = vmul.f32 %v3685, 0.044715
    %v3734 = vmul.f32 %v3688, 0.044715
    %v3735 = vmul.f32 %v3693, 0.044715
    %v3736 = vmul.f32 %v3696, 0.044715
    %v3737 = vmul.f32 %v3701, 0.044715
    %v3738 = vmul.f32 %v3704, 0.044715
    %v3739 = vmul.f32 %v3723, %v3645
    %v3740 = vmul.f32 %v3724, %v3648
    %v3741 = vmul.f32 %v3725, %v3653
    %v3742 = vmul.f32 %v3726, %v3656
    %v3743 = vmul.f32 %v3727, %v3661
    %v3744 = vmul.f32 %v3728, %v3664
    %v3745 = vmul.f32 %v3729, %v3669
    %v3746 = vmul.f32 %v3730, %v3672
    %v3747 = vmul.f32 %v3731, %v3677
    %v3748 = vmul.f32 %v3732, %v3680
    %v3749 = vmul.f32 %v3733, %v3685
    %v3750 = vmul.f32 %v3734, %v3688
    %v3751 = vmul.f32 %v3735, %v3693
    %v3752 = vmul.f32 %v3736, %v3696
    %v3753 = vmul.f32 %v3737, %v3701
    %v3754 = vmul.f32 %v3738, %v3704
    %v3755 = vmul.f32 %v3739, %v3645
    %v3756 = vmul.f32 %v3740, %v3648
    %v3757 = vmul.f32 %v3741, %v3653
    %v3758 = vmul.f32 %v3742, %v3656
    %v3759 = vmul.f32 %v3743, %v3661
    %v3760 = vmul.f32 %v3744, %v3664
    %v3761 = vmul.f32 %v3745, %v3669
    %v3762 = vmul.f32 %v3746, %v3672
    %v3763 = vmul.f32 %v3747, %v3677
    %v3764 = vmul.f32 %v3748, %v3680
    %v3765 = vmul.f32 %v3749, %v3685
    %v3766 = vmul.f32 %v3750, %v3688
    %v3767 = vmul.f32 %v3751, %v3693
    %v3768 = vmul.f32 %v3752, %v3696
    %v3769 = vmul.f32 %v3753, %v3701
    %v3770 = vmul.f32 %v3754, %v3704
    %v3771 = vadd.f32 %v3645, %v3755
    %v3772 = vadd.f32 %v3648, %v3756
    %v3773 = vadd.f32 %v3653, %v3757
    %v3774 = vadd.f32 %v3656, %v3758
    %v3775 = vadd.f32 %v3661, %v3759
    %v3776 = vadd.f32 %v3664, %v3760
    %v3777 = vadd.f32 %v3669, %v3761
    %v3778 = vadd.f32 %v3672, %v3762
    %v3779 = vadd.f32 %v3677, %v3763
    %v3780 = vadd.f32 %v3680, %v3764
    %v3781 = vadd.f32 %v3685, %v3765
    %v3782 = vadd.f32 %v3688, %v3766
    %v3783 = vadd.f32 %v3693, %v3767
    %v3784 = vadd.f32 %v3696, %v3768
    %v3785 = vadd.f32 %v3701, %v3769
    %v3786 = vadd.f32 %v3704, %v3770
    %v3787 = vmul.f32 %v3771, 0.7978846
    %v3788 = vmul.f32 %v3772, 0.7978846
    %v3789 = vmul.f32 %v3773, 0.7978846
    %v3790 = vmul.f32 %v3774, 0.7978846
    %v3791 = vmul.f32 %v3775, 0.7978846
    %v3792 = vmul.f32 %v3776, 0.7978846
    %v3793 = vmul.f32 %v3777, 0.7978846
    %v3794 = vmul.f32 %v3778, 0.7978846
    %v3795 = vmul.f32 %v3779, 0.7978846
    %v3796 = vmul.f32 %v3780, 0.7978846
    %v3797 = vmul.f32 %v3781, 0.7978846
    %v3798 = vmul.f32 %v3782, 0.7978846
    %v3799 = vmul.f32 %v3783, 0.7978846
    %v3800 = vmul.f32 %v3784, 0.7978846
    %v3801 = vmul.f32 %v3785, 0.7978846
    %v3802 = vmul.f32 %v3786, 0.7978846
    %v3803 = vtanh.pop %v3787
    %v3804 = vtanh.pop %v3788
    %v3805 = vtanh.pop %v3789
    %v3806 = vtanh.pop %v3790
    %v3807 = vtanh.pop %v3791
    %v3808 = vtanh.pop %v3792
    %v3809 = vtanh.pop %v3793
    %v3810 = vtanh.pop %v3794
    %v3811 = vtanh.pop %v3795
    %v3812 = vtanh.pop %v3796
    %v3813 = vtanh.pop %v3797
    %v3814 = vtanh.pop %v3798
    %v3815 = vtanh.pop %v3799
    %v3816 = vtanh.pop %v3800
    %v3817 = vtanh.pop %v3801
    %v3818 = vtanh.pop %v3802
    %v3819 = vadd.f32 %v3803, 1.0
    %v3820 = vadd.f32 %v3804, 1.0
    %v3821 = vadd.f32 %v3805, 1.0
    %v3822 = vadd.f32 %v3806, 1.0
    %v3823 = vadd.f32 %v3807, 1.0
    %v3824 = vadd.f32 %v3808, 1.0
    %v3825 = vadd.f32 %v3809, 1.0
    %v3826 = vadd.f32 %v3810, 1.0
    %v3827 = vadd.f32 %v3811, 1.0
    %v3828 = vadd.f32 %v3812, 1.0
    %v3829 = vadd.f32 %v3813, 1.0
    %v3830 = vadd.f32 %v3814, 1.0
    %v3831 = vadd.f32 %v3815, 1.0
    %v3832 = vadd.f32 %v3816, 1.0
    %v3833 = vadd.f32 %v3817, 1.0
    %v3834 = vadd.f32 %v3818, 1.0
    %v3835 = vmul.f32 %v3707, %v3819
    %v3836 = vmul.f32 %v3708, %v3820
    %v3837 = vmul.f32 %v3709, %v3821
    %v3838 = vmul.f32 %v3710, %v3822
    %v3839 = vmul.f32 %v3711, %v3823
    %v3840 = vmul.f32 %v3712, %v3824
    %v3841 = vmul.f32 %v3713, %v3825
    %v3842 = vmul.f32 %v3714, %v3826
    %v3843 = vmul.f32 %v3715, %v3827
    %v3844 = vmul.f32 %v3716, %v3828
    %v3845 = vmul.f32 %v3717, %v3829
    %v3846 = vmul.f32 %v3718, %v3830
    %v3847 = vmul.f32 %v3719, %v3831
    %v3848 = vmul.f32 %v3720, %v3832
    %v3849 = vmul.f32 %v3721, %v3833
    %v3850 = vmul.f32 %v3722, %v3834
    %v3851 = vld [vmem:[%s59] sm:$0xf]
    %v3852 = vld [vmem:[%s59 + $0x4] sm:$0xf]
    %v3853 = vld [vmem:[%s59 + $0x8] sm:$0xf]
    %v3854 = vld [vmem:[%s59 + $0xc] sm:$0xf]
    %v3855 = vld [vmem:[%s59 + $0x10] sm:$0xf]
    %v3856 = vld [vmem:[%s59 + $0x14] sm:$0xf]
    %v3857 = vld [vmem:[%s59 + $0x18] sm:$0xf]
    %v3858 = vld [vmem:[%s59 + $0x1c] sm:$0xf]
    %v3859 = vld [vmem:[%s59 + $0x20] sm:$0xf]
    %v3860 = vld [vmem:[%s59 + $0x24] sm:$0xf]
    %v3861 = vld [vmem:[%s59 + $0x28] sm:$0xf]
    %v3862 = vld [vmem:[%s59 + $0x2c] sm:$0xf]
    %v3863 = vld [vmem:[%s59 + $0x30] sm:$0xf]
    %v3864 = vld [vmem:[%s59 + $0x34] sm:$0xf]
    %v3865 = vld [vmem:[%s59 + $0x38] sm:$0xf]
    %v3866 = vld [vmem:[%s59 + $0x3c] sm:$0xf]
    %v3867 = vpack.c.bf16 %v3836, %v3835
    %v3868 = vpack.c.bf16 %v3838, %v3837
    %v3869 = vpack.c.bf16 %v3840, %v3839
    %v3870 = vpack.c.bf16 %v3842, %v3841
    %v3871 = vpack.c.bf16 %v3844, %v3843
    %v3872 = vpack.c.bf16 %v3846, %v3845
    %v3873 = vpack.c.bf16 %v3848, %v3847
    %v3874 = vpack.c.bf16 %v3850, %v3849
    %v3875 = vld [vmem:[%s61] sm:$0x1]
    %v3877 = vlaneseq
    %v3878 = vshrl.u32 %v3877, 7
    %v3879 = vsub.s32 0, %v3878
    %v3880 = vrot.slane %v3875, %v3879
    %v3898 = vunpack.c.l.b16 %v3851
    %v3899 = vunpack.c.l.b16 %v3852
    %v3900 = vunpack.c.l.b16 %v3853
    %v3901 = vunpack.c.l.b16 %v3854
    %v3902 = vunpack.c.l.b16 %v3855
    %v3903 = vunpack.c.l.b16 %v3856
    %v3904 = vunpack.c.l.b16 %v3857
    %v3905 = vunpack.c.l.b16 %v3858
    %v3906 = vunpack.c.l.b16 %v3859
    %v3907 = vunpack.c.l.b16 %v3860
    %v3908 = vunpack.c.l.b16 %v3861
    %v3909 = vunpack.c.l.b16 %v3862
    %v3910 = vunpack.c.l.b16 %v3863
    %v3911 = vunpack.c.l.b16 %v3864
    %v3912 = vunpack.c.l.b16 %v3865
    %v3913 = vunpack.c.l.b16 %v3866
    %v3914 = vpack.c.b16 %v3899, %v3898
    %v3915 = vpack.c.b16 %v3901, %v3900
    %v3916 = vpack.c.b16 %v3903, %v3902
    %v3917 = vpack.c.b16 %v3905, %v3904
    %v3918 = vpack.c.b16 %v3907, %v3906
    %v3919 = vpack.c.b16 %v3909, %v3908
    %v3920 = vpack.c.b16 %v3911, %v3910
    %v3921 = vpack.c.b16 %v3913, %v3912
    %3930 = vmatprep.subr.bf16.mxu0 0
    %3931 = vmatpush1.bf16.msra.mxu0 %v3914
    %3932 = vmatprep.subr.bf16.mxu0 0
    %3933 = vmatpush1.bf16.msra.mxu0 %v3915
    %3934 = vmatprep.subr.bf16.mxu0 0
    %3935 = vmatpush1.bf16.msra.mxu0 %v3916
    %3936 = vmatprep.subr.bf16.mxu0 0
    %3937 = vmatpush1.bf16.msra.mxu0 %v3917
    %3938 = vmatprep.subr.bf16.mxu0 0
    %3939 = vmatpush1.bf16.msra.mxu0 %v3918
    %3940 = vmatprep.subr.bf16.mxu0 0
    %3941 = vmatpush1.bf16.msra.mxu0 %v3919
    %3942 = vmatprep.subr.bf16.mxu0 0
    %3943 = vmatpush1.bf16.msra.mxu0 %v3920
    %3944 = vmatprep.subr.bf16.mxu0 0
    %3945 = vmatpush1.bf16.msra.mxu0 %v3921
    %3946 = vmatprep.subr.bf16.mxu0 0
    %3947 = vmatpush1.bf16.msra.mxu0 0
    %3948 = vmatprep.subr.bf16.mxu0 0
    %3949 = vmatpush1.bf16.msra.mxu0 0
    %3950 = vmatprep.subr.bf16.mxu0 0
    %3951 = vmatpush1.bf16.msra.mxu0 0
    %3952 = vmatprep.subr.bf16.mxu0 0
    %3953 = vmatpush1.bf16.msra.mxu0 0
    %3954 = vmatprep.subr.bf16.mxu0 0
    %3955 = vmatpush1.bf16.msra.mxu0 0
    %3956 = vmatprep.subr.bf16.mxu0 0
    %3957 = vmatpush1.bf16.msra.mxu0 0
    %3958 = vmatprep.subr.bf16.mxu0 0
    %3959 = vmatpush1.bf16.msra.mxu0 0
    %3960 = vmatprep.subr.bf16.mxu0 0
    %3961 = vmatpush1.bf16.msra.mxu0 0
    %3962 = vmatprep.mubr.bf16.mxu0 0
    %3963 = vmatmul.mubr.bf16.gmra.mrb[0].mxu0 %v3867
    %v3964 = vpop.f32.mrb[0].mxu0
    %v3965 = vadd.f32 %v3880, %v3964
    %v3966 = vpop.f32.mrb[0].mxu0
    %v3967 = vpop.f32.mrb[0].mxu0
    %v3968 = vadd.f32 %v3880, %v3967
    %v3969 = vpop.f32.mrb[0].mxu0
    %3970 = vmatprep.mubr.bf16.mxu0 0
    %3971 = vmatmul.mubr.bf16.gmra.mrb[0].mxu0 %v3868
    %v3972 = vpop.f32.mrb[0].mxu0
    %v3973 = vadd.f32 %v3880, %v3972
    %v3974 = vpop.f32.mrb[0].mxu0
    %v3975 = vpop.f32.mrb[0].mxu0
    %v3976 = vadd.f32 %v3880, %v3975
    %v3977 = vpop.f32.mrb[0].mxu0
    %3978 = vmatprep.mubr.bf16.mxu0 0
    %3979 = vmatmul.mubr.bf16.gmra.mrb[0].mxu0 %v3869
    %v3980 = vpop.f32.mrb[0].mxu0
    %v3981 = vadd.f32 %v3880, %v3980
    %v3982 = vpop.f32.mrb[0].mxu0
    %v3983 = vpop.f32.mrb[0].mxu0
    %v3984 = vadd.f32 %v3880, %v3983
    %v3985 = vpop.f32.mrb[0].mxu0
    %3986 = vmatprep.mubr.bf16.mxu0 0
    %3987 = vmatmul.mubr.bf16.gmra.mrb[0].mxu0 %v3870
    %v3988 = vpop.f32.mrb[0].mxu0
    %v3989 = vadd.f32 %v3880, %v3988
    %v3990 = vpop.f32.mrb[0].mxu0
    %v3991 = vpop.f32.mrb[0].mxu0
    %v3992 = vadd.f32 %v3880, %v3991
    %v3993 = vpop.f32.mrb[0].mxu0
    %3994 = vmatprep.mubr.bf16.mxu0 0
    %3995 = vmatmul.mubr.bf16.gmra.mrb[0].mxu0 %v3871
    %v3996 = vpop.f32.mrb[0].mxu0
    %v3997 = vadd.f32 %v3880, %v3996
    %v3998 = vpop.f32.mrb[0].mxu0
    %v3999 = vpop.f32.mrb[0].mxu0
    %v4000 = vadd.f32 %v3880, %v3999
    %v4001 = vpop.f32.mrb[0].mxu0
    %4002 = vmatprep.mubr.bf16.mxu0 0
    %4003 = vmatmul.mubr.bf16.gmra.mrb[0].mxu0 %v3872
    %v4004 = vpop.f32.mrb[0].mxu0
    %v4005 = vadd.f32 %v3880, %v4004
    %v4006 = vpop.f32.mrb[0].mxu0
    %v4007 = vpop.f32.mrb[0].mxu0
    %v4008 = vadd.f32 %v3880, %v4007
    %v4009 = vpop.f32.mrb[0].mxu0
    %4010 = vmatprep.mubr.bf16.mxu0 0
    %4011 = vmatmul.mubr.bf16.gmra.mrb[0].mxu0 %v3873
    %v4012 = vpop.f32.mrb[0].mxu0
    %v4013 = vadd.f32 %v3880, %v4012
    %v4014 = vpop.f32.mrb[0].mxu0
    %v4015 = vpop.f32.mrb[0].mxu0
    %v4016 = vadd.f32 %v3880, %v4015
    %v4017 = vpop.f32.mrb[0].mxu0
    %4018 = vmatprep.mubr.bf16.mxu0 0
    %4019 = vmatmul.mubr.bf16.gmra.mrb[0].mxu0 %v3874
    %v4020 = vpop.f32.mrb[0].mxu0
    %v4021 = vadd.f32 %v3880, %v4020
    %v4022 = vpop.f32.mrb[0].mxu0
    %v4023 = vpop.f32.mrb[0].mxu0
    %v4024 = vadd.f32 %v3880, %v4023
    %v4025 = vpop.f32.mrb[0].mxu0
    %4026 = vdwg.mxu0
    %4027 = vrot.lane.b32.xlu0 %v1461, 96
    %v4028 = vpop.permute.xlu0 %4027
    %v4030 = vmul.f32 %v3965, %v4028
    %v4031 = vmul.f32 %v3968, %v4028
    %v4032 = vmul.f32 %v3973, %v4028
    %v4033 = vmul.f32 %v3976, %v4028
    %v4034 = vmul.f32 %v3981, %v4028
    %v4035 = vmul.f32 %v3984, %v4028
    %v4036 = vmul.f32 %v3989, %v4028
    %v4037 = vmul.f32 %v3992, %v4028
    %4038 = vrot.lane.b32.xlu0 %v1479, 96
    %v4039 = vpop.permute.xlu0 %4038
    %v4041 = vmul.f32 %v3997, %v4039
    %v4042 = vmul.f32 %v4000, %v4039
    %v4043 = vmul.f32 %v4005, %v4039
    %v4044 = vmul.f32 %v4008, %v4039
    %v4045 = vmul.f32 %v4013, %v4039
    %v4046 = vmul.f32 %v4016, %v4039
    %v4047 = vmul.f32 %v4021, %v4039
    %v4048 = vmul.f32 %v4024, %v4039
    %v4049 = vadd.f32 %v3293, %v4030
    %v4050 = vadd.f32 %v3294, %v4031
    %v4051 = vadd.f32 %v3295, %v4032
    %v4052 = vadd.f32 %v3296, %v4033
    %v4053 = vadd.f32 %v3297, %v4034
    %v4054 = vadd.f32 %v3298, %v4035
    %v4055 = vadd.f32 %v3299, %v4036
    %v4056 = vadd.f32 %v3300, %v4037
    %v4057 = vadd.f32 %v3301, %v4041
    %v4058 = vadd.f32 %v3302, %v4042
    %v4059 = vadd.f32 %v3303, %v4043
    %v4060 = vadd.f32 %v3304, %v4044
    %v4061 = vadd.f32 %v3305, %v4045
    %v4062 = vadd.f32 %v3306, %v4046
    %v4063 = vadd.f32 %v3307, %v4047
    %v4064 = vadd.f32 %v3308, %v4048
    %v4065 = vld [vmem:[%s51] sm:$0xf]
    %v4066 = vld [vmem:[%s51 + $0x4] sm:$0xf]
    %v4067 = vld [vmem:[%s51 + $0x8] sm:$0xf]
    %v4068 = vld [vmem:[%s51 + $0xc] sm:$0xf]
    %v4069 = vpack.c.bf16 %v3116, %v2411
    %v4070 = vld [vmem:[%s53] sm:$0x1]
    %v4072 = vlaneseq
    %v4073 = vshrl.u32 %v4072, 7
    %v4074 = vsub.s32 0, %v4073
    %v4075 = vrot.slane %v4070, %v4074
    %v4081 = vunpack.c.l.b16 %v4065
    %v4082 = vunpack.c.l.b16 %v4066
    %v4083 = vunpack.c.l.b16 %v4067
    %v4084 = vunpack.c.l.b16 %v4068
    %v4085 = vpack.c.b16 %v4082, %v4081
    %v4086 = vpack.c.b16 %v4084, %v4083
    %v4090 = vsel %vm714, %v4069, 0
    %4092 = vmatprep.subr.bf16.mxu0 0
    %4093 = vmatpush1.bf16.msra.mxu0 %v4085
    %4094 = vmatprep.subr.bf16.mxu0 0
    %4095 = vmatpush1.bf16.msra.mxu0 %v4086
    %4096 = vmatprep.subr.bf16.mxu0 0
    %4097 = vmatpush1.bf16.msra.mxu0 0
    %4098 = vmatprep.subr.bf16.mxu0 0
    %4099 = vmatpush1.bf16.msra.mxu0 0
    %4100 = vmatprep.subr.bf16.mxu0 0
    %4101 = vmatpush1.bf16.msra.mxu0 0
    %4102 = vmatprep.subr.bf16.mxu0 0
    %4103 = vmatpush1.bf16.msra.mxu0 0
    %4104 = vmatprep.subr.bf16.mxu0 0
    %4105 = vmatpush1.bf16.msra.mxu0 0
    %4106 = vmatprep.subr.bf16.mxu0 0
    %4107 = vmatpush1.bf16.msra.mxu0 0
    %4108 = vmatprep.subr.bf16.mxu0 0
    %4109 = vmatpush1.bf16.msra.mxu0 0
    %4110 = vmatprep.subr.bf16.mxu0 0
    %4111 = vmatpush1.bf16.msra.mxu0 0
    %4112 = vmatprep.subr.bf16.mxu0 0
    %4113 = vmatpush1.bf16.msra.mxu0 0
    %4114 = vmatprep.subr.bf16.mxu0 0
    %4115 = vmatpush1.bf16.msra.mxu0 0
    %4116 = vmatprep.subr.bf16.mxu0 0
    %4117 = vmatpush1.bf16.msra.mxu0 0
    %4118 = vmatprep.subr.bf16.mxu0 0
    %4119 = vmatpush1.bf16.msra.mxu0 0
    %4120 = vmatprep.subr.bf16.mxu0 0
    %4121 = vmatpush1.bf16.msra.mxu0 0
    %4122 = vmatprep.subr.bf16.mxu0 0
    %4123 = vmatpush1.bf16.msra.mxu0 0
    %4124 = vmatprep.mubr.bf16.mxu0 0
    %4125 = vmatmul.mubr.bf16.gmra.mrb[0].mxu0 %v4090
    %v4126 = vpop.f32.mrb[0].mxu0
    %v4127 = vadd.f32 %v4075, %v4126
    %v4128 = vpop.f32.mrb[0].mxu0
    %v4129 = vpop.f32.mrb[0].mxu0
    %v4130 = vadd.f32 %v4075, %v4129
    %v4131 = vpop.f32.mrb[0].mxu0
    %4132 = vdwg.mxu0
    %v4133 = vlaneseq
    %v4134 = vshrl.u32 %v4133, 7
    %v4135 = vsub.s32 0, %v4134
    %v4136 = vrot.slane %v1109, %v4135
    %v4137 = vmul.f32 %v4127, %v4136
    %v4138 = vlaneseq
    %v4139 = vshrl.u32 %v4138, 7
    %v4140 = vsub.s32 1, %v4139
    %v4141 = vrot.slane %v1109, %v4140
    %v4142 = vmul.f32 %v4130, %v4141
    %v4143 = vadd.f32 %v488, %v4137
    %v4144 = vadd.f32 %v491, %v4142
    %v4145 = vsel %vm714, %v4143, 0.0
    %4146 = vadd.xlane.f32.xlu0 %v4145
    %v4147 = vpop.xlane.xlu0 %4146
    %v4148 = vsel %vm714, %v4144, 0.0
    %4149 = vadd.xlane.f32.xlu0 %v4148
    %v4150 = vpop.xlane.xlu0 %4149
    %v4151 = vmul.f32 %v4147, %v1204
    %v4152 = vmul.f32 %v4150, %v1204
    %v4153 = vsub.f32 %v4143, %v4151
    %v4154 = vsub.f32 %v4144, %v4152
    %v4155 = vmul.f32 %v4153, %v4153
    %v4156 = vmul.f32 %v4154, %v4154
    %v4157 = vsel %vm714, %v4155, 0.0
    %4158 = vadd.xlane.f32.xlu0 %v4157
    %v4159 = vpop.xlane.xlu0 %4158
    %v4160 = vsel %vm714, %v4156, 0.0
    %4161 = vadd.xlane.f32.xlu0 %v4160
    %v4162 = vpop.xlane.xlu0 %4161
    %v4163 = vmul.f32 %v4159, %v1204
    %v4164 = vmul.f32 %v4162, %v1204
    %v4165 = vadd.f32 %v4163, 1e-06
    %v4166 = vadd.f32 %v4164, 1e-06
    %v4167 = vrsqrt.pop %v4165
    %v4168 = vrsqrt.pop %v4166
    %v4169 = vmul.f32 %v4153, %v4167
    %v4170 = vmul.f32 %v4154, %v4168
    %v4171 = vadd.f32 %v1109, 1.0
    %v4172 = vlaneseq
    %v4173 = vshrl.u32 %v4172, 7
    %v4174 = vsub.s32 0, %v4173
    %v4175 = vrot.slane %v4171, %v4174
    %4177 = vrot.lane.b32.xlu0 %v4175, 64
    %v4178 = vpop.permute.xlu0 %4177
    %v4180 = vmul.f32 %v4169, %v4178
    %4182 = vrot.lane.b32.xlu0 %v4136, 96
    %v4183 = vpop.permute.xlu0 %4182
    %v4185 = vadd.f32 %v4180, %v4183
    %v4186 = vlaneseq
    %v4187 = vshrl.u32 %v4186, 7
    %v4188 = vsub.s32 1, %v4187
    %v4189 = vrot.slane %v4171, %v4188
    %4191 = vrot.lane.b32.xlu0 %v4189, 64
    %v4192 = vpop.permute.xlu0 %4191
    %v4194 = vmul.f32 %v4170, %v4192
    %4196 = vrot.lane.b32.xlu0 %v4141, 96
    %v4197 = vpop.permute.xlu0 %4196
    %v4199 = vadd.f32 %v4194, %v4197
    %v4200 = vld [vmem:[%s63] sm:$0xf]
    %v4201 = vld [vmem:[%s63 + $0x4] sm:$0xf]
    %v4202 = vld [vmem:[%s63 + $0x8] sm:$0xf]
    %v4203 = vld [vmem:[%s63 + $0xc] sm:$0xf]
    %v4204 = vpack.c.bf16 %v4199, %v4185
    %v4205 = vld [vmem:[%s65] sm:$0x1]
    %v4207 = vlaneseq
    %v4208 = vshrl.u32 %v4207, 7
    %v4209 = vsub.s32 0, %v4208
    %v4210 = vrot.slane %v4205, %v4209
    %v4216 = vunpack.c.l.b16 %v4200
    %v4217 = vunpack.c.l.b16 %v4201
    %v4218 = vunpack.c.l.b16 %v4202
    %v4219 = vunpack.c.l.b16 %v4203
    %v4220 = vpack.c.b16 %v4217, %v4216
    %v4221 = vpack.c.b16 %v4219, %v4218
    %v4225 = vsel %vm714, %v4204, 0
    %4227 = vmatprep.subr.bf16.mxu0 0
    %4228 = vmatpush1.bf16.msra.mxu0 %v4220
    %4229 = vmatprep.subr.bf16.mxu0 0
    %4230 = vmatpush1.bf16.msra.mxu0 %v4221
    %4231 = vmatprep.subr.bf16.mxu0 0
    %4232 = vmatpush1.bf16.msra.mxu0 0
    %4233 = vmatprep.subr.bf16.mxu0 0
    %4234 = vmatpush1.bf16.msra.mxu0 0
    %4235 = vmatprep.subr.bf16.mxu0 0
    %4236 = vmatpush1.bf16.msra.mxu0 0
    %4237 = vmatprep.subr.bf16.mxu0 0
    %4238 = vmatpush1.bf16.msra.mxu0 0
    %4239 = vmatprep.subr.bf16.mxu0 0
    %4240 = vmatpush1.bf16.msra.mxu0 0
    %4241 = vmatprep.subr.bf16.mxu0 0
    %4242 = vmatpush1.bf16.msra.mxu0 0
    %4243 = vmatprep.subr.bf16.mxu0 0
    %4244 = vmatpush1.bf16.msra.mxu0 0
    %4245 = vmatprep.subr.bf16.mxu0 0
    %4246 = vmatpush1.bf16.msra.mxu0 0
    %4247 = vmatprep.subr.bf16.mxu0 0
    %4248 = vmatpush1.bf16.msra.mxu0 0
    %4249 = vmatprep.subr.bf16.mxu0 0
    %4250 = vmatpush1.bf16.msra.mxu0 0
    %4251 = vmatprep.subr.bf16.mxu0 0
    %4252 = vmatpush1.bf16.msra.mxu0 0
    %4253 = vmatprep.subr.bf16.mxu0 0
    %4254 = vmatpush1.bf16.msra.mxu0 0
    %4255 = vmatprep.subr.bf16.mxu0 0
    %4256 = vmatpush1.bf16.msra.mxu0 0
    %4257 = vmatprep.subr.bf16.mxu0 0
    %4258 = vmatpush1.bf16.msra.mxu0 0
    %4259 = vmatprep.mubr.bf16.mxu0 0
    %4260 = vmatmul.mubr.bf16.gmra.mrb[0].mxu0 %v4225
    %v4261 = vpop.f32.mrb[0].mxu0
    %v4262 = vadd.f32 %v4210, %v4261
    %v4263 = vpop.f32.mrb[0].mxu0
    %v4264 = vpop.f32.mrb[0].mxu0
    %v4265 = vadd.f32 %v4210, %v4264
    %v4266 = vpop.f32.mrb[0].mxu0
    %4267 = vdwg.mxu0
    %v4268 = vmul.f32 %v4262, 0.5
    %v4269 = vmul.f32 %v4265, 0.5
    %v4270 = vmul.f32 %v4262, 0.044715
    %v4271 = vmul.f32 %v4265, 0.044715
    %v4272 = vmul.f32 %v4270, %v4262
    %v4273 = vmul.f32 %v4271, %v4265
    %v4274 = vmul.f32 %v4272, %v4262
    %v4275 = vmul.f32 %v4273, %v4265
    %v4276 = vadd.f32 %v4262, %v4274
    %v4277 = vadd.f32 %v4265, %v4275
    %v4278 = vmul.f32 %v4276, 0.7978846
    %v4279 = vmul.f32 %v4277, 0.7978846
    %v4280 = vtanh.pop %v4278
    %v4281 = vtanh.pop %v4279
    %v4282 = vadd.f32 %v4280, 1.0
    %v4283 = vadd.f32 %v4281, 1.0
    %v4284 = vmul.f32 %v4268, %v4282
    %v4285 = vmul.f32 %v4269, %v4283
    %v4286 = vld [vmem:[%s67] sm:$0xf]
    %v4287 = vld [vmem:[%s67 + $0x4] sm:$0xf]
    %v4288 = vld [vmem:[%s67 + $0x8] sm:$0xf]
    %v4289 = vld [vmem:[%s67 + $0xc] sm:$0xf]
    %v4290 = vld [vmem:[%s67 + $0x10] sm:$0xf]
    %v4291 = vld [vmem:[%s67 + $0x14] sm:$0xf]
    %v4292 = vld [vmem:[%s67 + $0x18] sm:$0xf]
    %v4293 = vld [vmem:[%s67 + $0x1c] sm:$0xf]
    %v4294 = vld [vmem:[%s67 + $0x20] sm:$0xf]
    %v4295 = vld [vmem:[%s67 + $0x24] sm:$0xf]
    %v4296 = vld [vmem:[%s67 + $0x28] sm:$0xf]
    %v4297 = vld [vmem:[%s67 + $0x2c] sm:$0xf]
    %v4298 = vld [vmem:[%s67 + $0x30] sm:$0xf]
    %v4299 = vld [vmem:[%s67 + $0x34] sm:$0xf]
    %v4300 = vld [vmem:[%s67 + $0x38] sm:$0xf]
    %v4301 = vld [vmem:[%s67 + $0x3c] sm:$0xf]
    %v4302 = vpack.c.bf16 %v4285, %v4284
    %v4303 = vld [vmem:[%s69] sm:$0x1]
    %v4305 = vlaneseq
    %v4306 = vshrl.u32 %v4305, 7
    %v4307 = vsub.s32 0, %v4306
    %v4308 = vrot.slane %v4303, %v4307
    %v4326 = vunpack.c.l.b16 %v4286
    %v4327 = vunpack.c.l.b16 %v4287
    %v4328 = vunpack.c.l.b16 %v4288
    %v4329 = vunpack.c.l.b16 %v4289
    %v4330 = vunpack.c.l.b16 %v4290
    %v4331 = vunpack.c.l.b16 %v4291
    %v4332 = vunpack.c.l.b16 %v4292
    %v4333 = vunpack.c.l.b16 %v4293
    %v4334 = vunpack.c.l.b16 %v4294
    %v4335 = vunpack.c.l.b16 %v4295
    %v4336 = vunpack.c.l.b16 %v4296
    %v4337 = vunpack.c.l.b16 %v4297
    %v4338 = vunpack.c.l.b16 %v4298
    %v4339 = vunpack.c.l.b16 %v4299
    %v4340 = vunpack.c.l.b16 %v4300
    %v4341 = vunpack.c.l.b16 %v4301
    %v4342 = vpack.c.b16 %v4327, %v4326
    %v4343 = vpack.c.b16 %v4329, %v4328
    %v4344 = vpack.c.b16 %v4331, %v4330
    %v4345 = vpack.c.b16 %v4333, %v4332
    %v4346 = vpack.c.b16 %v4335, %v4334
    %v4347 = vpack.c.b16 %v4337, %v4336
    %v4348 = vpack.c.b16 %v4339, %v4338
    %v4349 = vpack.c.b16 %v4341, %v4340
    %4358 = vmatprep.subr.bf16.mxu0 0
    %4359 = vmatpush1.bf16.msra.mxu0 %v4342
    %4360 = vmatprep.subr.bf16.mxu0 0
    %4361 = vmatpush1.bf16.msra.mxu0 %v4343
    %4362 = vmatprep.subr.bf16.mxu0 0
    %4363 = vmatpush1.bf16.msra.mxu0 %v4344
    %4364 = vmatprep.subr.bf16.mxu0 0
    %4365 = vmatpush1.bf16.msra.mxu0 %v4345
    %4366 = vmatprep.subr.bf16.mxu0 0
    %4367 = vmatpush1.bf16.msra.mxu0 %v4346
    %4368 = vmatprep.subr.bf16.mxu0 0
    %4369 = vmatpush1.bf16.msra.mxu0 %v4347
    %4370 = vmatprep.subr.bf16.mxu0 0
    %4371 = vmatpush1.bf16.msra.mxu0 %v4348
    %4372 = vmatprep.subr.bf16.mxu0 0
    %4373 = vmatpush1.bf16.msra.mxu0 %v4349
    %4374 = vmatprep.subr.bf16.mxu0 0
    %4375 = vmatpush1.bf16.msra.mxu0 0
    %4376 = vmatprep.subr.bf16.mxu0 0
    %4377 = vmatpush1.bf16.msra.mxu0 0
    %4378 = vmatprep.subr.bf16.mxu0 0
    %4379 = vmatpush1.bf16.msra.mxu0 0
    %4380 = vmatprep.subr.bf16.mxu0 0
    %4381 = vmatpush1.bf16.msra.mxu0 0
    %4382 = vmatprep.subr.bf16.mxu0 0
    %4383 = vmatpush1.bf16.msra.mxu0 0
    %4384 = vmatprep.subr.bf16.mxu0 0
    %4385 = vmatpush1.bf16.msra.mxu0 0
    %4386 = vmatprep.subr.bf16.mxu0 0
    %4387 = vmatpush1.bf16.msra.mxu0 0
    %4388 = vmatprep.subr.bf16.mxu0 0
    %4389 = vmatpush1.bf16.msra.mxu0 0
    %4390 = vmatprep.mubr.bf16.mxu0 0
    %4391 = vmatmul.mubr.bf16.gmra.mrb[0].mxu0 %v4302
    %v4392 = vpop.f32.mrb[0].mxu0
    %v4393 = vadd.f32 %v4308, %v4392
    %v4394 = vpop.f32.mrb[0].mxu0
    %v4395 = vpop.f32.mrb[0].mxu0
    %v4396 = vadd.f32 %v4308, %v4395
    %v4397 = vpop.f32.mrb[0].mxu0
    %4398 = vdwg.mxu0
    %4399 = vrot.lane.b32.xlu0 %v4136, 32
    %v4400 = vpop.permute.xlu0 %4399
    %v4402 = vmul.f32 %v4393, %v4400
    %4403 = vrot.lane.b32.xlu0 %v4141, 32
    %v4404 = vpop.permute.xlu0 %4403
    %v4406 = vmul.f32 %v4396, %v4404
    %v4407 = vadd.f32 %v4143, %v4402
    %v4408 = vadd.f32 %v4144, %v4406
    %v4409 = vsel %vm714, %v4049, 0.0
    %4410 = vadd.xlane.f32.xlu0 %v4409
    %v4411 = vpop.xlane.xlu0 %4410
    %v4412 = vsel %vm714, %v4050, 0.0
    %4413 = vadd.xlane.f32.xlu0 %v4412
    %v4414 = vpop.xlane.xlu0 %4413
    %v4415 = vsel %vm714, %v4051, 0.0
    %4416 = vadd.xlane.f32.xlu0 %v4415
    %v4417 = vpop.xlane.xlu0 %4416
    %v4418 = vsel %vm714, %v4052, 0.0
    %4419 = vadd.xlane.f32.xlu0 %v4418
    %v4420 = vpop.xlane.xlu0 %4419
    %v4421 = vsel %vm714, %v4053, 0.0
    %4422 = vadd.xlane.f32.xlu0 %v4421
    %v4423 = vpop.xlane.xlu0 %4422
    %v4424 = vsel %vm714, %v4054, 0.0
    %4425 = vadd.xlane.f32.xlu0 %v4424
    %v4426 = vpop.xlane.xlu0 %4425
    %v4427 = vsel %vm714, %v4055, 0.0
    %4428 = vadd.xlane.f32.xlu0 %v4427
    %v4429 = vpop.xlane.xlu0 %4428
    %v4430 = vsel %vm714, %v4056, 0.0
    %4431 = vadd.xlane.f32.xlu0 %v4430
    %v4432 = vpop.xlane.xlu0 %4431
    %v4433 = vsel %vm714, %v4057, 0.0
    %4434 = vadd.xlane.f32.xlu0 %v4433
    %v4435 = vpop.xlane.xlu0 %4434
    %v4436 = vsel %vm714, %v4058, 0.0
    %4437 = vadd.xlane.f32.xlu0 %v4436
    %v4438 = vpop.xlane.xlu0 %4437
    %v4439 = vsel %vm714, %v4059, 0.0
    %4440 = vadd.xlane.f32.xlu0 %v4439
    %v4441 = vpop.xlane.xlu0 %4440
    %v4442 = vsel %vm714, %v4060, 0.0
    %4443 = vadd.xlane.f32.xlu0 %v4442
    %v4444 = vpop.xlane.xlu0 %4443
    %v4445 = vsel %vm714, %v4061, 0.0
    %4446 = vadd.xlane.f32.xlu0 %v4445
    %v4447 = vpop.xlane.xlu0 %4446
    %v4448 = vsel %vm714, %v4062, 0.0
    %4449 = vadd.xlane.f32.xlu0 %v4448
    %v4450 = vpop.xlane.xlu0 %4449
    %v4451 = vsel %vm714, %v4063, 0.0
    %4452 = vadd.xlane.f32.xlu0 %v4451
    %v4453 = vpop.xlane.xlu0 %4452
    %v4454 = vsel %vm714, %v4064, 0.0
    %4455 = vadd.xlane.f32.xlu0 %v4454
    %v4456 = vpop.xlane.xlu0 %4455
    %v4457 = vmul.f32 %v4411, %v1204
    %v4458 = vmul.f32 %v4414, %v1204
    %v4459 = vmul.f32 %v4417, %v1204
    %v4460 = vmul.f32 %v4420, %v1204
    %v4461 = vmul.f32 %v4423, %v1204
    %v4462 = vmul.f32 %v4426, %v1204
    %v4463 = vmul.f32 %v4429, %v1204
    %v4464 = vmul.f32 %v4432, %v1204
    %v4465 = vmul.f32 %v4435, %v1204
    %v4466 = vmul.f32 %v4438, %v1204
    %v4467 = vmul.f32 %v4441, %v1204
    %v4468 = vmul.f32 %v4444, %v1204
    %v4469 = vmul.f32 %v4447, %v1204
    %v4470 = vmul.f32 %v4450, %v1204
    %v4471 = vmul.f32 %v4453, %v1204
    %v4472 = vmul.f32 %v4456, %v1204
    %v4473 = vsub.f32 %v4049, %v4457
    %v4474 = vsub.f32 %v4050, %v4458
    %v4475 = vsub.f32 %v4051, %v4459
    %v4476 = vsub.f32 %v4052, %v4460
    %v4477 = vsub.f32 %v4053, %v4461
    %v4478 = vsub.f32 %v4054, %v4462
    %v4479 = vsub.f32 %v4055, %v4463
    %v4480 = vsub.f32 %v4056, %v4464
    %v4481 = vsub.f32 %v4057, %v4465
    %v4482 = vsub.f32 %v4058, %v4466
    %v4483 = vsub.f32 %v4059, %v4467
    %v4484 = vsub.f32 %v4060, %v4468
    %v4485 = vsub.f32 %v4061, %v4469
    %v4486 = vsub.f32 %v4062, %v4470
    %v4487 = vsub.f32 %v4063, %v4471
    %v4488 = vsub.f32 %v4064, %v4472
    %v4489 = vmul.f32 %v4473, %v4473
    %v4490 = vmul.f32 %v4474, %v4474
    %v4491 = vmul.f32 %v4475, %v4475
    %v4492 = vmul.f32 %v4476, %v4476
    %v4493 = vmul.f32 %v4477, %v4477
    %v4494 = vmul.f32 %v4478, %v4478
    %v4495 = vmul.f32 %v4479, %v4479
    %v4496 = vmul.f32 %v4480, %v4480
    %v4497 = vmul.f32 %v4481, %v4481
    %v4498 = vmul.f32 %v4482, %v4482
    %v4499 = vmul.f32 %v4483, %v4483
    %v4500 = vmul.f32 %v4484, %v4484
    %v4501 = vmul.f32 %v4485, %v4485
    %v4502 = vmul.f32 %v4486, %v4486
    %v4503 = vmul.f32 %v4487, %v4487
    %v4504 = vmul.f32 %v4488, %v4488
    %v4505 = vsel %vm714, %v4489, 0.0
    %4506 = vadd.xlane.f32.xlu0 %v4505
    %v4507 = vpop.xlane.xlu0 %4506
    %v4508 = vsel %vm714, %v4490, 0.0
    %4509 = vadd.xlane.f32.xlu0 %v4508
    %v4510 = vpop.xlane.xlu0 %4509
    %v4511 = vsel %vm714, %v4491, 0.0
    %4512 = vadd.xlane.f32.xlu0 %v4511
    %v4513 = vpop.xlane.xlu0 %4512
    %v4514 = vsel %vm714, %v4492, 0.0
    %4515 = vadd.xlane.f32.xlu0 %v4514
    %v4516 = vpop.xlane.xlu0 %4515
    %v4517 = vsel %vm714, %v4493, 0.0
    %4518 = vadd.xlane.f32.xlu0 %v4517
    %v4519 = vpop.xlane.xlu0 %4518
    %v4520 = vsel %vm714, %v4494, 0.0
    %4521 = vadd.xlane.f32.xlu0 %v4520
    %v4522 = vpop.xlane.xlu0 %4521
    %v4523 = vsel %vm714, %v4495, 0.0
    %4524 = vadd.xlane.f32.xlu0 %v4523
    %v4525 = vpop.xlane.xlu0 %4524
    %v4526 = vsel %vm714, %v4496, 0.0
    %4527 = vadd.xlane.f32.xlu0 %v4526
    %v4528 = vpop.xlane.xlu0 %4527
    %v4529 = vsel %vm714, %v4497, 0.0
    %4530 = vadd.xlane.f32.xlu0 %v4529
    %v4531 = vpop.xlane.xlu0 %4530
    %v4532 = vsel %vm714, %v4498, 0.0
    %4533 = vadd.xlane.f32.xlu0 %v4532
    %v4534 = vpop.xlane.xlu0 %4533
    %v4535 = vsel %vm714, %v4499, 0.0
    %4536 = vadd.xlane.f32.xlu0 %v4535
    %v4537 = vpop.xlane.xlu0 %4536
    %v4538 = vsel %vm714, %v4500, 0.0
    %4539 = vadd.xlane.f32.xlu0 %v4538
    %v4540 = vpop.xlane.xlu0 %4539
    %v4541 = vsel %vm714, %v4501, 0.0
    %4542 = vadd.xlane.f32.xlu0 %v4541
    %v4543 = vpop.xlane.xlu0 %4542
    %v4544 = vsel %vm714, %v4502, 0.0
    %4545 = vadd.xlane.f32.xlu0 %v4544
    %v4546 = vpop.xlane.xlu0 %4545
    %v4547 = vsel %vm714, %v4503, 0.0
    %4548 = vadd.xlane.f32.xlu0 %v4547
    %v4549 = vpop.xlane.xlu0 %4548
    %v4550 = vsel %vm714, %v4504, 0.0
    %4551 = vadd.xlane.f32.xlu0 %v4550
    %v4552 = vpop.xlane.xlu0 %4551
    %v4553 = vmul.f32 %v4507, %v1204
    %v4554 = vmul.f32 %v4510, %v1204
    %v4555 = vmul.f32 %v4513, %v1204
    %v4556 = vmul.f32 %v4516, %v1204
    %v4557 = vmul.f32 %v4519, %v1204
    %v4558 = vmul.f32 %v4522, %v1204
    %v4559 = vmul.f32 %v4525, %v1204
    %v4560 = vmul.f32 %v4528, %v1204
    %v4561 = vmul.f32 %v4531, %v1204
    %v4562 = vmul.f32 %v4534, %v1204
    %v4563 = vmul.f32 %v4537, %v1204
    %v4564 = vmul.f32 %v4540, %v1204
    %v4565 = vmul.f32 %v4543, %v1204
    %v4566 = vmul.f32 %v4546, %v1204
    %v4567 = vmul.f32 %v4549, %v1204
    %v4568 = vmul.f32 %v4552, %v1204
    %v4569 = vadd.f32 %v4553, 1e-06
    %v4570 = vadd.f32 %v4554, 1e-06
    %v4571 = vadd.f32 %v4555, 1e-06
    %v4572 = vadd.f32 %v4556, 1e-06
    %v4573 = vadd.f32 %v4557, 1e-06
    %v4574 = vadd.f32 %v4558, 1e-06
    %v4575 = vadd.f32 %v4559, 1e-06
    %v4576 = vadd.f32 %v4560, 1e-06
    %v4577 = vadd.f32 %v4561, 1e-06
    %v4578 = vadd.f32 %v4562, 1e-06
    %v4579 = vadd.f32 %v4563, 1e-06
    %v4580 = vadd.f32 %v4564, 1e-06
    %v4581 = vadd.f32 %v4565, 1e-06
    %v4582 = vadd.f32 %v4566, 1e-06
    %v4583 = vadd.f32 %v4567, 1e-06
    %v4584 = vadd.f32 %v4568, 1e-06
    %v4585 = vrsqrt.pop %v4569
    %v4586 = vrsqrt.pop %v4570
    %v4587 = vrsqrt.pop %v4571
    %v4588 = vrsqrt.pop %v4572
    %v4589 = vrsqrt.pop %v4573
    %v4590 = vrsqrt.pop %v4574
    %v4591 = vrsqrt.pop %v4575
    %v4592 = vrsqrt.pop %v4576
    %v4593 = vrsqrt.pop %v4577
    %v4594 = vrsqrt.pop %v4578
    %v4595 = vrsqrt.pop %v4579
    %v4596 = vrsqrt.pop %v4580
    %v4597 = vrsqrt.pop %v4581
    %v4598 = vrsqrt.pop %v4582
    %v4599 = vrsqrt.pop %v4583
    %v4600 = vrsqrt.pop %v4584
    %v4601 = vmul.f32 %v4473, %v4585
    %v4602 = vmul.f32 %v4474, %v4586
    %v4603 = vmul.f32 %v4475, %v4587
    %v4604 = vmul.f32 %v4476, %v4588
    %v4605 = vmul.f32 %v4477, %v4589
    %v4606 = vmul.f32 %v4478, %v4590
    %v4607 = vmul.f32 %v4479, %v4591
    %v4608 = vmul.f32 %v4480, %v4592
    %v4609 = vmul.f32 %v4481, %v4593
    %v4610 = vmul.f32 %v4482, %v4594
    %v4611 = vmul.f32 %v4483, %v4595
    %v4612 = vmul.f32 %v4484, %v4596
    %v4613 = vmul.f32 %v4485, %v4597
    %v4614 = vmul.f32 %v4486, %v4598
    %v4615 = vmul.f32 %v4487, %v4599
    %v4616 = vmul.f32 %v4488, %v4600
    %v4617 = vadd.f32 %v1111, 1.0
    %v4618 = vlaneseq
    %v4619 = vshrl.u32 %v4618, 7
    %v4620 = vsub.s32 0, %v4619
    %v4621 = vrot.slane %v4617, %v4620
    %4623 = vrot.lane.b32.xlu0 %v4621, 96
    %v4624 = vpop.permute.xlu0 %4623
    %v4626 = vmul.f32 %v4601, %v4624
    %v4627 = vmul.f32 %v4602, %v4624
    %v4628 = vmul.f32 %v4603, %v4624
    %v4629 = vmul.f32 %v4604, %v4624
    %v4630 = vmul.f32 %v4605, %v4624
    %v4631 = vmul.f32 %v4606, %v4624
    %v4632 = vmul.f32 %v4607, %v4624
    %v4633 = vmul.f32 %v4608, %v4624
    %v4634 = vlaneseq
    %v4635 = vshrl.u32 %v4634, 7
    %v4636 = vsub.s32 0, %v4635
    %v4637 = vrot.slane %v1111, %v4636
    %v4638 = vadd.f32 %v4626, %v4637
    %v4639 = vadd.f32 %v4627, %v4637
    %v4640 = vadd.f32 %v4628, %v4637
    %v4641 = vadd.f32 %v4629, %v4637
    %v4642 = vadd.f32 %v4630, %v4637
    %v4643 = vadd.f32 %v4631, %v4637
    %v4644 = vadd.f32 %v4632, %v4637
    %v4645 = vadd.f32 %v4633, %v4637
    %v4646 = vlaneseq
    %v4647 = vshrl.u32 %v4646, 7
    %v4648 = vsub.s32 1, %v4647
    %v4649 = vrot.slane %v4617, %v4648
    %4651 = vrot.lane.b32.xlu0 %v4649, 96
    %v4652 = vpop.permute.xlu0 %4651
    %v4654 = vmul.f32 %v4609, %v4652
    %v4655 = vmul.f32 %v4610, %v4652
    %v4656 = vmul.f32 %v4611, %v4652
    %v4657 = vmul.f32 %v4612, %v4652
    %v4658 = vmul.f32 %v4613, %v4652
    %v4659 = vmul.f32 %v4614, %v4652
    %v4660 = vmul.f32 %v4615, %v4652
    %v4661 = vmul.f32 %v4616, %v4652
    %v4662 = vlaneseq
    %v4663 = vshrl.u32 %v4662, 7
    %v4664 = vsub.s32 1, %v4663
    %v4665 = vrot.slane %v1111, %v4664
    %v4666 = vadd.f32 %v4654, %v4665
    %v4667 = vadd.f32 %v4655, %v4665
    %v4668 = vadd.f32 %v4656, %v4665
    %v4669 = vadd.f32 %v4657, %v4665
    %v4670 = vadd.f32 %v4658, %v4665
    %v4671 = vadd.f32 %v4659, %v4665
    %v4672 = vadd.f32 %v4660, %v4665
    %v4673 = vadd.f32 %v4661, %v4665
    %v4674 = vsel %vm714, %v4407, 0.0
    %4675 = vadd.xlane.f32.xlu0 %v4674
    %v4676 = vpop.xlane.xlu0 %4675
    %v4677 = vsel %vm714, %v4408, 0.0
    %4678 = vadd.xlane.f32.xlu0 %v4677
    %v4679 = vpop.xlane.xlu0 %4678
    %v4680 = vmul.f32 %v4676, %v1204
    %v4681 = vmul.f32 %v4679, %v1204
    %v4682 = vsub.f32 %v4407, %v4680
    %v4683 = vsub.f32 %v4408, %v4681
    %v4684 = vmul.f32 %v4682, %v4682
    %v4685 = vmul.f32 %v4683, %v4683
    %v4686 = vsel %vm714, %v4684, 0.0
    %4687 = vadd.xlane.f32.xlu0 %v4686
    %v4688 = vpop.xlane.xlu0 %4687
    %v4689 = vsel %vm714, %v4685, 0.0
    %4690 = vadd.xlane.f32.xlu0 %v4689
    %v4691 = vpop.xlane.xlu0 %4690
    %v4692 = vmul.f32 %v4688, %v1204
    %v4693 = vmul.f32 %v4691, %v1204
    %v4694 = vadd.f32 %v4692, 1e-06
    %v4695 = vadd.f32 %v4693, 1e-06
    %v4696 = vrsqrt.pop %v4694
    %v4697 = vrsqrt.pop %v4695
    %v4698 = vmul.f32 %v4682, %v4696
    %v4699 = vmul.f32 %v4683, %v4697
    %v4700 = vadd.f32 %v1150, 1.0
    %v4701 = vlaneseq
    %v4702 = vshrl.u32 %v4701, 7
    %v4703 = vsub.s32 0, %v4702
    %v4704 = vrot.slane %v4700, %v4703
    %4706 = vrot.lane.b32.xlu0 %v4704, 64
    %v4707 = vpop.permute.xlu0 %4706
    %v4709 = vmul.f32 %v4698, %v4707
    %v4710 = vlaneseq
    %v4711 = vshrl.u32 %v4710, 7
    %v4712 = vsub.s32 0, %v4711
    %v4713 = vrot.slane %v1150, %v4712
    %4715 = vrot.lane.b32.xlu0 %v4713, 32
    %v4716 = vpop.permute.xlu0 %4715
    %v4718 = vadd.f32 %v4709, %v4716
    %v4719 = vlaneseq
    %v4720 = vshrl.u32 %v4719, 7
    %v4721 = vsub.s32 1, %v4720
    %v4722 = vrot.slane %v4700, %v4721
    %4724 = vrot.lane.b32.xlu0 %v4722, 64
    %v4725 = vpop.permute.xlu0 %4724
    %v4727 = vmul.f32 %v4699, %v4725
    %v4728 = vlaneseq
    %v4729 = vshrl.u32 %v4728, 7
    %v4730 = vsub.s32 1, %v4729
    %v4731 = vrot.slane %v1150, %v4730
    %4733 = vrot.lane.b32.xlu0 %v4731, 32
    %v4734 = vpop.permute.xlu0 %4733
    %v4736 = vadd.f32 %v4727, %v4734
    %v4737 = vld [vmem:[%s71] sm:$0xf]
    %v4738 = vld [vmem:[%s71 + $0x4] sm:$0xf]
    %v4739 = vld [vmem:[%s71 + $0x8] sm:$0xf]
    %v4740 = vld [vmem:[%s71 + $0xc] sm:$0xf]
    %v4741 = vpack.c.bf16 %v4639, %v4638
    %v4742 = vpack.c.bf16 %v4641, %v4640
    %v4743 = vpack.c.bf16 %v4643, %v4642
    %v4744 = vpack.c.bf16 %v4645, %v4644
    %v4745 = vpack.c.bf16 %v4667, %v4666
    %v4746 = vpack.c.bf16 %v4669, %v4668
    %v4747 = vpack.c.bf16 %v4671, %v4670
    %v4748 = vpack.c.bf16 %v4673, %v4672
    %v4749 = vld [vmem:[%s73] sm:$0x1]
    %v4751 = vlaneseq
    %v4752 = vshrl.u32 %v4751, 7
    %v4753 = vsub.s32 0, %v4752
    %v4754 = vrot.slane %v4749, %v4753
    %v4760 = vunpack.c.l.b16 %v4737
    %v4761 = vunpack.c.l.b16 %v4738
    %v4762 = vunpack.c.l.b16 %v4739
    %v4763 = vunpack.c.l.b16 %v4740
    %v4764 = vpack.c.b16 %v4761, %v4760
    %v4765 = vpack.c.b16 %v4763, %v4762
    %v4769 = vsel %vm714, %v4741, 0
    %v4772 = vsel %vm714, %v4742, 0
    %v4775 = vsel %vm714, %v4743, 0
    %v4778 = vsel %vm714, %v4744, 0
    %v4781 = vsel %vm714, %v4745, 0
    %v4784 = vsel %vm714, %v4746, 0
    %v4787 = vsel %vm714, %v4747, 0
    %v4790 = vsel %vm714, %v4748, 0
    %4792 = vmatprep.subr.bf16.mxu0 0
    %4793 = vmatpush1.bf16.msra.mxu0 %v4764
    %4794 = vmatprep.subr.bf16.mxu0 0
    %4795 = vmatpush1.bf16.msra.mxu0 %v4765
    %4796 = vmatprep.subr.bf16.mxu0 0
    %4797 = vmatpush1.bf16.msra.mxu0 0
    %4798 = vmatprep.subr.bf16.mxu0 0
    %4799 = vmatpush1.bf16.msra.mxu0 0
    %4800 = vmatprep.subr.bf16.mxu0 0
    %4801 = vmatpush1.bf16.msra.mxu0 0
    %4802 = vmatprep.subr.bf16.mxu0 0
    %4803 = vmatpush1.bf16.msra.mxu0 0
    %4804 = vmatprep.subr.bf16.mxu0 0
    %4805 = vmatpush1.bf16.msra.mxu0 0
    %4806 = vmatprep.subr.bf16.mxu0 0
    %4807 = vmatpush1.bf16.msra.mxu0 0
    %4808 = vmatprep.subr.bf16.mxu0 0
    %4809 = vmatpush1.bf16.msra.mxu0 0
    %4810 = vmatprep.subr.bf16.mxu0 0
    %4811 = vmatpush1.bf16.msra.mxu0 0
    %4812 = vmatprep.subr.bf16.mxu0 0
    %4813 = vmatpush1.bf16.msra.mxu0 0
    %4814 = vmatprep.subr.bf16.mxu0 0
    %4815 = vmatpush1.bf16.msra.mxu0 0
    %4816 = vmatprep.subr.bf16.mxu0 0
    %4817 = vmatpush1.bf16.msra.mxu0 0
    %4818 = vmatprep.subr.bf16.mxu0 0
    %4819 = vmatpush1.bf16.msra.mxu0 0
    %4820 = vmatprep.subr.bf16.mxu0 0
    %4821 = vmatpush1.bf16.msra.mxu0 0
    %4822 = vmatprep.subr.bf16.mxu0 0
    %4823 = vmatpush1.bf16.msra.mxu0 0
    %4824 = vmatprep.mubr.bf16.mxu0 0
    %4825 = vmatmul.mubr.bf16.gmra.mrb[0].mxu0 %v4769
    %v4826 = vpop.f32.mrb[0].mxu0
    %v4827 = vadd.f32 %v4754, %v4826
    %v4828 = vpop.f32.mrb[0].mxu0
    %v4829 = vpop.f32.mrb[0].mxu0
    %v4830 = vadd.f32 %v4754, %v4829
    %v4831 = vpop.f32.mrb[0].mxu0
    %4832 = vmatprep.mubr.bf16.mxu0 0
    %4833 = vmatmul.mubr.bf16.gmra.mrb[0].mxu0 %v4772
    %v4834 = vpop.f32.mrb[0].mxu0
    %v4835 = vadd.f32 %v4754, %v4834
    %v4836 = vpop.f32.mrb[0].mxu0
    %v4837 = vpop.f32.mrb[0].mxu0
    %v4838 = vadd.f32 %v4754, %v4837
    %v4839 = vpop.f32.mrb[0].mxu0
    %4840 = vmatprep.mubr.bf16.mxu0 0
    %4841 = vmatmul.mubr.bf16.gmra.mrb[0].mxu0 %v4775
    %v4842 = vpop.f32.mrb[0].mxu0
    %v4843 = vadd.f32 %v4754, %v4842
    %v4844 = vpop.f32.mrb[0].mxu0
    %v4845 = vpop.f32.mrb[0].mxu0
    %v4846 = vadd.f32 %v4754, %v4845
    %v4847 = vpop.f32.mrb[0].mxu0
    %4848 = vmatprep.mubr.bf16.mxu0 0
    %4849 = vmatmul.mubr.bf16.gmra.mrb[0].mxu0 %v4778
    %v4850 = vpop.f32.mrb[0].mxu0
    %v4851 = vadd.f32 %v4754, %v4850
    %v4852 = vpop.f32.mrb[0].mxu0
    %v4853 = vpop.f32.mrb[0].mxu0
    %v4854 = vadd.f32 %v4754, %v4853
    %v4855 = vpop.f32.mrb[0].mxu0
    %4856 = vmatprep.mubr.bf16.mxu0 0
    %4857 = vmatmul.mubr.bf16.gmra.mrb[0].mxu0 %v4781
    %v4858 = vpop.f32.mrb[0].mxu0
    %v4859 = vadd.f32 %v4754, %v4858
    %v4860 = vpop.f32.mrb[0].mxu0
    %v4861 = vpop.f32.mrb[0].mxu0
    %v4862 = vadd.f32 %v4754, %v4861
    %v4863 = vpop.f32.mrb[0].mxu0
    %4864 = vmatprep.mubr.bf16.mxu0 0
    %4865 = vmatmul.mubr.bf16.gmra.mrb[0].mxu0 %v4784
    %v4866 = vpop.f32.mrb[0].mxu0
    %v4867 = vadd.f32 %v4754, %v4866
    %v4868 = vpop.f32.mrb[0].mxu0
    %v4869 = vpop.f32.mrb[0].mxu0
    %v4870 = vadd.f32 %v4754, %v4869
    %v4871 = vpop.f32.mrb[0].mxu0
    %4872 = vmatprep.mubr.bf16.mxu0 0
    %4873 = vmatmul.mubr.bf16.gmra.mrb[0].mxu0 %v4787
    %v4874 = vpop.f32.mrb[0].mxu0
    %v4875 = vadd.f32 %v4754, %v4874
    %v4876 = vpop.f32.mrb[0].mxu0
    %v4877 = vpop.f32.mrb[0].mxu0
    %v4878 = vadd.f32 %v4754, %v4877
    %v4879 = vpop.f32.mrb[0].mxu0
    %4880 = vmatprep.mubr.bf16.mxu0 0
    %4881 = vmatmul.mubr.bf16.gmra.mrb[0].mxu0 %v4790
    %v4882 = vpop.f32.mrb[0].mxu0
    %v4883 = vadd.f32 %v4754, %v4882
    %v4884 = vpop.f32.mrb[0].mxu0
    %v4885 = vpop.f32.mrb[0].mxu0
    %v4886 = vadd.f32 %v4754, %v4885
    %v4887 = vpop.f32.mrb[0].mxu0
    %4888 = vdwg.mxu0
    %v4889 = vld [vmem:[%s75] sm:$0xf]
    %v4890 = vld [vmem:[%s75 + $0x4] sm:$0xf]
    %v4891 = vld [vmem:[%s75 + $0x8] sm:$0xf]
    %v4892 = vld [vmem:[%s75 + $0xc] sm:$0xf]
    %v4893 = vpack.c.bf16 %v4736, %v4718
    %v4894 = vld [vmem:[%s77] sm:$0x1]
    %v4896 = vlaneseq
    %v4897 = vshrl.u32 %v4896, 7
    %v4898 = vsub.s32 0, %v4897
    %v4899 = vrot.slane %v4894, %v4898
    %v4905 = vunpack.c.l.b16 %v4889
    %v4906 = vunpack.c.l.b16 %v4890
    %v4907 = vunpack.c.l.b16 %v4891
    %v4908 = vunpack.c.l.b16 %v4892
    %v4909 = vpack.c.b16 %v4906, %v4905
    %v4910 = vpack.c.b16 %v4908, %v4907
    %v4914 = vsel %vm714, %v4893, 0
    %4916 = vmatprep.subr.bf16.mxu0 0
    %4917 = vmatpush1.bf16.msra.mxu0 %v4909
    %4918 = vmatprep.subr.bf16.mxu0 0
    %4919 = vmatpush1.bf16.msra.mxu0 %v4910
    %4920 = vmatprep.subr.bf16.mxu0 0
    %4921 = vmatpush1.bf16.msra.mxu0 0
    %4922 = vmatprep.subr.bf16.mxu0 0
    %4923 = vmatpush1.bf16.msra.mxu0 0
    %4924 = vmatprep.subr.bf16.mxu0 0
    %4925 = vmatpush1.bf16.msra.mxu0 0
    %4926 = vmatprep.subr.bf16.mxu0 0
    %4927 = vmatpush1.bf16.msra.mxu0 0
    %4928 = vmatprep.subr.bf16.mxu0 0
    %4929 = vmatpush1.bf16.msra.mxu0 0
    %4930 = vmatprep.subr.bf16.mxu0 0
    %4931 = vmatpush1.bf16.msra.mxu0 0
    %4932 = vmatprep.subr.bf16.mxu0 0
    %4933 = vmatpush1.bf16.msra.mxu0 0
    %4934 = vmatprep.subr.bf16.mxu0 0
    %4935 = vmatpush1.bf16.msra.mxu0 0
    %4936 = vmatprep.subr.bf16.mxu0 0
    %4937 = vmatpush1.bf16.msra.mxu0 0
    %4938 = vmatprep.subr.bf16.mxu0 0
    %4939 = vmatpush1.bf16.msra.mxu0 0
    %4940 = vmatprep.subr.bf16.mxu0 0
    %4941 = vmatpush1.bf16.msra.mxu0 0
    %4942 = vmatprep.subr.bf16.mxu0 0
    %4943 = vmatpush1.bf16.msra.mxu0 0
    %4944 = vmatprep.subr.bf16.mxu0 0
    %4945 = vmatpush1.bf16.msra.mxu0 0
    %4946 = vmatprep.subr.bf16.mxu0 0
    %4947 = vmatpush1.bf16.msra.mxu0 0
    %4948 = vmatprep.mubr.bf16.mxu0 0
    %4949 = vmatmul.mubr.bf16.gmra.mrb[0].mxu0 %v4914
    %v4950 = vpop.f32.mrb[0].mxu0
    %v4951 = vadd.f32 %v4899, %v4950
    %v4952 = vpop.f32.mrb[0].mxu0
    %v4953 = vpop.f32.mrb[0].mxu0
    %v4954 = vadd.f32 %v4899, %v4953
    %v4955 = vpop.f32.mrb[0].mxu0
    %4956 = vdwg.mxu0
    %v4957 = vpack.c.bf16 %v4830, %v4827
    %v4958 = vpack.c.bf16 %v4838, %v4835
    %v4959 = vpack.c.bf16 %v4846, %v4843
    %v4960 = vpack.c.bf16 %v4854, %v4851
    %v4961 = vpack.c.bf16 %v4951, %v4951
    %4967 = vrot.lane.b32.xlu0 %v4957, 96
    %v4968 = vpop.permute.xlu0 %4967
    %4969 = vrot.lane.b32.xlu0 %v4958, 96
    %v4970 = vpop.permute.xlu0 %4969
    %4971 = vrot.lane.b32.xlu0 %v4959, 96
    %v4972 = vpop.permute.xlu0 %4971
    %4973 = vrot.lane.b32.xlu0 %v4960, 96
    %v4974 = vpop.permute.xlu0 %4973
    %4975 = vrot.lane.b32.xlu0 %v4961, 96
    %v4976 = vpop.permute.xlu0 %4975
    %v4978 = vsel %vm269, %v4957, 0
    %v4981 = vsel %vm269, %v4958, 0
    %v4984 = vsel %vm269, %v4959, 0
    %v4987 = vsel %vm269, %v4960, 0
    %v4990 = vsel %vm269, %v4961, 0
    %v4993 = vsel %vm269, %v4968, 0
    %v4996 = vsel %vm269, %v4970, 0
    %v4999 = vsel %vm269, %v4972, 0
    %v5002 = vsel %vm269, %v4974, 0
    %v5005 = vsel %vm269, %v4976, 0
    %5007 = vmatprep.subr.bf16.mxu0 0
    %5008 = vmatpush1.bf16.xpose.msra.mxu0 %v4993
    %5009 = vmatprep.subr.bf16.mxu0 0
    %5010 = vmatpush1.bf16.xpose.msra.mxu0 %v4996
    %5011 = vmatprep.subr.bf16.mxu0 0
    %5012 = vmatpush1.bf16.xpose.msra.mxu0 %v4999
    %5013 = vmatprep.subr.bf16.mxu0 0
    %5014 = vmatpush1.bf16.xpose.msra.mxu0 %v5002
    %5015 = vmatprep.subr.bf16.mxu0 0
    %5016 = vmatpush1.bf16.xpose.msra.mxu0 %v5005
    %5017 = vmatprep.subr.bf16.mxu0 0
    %5018 = vmatpush1.bf16.xpose.msra.mxu0 0
    %5019 = vmatprep.subr.bf16.mxu0 0
    %5020 = vmatpush1.bf16.xpose.msra.mxu0 0
    %5021 = vmatprep.subr.bf16.mxu0 0
    %5022 = vmatpush1.bf16.xpose.msra.mxu0 0
    %5023 = vmatprep.subr.bf16.mxu0 0
    %5024 = vmatpush1.bf16.xpose.msra.mxu0 0
    %5025 = vmatprep.subr.bf16.mxu0 0
    %5026 = vmatpush1.bf16.xpose.msra.mxu0 0
    %5027 = vmatprep.subr.bf16.mxu0 0
    %5028 = vmatpush1.bf16.xpose.msra.mxu0 0
    %5029 = vmatprep.subr.bf16.mxu0 0
    %5030 = vmatpush1.bf16.xpose.msra.mxu0 0
    %5031 = vmatprep.subr.bf16.mxu0 0
    %5032 = vmatpush1.bf16.xpose.msra.mxu0 0
    %5033 = vmatprep.subr.bf16.mxu0 0
    %5034 = vmatpush1.bf16.xpose.msra.mxu0 0
    %5035 = vmatprep.subr.bf16.mxu0 0
    %5036 = vmatpush1.bf16.xpose.msra.mxu0 0
    %5037 = vmatprep.subr.bf16.mxu0 0
    %5038 = vmatpush1.bf16.xpose.msra.mxu0 0
    %5039 = vmatprep.mubr.bf16.mxu0 0
    %5040 = vmatmul.mubr.bf16.gmra.mrb[0].mxu0 %v4978
    %v5041 = vpop.f32.mrb[0].mxu0
    %v5042 = vadd.f32 0.0, %v5041
    %v5043 = vpop.f32.mrb[0].mxu0
    %v5044 = vpop.f32.mrb[0].mxu0
    %v5045 = vadd.f32 0.0, %v5044
    %v5046 = vpop.f32.mrb[0].mxu0
    %5047 = vmatprep.mubr.bf16.mxu0 0
    %5048 = vmatmul.mubr.bf16.gmra.mrb[0].mxu0 %v4981
    %v5049 = vpop.f32.mrb[0].mxu0
    %v5050 = vadd.f32 0.0, %v5049
    %v5051 = vpop.f32.mrb[0].mxu0
    %v5052 = vpop.f32.mrb[0].mxu0
    %v5053 = vadd.f32 0.0, %v5052
    %v5054 = vpop.f32.mrb[0].mxu0
    %5055 = vmatprep.mubr.bf16.mxu0 0
    %5056 = vmatmul.mubr.bf16.gmra.mrb[0].mxu0 %v4984
    %v5057 = vpop.f32.mrb[0].mxu0
    %v5058 = vadd.f32 0.0, %v5057
    %v5059 = vpop.f32.mrb[0].mxu0
    %v5060 = vpop.f32.mrb[0].mxu0
    %v5061 = vadd.f32 0.0, %v5060
    %v5062 = vpop.f32.mrb[0].mxu0
    %5063 = vmatprep.mubr.bf16.mxu0 0
    %5064 = vmatmul.mubr.bf16.gmra.mrb[0].mxu0 %v4987
    %v5065 = vpop.f32.mrb[0].mxu0
    %v5066 = vadd.f32 0.0, %v5065
    %v5067 = vpop.f32.mrb[0].mxu0
    %v5068 = vpop.f32.mrb[0].mxu0
    %v5069 = vadd.f32 0.0, %v5068
    %v5070 = vpop.f32.mrb[0].mxu0
    %5071 = vmatprep.mubr.bf16.mxu0 0
    %5072 = vmatmul.mubr.bf16.gmra.mrb[0].mxu0 %v4990
    %v5073 = vpop.f32.mrb[0].mxu0
    %v5074 = vadd.f32 0.0, %v5073
    %v5075 = vpop.f32.mrb[0].mxu0
    %v5076 = vpop.f32.mrb[0].mxu0
    %v5077 = vpop.f32.mrb[0].mxu0
    %5078 = vdwg.mxu0
    %v5079 = vsel %vm1827, %v5042, -inf
    %5080 = vmax.xlane.f32.xlu0 %v5079
    %v5081 = vpop.xlane.xlu0 %5080
    %v5082 = vsel %vm1827, %v5045, -inf
    %5083 = vmax.xlane.f32.xlu0 %v5082
    %v5084 = vpop.xlane.xlu0 %5083
    %v5085 = vsel %vm1827, %v5050, -inf
    %5086 = vmax.xlane.f32.xlu0 %v5085
    %v5087 = vpop.xlane.xlu0 %5086
    %v5088 = vsel %vm1827, %v5053, -inf
    %5089 = vmax.xlane.f32.xlu0 %v5088
    %v5090 = vpop.xlane.xlu0 %5089
    %v5091 = vsel %vm1827, %v5058, -inf
    %5092 = vmax.xlane.f32.xlu0 %v5091
    %v5093 = vpop.xlane.xlu0 %5092
    %v5094 = vsel %vm1827, %v5061, -inf
    %5095 = vmax.xlane.f32.xlu0 %v5094
    %v5096 = vpop.xlane.xlu0 %5095
    %v5097 = vsel %vm1827, %v5066, -inf
    %5098 = vmax.xlane.f32.xlu0 %v5097
    %v5099 = vpop.xlane.xlu0 %5098
    %v5100 = vsel %vm1827, %v5069, -inf
    %5101 = vmax.xlane.f32.xlu0 %v5100
    %v5102 = vpop.xlane.xlu0 %5101
    %v5103 = vsel %vm1827, %v5074, -inf
    %5104 = vmax.xlane.f32.xlu0 %v5103
    %v5105 = vpop.xlane.xlu0 %5104
    %v5106 = vsub.f32 %v5042, %v5081
    %v5107 = vsub.f32 %v5045, %v5084
    %v5108 = vsub.f32 %v5050, %v5087
    %v5109 = vsub.f32 %v5053, %v5090
    %v5110 = vsub.f32 %v5058, %v5093
    %v5111 = vsub.f32 %v5061, %v5096
    %v5112 = vsub.f32 %v5066, %v5099
    %v5113 = vsub.f32 %v5069, %v5102
    %v5114 = vsub.f32 %v5074, %v5105
    %v5115 = vmul.f32 %v5106, 1.442695
    %v5116 = vpow.pop %v5115
    %v5117 = vmul.f32 %v5107, 1.442695
    %v5118 = vpow.pop %v5117
    %v5119 = vmul.f32 %v5108, 1.442695
    %v5120 = vpow.pop %v5119
    %v5121 = vmul.f32 %v5109, 1.442695
    %v5122 = vpow.pop %v5121
    %v5123 = vmul.f32 %v5110, 1.442695
    %v5124 = vpow.pop %v5123
    %v5125 = vmul.f32 %v5111, 1.442695
    %v5126 = vpow.pop %v5125
    %v5127 = vmul.f32 %v5112, 1.442695
    %v5128 = vpow.pop %v5127
    %v5129 = vmul.f32 %v5113, 1.442695
    %v5130 = vpow.pop %v5129
    %v5131 = vmul.f32 %v5114, 1.442695
    %v5132 = vpow.pop %v5131
    %v5133 = vsel %vm1827, %v5116, 0.0
    %5134 = vadd.xlane.f32.xlu0 %v5133
    %v5135 = vpop.xlane.xlu0 %5134
    %v5136 = vsel %vm1827, %v5118, 0.0
    %5137 = vadd.xlane.f32.xlu0 %v5136
    %v5138 = vpop.xlane.xlu0 %5137
    %v5139 = vsel %vm1827, %v5120, 0.0
    %5140 = vadd.xlane.f32.xlu0 %v5139
    %v5141 = vpop.xlane.xlu0 %5140
    %v5142 = vsel %vm1827, %v5122, 0.0
    %5143 = vadd.xlane.f32.xlu0 %v5142
    %v5144 = vpop.xlane.xlu0 %5143
    %v5145 = vsel %vm1827, %v5124, 0.0
    %5146 = vadd.xlane.f32.xlu0 %v5145
    %v5147 = vpop.xlane.xlu0 %5146
    %v5148 = vsel %vm1827, %v5126, 0.0
    %5149 = vadd.xlane.f32.xlu0 %v5148
    %v5150 = vpop.xlane.xlu0 %5149
    %v5151 = vsel %vm1827, %v5128, 0.0
    %5152 = vadd.xlane.f32.xlu0 %v5151
    %v5153 = vpop.xlane.xlu0 %5152
    %v5154 = vsel %vm1827, %v5130, 0.0
    %5155 = vadd.xlane.f32.xlu0 %v5154
    %v5156 = vpop.xlane.xlu0 %5155
    %v5157 = vrcp.pop %v5135
    %v5158 = vrcp.pop %v5138
    %v5159 = vrcp.pop %v5141
    %v5160 = vrcp.pop %v5144
    %v5161 = vrcp.pop %v5147
    %v5162 = vrcp.pop %v5150
    %v5163 = vrcp.pop %v5153
    %v5164 = vrcp.pop %v5156
    %v5165 = vpack.c.bf16 %v5118, %v5116
    %v5166 = vpack.c.bf16 %v5122, %v5120
    %v5167 = vpack.c.bf16 %v5126, %v5124
    %v5168 = vpack.c.bf16 %v5130, %v5128
    %v5169 = vpack.c.bf16 %v5132, %v5132
    %5170 = vrot.lane.b32.xlu0 %v4957, 64
    %v5171 = vpop.permute.xlu0 %5170
    %5172 = vrot.lane.b32.xlu0 %v4958, 64
    %v5173 = vpop.permute.xlu0 %5172
    %5174 = vrot.lane.b32.xlu0 %v4959, 64
    %v5175 = vpop.permute.xlu0 %5174
    %5176 = vrot.lane.b32.xlu0 %v4960, 64
    %v5177 = vpop.permute.xlu0 %5176
    %5178 = vrot.lane.b32.xlu0 %v4961, 64
    %v5179 = vpop.permute.xlu0 %5178
    %v5185 = vsel %vm1827, %v5165, 0
    %v5188 = vsel %vm1827, %v5166, 0
    %v5191 = vsel %vm1827, %v5167, 0
    %v5194 = vsel %vm1827, %v5168, 0
    %v5197 = vsel %vm1827, %v5169, 0
    %v5200 = vsel %vm1952, %v5179, 0
    %5202 = vmatprep.subr.bf16.mxu0 0
    %5203 = vmatpush1.bf16.msra.mxu0 %v5171
    %5204 = vmatprep.subr.bf16.mxu0 0
    %5205 = vmatpush1.bf16.msra.mxu0 %v5173
    %5206 = vmatprep.subr.bf16.mxu0 0
    %5207 = vmatpush1.bf16.msra.mxu0 %v5175
    %5208 = vmatprep.subr.bf16.mxu0 0
    %5209 = vmatpush1.bf16.msra.mxu0 %v5177
    %5210 = vmatprep.subr.bf16.mxu0 0
    %5211 = vmatpush1.bf16.msra.mxu0 %v5200
    %5212 = vmatprep.subr.bf16.mxu0 0
    %5213 = vmatpush1.bf16.msra.mxu0 0
    %5214 = vmatprep.subr.bf16.mxu0 0
    %5215 = vmatpush1.bf16.msra.mxu0 0
    %5216 = vmatprep.subr.bf16.mxu0 0
    %5217 = vmatpush1.bf16.msra.mxu0 0
    %5218 = vmatprep.subr.bf16.mxu0 0
    %5219 = vmatpush1.bf16.msra.mxu0 0
    %5220 = vmatprep.subr.bf16.mxu0 0
    %5221 = vmatpush1.bf16.msra.mxu0 0
    %5222 = vmatprep.subr.bf16.mxu0 0
    %5223 = vmatpush1.bf16.msra.mxu0 0
    %5224 = vmatprep.subr.bf16.mxu0 0
    %5225 = vmatpush1.bf16.msra.mxu0 0
    %5226 = vmatprep.subr.bf16.mxu0 0
    %5227 = vmatpush1.bf16.msra.mxu0 0
    %5228 = vmatprep.subr.bf16.mxu0 0
    %5229 = vmatpush1.bf16.msra.mxu0 0
    %5230 = vmatprep.subr.bf16.mxu0 0
    %5231 = vmatpush1.bf16.msra.mxu0 0
    %5232 = vmatprep.subr.bf16.mxu0 0
    %5233 = vmatpush1.bf16.msra.mxu0 0
    %5234 = vmatprep.mubr.bf16.mxu0 0
    %5235 = vmatmul.mubr.bf16.gmra.mrb[0].mxu0 %v5185
    %v5236 = vpop.f32.mrb[0].mxu0
    %v5237 = vadd.f32 0.0, %v5236
    %v5238 = vpop.f32.mrb[0].mxu0
    %v5239 = vpop.f32.mrb[0].mxu0
    %v5240 = vadd.f32 0.0, %v5239
    %v5241 = vpop.f32.mrb[0].mxu0
    %5242 = vmatprep.mubr.bf16.mxu0 0
    %5243 = vmatmul.mubr.bf16.gmra.mrb[0].mxu0 %v5188
    %v5244 = vpop.f32.mrb[0].mxu0
    %v5245 = vadd.f32 0.0, %v5244
    %v5246 = vpop.f32.mrb[0].mxu0
    %v5247 = vpop.f32.mrb[0].mxu0
    %v5248 = vadd.f32 0.0, %v5247
    %v5249 = vpop.f32.mrb[0].mxu0
    %5250 = vmatprep.mubr.bf16.mxu0 0
    %5251 = vmatmul.mubr.bf16.gmra.mrb[0].mxu0 %v5191
    %v5252 = vpop.f32.mrb[0].mxu0
    %v5253 = vadd.f32 0.0, %v5252
    %v5254 = vpop.f32.mrb[0].mxu0
    %v5255 = vpop.f32.mrb[0].mxu0
    %v5256 = vadd.f32 0.0, %v5255
    %v5257 = vpop.f32.mrb[0].mxu0
    %5258 = vmatprep.mubr.bf16.mxu0 0
    %5259 = vmatmul.mubr.bf16.gmra.mrb[0].mxu0 %v5194
    %v5260 = vpop.f32.mrb[0].mxu0
    %v5261 = vadd.f32 0.0, %v5260
    %v5262 = vpop.f32.mrb[0].mxu0
    %v5263 = vpop.f32.mrb[0].mxu0
    %v5264 = vadd.f32 0.0, %v5263
    %v5265 = vpop.f32.mrb[0].mxu0
    %5266 = vmatprep.mubr.bf16.mxu0 0
    %5267 = vmatmul.mubr.bf16.gmra.mrb[0].mxu0 %v5197
    %v5268 = vpop.f32.mrb[0].mxu0
    %v5269 = vpop.f32.mrb[0].mxu0
    %v5270 = vpop.f32.mrb[0].mxu0
    %v5271 = vpop.f32.mrb[0].mxu0
    %5272 = vdwg.mxu0
    %v5273 = vmul.f32 %v5237, %v5157
    %v5274 = vmul.f32 %v5240, %v5158
    %v5275 = vmul.f32 %v5245, %v5159
    %v5276 = vmul.f32 %v5248, %v5160
    %v5277 = vmul.f32 %v5253, %v5161
    %v5278 = vmul.f32 %v5256, %v5162
    %v5279 = vmul.f32 %v5261, %v5163
    %v5280 = vmul.f32 %v5264, %v5164
    %5281 = vrot.lane.b32.xlu0 %v4957, 112
    %v5282 = vpop.permute.xlu0 %5281
    %5283 = vrot.lane.b32.xlu0 %v4958, 112
    %v5284 = vpop.permute.xlu0 %5283
    %5285 = vrot.lane.b32.xlu0 %v4959, 112
    %v5286 = vpop.permute.xlu0 %5285
    %5287 = vrot.lane.b32.xlu0 %v4960, 112
    %v5288 = vpop.permute.xlu0 %5287
    %5289 = vrot.lane.b32.xlu0 %v4961, 112
    %v5290 = vpop.permute.xlu0 %5289
    %5291 = vrot.lane.b32.xlu0 %v4957, 80
    %v5292 = vpop.permute.xlu0 %5291
    %5293 = vrot.lane.b32.xlu0 %v4958, 80
    %v5294 = vpop.permute.xlu0 %5293
    %5295 = vrot.lane.b32.xlu0 %v4959, 80
    %v5296 = vpop.permute.xlu0 %5295
    %5297 = vrot.lane.b32.xlu0 %v4960, 80
    %v5298 = vpop.permute.xlu0 %5297
    %5299 = vrot.lane.b32.xlu0 %v4961, 80
    %v5300 = vpop.permute.xlu0 %5299
    %v5302 = vsel %vm269, %v5282, 0
    %v5305 = vsel %vm269, %v5284, 0
    %v5308 = vsel %vm269, %v5286, 0
    %v5311 = vsel %vm269, %v5288, 0
    %v5314 = vsel %vm269, %v5290, 0
    %v5317 = vsel %vm269, %v5292, 0
    %v5320 = vsel %vm269, %v5294, 0
    %v5323 = vsel %vm269, %v5296, 0
    %v5326 = vsel %vm269, %v5298, 0
    %v5329 = vsel %vm269, %v5300, 0
    %5331 = vmatprep.subr.bf16.mxu0 0
    %5332 = vmatpush1.bf16.xpose.msra.mxu0 %v5317
    %5333 = vmatprep.subr.bf16.mxu0 0
    %5334 = vmatpush1.bf16.xpose.msra.mxu0 %v5320
    %5335 = vmatprep.subr.bf16.mxu0 0
    %5336 = vmatpush1.bf16.xpose.msra.mxu0 %v5323
    %5337 = vmatprep.subr.bf16.mxu0 0
    %5338 = vmatpush1.bf16.xpose.msra.mxu0 %v5326
    %5339 = vmatprep.subr.bf16.mxu0 0
    %5340 = vmatpush1.bf16.xpose.msra.mxu0 %v5329
    %5341 = vmatprep.subr.bf16.mxu0 0
    %5342 = vmatpush1.bf16.xpose.msra.mxu0 0
    %5343 = vmatprep.subr.bf16.mxu0 0
    %5344 = vmatpush1.bf16.xpose.msra.mxu0 0
    %5345 = vmatprep.subr.bf16.mxu0 0
    %5346 = vmatpush1.bf16.xpose.msra.mxu0 0
    %5347 = vmatprep.subr.bf16.mxu0 0
    %5348 = vmatpush1.bf16.xpose.msra.mxu0 0
    %5349 = vmatprep.subr.bf16.mxu0 0
    %5350 = vmatpush1.bf16.xpose.msra.mxu0 0
    %5351 = vmatprep.subr.bf16.mxu0 0
    %5352 = vmatpush1.bf16.xpose.msra.mxu0 0
    %5353 = vmatprep.subr.bf16.mxu0 0
    %5354 = vmatpush1.bf16.xpose.msra.mxu0 0
    %5355 = vmatprep.subr.bf16.mxu0 0
    %5356 = vmatpush1.bf16.xpose.msra.mxu0 0
    %5357 = vmatprep.subr.bf16.mxu0 0
    %5358 = vmatpush1.bf16.xpose.msra.mxu0 0
    %5359 = vmatprep.subr.bf16.mxu0 0
    %5360 = vmatpush1.bf16.xpose.msra.mxu0 0
    %5361 = vmatprep.subr.bf16.mxu0 0
    %5362 = vmatpush1.bf16.xpose.msra.mxu0 0
    %5363 = vmatprep.mubr.bf16.mxu0 0
    %5364 = vmatmul.mubr.bf16.gmra.mrb[0].mxu0 %v5302
    %v5365 = vpop.f32.mrb[0].mxu0
    %v5366 = vadd.f32 0.0, %v5365
    %v5367 = vpop.f32.mrb[0].mxu0
    %v5368 = vpop.f32.mrb[0].mxu0
    %v5369 = vadd.f32 0.0, %v5368
    %v5370 = vpop.f32.mrb[0].mxu0
    %5371 = vmatprep.mubr.bf16.mxu0 0
    %5372 = vmatmul.mubr.bf16.gmra.mrb[0].mxu0 %v5305
    %v5373 = vpop.f32.mrb[0].mxu0
    %v5374 = vadd.f32 0.0, %v5373
    %v5375 = vpop.f32.mrb[0].mxu0
    %v5376 = vpop.f32.mrb[0].mxu0
    %v5377 = vadd.f32 0.0, %v5376
    %v5378 = vpop.f32.mrb[0].mxu0
    %5379 = vmatprep.mubr.bf16.mxu0 0
    %5380 = vmatmul.mubr.bf16.gmra.mrb[0].mxu0 %v5308
    %v5381 = vpop.f32.mrb[0].mxu0
    %v5382 = vadd.f32 0.0, %v5381
    %v5383 = vpop.f32.mrb[0].mxu0
    %v5384 = vpop.f32.mrb[0].mxu0
    %v5385 = vadd.f32 0.0, %v5384
    %v5386 = vpop.f32.mrb[0].mxu0
    %5387 = vmatprep.mubr.bf16.mxu0 0
    %5388 = vmatmul.mubr.bf16.gmra.mrb[0].mxu0 %v5311
    %v5389 = vpop.f32.mrb[0].mxu0
    %v5390 = vadd.f32 0.0, %v5389
    %v5391 = vpop.f32.mrb[0].mxu0
    %v5392 = vpop.f32.mrb[0].mxu0
    %v5393 = vadd.f32 0.0, %v5392
    %v5394 = vpop.f32.mrb[0].mxu0
    %5395 = vmatprep.mubr.bf16.mxu0 0
    %5396 = vmatmul.mubr.bf16.gmra.mrb[0].mxu0 %v5314
    %v5397 = vpop.f32.mrb[0].mxu0
    %v5398 = vadd.f32 0.0, %v5397
    %v5399 = vpop.f32.mrb[0].mxu0
    %v5400 = vpop.f32.mrb[0].mxu0
    %v5401 = vpop.f32.mrb[0].mxu0
    %5402 = vdwg.mxu0
    %v5403 = vsel %vm1827, %v5366, -inf
    %5404 = vmax.xlane.f32.xlu0 %v5403
    %v5405 = vpop.xlane.xlu0 %5404
    %v5406 = vsel %vm1827, %v5369, -inf
    %5407 = vmax.xlane.f32.xlu0 %v5406
    %v5408 = vpop.xlane.xlu0 %5407
    %v5409 = vsel %vm1827, %v5374, -inf
    %5410 = vmax.xlane.f32.xlu0 %v5409
    %v5411 = vpop.xlane.xlu0 %5410
    %v5412 = vsel %vm1827, %v5377, -inf
    %5413 = vmax.xlane.f32.xlu0 %v5412
    %v5414 = vpop.xlane.xlu0 %5413
    %v5415 = vsel %vm1827, %v5382, -inf
    %5416 = vmax.xlane.f32.xlu0 %v5415
    %v5417 = vpop.xlane.xlu0 %5416
    %v5418 = vsel %vm1827, %v5385, -inf
    %5419 = vmax.xlane.f32.xlu0 %v5418
    %v5420 = vpop.xlane.xlu0 %5419
    %v5421 = vsel %vm1827, %v5390, -inf
    %5422 = vmax.xlane.f32.xlu0 %v5421
    %v5423 = vpop.xlane.xlu0 %5422
    %v5424 = vsel %vm1827, %v5393, -inf
    %5425 = vmax.xlane.f32.xlu0 %v5424
    %v5426 = vpop.xlane.xlu0 %5425
    %v5427 = vsel %vm1827, %v5398, -inf
    %5428 = vmax.xlane.f32.xlu0 %v5427
    %v5429 = vpop.xlane.xlu0 %5428
    %v5430 = vsub.f32 %v5366, %v5405
    %v5431 = vsub.f32 %v5369, %v5408
    %v5432 = vsub.f32 %v5374, %v5411
    %v5433 = vsub.f32 %v5377, %v5414
    %v5434 = vsub.f32 %v5382, %v5417
    %v5435 = vsub.f32 %v5385, %v5420
    %v5436 = vsub.f32 %v5390, %v5423
    %v5437 = vsub.f32 %v5393, %v5426
    %v5438 = vsub.f32 %v5398, %v5429
    %v5439 = vmul.f32 %v5430, 1.442695
    %v5440 = vpow.pop %v5439
    %v5441 = vmul.f32 %v5431, 1.442695
    %v5442 = vpow.pop %v5441
    %v5443 = vmul.f32 %v5432, 1.442695
    %v5444 = vpow.pop %v5443
    %v5445 = vmul.f32 %v5433, 1.442695
    %v5446 = vpow.pop %v5445
    %v5447 = vmul.f32 %v5434, 1.442695
    %v5448 = vpow.pop %v5447
    %v5449 = vmul.f32 %v5435, 1.442695
    %v5450 = vpow.pop %v5449
    %v5451 = vmul.f32 %v5436, 1.442695
    %v5452 = vpow.pop %v5451
    %v5453 = vmul.f32 %v5437, 1.442695
    %v5454 = vpow.pop %v5453
    %v5455 = vmul.f32 %v5438, 1.442695
    %v5456 = vpow.pop %v5455
    %v5457 = vsel %vm1827, %v5440, 0.0
    %5458 = vadd.xlane.f32.xlu0 %v5457
    %v5459 = vpop.xlane.xlu0 %5458
    %v5460 = vsel %vm1827, %v5442, 0.0
    %5461 = vadd.xlane.f32.xlu0 %v5460
    %v5462 = vpop.xlane.xlu0 %5461
    %v5463 = vsel %vm1827, %v5444, 0.0
    %5464 = vadd.xlane.f32.xlu0 %v5463
    %v5465 = vpop.xlane.xlu0 %5464
    %v5466 = vsel %vm1827, %v5446, 0.0
    %5467 = vadd.xlane.f32.xlu0 %v5466
    %v5468 = vpop.xlane.xlu0 %5467
    %v5469 = vsel %vm1827, %v5448, 0.0
    %5470 = vadd.xlane.f32.xlu0 %v5469
    %v5471 = vpop.xlane.xlu0 %5470
    %v5472 = vsel %vm1827, %v5450, 0.0
    %5473 = vadd.xlane.f32.xlu0 %v5472
    %v5474 = vpop.xlane.xlu0 %5473
    %v5475 = vsel %vm1827, %v5452, 0.0
    %5476 = vadd.xlane.f32.xlu0 %v5475
    %v5477 = vpop.xlane.xlu0 %5476
    %v5478 = vsel %vm1827, %v5454, 0.0
    %5479 = vadd.xlane.f32.xlu0 %v5478
    %v5480 = vpop.xlane.xlu0 %5479
    %v5481 = vrcp.pop %v5459
    %v5482 = vrcp.pop %v5462
    %v5483 = vrcp.pop %v5465
    %v5484 = vrcp.pop %v5468
    %v5485 = vrcp.pop %v5471
    %v5486 = vrcp.pop %v5474
    %v5487 = vrcp.pop %v5477
    %v5488 = vrcp.pop %v5480
    %v5489 = vpack.c.bf16 %v5442, %v5440
    %v5490 = vpack.c.bf16 %v5446, %v5444
    %v5491 = vpack.c.bf16 %v5450, %v5448
    %v5492 = vpack.c.bf16 %v5454, %v5452
    %v5493 = vpack.c.bf16 %v5456, %v5456
    %5494 = vrot.lane.b32.xlu0 %v4957, 48
    %v5495 = vpop.permute.xlu0 %5494
    %5496 = vrot.lane.b32.xlu0 %v4958, 48
    %v5497 = vpop.permute.xlu0 %5496
    %5498 = vrot.lane.b32.xlu0 %v4959, 48
    %v5499 = vpop.permute.xlu0 %5498
    %5500 = vrot.lane.b32.xlu0 %v4960, 48
    %v5501 = vpop.permute.xlu0 %5500
    %5502 = vrot.lane.b32.xlu0 %v4961, 48
    %v5503 = vpop.permute.xlu0 %5502
    %v5509 = vsel %vm1827, %v5489, 0
    %v5512 = vsel %vm1827, %v5490, 0
    %v5515 = vsel %vm1827, %v5491, 0
    %v5518 = vsel %vm1827, %v5492, 0
    %v5521 = vsel %vm1827, %v5493, 0
    %v5524 = vsel %vm1952, %v5503, 0
    %5526 = vmatprep.subr.bf16.mxu0 0
    %5527 = vmatpush1.bf16.msra.mxu0 %v5495
    %5528 = vmatprep.subr.bf16.mxu0 0
    %5529 = vmatpush1.bf16.msra.mxu0 %v5497
    %5530 = vmatprep.subr.bf16.mxu0 0
    %5531 = vmatpush1.bf16.msra.mxu0 %v5499
    %5532 = vmatprep.subr.bf16.mxu0 0
    %5533 = vmatpush1.bf16.msra.mxu0 %v5501
    %5534 = vmatprep.subr.bf16.mxu0 0
    %5535 = vmatpush1.bf16.msra.mxu0 %v5524
    %5536 = vmatprep.subr.bf16.mxu0 0
    %5537 = vmatpush1.bf16.msra.mxu0 0
    %5538 = vmatprep.subr.bf16.mxu0 0
    %5539 = vmatpush1.bf16.msra.mxu0 0
    %5540 = vmatprep.subr.bf16.mxu0 0
    %5541 = vmatpush1.bf16.msra.mxu0 0
    %5542 = vmatprep.subr.bf16.mxu0 0
    %5543 = vmatpush1.bf16.msra.mxu0 0
    %5544 = vmatprep.subr.bf16.mxu0 0
    %5545 = vmatpush1.bf16.msra.mxu0 0
    %5546 = vmatprep.subr.bf16.mxu0 0
    %5547 = vmatpush1.bf16.msra.mxu0 0
    %5548 = vmatprep.subr.bf16.mxu0 0
    %5549 = vmatpush1.bf16.msra.mxu0 0
    %5550 = vmatprep.subr.bf16.mxu0 0
    %5551 = vmatpush1.bf16.msra.mxu0 0
    %5552 = vmatprep.subr.bf16.mxu0 0
    %5553 = vmatpush1.bf16.msra.mxu0 0
    %5554 = vmatprep.subr.bf16.mxu0 0
    %5555 = vmatpush1.bf16.msra.mxu0 0
    %5556 = vmatprep.subr.bf16.mxu0 0
    %5557 = vmatpush1.bf16.msra.mxu0 0
    %5558 = vmatprep.mubr.bf16.mxu0 0
    %5559 = vmatmul.mubr.bf16.gmra.mrb[0].mxu0 %v5509
    %v5560 = vpop.f32.mrb[0].mxu0
    %v5561 = vadd.f32 0.0, %v5560
    %v5562 = vpop.f32.mrb[0].mxu0
    %v5563 = vpop.f32.mrb[0].mxu0
    %v5564 = vadd.f32 0.0, %v5563
    %v5565 = vpop.f32.mrb[0].mxu0
    %5566 = vmatprep.mubr.bf16.mxu0 0
    %5567 = vmatmul.mubr.bf16.gmra.mrb[0].mxu0 %v5512
    %v5568 = vpop.f32.mrb[0].mxu0
    %v5569 = vadd.f32 0.0, %v5568
    %v5570 = vpop.f32.mrb[0].mxu0
    %v5571 = vpop.f32.mrb[0].mxu0
    %v5572 = vadd.f32 0.0, %v5571
    %v5573 = vpop.f32.mrb[0].mxu0
    %5574 = vmatprep.mubr.bf16.mxu0 0
    %5575 = vmatmul.mubr.bf16.gmra.mrb[0].mxu0 %v5515
    %v5576 = vpop.f32.mrb[0].mxu0
    %v5577 = vadd.f32 0.0, %v5576
    %v5578 = vpop.f32.mrb[0].mxu0
    %v5579 = vpop.f32.mrb[0].mxu0
    %v5580 = vadd.f32 0.0, %v5579
    %v5581 = vpop.f32.mrb[0].mxu0
    %5582 = vmatprep.mubr.bf16.mxu0 0
    %5583 = vmatmul.mubr.bf16.gmra.mrb[0].mxu0 %v5518
    %v5584 = vpop.f32.mrb[0].mxu0
    %v5585 = vadd.f32 0.0, %v5584
    %v5586 = vpop.f32.mrb[0].mxu0
    %v5587 = vpop.f32.mrb[0].mxu0
    %v5588 = vadd.f32 0.0, %v5587
    %v5589 = vpop.f32.mrb[0].mxu0
    %5590 = vmatprep.mubr.bf16.mxu0 0
    %5591 = vmatmul.mubr.bf16.gmra.mrb[0].mxu0 %v5521
    %v5592 = vpop.f32.mrb[0].mxu0
    %v5593 = vpop.f32.mrb[0].mxu0
    %v5594 = vpop.f32.mrb[0].mxu0
    %v5595 = vpop.f32.mrb[0].mxu0
    %5596 = vdwg.mxu0
    %v5597 = vmul.f32 %v5561, %v5481
    %v5598 = vmul.f32 %v5564, %v5482
    %v5599 = vmul.f32 %v5569, %v5483
    %v5600 = vmul.f32 %v5572, %v5484
    %v5601 = vmul.f32 %v5577, %v5485
    %v5602 = vmul.f32 %v5580, %v5486
    %v5603 = vmul.f32 %v5585, %v5487
    %v5604 = vmul.f32 %v5588, %v5488
    %5613 = vrot.lane.b32.xlu0 %v5597, 16
    %v5614 = vpop.permute.xlu0 %5613
    %5615 = vrot.lane.b32.xlu0 %v5598, 16
    %v5616 = vpop.permute.xlu0 %5615
    %5617 = vrot.lane.b32.xlu0 %v5599, 16
    %v5618 = vpop.permute.xlu0 %5617
    %5619 = vrot.lane.b32.xlu0 %v5600, 16
    %v5620 = vpop.permute.xlu0 %5619
    %5621 = vrot.lane.b32.xlu0 %v5601, 16
    %v5622 = vpop.permute.xlu0 %5621
    %5623 = vrot.lane.b32.xlu0 %v5602, 16
    %v5624 = vpop.permute.xlu0 %5623
    %5625 = vrot.lane.b32.xlu0 %v5603, 16
    %v5626 = vpop.permute.xlu0 %5625
    %5627 = vrot.lane.b32.xlu0 %v5604, 16
    %v5628 = vpop.permute.xlu0 %5627
    %v5637 = vsel %vm269, %v5273, %v5614
    %v5638 = vsel %vm269, %v5274, %v5616
    %v5639 = vsel %vm269, %v5275, %v5618
    %v5640 = vsel %vm269, %v5276, %v5620
    %v5641 = vsel %vm269, %v5277, %v5622
    %v5642 = vsel %vm269, %v5278, %v5624
    %v5643 = vsel %vm269, %v5279, %v5626
    %v5644 = vsel %vm269, %v5280, %v5628
    %v5645 = vpack.c.bf16 %v4862, %v4859
    %v5646 = vpack.c.bf16 %v4870, %v4867
    %v5647 = vpack.c.bf16 %v4878, %v4875
    %v5648 = vpack.c.bf16 %v4886, %v4883
    %v5649 = vpack.c.bf16 %v4954, %v4954
    %5655 = vrot.lane.b32.xlu0 %v5645, 96
    %v5656 = vpop.permute.xlu0 %5655
    %5657 = vrot.lane.b32.xlu0 %v5646, 96
    %v5658 = vpop.permute.xlu0 %5657
    %5659 = vrot.lane.b32.xlu0 %v5647, 96
    %v5660 = vpop.permute.xlu0 %5659
    %5661 = vrot.lane.b32.xlu0 %v5648, 96
    %v5662 = vpop.permute.xlu0 %5661
    %5663 = vrot.lane.b32.xlu0 %v5649, 96
    %v5664 = vpop.permute.xlu0 %5663
    %v5666 = vsel %vm269, %v5645, 0
    %v5669 = vsel %vm269, %v5646, 0
    %v5672 = vsel %vm269, %v5647, 0
    %v5675 = vsel %vm269, %v5648, 0
    %v5678 = vsel %vm269, %v5649, 0
    %v5681 = vsel %vm269, %v5656, 0
    %v5684 = vsel %vm269, %v5658, 0
    %v5687 = vsel %vm269, %v5660, 0
    %v5690 = vsel %vm269, %v5662, 0
    %v5693 = vsel %vm269, %v5664, 0
    %5695 = vmatprep.subr.bf16.mxu0 0
    %5696 = vmatpush1.bf16.xpose.msra.mxu0 %v5681
    %5697 = vmatprep.subr.bf16.mxu0 0
    %5698 = vmatpush1.bf16.xpose.msra.mxu0 %v5684
    %5699 = vmatprep.subr.bf16.mxu0 0
    %5700 = vmatpush1.bf16.xpose.msra.mxu0 %v5687
    %5701 = vmatprep.subr.bf16.mxu0 0
    %5702 = vmatpush1.bf16.xpose.msra.mxu0 %v5690
    %5703 = vmatprep.subr.bf16.mxu0 0
    %5704 = vmatpush1.bf16.xpose.msra.mxu0 %v5693
    %5705 = vmatprep.subr.bf16.mxu0 0
    %5706 = vmatpush1.bf16.xpose.msra.mxu0 0
    %5707 = vmatprep.subr.bf16.mxu0 0
    %5708 = vmatpush1.bf16.xpose.msra.mxu0 0
    %5709 = vmatprep.subr.bf16.mxu0 0
    %5710 = vmatpush1.bf16.xpose.msra.mxu0 0
    %5711 = vmatprep.subr.bf16.mxu0 0
    %5712 = vmatpush1.bf16.xpose.msra.mxu0 0
    %5713 = vmatprep.subr.bf16.mxu0 0
    %5714 = vmatpush1.bf16.xpose.msra.mxu0 0
    %5715 = vmatprep.subr.bf16.mxu0 0
    %5716 = vmatpush1.bf16.xpose.msra.mxu0 0
    %5717 = vmatprep.subr.bf16.mxu0 0
    %5718 = vmatpush1.bf16.xpose.msra.mxu0 0
    %5719 = vmatprep.subr.bf16.mxu0 0
    %5720 = vmatpush1.bf16.xpose.msra.mxu0 0
    %5721 = vmatprep.subr.bf16.mxu0 0
    %5722 = vmatpush1.bf16.xpose.msra.mxu0 0
    %5723 = vmatprep.subr.bf16.mxu0 0
    %5724 = vmatpush1.bf16.xpose.msra.mxu0 0
    %5725 = vmatprep.subr.bf16.mxu0 0
    %5726 = vmatpush1.bf16.xpose.msra.mxu0 0
    %5727 = vmatprep.mubr.bf16.mxu0 0
    %5728 = vmatmul.mubr.bf16.gmra.mrb[0].mxu0 %v5666
    %v5729 = vpop.f32.mrb[0].mxu0
    %v5730 = vadd.f32 0.0, %v5729
    %v5731 = vpop.f32.mrb[0].mxu0
    %v5732 = vpop.f32.mrb[0].mxu0
    %v5733 = vadd.f32 0.0, %v5732
    %v5734 = vpop.f32.mrb[0].mxu0
    %5735 = vmatprep.mubr.bf16.mxu0 0
    %5736 = vmatmul.mubr.bf16.gmra.mrb[0].mxu0 %v5669
    %v5737 = vpop.f32.mrb[0].mxu0
    %v5738 = vadd.f32 0.0, %v5737
    %v5739 = vpop.f32.mrb[0].mxu0
    %v5740 = vpop.f32.mrb[0].mxu0
    %v5741 = vadd.f32 0.0, %v5740
    %v5742 = vpop.f32.mrb[0].mxu0
    %5743 = vmatprep.mubr.bf16.mxu0 0
    %5744 = vmatmul.mubr.bf16.gmra.mrb[0].mxu0 %v5672
    %v5745 = vpop.f32.mrb[0].mxu0
    %v5746 = vadd.f32 0.0, %v5745
    %v5747 = vpop.f32.mrb[0].mxu0
    %v5748 = vpop.f32.mrb[0].mxu0
    %v5749 = vadd.f32 0.0, %v5748
    %v5750 = vpop.f32.mrb[0].mxu0
    %5751 = vmatprep.mubr.bf16.mxu0 0
    %5752 = vmatmul.mubr.bf16.gmra.mrb[0].mxu0 %v5675
    %v5753 = vpop.f32.mrb[0].mxu0
    %v5754 = vadd.f32 0.0, %v5753
    %v5755 = vpop.f32.mrb[0].mxu0
    %v5756 = vpop.f32.mrb[0].mxu0
    %v5757 = vadd.f32 0.0, %v5756
    %v5758 = vpop.f32.mrb[0].mxu0
    %5759 = vmatprep.mubr.bf16.mxu0 0
    %5760 = vmatmul.mubr.bf16.gmra.mrb[0].mxu0 %v5678
    %v5761 = vpop.f32.mrb[0].mxu0
    %v5762 = vadd.f32 0.0, %v5761
    %v5763 = vpop.f32.mrb[0].mxu0
    %v5764 = vpop.f32.mrb[0].mxu0
    %v5765 = vpop.f32.mrb[0].mxu0
    %5766 = vdwg.mxu0
    %v5767 = vsel %vm1827, %v5730, -inf
    %5768 = vmax.xlane.f32.xlu0 %v5767
    %v5769 = vpop.xlane.xlu0 %5768
    %v5770 = vsel %vm1827, %v5733, -inf
    %5771 = vmax.xlane.f32.xlu0 %v5770
    %v5772 = vpop.xlane.xlu0 %5771
    %v5773 = vsel %vm1827, %v5738, -inf
    %5774 = vmax.xlane.f32.xlu0 %v5773
    %v5775 = vpop.xlane.xlu0 %5774
    %v5776 = vsel %vm1827, %v5741, -inf
    %5777 = vmax.xlane.f32.xlu0 %v5776
    %v5778 = vpop.xlane.xlu0 %5777
    %v5779 = vsel %vm1827, %v5746, -inf
    %5780 = vmax.xlane.f32.xlu0 %v5779
    %v5781 = vpop.xlane.xlu0 %5780
    %v5782 = vsel %vm1827, %v5749, -inf
    %5783 = vmax.xlane.f32.xlu0 %v5782
    %v5784 = vpop.xlane.xlu0 %5783
    %v5785 = vsel %vm1827, %v5754, -inf
    %5786 = vmax.xlane.f32.xlu0 %v5785
    %v5787 = vpop.xlane.xlu0 %5786
    %v5788 = vsel %vm1827, %v5757, -inf
    %5789 = vmax.xlane.f32.xlu0 %v5788
    %v5790 = vpop.xlane.xlu0 %5789
    %v5791 = vsel %vm1827, %v5762, -inf
    %5792 = vmax.xlane.f32.xlu0 %v5791
    %v5793 = vpop.xlane.xlu0 %5792
    %v5794 = vsub.f32 %v5730, %v5769
    %v5795 = vsub.f32 %v5733, %v5772
    %v5796 = vsub.f32 %v5738, %v5775
    %v5797 = vsub.f32 %v5741, %v5778
    %v5798 = vsub.f32 %v5746, %v5781
    %v5799 = vsub.f32 %v5749, %v5784
    %v5800 = vsub.f32 %v5754, %v5787
    %v5801 = vsub.f32 %v5757, %v5790
    %v5802 = vsub.f32 %v5762, %v5793
    %v5803 = vmul.f32 %v5794, 1.442695
    %v5804 = vpow.pop %v5803
    %v5805 = vmul.f32 %v5795, 1.442695
    %v5806 = vpow.pop %v5805
    %v5807 = vmul.f32 %v5796, 1.442695
    %v5808 = vpow.pop %v5807
    %v5809 = vmul.f32 %v5797, 1.442695
    %v5810 = vpow.pop %v5809
    %v5811 = vmul.f32 %v5798, 1.442695
    %v5812 = vpow.pop %v5811
    %v5813 = vmul.f32 %v5799, 1.442695
    %v5814 = vpow.pop %v5813
    %v5815 = vmul.f32 %v5800, 1.442695
    %v5816 = vpow.pop %v5815
    %v5817 = vmul.f32 %v5801, 1.442695
    %v5818 = vpow.pop %v5817
    %v5819 = vmul.f32 %v5802, 1.442695
    %v5820 = vpow.pop %v5819
    %v5821 = vsel %vm1827, %v5804, 0.0
    %5822 = vadd.xlane.f32.xlu0 %v5821
    %v5823 = vpop.xlane.xlu0 %5822
    %v5824 = vsel %vm1827, %v5806, 0.0
    %5825 = vadd.xlane.f32.xlu0 %v5824
    %v5826 = vpop.xlane.xlu0 %5825
    %v5827 = vsel %vm1827, %v5808, 0.0
    %5828 = vadd.xlane.f32.xlu0 %v5827
    %v5829 = vpop.xlane.xlu0 %5828
    %v5830 = vsel %vm1827, %v5810, 0.0
    %5831 = vadd.xlane.f32.xlu0 %v5830
    %v5832 = vpop.xlane.xlu0 %5831
    %v5833 = vsel %vm1827, %v5812, 0.0
    %5834 = vadd.xlane.f32.xlu0 %v5833
    %v5835 = vpop.xlane.xlu0 %5834
    %v5836 = vsel %vm1827, %v5814, 0.0
    %5837 = vadd.xlane.f32.xlu0 %v5836
    %v5838 = vpop.xlane.xlu0 %5837
    %v5839 = vsel %vm1827, %v5816, 0.0
    %5840 = vadd.xlane.f32.xlu0 %v5839
    %v5841 = vpop.xlane.xlu0 %5840
    %v5842 = vsel %vm1827, %v5818, 0.0
    %5843 = vadd.xlane.f32.xlu0 %v5842
    %v5844 = vpop.xlane.xlu0 %5843
    %v5845 = vrcp.pop %v5823
    %v5846 = vrcp.pop %v5826
    %v5847 = vrcp.pop %v5829
    %v5848 = vrcp.pop %v5832
    %v5849 = vrcp.pop %v5835
    %v5850 = vrcp.pop %v5838
    %v5851 = vrcp.pop %v5841
    %v5852 = vrcp.pop %v5844
    %v5853 = vpack.c.bf16 %v5806, %v5804
    %v5854 = vpack.c.bf16 %v5810, %v5808
    %v5855 = vpack.c.bf16 %v5814, %v5812
    %v5856 = vpack.c.bf16 %v5818, %v5816
    %v5857 = vpack.c.bf16 %v5820, %v5820
    %5858 = vrot.lane.b32.xlu0 %v5645, 64
    %v5859 = vpop.permute.xlu0 %5858
    %5860 = vrot.lane.b32.xlu0 %v5646, 64
    %v5861 = vpop.permute.xlu0 %5860
    %5862 = vrot.lane.b32.xlu0 %v5647, 64
    %v5863 = vpop.permute.xlu0 %5862
    %5864 = vrot.lane.b32.xlu0 %v5648, 64
    %v5865 = vpop.permute.xlu0 %5864
    %5866 = vrot.lane.b32.xlu0 %v5649, 64
    %v5867 = vpop.permute.xlu0 %5866
    %v5873 = vsel %vm1827, %v5853, 0
    %v5876 = vsel %vm1827, %v5854, 0
    %v5879 = vsel %vm1827, %v5855, 0
    %v5882 = vsel %vm1827, %v5856, 0
    %v5885 = vsel %vm1827, %v5857, 0
    %v5888 = vsel %vm1952, %v5867, 0
    %5890 = vmatprep.subr.bf16.mxu0 0
    %5891 = vmatpush1.bf16.msra.mxu0 %v5859
    %5892 = vmatprep.subr.bf16.mxu0 0
    %5893 = vmatpush1.bf16.msra.mxu0 %v5861
    %5894 = vmatprep.subr.bf16.mxu0 0
    %5895 = vmatpush1.bf16.msra.mxu0 %v5863
    %5896 = vmatprep.subr.bf16.mxu0 0
    %5897 = vmatpush1.bf16.msra.mxu0 %v5865
    %5898 = vmatprep.subr.bf16.mxu0 0
    %5899 = vmatpush1.bf16.msra.mxu0 %v5888
    %5900 = vmatprep.subr.bf16.mxu0 0
    %5901 = vmatpush1.bf16.msra.mxu0 0
    %5902 = vmatprep.subr.bf16.mxu0 0
    %5903 = vmatpush1.bf16.msra.mxu0 0
    %5904 = vmatprep.subr.bf16.mxu0 0
    %5905 = vmatpush1.bf16.msra.mxu0 0
    %5906 = vmatprep.subr.bf16.mxu0 0
    %5907 = vmatpush1.bf16.msra.mxu0 0
    %5908 = vmatprep.subr.bf16.mxu0 0
    %5909 = vmatpush1.bf16.msra.mxu0 0
    %5910 = vmatprep.subr.bf16.mxu0 0
    %5911 = vmatpush1.bf16.msra.mxu0 0
    %5912 = vmatprep.subr.bf16.mxu0 0
    %5913 = vmatpush1.bf16.msra.mxu0 0
    %5914 = vmatprep.subr.bf16.mxu0 0
    %5915 = vmatpush1.bf16.msra.mxu0 0
    %5916 = vmatprep.subr.bf16.mxu0 0
    %5917 = vmatpush1.bf16.msra.mxu0 0
    %5918 = vmatprep.subr.bf16.mxu0 0
    %5919 = vmatpush1.bf16.msra.mxu0 0
    %5920 = vmatprep.subr.bf16.mxu0 0
    %5921 = vmatpush1.bf16.msra.mxu0 0
    %5922 = vmatprep.mubr.bf16.mxu0 0
    %5923 = vmatmul.mubr.bf16.gmra.mrb[0].mxu0 %v5873
    %v5924 = vpop.f32.mrb[0].mxu0
    %v5925 = vadd.f32 0.0, %v5924
    %v5926 = vpop.f32.mrb[0].mxu0
    %v5927 = vpop.f32.mrb[0].mxu0
    %v5928 = vadd.f32 0.0, %v5927
    %v5929 = vpop.f32.mrb[0].mxu0
    %5930 = vmatprep.mubr.bf16.mxu0 0
    %5931 = vmatmul.mubr.bf16.gmra.mrb[0].mxu0 %v5876
    %v5932 = vpop.f32.mrb[0].mxu0
    %v5933 = vadd.f32 0.0, %v5932
    %v5934 = vpop.f32.mrb[0].mxu0
    %v5935 = vpop.f32.mrb[0].mxu0
    %v5936 = vadd.f32 0.0, %v5935
    %v5937 = vpop.f32.mrb[0].mxu0
    %5938 = vmatprep.mubr.bf16.mxu0 0
    %5939 = vmatmul.mubr.bf16.gmra.mrb[0].mxu0 %v5879
    %v5940 = vpop.f32.mrb[0].mxu0
    %v5941 = vadd.f32 0.0, %v5940
    %v5942 = vpop.f32.mrb[0].mxu0
    %v5943 = vpop.f32.mrb[0].mxu0
    %v5944 = vadd.f32 0.0, %v5943
    %v5945 = vpop.f32.mrb[0].mxu0
    %5946 = vmatprep.mubr.bf16.mxu0 0
    %5947 = vmatmul.mubr.bf16.gmra.mrb[0].mxu0 %v5882
    %v5948 = vpop.f32.mrb[0].mxu0
    %v5949 = vadd.f32 0.0, %v5948
    %v5950 = vpop.f32.mrb[0].mxu0
    %v5951 = vpop.f32.mrb[0].mxu0
    %v5952 = vadd.f32 0.0, %v5951
    %v5953 = vpop.f32.mrb[0].mxu0
    %5954 = vmatprep.mubr.bf16.mxu0 0
    %5955 = vmatmul.mubr.bf16.gmra.mrb[0].mxu0 %v5885
    %v5956 = vpop.f32.mrb[0].mxu0
    %v5957 = vpop.f32.mrb[0].mxu0
    %v5958 = vpop.f32.mrb[0].mxu0
    %v5959 = vpop.f32.mrb[0].mxu0
    %5960 = vdwg.mxu0
    %v5961 = vmul.f32 %v5925, %v5845
    %v5962 = vmul.f32 %v5928, %v5846
    %v5963 = vmul.f32 %v5933, %v5847
    %v5964 = vmul.f32 %v5936, %v5848
    %v5965 = vmul.f32 %v5941, %v5849
    %v5966 = vmul.f32 %v5944, %v5850
    %v5967 = vmul.f32 %v5949, %v5851
    %v5968 = vmul.f32 %v5952, %v5852
    %5969 = vrot.lane.b32.xlu0 %v5645, 112
    %v5970 = vpop.permute.xlu0 %5969
    %5971 = vrot.lane.b32.xlu0 %v5646, 112
    %v5972 = vpop.permute.xlu0 %5971
    %5973 = vrot.lane.b32.xlu0 %v5647, 112
    %v5974 = vpop.permute.xlu0 %5973
    %5975 = vrot.lane.b32.xlu0 %v5648, 112
    %v5976 = vpop.permute.xlu0 %5975
    %5977 = vrot.lane.b32.xlu0 %v5649, 112
    %v5978 = vpop.permute.xlu0 %5977
    %5979 = vrot.lane.b32.xlu0 %v5645, 80
    %v5980 = vpop.permute.xlu0 %5979
    %5981 = vrot.lane.b32.xlu0 %v5646, 80
    %v5982 = vpop.permute.xlu0 %5981
    %5983 = vrot.lane.b32.xlu0 %v5647, 80
    %v5984 = vpop.permute.xlu0 %5983
    %5985 = vrot.lane.b32.xlu0 %v5648, 80
    %v5986 = vpop.permute.xlu0 %5985
    %5987 = vrot.lane.b32.xlu0 %v5649, 80
    %v5988 = vpop.permute.xlu0 %5987
    %v5990 = vsel %vm269, %v5970, 0
    %v5993 = vsel %vm269, %v5972, 0
    %v5996 = vsel %vm269, %v5974, 0
    %v5999 = vsel %vm269, %v5976, 0
    %v6002 = vsel %vm269, %v5978, 0
    %v6005 = vsel %vm269, %v5980, 0
    %v6008 = vsel %vm269, %v5982, 0
    %v6011 = vsel %vm269, %v5984, 0
    %v6014 = vsel %vm269, %v5986, 0
    %v6017 = vsel %vm269, %v5988, 0
    %6019 = vmatprep.subr.bf16.mxu0 0
    %6020 = vmatpush1.bf16.xpose.msra.mxu0 %v6005
    %6021 = vmatprep.subr.bf16.mxu0 0
    %6022 = vmatpush1.bf16.xpose.msra.mxu0 %v6008
    %6023 = vmatprep.subr.bf16.mxu0 0
    %6024 = vmatpush1.bf16.xpose.msra.mxu0 %v6011
    %6025 = vmatprep.subr.bf16.mxu0 0
    %6026 = vmatpush1.bf16.xpose.msra.mxu0 %v6014
    %6027 = vmatprep.subr.bf16.mxu0 0
    %6028 = vmatpush1.bf16.xpose.msra.mxu0 %v6017
    %6029 = vmatprep.subr.bf16.mxu0 0
    %6030 = vmatpush1.bf16.xpose.msra.mxu0 0
    %6031 = vmatprep.subr.bf16.mxu0 0
    %6032 = vmatpush1.bf16.xpose.msra.mxu0 0
    %6033 = vmatprep.subr.bf16.mxu0 0
    %6034 = vmatpush1.bf16.xpose.msra.mxu0 0
    %6035 = vmatprep.subr.bf16.mxu0 0
    %6036 = vmatpush1.bf16.xpose.msra.mxu0 0
    %6037 = vmatprep.subr.bf16.mxu0 0
    %6038 = vmatpush1.bf16.xpose.msra.mxu0 0
    %6039 = vmatprep.subr.bf16.mxu0 0
    %6040 = vmatpush1.bf16.xpose.msra.mxu0 0
    %6041 = vmatprep.subr.bf16.mxu0 0
    %6042 = vmatpush1.bf16.xpose.msra.mxu0 0
    %6043 = vmatprep.subr.bf16.mxu0 0
    %6044 = vmatpush1.bf16.xpose.msra.mxu0 0
    %6045 = vmatprep.subr.bf16.mxu0 0
    %6046 = vmatpush1.bf16.xpose.msra.mxu0 0
    %6047 = vmatprep.subr.bf16.mxu0 0
    %6048 = vmatpush1.bf16.xpose.msra.mxu0 0
    %6049 = vmatprep.subr.bf16.mxu0 0
    %6050 = vmatpush1.bf16.xpose.msra.mxu0 0
    %6051 = vmatprep.mubr.bf16.mxu0 0
    %6052 = vmatmul.mubr.bf16.gmra.mrb[0].mxu0 %v5990
    %v6053 = vpop.f32.mrb[0].mxu0
    %v6054 = vadd.f32 0.0, %v6053
    %v6055 = vpop.f32.mrb[0].mxu0
    %v6056 = vpop.f32.mrb[0].mxu0
    %v6057 = vadd.f32 0.0, %v6056
    %v6058 = vpop.f32.mrb[0].mxu0
    %6059 = vmatprep.mubr.bf16.mxu0 0
    %6060 = vmatmul.mubr.bf16.gmra.mrb[0].mxu0 %v5993
    %v6061 = vpop.f32.mrb[0].mxu0
    %v6062 = vadd.f32 0.0, %v6061
    %v6063 = vpop.f32.mrb[0].mxu0
    %v6064 = vpop.f32.mrb[0].mxu0
    %v6065 = vadd.f32 0.0, %v6064
    %v6066 = vpop.f32.mrb[0].mxu0
    %6067 = vmatprep.mubr.bf16.mxu0 0
    %6068 = vmatmul.mubr.bf16.gmra.mrb[0].mxu0 %v5996
    %v6069 = vpop.f32.mrb[0].mxu0
    %v6070 = vadd.f32 0.0, %v6069
    %v6071 = vpop.f32.mrb[0].mxu0
    %v6072 = vpop.f32.mrb[0].mxu0
    %v6073 = vadd.f32 0.0, %v6072
    %v6074 = vpop.f32.mrb[0].mxu0
    %6075 = vmatprep.mubr.bf16.mxu0 0
    %6076 = vmatmul.mubr.bf16.gmra.mrb[0].mxu0 %v5999
    %v6077 = vpop.f32.mrb[0].mxu0
    %v6078 = vadd.f32 0.0, %v6077
    %v6079 = vpop.f32.mrb[0].mxu0
    %v6080 = vpop.f32.mrb[0].mxu0
    %v6081 = vadd.f32 0.0, %v6080
    %v6082 = vpop.f32.mrb[0].mxu0
    %6083 = vmatprep.mubr.bf16.mxu0 0
    %6084 = vmatmul.mubr.bf16.gmra.mrb[0].mxu0 %v6002
    %v6085 = vpop.f32.mrb[0].mxu0
    %v6086 = vadd.f32 0.0, %v6085
    %v6087 = vpop.f32.mrb[0].mxu0
    %v6088 = vpop.f32.mrb[0].mxu0
    %v6089 = vpop.f32.mrb[0].mxu0
    %6090 = vdwg.mxu0
    %v6091 = vsel %vm1827, %v6054, -inf
    %6092 = vmax.xlane.f32.xlu0 %v6091
    %v6093 = vpop.xlane.xlu0 %6092
    %v6094 = vsel %vm1827, %v6057, -inf
    %6095 = vmax.xlane.f32.xlu0 %v6094
    %v6096 = vpop.xlane.xlu0 %6095
    %v6097 = vsel %vm1827, %v6062, -inf
    %6098 = vmax.xlane.f32.xlu0 %v6097
    %v6099 = vpop.xlane.xlu0 %6098
    %v6100 = vsel %vm1827, %v6065, -inf
    %6101 = vmax.xlane.f32.xlu0 %v6100
    %v6102 = vpop.xlane.xlu0 %6101
    %v6103 = vsel %vm1827, %v6070, -inf
    %6104 = vmax.xlane.f32.xlu0 %v6103
    %v6105 = vpop.xlane.xlu0 %6104
    %v6106 = vsel %vm1827, %v6073, -inf
    %6107 = vmax.xlane.f32.xlu0 %v6106
    %v6108 = vpop.xlane.xlu0 %6107
    %v6109 = vsel %vm1827, %v6078, -inf
    %6110 = vmax.xlane.f32.xlu0 %v6109
    %v6111 = vpop.xlane.xlu0 %6110
    %v6112 = vsel %vm1827, %v6081, -inf
    %6113 = vmax.xlane.f32.xlu0 %v6112
    %v6114 = vpop.xlane.xlu0 %6113
    %v6115 = vsel %vm1827, %v6086, -inf
    %6116 = vmax.xlane.f32.xlu0 %v6115
    %v6117 = vpop.xlane.xlu0 %6116
    %v6118 = vsub.f32 %v6054, %v6093
    %v6119 = vsub.f32 %v6057, %v6096
    %v6120 = vsub.f32 %v6062, %v6099
    %v6121 = vsub.f32 %v6065, %v6102
    %v6122 = vsub.f32 %v6070, %v6105
    %v6123 = vsub.f32 %v6073, %v6108
    %v6124 = vsub.f32 %v6078, %v6111
    %v6125 = vsub.f32 %v6081, %v6114
    %v6126 = vsub.f32 %v6086, %v6117
    %v6127 = vmul.f32 %v6118, 1.442695
    %v6128 = vpow.pop %v6127
    %v6129 = vmul.f32 %v6119, 1.442695
    %v6130 = vpow.pop %v6129
    %v6131 = vmul.f32 %v6120, 1.442695
    %v6132 = vpow.pop %v6131
    %v6133 = vmul.f32 %v6121, 1.442695
    %v6134 = vpow.pop %v6133
    %v6135 = vmul.f32 %v6122, 1.442695
    %v6136 = vpow.pop %v6135
    %v6137 = vmul.f32 %v6123, 1.442695
    %v6138 = vpow.pop %v6137
    %v6139 = vmul.f32 %v6124, 1.442695
    %v6140 = vpow.pop %v6139
    %v6141 = vmul.f32 %v6125, 1.442695
    %v6142 = vpow.pop %v6141
    %v6143 = vmul.f32 %v6126, 1.442695
    %v6144 = vpow.pop %v6143
    %v6145 = vsel %vm1827, %v6128, 0.0
    %6146 = vadd.xlane.f32.xlu0 %v6145
    %v6147 = vpop.xlane.xlu0 %6146
    %v6148 = vsel %vm1827, %v6130, 0.0
    %6149 = vadd.xlane.f32.xlu0 %v6148
    %v6150 = vpop.xlane.xlu0 %6149
    %v6151 = vsel %vm1827, %v6132, 0.0
    %6152 = vadd.xlane.f32.xlu0 %v6151
    %v6153 = vpop.xlane.xlu0 %6152
    %v6154 = vsel %vm1827, %v6134, 0.0
    %6155 = vadd.xlane.f32.xlu0 %v6154
    %v6156 = vpop.xlane.xlu0 %6155
    %v6157 = vsel %vm1827, %v6136, 0.0
    %6158 = vadd.xlane.f32.xlu0 %v6157
    %v6159 = vpop.xlane.xlu0 %6158
    %v6160 = vsel %vm1827, %v6138, 0.0
    %6161 = vadd.xlane.f32.xlu0 %v6160
    %v6162 = vpop.xlane.xlu0 %6161
    %v6163 = vsel %vm1827, %v6140, 0.0
    %6164 = vadd.xlane.f32.xlu0 %v6163
    %v6165 = vpop.xlane.xlu0 %6164
    %v6166 = vsel %vm1827, %v6142, 0.0
    %6167 = vadd.xlane.f32.xlu0 %v6166
    %v6168 = vpop.xlane.xlu0 %6167
    %v6169 = vrcp.pop %v6147
    %v6170 = vrcp.pop %v6150
    %v6171 = vrcp.pop %v6153
    %v6172 = vrcp.pop %v6156
    %v6173 = vrcp.pop %v6159
    %v6174 = vrcp.pop %v6162
    %v6175 = vrcp.pop %v6165
    %v6176 = vrcp.pop %v6168
    %v6177 = vpack.c.bf16 %v6130, %v6128
    %v6178 = vpack.c.bf16 %v6134, %v6132
    %v6179 = vpack.c.bf16 %v6138, %v6136
    %v6180 = vpack.c.bf16 %v6142, %v6140
    %v6181 = vpack.c.bf16 %v6144, %v6144
    %6182 = vrot.lane.b32.xlu0 %v5645, 48
    %v6183 = vpop.permute.xlu0 %6182
    %6184 = vrot.lane.b32.xlu0 %v5646, 48
    %v6185 = vpop.permute.xlu0 %6184
    %6186 = vrot.lane.b32.xlu0 %v5647, 48
    %v6187 = vpop.permute.xlu0 %6186
    %6188 = vrot.lane.b32.xlu0 %v5648, 48
    %v6189 = vpop.permute.xlu0 %6188
    %6190 = vrot.lane.b32.xlu0 %v5649, 48
    %v6191 = vpop.permute.xlu0 %6190
    %v6197 = vsel %vm1827, %v6177, 0
    %v6200 = vsel %vm1827, %v6178, 0
    %v6203 = vsel %vm1827, %v6179, 0
    %v6206 = vsel %vm1827, %v6180, 0
    %v6209 = vsel %vm1827, %v6181, 0
    %v6212 = vsel %vm1952, %v6191, 0
    %6214 = vmatprep.subr.bf16.mxu0 0
    %6215 = vmatpush1.bf16.msra.mxu0 %v6183
    %6216 = vmatprep.subr.bf16.mxu0 0
    %6217 = vmatpush1.bf16.msra.mxu0 %v6185
    %6218 = vmatprep.subr.bf16.mxu0 0
    %6219 = vmatpush1.bf16.msra.mxu0 %v6187
    %6220 = vmatprep.subr.bf16.mxu0 0
    %6221 = vmatpush1.bf16.msra.mxu0 %v6189
    %6222 = vmatprep.subr.bf16.mxu0 0
    %6223 = vmatpush1.bf16.msra.mxu0 %v6212
    %6224 = vmatprep.subr.bf16.mxu0 0
    %6225 = vmatpush1.bf16.msra.mxu0 0
    %6226 = vmatprep.subr.bf16.mxu0 0
    %6227 = vmatpush1.bf16.msra.mxu0 0
    %6228 = vmatprep.subr.bf16.mxu0 0
    %6229 = vmatpush1.bf16.msra.mxu0 0
    %6230 = vmatprep.subr.bf16.mxu0 0
    %6231 = vmatpush1.bf16.msra.mxu0 0
    %6232 = vmatprep.subr.bf16.mxu0 0
    %6233 = vmatpush1.bf16.msra.mxu0 0
    %6234 = vmatprep.subr.bf16.mxu0 0
    %6235 = vmatpush1.bf16.msra.mxu0 0
    %6236 = vmatprep.subr.bf16.mxu0 0
    %6237 = vmatpush1.bf16.msra.mxu0 0
    %6238 = vmatprep.subr.bf16.mxu0 0
    %6239 = vmatpush1.bf16.msra.mxu0 0
    %6240 = vmatprep.subr.bf16.mxu0 0
    %6241 = vmatpush1.bf16.msra.mxu0 0
    %6242 = vmatprep.subr.bf16.mxu0 0
    %6243 = vmatpush1.bf16.msra.mxu0 0
    %6244 = vmatprep.subr.bf16.mxu0 0
    %6245 = vmatpush1.bf16.msra.mxu0 0
    %6246 = vmatprep.mubr.bf16.mxu0 0
    %6247 = vmatmul.mubr.bf16.gmra.mrb[0].mxu0 %v6197
    %v6248 = vpop.f32.mrb[0].mxu0
    %v6249 = vadd.f32 0.0, %v6248
    %v6250 = vpop.f32.mrb[0].mxu0
    %v6251 = vpop.f32.mrb[0].mxu0
    %v6252 = vadd.f32 0.0, %v6251
    %v6253 = vpop.f32.mrb[0].mxu0
    %6254 = vmatprep.mubr.bf16.mxu0 0
    %6255 = vmatmul.mubr.bf16.gmra.mrb[0].mxu0 %v6200
    %v6256 = vpop.f32.mrb[0].mxu0
    %v6257 = vadd.f32 0.0, %v6256
    %v6258 = vpop.f32.mrb[0].mxu0
    %v6259 = vpop.f32.mrb[0].mxu0
    %v6260 = vadd.f32 0.0, %v6259
    %v6261 = vpop.f32.mrb[0].mxu0
    %6262 = vmatprep.mubr.bf16.mxu0 0
    %6263 = vmatmul.mubr.bf16.gmra.mrb[0].mxu0 %v6203
    %v6264 = vpop.f32.mrb[0].mxu0
    %v6265 = vadd.f32 0.0, %v6264
    %v6266 = vpop.f32.mrb[0].mxu0
    %v6267 = vpop.f32.mrb[0].mxu0
    %v6268 = vadd.f32 0.0, %v6267
    %v6269 = vpop.f32.mrb[0].mxu0
    %6270 = vmatprep.mubr.bf16.mxu0 0
    %6271 = vmatmul.mubr.bf16.gmra.mrb[0].mxu0 %v6206
    %v6272 = vpop.f32.mrb[0].mxu0
    %v6273 = vadd.f32 0.0, %v6272
    %v6274 = vpop.f32.mrb[0].mxu0
    %v6275 = vpop.f32.mrb[0].mxu0
    %v6276 = vadd.f32 0.0, %v6275
    %v6277 = vpop.f32.mrb[0].mxu0
    %6278 = vmatprep.mubr.bf16.mxu0 0
    %6279 = vmatmul.mubr.bf16.gmra.mrb[0].mxu0 %v6209
    %v6280 = vpop.f32.mrb[0].mxu0
    %v6281 = vpop.f32.mrb[0].mxu0
    %v6282 = vpop.f32.mrb[0].mxu0
    %v6283 = vpop.f32.mrb[0].mxu0
    %6284 = vdwg.mxu0
    %v6285 = vmul.f32 %v6249, %v6169
    %v6286 = vmul.f32 %v6252, %v6170
    %v6287 = vmul.f32 %v6257, %v6171
    %v6288 = vmul.f32 %v6260, %v6172
    %v6289 = vmul.f32 %v6265, %v6173
    %v6290 = vmul.f32 %v6268, %v6174
    %v6291 = vmul.f32 %v6273, %v6175
    %v6292 = vmul.f32 %v6276, %v6176
    %6301 = vrot.lane.b32.xlu0 %v6285, 16
    %v6302 = vpop.permute.xlu0 %6301
    %6303 = vrot.lane.b32.xlu0 %v6286, 16
    %v6304 = vpop.permute.xlu0 %6303
    %6305 = vrot.lane.b32.xlu0 %v6287, 16
    %v6306 = vpop.permute.xlu0 %6305
    %6307 = vrot.lane.b32.xlu0 %v6288, 16
    %v6308 = vpop.permute.xlu0 %6307
    %6309 = vrot.lane.b32.xlu0 %v6289, 16
    %v6310 = vpop.permute.xlu0 %6309
    %6311 = vrot.lane.b32.xlu0 %v6290, 16
    %v6312 = vpop.permute.xlu0 %6311
    %6313 = vrot.lane.b32.xlu0 %v6291, 16
    %v6314 = vpop.permute.xlu0 %6313
    %6315 = vrot.lane.b32.xlu0 %v6292, 16
    %v6316 = vpop.permute.xlu0 %6315
    %v6325 = vsel %vm269, %v5961, %v6302
    %v6326 = vsel %vm269, %v5962, %v6304
    %v6327 = vsel %vm269, %v5963, %v6306
    %v6328 = vsel %vm269, %v5964, %v6308
    %v6329 = vsel %vm269, %v5965, %v6310
    %v6330 = vsel %vm269, %v5966, %v6312
    %v6331 = vsel %vm269, %v5967, %v6314
    %v6332 = vsel %vm269, %v5968, %v6316
    %v6333 = vld [vmem:[%s79] sm:$0xf]
    %v6334 = vld [vmem:[%s79 + $0x4] sm:$0xf]
    %v6335 = vld [vmem:[%s79 + $0x8] sm:$0xf]
    %v6336 = vld [vmem:[%s79 + $0xc] sm:$0xf]
    %v6337 = vpack.c.bf16 %v5638, %v5637
    %v6338 = vpack.c.bf16 %v5640, %v5639
    %v6339 = vpack.c.bf16 %v5642, %v5641
    %v6340 = vpack.c.bf16 %v5644, %v5643
    %v6341 = vpack.c.bf16 %v6326, %v6325
    %v6342 = vpack.c.bf16 %v6328, %v6327
    %v6343 = vpack.c.bf16 %v6330, %v6329
    %v6344 = vpack.c.bf16 %v6332, %v6331
    %v6345 = vld [vmem:[#allocation2] sm:$0x1]
    %v6347 = vlaneseq
    %v6348 = vshrl.u32 %v6347, 7
    %v6349 = vsub.s32 0, %v6348
    %v6350 = vrot.slane %v6345, %v6349
    %v6356 = vunpack.c.l.b16 %v6333
    %v6357 = vunpack.c.l.b16 %v6334
    %v6358 = vunpack.c.l.b16 %v6335
    %v6359 = vunpack.c.l.b16 %v6336
    %v6360 = vpack.c.b16 %v6357, %v6356
    %v6361 = vpack.c.b16 %v6359, %v6358
    %v6365 = vsel %vm714, %v6337, 0
    %v6368 = vsel %vm714, %v6338, 0
    %v6371 = vsel %vm714, %v6339, 0
    %v6374 = vsel %vm714, %v6340, 0
    %v6377 = vsel %vm714, %v6341, 0
    %v6380 = vsel %vm714, %v6342, 0
    %v6383 = vsel %vm714, %v6343, 0
    %v6386 = vsel %vm714, %v6344, 0
    %6388 = vmatprep.subr.bf16.mxu0 0
    %6389 = vmatpush1.bf16.msra.mxu0 %v6360
    %6390 = vmatprep.subr.bf16.mxu0 0
    %6391 = vmatpush1.bf16.msra.mxu0 %v6361
    %6392 = vmatprep.subr.bf16.mxu0 0
    %6393 = vmatpush1.bf16.msra.mxu0 0
    %6394 = vmatprep.subr.bf16.mxu0 0
    %6395 = vmatpush1.bf16.msra.mxu0 0
    %6396 = vmatprep.subr.bf16.mxu0 0
    %6397 = vmatpush1.bf16.msra.mxu0 0
    %6398 = vmatprep.subr.bf16.mxu0 0
    %6399 = vmatpush1.bf16.msra.mxu0 0
    %6400 = vmatprep.subr.bf16.mxu0 0
    %6401 = vmatpush1.bf16.msra.mxu0 0
    %6402 = vmatprep.subr.bf16.mxu0 0
    %6403 = vmatpush1.bf16.msra.mxu0 0
    %6404 = vmatprep.subr.bf16.mxu0 0
    %6405 = vmatpush1.bf16.msra.mxu0 0
    %6406 = vmatprep.subr.bf16.mxu0 0
    %6407 = vmatpush1.bf16.msra.mxu0 0
    %6408 = vmatprep.subr.bf16.mxu0 0
    %6409 = vmatpush1.bf16.msra.mxu0 0
    %6410 = vmatprep.subr.bf16.mxu0 0
    %6411 = vmatpush1.bf16.msra.mxu0 0
    %6412 = vmatprep.subr.bf16.mxu0 0
    %6413 = vmatpush1.bf16.msra.mxu0 0
    %6414 = vmatprep.subr.bf16.mxu0 0
    %6415 = vmatpush1.bf16.msra.mxu0 0
    %6416 = vmatprep.subr.bf16.mxu0 0
    %6417 = vmatpush1.bf16.msra.mxu0 0
    %6418 = vmatprep.subr.bf16.mxu0 0
    %6419 = vmatpush1.bf16.msra.mxu0 0
    %6420 = vmatprep.mubr.bf16.mxu0 0
    %6421 = vmatmul.mubr.bf16.gmra.mrb[0].mxu0 %v6365
    %v6422 = vpop.f32.mrb[0].mxu0
    %v6423 = vadd.f32 %v6350, %v6422
    %v6424 = vpop.f32.mrb[0].mxu0
    %v6425 = vpop.f32.mrb[0].mxu0
    %v6426 = vadd.f32 %v6350, %v6425
    %v6427 = vpop.f32.mrb[0].mxu0
    %6428 = vmatprep.mubr.bf16.mxu0 0
    %6429 = vmatmul.mubr.bf16.gmra.mrb[0].mxu0 %v6368
    %v6430 = vpop.f32.mrb[0].mxu0
    %v6431 = vadd.f32 %v6350, %v6430
    %v6432 = vpop.f32.mrb[0].mxu0
    %v6433 = vpop.f32.mrb[0].mxu0
    %v6434 = vadd.f32 %v6350, %v6433
    %v6435 = vpop.f32.mrb[0].mxu0
    %6436 = vmatprep.mubr.bf16.mxu0 0
    %6437 = vmatmul.mubr.bf16.gmra.mrb[0].mxu0 %v6371
    %v6438 = vpop.f32.mrb[0].mxu0
    %v6439 = vadd.f32 %v6350, %v6438
    %v6440 = vpop.f32.mrb[0].mxu0
    %v6441 = vpop.f32.mrb[0].mxu0
    %v6442 = vadd.f32 %v6350, %v6441
    %v6443 = vpop.f32.mrb[0].mxu0
    %6444 = vmatprep.mubr.bf16.mxu0 0
    %6445 = vmatmul.mubr.bf16.gmra.mrb[0].mxu0 %v6374
    %v6446 = vpop.f32.mrb[0].mxu0
    %v6447 = vadd.f32 %v6350, %v6446
    %v6448 = vpop.f32.mrb[0].mxu0
    %v6449 = vpop.f32.mrb[0].mxu0
    %v6450 = vadd.f32 %v6350, %v6449
    %v6451 = vpop.f32.mrb[0].mxu0
    %6452 = vmatprep.mubr.bf16.mxu0 0
    %6453 = vmatmul.mubr.bf16.gmra.mrb[0].mxu0 %v6377
    %v6454 = vpop.f32.mrb[0].mxu0
    %v6455 = vadd.f32 %v6350, %v6454
    %v6456 = vpop.f32.mrb[0].mxu0
    %v6457 = vpop.f32.mrb[0].mxu0
    %v6458 = vadd.f32 %v6350, %v6457
    %v6459 = vpop.f32.mrb[0].mxu0
    %6460 = vmatprep.mubr.bf16.mxu0 0
    %6461 = vmatmul.mubr.bf16.gmra.mrb[0].mxu0 %v6380
    %v6462 = vpop.f32.mrb[0].mxu0
    %v6463 = vadd.f32 %v6350, %v6462
    %v6464 = vpop.f32.mrb[0].mxu0
    %v6465 = vpop.f32.mrb[0].mxu0
    %v6466 = vadd.f32 %v6350, %v6465
    %v6467 = vpop.f32.mrb[0].mxu0
    %6468 = vmatprep.mubr.bf16.mxu0 0
    %6469 = vmatmul.mubr.bf16.gmra.mrb[0].mxu0 %v6383
    %v6470 = vpop.f32.mrb[0].mxu0
    %v6471 = vadd.f32 %v6350, %v6470
    %v6472 = vpop.f32.mrb[0].mxu0
    %v6473 = vpop.f32.mrb[0].mxu0
    %v6474 = vadd.f32 %v6350, %v6473
    %v6475 = vpop.f32.mrb[0].mxu0
    %6476 = vmatprep.mubr.bf16.mxu0 0
    %6477 = vmatmul.mubr.bf16.gmra.mrb[0].mxu0 %v6386
    %v6478 = vpop.f32.mrb[0].mxu0
    %v6479 = vadd.f32 %v6350, %v6478
    %v6480 = vpop.f32.mrb[0].mxu0
    %v6481 = vpop.f32.mrb[0].mxu0
    %v6482 = vadd.f32 %v6350, %v6481
    %v6483 = vpop.f32.mrb[0].mxu0
    %6484 = vdwg.mxu0
    %6486 = vrot.lane.b32.xlu0 %v4637, 64
    %v6487 = vpop.permute.xlu0 %6486
    %v6489 = vmul.f32 %v6423, %v6487
    %v6490 = vmul.f32 %v6426, %v6487
    %v6491 = vmul.f32 %v6431, %v6487
    %v6492 = vmul.f32 %v6434, %v6487
    %v6493 = vmul.f32 %v6439, %v6487
    %v6494 = vmul.f32 %v6442, %v6487
    %v6495 = vmul.f32 %v6447, %v6487
    %v6496 = vmul.f32 %v6450, %v6487
    %6498 = vrot.lane.b32.xlu0 %v4665, 64
    %v6499 = vpop.permute.xlu0 %6498
    %v6501 = vmul.f32 %v6455, %v6499
    %v6502 = vmul.f32 %v6458, %v6499
    %v6503 = vmul.f32 %v6463, %v6499
    %v6504 = vmul.f32 %v6466, %v6499
    %v6505 = vmul.f32 %v6471, %v6499
    %v6506 = vmul.f32 %v6474, %v6499
    %v6507 = vmul.f32 %v6479, %v6499
    %v6508 = vmul.f32 %v6482, %v6499
    %v6509 = vadd.f32 %v4049, %v6489
    %v6510 = vadd.f32 %v4050, %v6490
    %v6511 = vadd.f32 %v4051, %v6491
    %v6512 = vadd.f32 %v4052, %v6492
    %v6513 = vadd.f32 %v4053, %v6493
    %v6514 = vadd.f32 %v4054, %v6494
    %v6515 = vadd.f32 %v4055, %v6495
    %v6516 = vadd.f32 %v4056, %v6496
    %v6517 = vadd.f32 %v4057, %v6501
    %v6518 = vadd.f32 %v4058, %v6502
    %v6519 = vadd.f32 %v4059, %v6503
    %v6520 = vadd.f32 %v4060, %v6504
    %v6521 = vadd.f32 %v4061, %v6505
    %v6522 = vadd.f32 %v4062, %v6506
    %v6523 = vadd.f32 %v4063, %v6507
    %v6524 = vadd.f32 %v4064, %v6508
    %v6525 = vsel %vm714, %v6509, 0.0
    %6526 = vadd.xlane.f32.xlu0 %v6525
    %v6527 = vpop.xlane.xlu0 %6526
    %v6528 = vsel %vm714, %v6510, 0.0
    %6529 = vadd.xlane.f32.xlu0 %v6528
    %v6530 = vpop.xlane.xlu0 %6529
    %v6531 = vsel %vm714, %v6511, 0.0
    %6532 = vadd.xlane.f32.xlu0 %v6531
    %v6533 = vpop.xlane.xlu0 %6532
    %v6534 = vsel %vm714, %v6512, 0.0
    %6535 = vadd.xlane.f32.xlu0 %v6534
    %v6536 = vpop.xlane.xlu0 %6535
    %v6537 = vsel %vm714, %v6513, 0.0
    %6538 = vadd.xlane.f32.xlu0 %v6537
    %v6539 = vpop.xlane.xlu0 %6538
    %v6540 = vsel %vm714, %v6514, 0.0
    %6541 = vadd.xlane.f32.xlu0 %v6540
    %v6542 = vpop.xlane.xlu0 %6541
    %v6543 = vsel %vm714, %v6515, 0.0
    %6544 = vadd.xlane.f32.xlu0 %v6543
    %v6545 = vpop.xlane.xlu0 %6544
    %v6546 = vsel %vm714, %v6516, 0.0
    %6547 = vadd.xlane.f32.xlu0 %v6546
    %v6548 = vpop.xlane.xlu0 %6547
    %v6549 = vsel %vm714, %v6517, 0.0
    %6550 = vadd.xlane.f32.xlu0 %v6549
    %v6551 = vpop.xlane.xlu0 %6550
    %v6552 = vsel %vm714, %v6518, 0.0
    %6553 = vadd.xlane.f32.xlu0 %v6552
    %v6554 = vpop.xlane.xlu0 %6553
    %v6555 = vsel %vm714, %v6519, 0.0
    %6556 = vadd.xlane.f32.xlu0 %v6555
    %v6557 = vpop.xlane.xlu0 %6556
    %v6558 = vsel %vm714, %v6520, 0.0
    %6559 = vadd.xlane.f32.xlu0 %v6558
    %v6560 = vpop.xlane.xlu0 %6559
    %v6561 = vsel %vm714, %v6521, 0.0
    %6562 = vadd.xlane.f32.xlu0 %v6561
    %v6563 = vpop.xlane.xlu0 %6562
    %v6564 = vsel %vm714, %v6522, 0.0
    %6565 = vadd.xlane.f32.xlu0 %v6564
    %v6566 = vpop.xlane.xlu0 %6565
    %v6567 = vsel %vm714, %v6523, 0.0
    %6568 = vadd.xlane.f32.xlu0 %v6567
    %v6569 = vpop.xlane.xlu0 %6568
    %v6570 = vsel %vm714, %v6524, 0.0
    %6571 = vadd.xlane.f32.xlu0 %v6570
    %v6572 = vpop.xlane.xlu0 %6571
    %v6573 = vmul.f32 %v6527, %v1204
    %v6574 = vmul.f32 %v6530, %v1204
    %v6575 = vmul.f32 %v6533, %v1204
    %v6576 = vmul.f32 %v6536, %v1204
    %v6577 = vmul.f32 %v6539, %v1204
    %v6578 = vmul.f32 %v6542, %v1204
    %v6579 = vmul.f32 %v6545, %v1204
    %v6580 = vmul.f32 %v6548, %v1204
    %v6581 = vmul.f32 %v6551, %v1204
    %v6582 = vmul.f32 %v6554, %v1204
    %v6583 = vmul.f32 %v6557, %v1204
    %v6584 = vmul.f32 %v6560, %v1204
    %v6585 = vmul.f32 %v6563, %v1204
    %v6586 = vmul.f32 %v6566, %v1204
    %v6587 = vmul.f32 %v6569, %v1204
    %v6588 = vmul.f32 %v6572, %v1204
    %v6589 = vsub.f32 %v6509, %v6573
    %v6590 = vsub.f32 %v6510, %v6574
    %v6591 = vsub.f32 %v6511, %v6575
    %v6592 = vsub.f32 %v6512, %v6576
    %v6593 = vsub.f32 %v6513, %v6577
    %v6594 = vsub.f32 %v6514, %v6578
    %v6595 = vsub.f32 %v6515, %v6579
    %v6596 = vsub.f32 %v6516, %v6580
    %v6597 = vsub.f32 %v6517, %v6581
    %v6598 = vsub.f32 %v6518, %v6582
    %v6599 = vsub.f32 %v6519, %v6583
    %v6600 = vsub.f32 %v6520, %v6584
    %v6601 = vsub.f32 %v6521, %v6585
    %v6602 = vsub.f32 %v6522, %v6586
    %v6603 = vsub.f32 %v6523, %v6587
    %v6604 = vsub.f32 %v6524, %v6588
    %v6605 = vmul.f32 %v6589, %v6589
    %v6606 = vmul.f32 %v6590, %v6590
    %v6607 = vmul.f32 %v6591, %v6591
    %v6608 = vmul.f32 %v6592, %v6592
    %v6609 = vmul.f32 %v6593, %v6593
    %v6610 = vmul.f32 %v6594, %v6594
    %v6611 = vmul.f32 %v6595, %v6595
    %v6612 = vmul.f32 %v6596, %v6596
    %v6613 = vmul.f32 %v6597, %v6597
    %v6614 = vmul.f32 %v6598, %v6598
    %v6615 = vmul.f32 %v6599, %v6599
    %v6616 = vmul.f32 %v6600, %v6600
    %v6617 = vmul.f32 %v6601, %v6601
    %v6618 = vmul.f32 %v6602, %v6602
    %v6619 = vmul.f32 %v6603, %v6603
    %v6620 = vmul.f32 %v6604, %v6604
    %v6621 = vsel %vm714, %v6605, 0.0
    %6622 = vadd.xlane.f32.xlu0 %v6621
    %v6623 = vpop.xlane.xlu0 %6622
    %v6624 = vsel %vm714, %v6606, 0.0
    %6625 = vadd.xlane.f32.xlu0 %v6624
    %v6626 = vpop.xlane.xlu0 %6625
    %v6627 = vsel %vm714, %v6607, 0.0
    %6628 = vadd.xlane.f32.xlu0 %v6627
    %v6629 = vpop.xlane.xlu0 %6628
    %v6630 = vsel %vm714, %v6608, 0.0
    %6631 = vadd.xlane.f32.xlu0 %v6630
    %v6632 = vpop.xlane.xlu0 %6631
    %v6633 = vsel %vm714, %v6609, 0.0
    %6634 = vadd.xlane.f32.xlu0 %v6633
    %v6635 = vpop.xlane.xlu0 %6634
    %v6636 = vsel %vm714, %v6610, 0.0
    %6637 = vadd.xlane.f32.xlu0 %v6636
    %v6638 = vpop.xlane.xlu0 %6637
    %v6639 = vsel %vm714, %v6611, 0.0
    %6640 = vadd.xlane.f32.xlu0 %v6639
    %v6641 = vpop.xlane.xlu0 %6640
    %v6642 = vsel %vm714, %v6612, 0.0
    %6643 = vadd.xlane.f32.xlu0 %v6642
    %v6644 = vpop.xlane.xlu0 %6643
    %v6645 = vsel %vm714, %v6613, 0.0
    %6646 = vadd.xlane.f32.xlu0 %v6645
    %v6647 = vpop.xlane.xlu0 %6646
    %v6648 = vsel %vm714, %v6614, 0.0
    %6649 = vadd.xlane.f32.xlu0 %v6648
    %v6650 = vpop.xlane.xlu0 %6649
    %v6651 = vsel %vm714, %v6615, 0.0
    %6652 = vadd.xlane.f32.xlu0 %v6651
    %v6653 = vpop.xlane.xlu0 %6652
    %v6654 = vsel %vm714, %v6616, 0.0
    %6655 = vadd.xlane.f32.xlu0 %v6654
    %v6656 = vpop.xlane.xlu0 %6655
    %v6657 = vsel %vm714, %v6617, 0.0
    %6658 = vadd.xlane.f32.xlu0 %v6657
    %v6659 = vpop.xlane.xlu0 %6658
    %v6660 = vsel %vm714, %v6618, 0.0
    %6661 = vadd.xlane.f32.xlu0 %v6660
    %v6662 = vpop.xlane.xlu0 %6661
    %v6663 = vsel %vm714, %v6619, 0.0
    %6664 = vadd.xlane.f32.xlu0 %v6663
    %v6665 = vpop.xlane.xlu0 %6664
    %v6666 = vsel %vm714, %v6620, 0.0
    %6667 = vadd.xlane.f32.xlu0 %v6666
    %v6668 = vpop.xlane.xlu0 %6667
    %v6669 = vmul.f32 %v6623, %v1204
    %v6670 = vmul.f32 %v6626, %v1204
    %v6671 = vmul.f32 %v6629, %v1204
    %v6672 = vmul.f32 %v6632, %v1204
    %v6673 = vmul.f32 %v6635, %v1204
    %v6674 = vmul.f32 %v6638, %v1204
    %v6675 = vmul.f32 %v6641, %v1204
    %v6676 = vmul.f32 %v6644, %v1204
    %v6677 = vmul.f32 %v6647, %v1204
    %v6678 = vmul.f32 %v6650, %v1204
    %v6679 = vmul.f32 %v6653, %v1204
    %v6680 = vmul.f32 %v6656, %v1204
    %v6681 = vmul.f32 %v6659, %v1204
    %v6682 = vmul.f32 %v6662, %v1204
    %v6683 = vmul.f32 %v6665, %v1204
    %v6684 = vmul.f32 %v6668, %v1204
    %v6685 = vadd.f32 %v6669, 1e-06
    %v6686 = vadd.f32 %v6670, 1e-06
    %v6687 = vadd.f32 %v6671, 1e-06
    %v6688 = vadd.f32 %v6672, 1e-06
    %v6689 = vadd.f32 %v6673, 1e-06
    %v6690 = vadd.f32 %v6674, 1e-06
    %v6691 = vadd.f32 %v6675, 1e-06
    %v6692 = vadd.f32 %v6676, 1e-06
    %v6693 = vadd.f32 %v6677, 1e-06
    %v6694 = vadd.f32 %v6678, 1e-06
    %v6695 = vadd.f32 %v6679, 1e-06
    %v6696 = vadd.f32 %v6680, 1e-06
    %v6697 = vadd.f32 %v6681, 1e-06
    %v6698 = vadd.f32 %v6682, 1e-06
    %v6699 = vadd.f32 %v6683, 1e-06
    %v6700 = vadd.f32 %v6684, 1e-06
    %v6701 = vrsqrt.pop %v6685
    %v6702 = vrsqrt.pop %v6686
    %v6703 = vrsqrt.pop %v6687
    %v6704 = vrsqrt.pop %v6688
    %v6705 = vrsqrt.pop %v6689
    %v6706 = vrsqrt.pop %v6690
    %v6707 = vrsqrt.pop %v6691
    %v6708 = vrsqrt.pop %v6692
    %v6709 = vrsqrt.pop %v6693
    %v6710 = vrsqrt.pop %v6694
    %v6711 = vrsqrt.pop %v6695
    %v6712 = vrsqrt.pop %v6696
    %v6713 = vrsqrt.pop %v6697
    %v6714 = vrsqrt.pop %v6698
    %v6715 = vrsqrt.pop %v6699
    %v6716 = vrsqrt.pop %v6700
    %v6717 = vmul.f32 %v6589, %v6701
    %v6718 = vmul.f32 %v6590, %v6702
    %v6719 = vmul.f32 %v6591, %v6703
    %v6720 = vmul.f32 %v6592, %v6704
    %v6721 = vmul.f32 %v6593, %v6705
    %v6722 = vmul.f32 %v6594, %v6706
    %v6723 = vmul.f32 %v6595, %v6707
    %v6724 = vmul.f32 %v6596, %v6708
    %v6725 = vmul.f32 %v6597, %v6709
    %v6726 = vmul.f32 %v6598, %v6710
    %v6727 = vmul.f32 %v6599, %v6711
    %v6728 = vmul.f32 %v6600, %v6712
    %v6729 = vmul.f32 %v6601, %v6713
    %v6730 = vmul.f32 %v6602, %v6714
    %v6731 = vmul.f32 %v6603, %v6715
    %v6732 = vmul.f32 %v6604, %v6716
    %v6733 = vmul.f32 %v6717, %v4704
    %v6734 = vmul.f32 %v6718, %v4704
    %v6735 = vmul.f32 %v6719, %v4704
    %v6736 = vmul.f32 %v6720, %v4704
    %v6737 = vmul.f32 %v6721, %v4704
    %v6738 = vmul.f32 %v6722, %v4704
    %v6739 = vmul.f32 %v6723, %v4704
    %v6740 = vmul.f32 %v6724, %v4704
    %6741 = vrot.lane.b32.xlu0 %v4637, 32
    %v6742 = vpop.permute.xlu0 %6741
    %v6744 = vadd.f32 %v6733, %v6742
    %v6745 = vadd.f32 %v6734, %v6742
    %v6746 = vadd.f32 %v6735, %v6742
    %v6747 = vadd.f32 %v6736, %v6742
    %v6748 = vadd.f32 %v6737, %v6742
    %v6749 = vadd.f32 %v6738, %v6742
    %v6750 = vadd.f32 %v6739, %v6742
    %v6751 = vadd.f32 %v6740, %v6742
    %v6752 = vmul.f32 %v6725, %v4722
    %v6753 = vmul.f32 %v6726, %v4722
    %v6754 = vmul.f32 %v6727, %v4722
    %v6755 = vmul.f32 %v6728, %v4722
    %v6756 = vmul.f32 %v6729, %v4722
    %v6757 = vmul.f32 %v6730, %v4722
    %v6758 = vmul.f32 %v6731, %v4722
    %v6759 = vmul.f32 %v6732, %v4722
    %6760 = vrot.lane.b32.xlu0 %v4665, 32
    %v6761 = vpop.permute.xlu0 %6760
    %v6763 = vadd.f32 %v6752, %v6761
    %v6764 = vadd.f32 %v6753, %v6761
    %v6765 = vadd.f32 %v6754, %v6761
    %v6766 = vadd.f32 %v6755, %v6761
    %v6767 = vadd.f32 %v6756, %v6761
    %v6768 = vadd.f32 %v6757, %v6761
    %v6769 = vadd.f32 %v6758, %v6761
    %v6770 = vadd.f32 %v6759, %v6761
    %v6771 = vld [vmem:[%s83] sm:$0xf]
    %v6772 = vld [vmem:[%s83 + $0x4] sm:$0xf]
    %v6773 = vld [vmem:[%s83 + $0x8] sm:$0xf]
    %v6774 = vld [vmem:[%s83 + $0xc] sm:$0xf]
    %v6775 = vpack.c.bf16 %v6745, %v6744
    %v6776 = vpack.c.bf16 %v6747, %v6746
    %v6777 = vpack.c.bf16 %v6749, %v6748
    %v6778 = vpack.c.bf16 %v6751, %v6750
    %v6779 = vpack.c.bf16 %v6764, %v6763
    %v6780 = vpack.c.bf16 %v6766, %v6765
    %v6781 = vpack.c.bf16 %v6768, %v6767
    %v6782 = vpack.c.bf16 %v6770, %v6769
    %v6783 = vld [vmem:[#allocation4] sm:$0x1]
    %v6785 = vlaneseq
    %v6786 = vshrl.u32 %v6785, 7
    %v6787 = vsub.s32 0, %v6786
    %v6788 = vrot.slane %v6783, %v6787
    %v6794 = vunpack.c.l.b16 %v6771
    %v6795 = vunpack.c.l.b16 %v6772
    %v6796 = vunpack.c.l.b16 %v6773
    %v6797 = vunpack.c.l.b16 %v6774
    %v6798 = vpack.c.b16 %v6795, %v6794
    %v6799 = vpack.c.b16 %v6797, %v6796
    %v6803 = vsel %vm714, %v6775, 0
    %v6806 = vsel %vm714, %v6776, 0
    %v6809 = vsel %vm714, %v6777, 0
    %v6812 = vsel %vm714, %v6778, 0
    %v6815 = vsel %vm714, %v6779, 0
    %v6818 = vsel %vm714, %v6780, 0
    %v6821 = vsel %vm714, %v6781, 0
    %v6824 = vsel %vm714, %v6782, 0
    %6826 = vmatprep.subr.bf16.mxu0 0
    %6827 = vmatpush1.bf16.msra.mxu0 %v6798
    %6828 = vmatprep.subr.bf16.mxu0 0
    %6829 = vmatpush1.bf16.msra.mxu0 %v6799
    %6830 = vmatprep.subr.bf16.mxu0 0
    %6831 = vmatpush1.bf16.msra.mxu0 0
    %6832 = vmatprep.subr.bf16.mxu0 0
    %6833 = vmatpush1.bf16.msra.mxu0 0
    %6834 = vmatprep.subr.bf16.mxu0 0
    %6835 = vmatpush1.bf16.msra.mxu0 0
    %6836 = vmatprep.subr.bf16.mxu0 0
    %6837 = vmatpush1.bf16.msra.mxu0 0
    %6838 = vmatprep.subr.bf16.mxu0 0
    %6839 = vmatpush1.bf16.msra.mxu0 0
    %6840 = vmatprep.subr.bf16.mxu0 0
    %6841 = vmatpush1.bf16.msra.mxu0 0
    %6842 = vmatprep.subr.bf16.mxu0 0
    %6843 = vmatpush1.bf16.msra.mxu0 0
    %6844 = vmatprep.subr.bf16.mxu0 0
    %6845 = vmatpush1.bf16.msra.mxu0 0
    %6846 = vmatprep.subr.bf16.mxu0 0
    %6847 = vmatpush1.bf16.msra.mxu0 0
    %6848 = vmatprep.subr.bf16.mxu0 0
    %6849 = vmatpush1.bf16.msra.mxu0 0
    %6850 = vmatprep.subr.bf16.mxu0 0
    %6851 = vmatpush1.bf16.msra.mxu0 0
    %6852 = vmatprep.subr.bf16.mxu0 0
    %6853 = vmatpush1.bf16.msra.mxu0 0
    %6854 = vmatprep.subr.bf16.mxu0 0
    %6855 = vmatpush1.bf16.msra.mxu0 0
    %6856 = vmatprep.subr.bf16.mxu0 0
    %6857 = vmatpush1.bf16.msra.mxu0 0
    %6858 = vmatprep.mubr.bf16.mxu0 0
    %6859 = vmatmul.mubr.bf16.gmra.mrb[0].mxu0 %v6803
    %v6860 = vpop.f32.mrb[0].mxu0
    %v6861 = vadd.f32 %v6788, %v6860
    %v6862 = vpop.f32.mrb[0].mxu0
    %v6863 = vpop.f32.mrb[0].mxu0
    %v6864 = vadd.f32 %v6788, %v6863
    %v6865 = vpop.f32.mrb[0].mxu0
    %6866 = vmatprep.mubr.bf16.mxu0 0
    %6867 = vmatmul.mubr.bf16.gmra.mrb[0].mxu0 %v6806
    %v6868 = vpop.f32.mrb[0].mxu0
    %v6869 = vadd.f32 %v6788, %v6868
    %v6870 = vpop.f32.mrb[0].mxu0
    %v6871 = vpop.f32.mrb[0].mxu0
    %v6872 = vadd.f32 %v6788, %v6871
    %v6873 = vpop.f32.mrb[0].mxu0
    %6874 = vmatprep.mubr.bf16.mxu0 0
    %6875 = vmatmul.mubr.bf16.gmra.mrb[0].mxu0 %v6809
    %v6876 = vpop.f32.mrb[0].mxu0
    %v6877 = vadd.f32 %v6788, %v6876
    %v6878 = vpop.f32.mrb[0].mxu0
    %v6879 = vpop.f32.mrb[0].mxu0
    %v6880 = vadd.f32 %v6788, %v6879
    %v6881 = vpop.f32.mrb[0].mxu0
    %6882 = vmatprep.mubr.bf16.mxu0 0
    %6883 = vmatmul.mubr.bf16.gmra.mrb[0].mxu0 %v6812
    %v6884 = vpop.f32.mrb[0].mxu0
    %v6885 = vadd.f32 %v6788, %v6884
    %v6886 = vpop.f32.mrb[0].mxu0
    %v6887 = vpop.f32.mrb[0].mxu0
    %v6888 = vadd.f32 %v6788, %v6887
    %v6889 = vpop.f32.mrb[0].mxu0
    %6890 = vmatprep.mubr.bf16.mxu0 0
    %6891 = vmatmul.mubr.bf16.gmra.mrb[0].mxu0 %v6815
    %v6892 = vpop.f32.mrb[0].mxu0
    %v6893 = vadd.f32 %v6788, %v6892
    %v6894 = vpop.f32.mrb[0].mxu0
    %v6895 = vpop.f32.mrb[0].mxu0
    %v6896 = vadd.f32 %v6788, %v6895
    %v6897 = vpop.f32.mrb[0].mxu0
    %6898 = vmatprep.mubr.bf16.mxu0 0
    %6899 = vmatmul.mubr.bf16.gmra.mrb[0].mxu0 %v6818
    %v6900 = vpop.f32.mrb[0].mxu0
    %v6901 = vadd.f32 %v6788, %v6900
    %v6902 = vpop.f32.mrb[0].mxu0
    %v6903 = vpop.f32.mrb[0].mxu0
    %v6904 = vadd.f32 %v6788, %v6903
    %v6905 = vpop.f32.mrb[0].mxu0
    %6906 = vmatprep.mubr.bf16.mxu0 0
    %6907 = vmatmul.mubr.bf16.gmra.mrb[0].mxu0 %v6821
    %v6908 = vpop.f32.mrb[0].mxu0
    %v6909 = vadd.f32 %v6788, %v6908
    %v6910 = vpop.f32.mrb[0].mxu0
    %v6911 = vpop.f32.mrb[0].mxu0
    %v6912 = vadd.f32 %v6788, %v6911
    %v6913 = vpop.f32.mrb[0].mxu0
    %6914 = vmatprep.mubr.bf16.mxu0 0
    %6915 = vmatmul.mubr.bf16.gmra.mrb[0].mxu0 %v6824
    %v6916 = vpop.f32.mrb[0].mxu0
    %v6917 = vadd.f32 %v6788, %v6916
    %v6918 = vpop.f32.mrb[0].mxu0
    %v6919 = vpop.f32.mrb[0].mxu0
    %v6920 = vadd.f32 %v6788, %v6919
    %v6921 = vpop.f32.mrb[0].mxu0
    %6922 = vdwg.mxu0
    %v6923 = vmul.f32 %v6861, 0.5
    %v6924 = vmul.f32 %v6864, 0.5
    %v6925 = vmul.f32 %v6869, 0.5
    %v6926 = vmul.f32 %v6872, 0.5
    %v6927 = vmul.f32 %v6877, 0.5
    %v6928 = vmul.f32 %v6880, 0.5
    %v6929 = vmul.f32 %v6885, 0.5
    %v6930 = vmul.f32 %v6888, 0.5
    %v6931 = vmul.f32 %v6893, 0.5
    %v6932 = vmul.f32 %v6896, 0.5
    %v6933 = vmul.f32 %v6901, 0.5
    %v6934 = vmul.f32 %v6904, 0.5
    %v6935 = vmul.f32 %v6909, 0.5
    %v6936 = vmul.f32 %v6912, 0.5
    %v6937 = vmul.f32 %v6917, 0.5
    %v6938 = vmul.f32 %v6920, 0.5
    %v6939 = vmul.f32 %v6861, 0.044715
    %v6940 = vmul.f32 %v6864, 0.044715
    %v6941 = vmul.f32 %v6869, 0.044715
    %v6942 = vmul.f32 %v6872, 0.044715
    %v6943 = vmul.f32 %v6877, 0.044715
    %v6944 = vmul.f32 %v6880, 0.044715
    %v6945 = vmul.f32 %v6885, 0.044715
    %v6946 = vmul.f32 %v6888, 0.044715
    %v6947 = vmul.f32 %v6893, 0.044715
    %v6948 = vmul.f32 %v6896, 0.044715
    %v6949 = vmul.f32 %v6901, 0.044715
    %v6950 = vmul.f32 %v6904, 0.044715
    %v6951 = vmul.f32 %v6909, 0.044715
    %v6952 = vmul.f32 %v6912, 0.044715
    %v6953 = vmul.f32 %v6917, 0.044715
    %v6954 = vmul.f32 %v6920, 0.044715
    %v6955 = vmul.f32 %v6939, %v6861
    %v6956 = vmul.f32 %v6940, %v6864
    %v6957 = vmul.f32 %v6941, %v6869
    %v6958 = vmul.f32 %v6942, %v6872
    %v6959 = vmul.f32 %v6943, %v6877
    %v6960 = vmul.f32 %v6944, %v6880
    %v6961 = vmul.f32 %v6945, %v6885
    %v6962 = vmul.f32 %v6946, %v6888
    %v6963 = vmul.f32 %v6947, %v6893
    %v6964 = vmul.f32 %v6948, %v6896
    %v6965 = vmul.f32 %v6949, %v6901
    %v6966 = vmul.f32 %v6950, %v6904
    %v6967 = vmul.f32 %v6951, %v6909
    %v6968 = vmul.f32 %v6952, %v6912
    %v6969 = vmul.f32 %v6953, %v6917
    %v6970 = vmul.f32 %v6954, %v6920
    %v6971 = vmul.f32 %v6955, %v6861
    %v6972 = vmul.f32 %v6956, %v6864
    %v6973 = vmul.f32 %v6957, %v6869
    %v6974 = vmul.f32 %v6958, %v6872
    %v6975 = vmul.f32 %v6959, %v6877
    %v6976 = vmul.f32 %v6960, %v6880
    %v6977 = vmul.f32 %v6961, %v6885
    %v6978 = vmul.f32 %v6962, %v6888
    %v6979 = vmul.f32 %v6963, %v6893
    %v6980 = vmul.f32 %v6964, %v6896
    %v6981 = vmul.f32 %v6965, %v6901
    %v6982 = vmul.f32 %v6966, %v6904
    %v6983 = vmul.f32 %v6967, %v6909
    %v6984 = vmul.f32 %v6968, %v6912
    %v6985 = vmul.f32 %v6969, %v6917
    %v6986 = vmul.f32 %v6970, %v6920
    %v6987 = vadd.f32 %v6861, %v6971
    %v6988 = vadd.f32 %v6864, %v6972
    %v6989 = vadd.f32 %v6869, %v6973
    %v6990 = vadd.f32 %v6872, %v6974
    %v6991 = vadd.f32 %v6877, %v6975
    %v6992 = vadd.f32 %v6880, %v6976
    %v6993 = vadd.f32 %v6885, %v6977
    %v6994 = vadd.f32 %v6888, %v6978
    %v6995 = vadd.f32 %v6893, %v6979
    %v6996 = vadd.f32 %v6896, %v6980
    %v6997 = vadd.f32 %v6901, %v6981
    %v6998 = vadd.f32 %v6904, %v6982
    %v6999 = vadd.f32 %v6909, %v6983
    %v7000 = vadd.f32 %v6912, %v6984
    %v7001 = vadd.f32 %v6917, %v6985
    %v7002 = vadd.f32 %v6920, %v6986
    %v7003 = vmul.f32 %v6987, 0.7978846
    %v7004 = vmul.f32 %v6988, 0.7978846
    %v7005 = vmul.f32 %v6989, 0.7978846
    %v7006 = vmul.f32 %v6990, 0.7978846
    %v7007 = vmul.f32 %v6991, 0.7978846
    %v7008 = vmul.f32 %v6992, 0.7978846
    %v7009 = vmul.f32 %v6993, 0.7978846
    %v7010 = vmul.f32 %v6994, 0.7978846
    %v7011 = vmul.f32 %v6995, 0.7978846
    %v7012 = vmul.f32 %v6996, 0.7978846
    %v7013 = vmul.f32 %v6997, 0.7978846
    %v7014 = vmul.f32 %v6998, 0.7978846
    %v7015 = vmul.f32 %v6999, 0.7978846
    %v7016 = vmul.f32 %v7000, 0.7978846
    %v7017 = vmul.f32 %v7001, 0.7978846
    %v7018 = vmul.f32 %v7002, 0.7978846
    %v7019 = vtanh.pop %v7003
    %v7020 = vtanh.pop %v7004
    %v7021 = vtanh.pop %v7005
    %v7022 = vtanh.pop %v7006
    %v7023 = vtanh.pop %v7007
    %v7024 = vtanh.pop %v7008
    %v7025 = vtanh.pop %v7009
    %v7026 = vtanh.pop %v7010
    %v7027 = vtanh.pop %v7011
    %v7028 = vtanh.pop %v7012
    %v7029 = vtanh.pop %v7013
    %v7030 = vtanh.pop %v7014
    %v7031 = vtanh.pop %v7015
    %v7032 = vtanh.pop %v7016
    %v7033 = vtanh.pop %v7017
    %v7034 = vtanh.pop %v7018
    %v7035 = vadd.f32 %v7019, 1.0
    %v7036 = vadd.f32 %v7020, 1.0
    %v7037 = vadd.f32 %v7021, 1.0
    %v7038 = vadd.f32 %v7022, 1.0
    %v7039 = vadd.f32 %v7023, 1.0
    %v7040 = vadd.f32 %v7024, 1.0
    %v7041 = vadd.f32 %v7025, 1.0
    %v7042 = vadd.f32 %v7026, 1.0
    %v7043 = vadd.f32 %v7027, 1.0
    %v7044 = vadd.f32 %v7028, 1.0
    %v7045 = vadd.f32 %v7029, 1.0
    %v7046 = vadd.f32 %v7030, 1.0
    %v7047 = vadd.f32 %v7031, 1.0
    %v7048 = vadd.f32 %v7032, 1.0
    %v7049 = vadd.f32 %v7033, 1.0
    %v7050 = vadd.f32 %v7034, 1.0
    %v7051 = vmul.f32 %v6923, %v7035
    %v7052 = vmul.f32 %v6924, %v7036
    %v7053 = vmul.f32 %v6925, %v7037
    %v7054 = vmul.f32 %v6926, %v7038
    %v7055 = vmul.f32 %v6927, %v7039
    %v7056 = vmul.f32 %v6928, %v7040
    %v7057 = vmul.f32 %v6929, %v7041
    %v7058 = vmul.f32 %v6930, %v7042
    %v7059 = vmul.f32 %v6931, %v7043
    %v7060 = vmul.f32 %v6932, %v7044
    %v7061 = vmul.f32 %v6933, %v7045
    %v7062 = vmul.f32 %v6934, %v7046
    %v7063 = vmul.f32 %v6935, %v7047
    %v7064 = vmul.f32 %v6936, %v7048
    %v7065 = vmul.f32 %v6937, %v7049
    %v7066 = vmul.f32 %v6938, %v7050
    %v7067 = vld [vmem:[%s87] sm:$0xf]
    %v7068 = vld [vmem:[%s87 + $0x4] sm:$0xf]
    %v7069 = vld [vmem:[%s87 + $0x8] sm:$0xf]
    %v7070 = vld [vmem:[%s87 + $0xc] sm:$0xf]
    %v7071 = vld [vmem:[%s87 + $0x10] sm:$0xf]
    %v7072 = vld [vmem:[%s87 + $0x14] sm:$0xf]
    %v7073 = vld [vmem:[%s87 + $0x18] sm:$0xf]
    %v7074 = vld [vmem:[%s87 + $0x1c] sm:$0xf]
    %v7075 = vld [vmem:[%s87 + $0x20] sm:$0xf]
    %v7076 = vld [vmem:[%s87 + $0x24] sm:$0xf]
    %v7077 = vld [vmem:[%s87 + $0x28] sm:$0xf]
    %v7078 = vld [vmem:[%s87 + $0x2c] sm:$0xf]
    %v7079 = vld [vmem:[%s87 + $0x30] sm:$0xf]
    %v7080 = vld [vmem:[%s87 + $0x34] sm:$0xf]
    %v7081 = vld [vmem:[%s87 + $0x38] sm:$0xf]
    %v7082 = vld [vmem:[%s87 + $0x3c] sm:$0xf]
    %v7083 = vpack.c.bf16 %v7052, %v7051
    %v7084 = vpack.c.bf16 %v7054, %v7053
    %v7085 = vpack.c.bf16 %v7056, %v7055
    %v7086 = vpack.c.bf16 %v7058, %v7057
    %v7087 = vpack.c.bf16 %v7060, %v7059
    %v7088 = vpack.c.bf16 %v7062, %v7061
    %v7089 = vpack.c.bf16 %v7064, %v7063
    %v7090 = vpack.c.bf16 %v7066, %v7065
    %v7091 = vld [vmem:[#allocation6] sm:$0x1]
    %v7093 = vlaneseq
    %v7094 = vshrl.u32 %v7093, 7
    %v7095 = vsub.s32 0, %v7094
    %v7096 = vrot.slane %v7091, %v7095
    %v7114 = vunpack.c.l.b16 %v7067
    %v7115 = vunpack.c.l.b16 %v7068
    %v7116 = vunpack.c.l.b16 %v7069
    %v7117 = vunpack.c.l.b16 %v7070
    %v7118 = vunpack.c.l.b16 %v7071
    %v7119 = vunpack.c.l.b16 %v7072
    %v7120 = vunpack.c.l.b16 %v7073
    %v7121 = vunpack.c.l.b16 %v7074
    %v7122 = vunpack.c.l.b16 %v7075
    %v7123 = vunpack.c.l.b16 %v7076
    %v7124 = vunpack.c.l.b16 %v7077
    %v7125 = vunpack.c.l.b16 %v7078
    %v7126 = vunpack.c.l.b16 %v7079
    %v7127 = vunpack.c.l.b16 %v7080
    %v7128 = vunpack.c.l.b16 %v7081
    %v7129 = vunpack.c.l.b16 %v7082
    %v7130 = vpack.c.b16 %v7115, %v7114
    %v7131 = vpack.c.b16 %v7117, %v7116
    %v7132 = vpack.c.b16 %v7119, %v7118
    %v7133 = vpack.c.b16 %v7121, %v7120
    %v7134 = vpack.c.b16 %v7123, %v7122
    %v7135 = vpack.c.b16 %v7125, %v7124
    %v7136 = vpack.c.b16 %v7127, %v7126
    %v7137 = vpack.c.b16 %v7129, %v7128
    %7146 = vmatprep.subr.bf16.mxu0 0
    %7147 = vmatpush1.bf16.msra.mxu0 %v7130
    %7148 = vmatprep.subr.bf16.mxu0 0
    %7149 = vmatpush1.bf16.msra.mxu0 %v7131
    %7150 = vmatprep.subr.bf16.mxu0 0
    %7151 = vmatpush1.bf16.msra.mxu0 %v7132
    %7152 = vmatprep.subr.bf16.mxu0 0
    %7153 = vmatpush1.bf16.msra.mxu0 %v7133
    %7154 = vmatprep.subr.bf16.mxu0 0
    %7155 = vmatpush1.bf16.msra.mxu0 %v7134
    %7156 = vmatprep.subr.bf16.mxu0 0
    %7157 = vmatpush1.bf16.msra.mxu0 %v7135
    %7158 = vmatprep.subr.bf16.mxu0 0
    %7159 = vmatpush1.bf16.msra.mxu0 %v7136
    %7160 = vmatprep.subr.bf16.mxu0 0
    %7161 = vmatpush1.bf16.msra.mxu0 %v7137
    %7162 = vmatprep.subr.bf16.mxu0 0
    %7163 = vmatpush1.bf16.msra.mxu0 0
    %7164 = vmatprep.subr.bf16.mxu0 0
    %7165 = vmatpush1.bf16.msra.mxu0 0
    %7166 = vmatprep.subr.bf16.mxu0 0
    %7167 = vmatpush1.bf16.msra.mxu0 0
    %7168 = vmatprep.subr.bf16.mxu0 0
    %7169 = vmatpush1.bf16.msra.mxu0 0
    %7170 = vmatprep.subr.bf16.mxu0 0
    %7171 = vmatpush1.bf16.msra.mxu0 0
    %7172 = vmatprep.subr.bf16.mxu0 0
    %7173 = vmatpush1.bf16.msra.mxu0 0
    %7174 = vmatprep.subr.bf16.mxu0 0
    %7175 = vmatpush1.bf16.msra.mxu0 0
    %7176 = vmatprep.subr.bf16.mxu0 0
    %7177 = vmatpush1.bf16.msra.mxu0 0
    %7178 = vmatprep.mubr.bf16.mxu0 0
    %7179 = vmatmul.mubr.bf16.gmra.mrb[0].mxu0 %v7083
    %v7180 = vpop.f32.mrb[0].mxu0
    %v7181 = vadd.f32 %v7096, %v7180
    %v7182 = vpop.f32.mrb[0].mxu0
    %v7183 = vpop.f32.mrb[0].mxu0
    %v7184 = vadd.f32 %v7096, %v7183
    %v7185 = vpop.f32.mrb[0].mxu0
    %7186 = vmatprep.mubr.bf16.mxu0 0
    %7187 = vmatmul.mubr.bf16.gmra.mrb[0].mxu0 %v7084
    %v7188 = vpop.f32.mrb[0].mxu0
    %v7189 = vadd.f32 %v7096, %v7188
    %v7190 = vpop.f32.mrb[0].mxu0
    %v7191 = vpop.f32.mrb[0].mxu0
    %v7192 = vadd.f32 %v7096, %v7191
    %v7193 = vpop.f32.mrb[0].mxu0
    %7194 = vmatprep.mubr.bf16.mxu0 0
    %7195 = vmatmul.mubr.bf16.gmra.mrb[0].mxu0 %v7085
    %v7196 = vpop.f32.mrb[0].mxu0
    %v7197 = vadd.f32 %v7096, %v7196
    %v7198 = vpop.f32.mrb[0].mxu0
    %v7199 = vpop.f32.mrb[0].mxu0
    %v7200 = vadd.f32 %v7096, %v7199
    %v7201 = vpop.f32.mrb[0].mxu0
    %7202 = vmatprep.mubr.bf16.mxu0 0
    %7203 = vmatmul.mubr.bf16.gmra.mrb[0].mxu0 %v7086
    %v7204 = vpop.f32.mrb[0].mxu0
    %v7205 = vadd.f32 %v7096, %v7204
    %v7206 = vpop.f32.mrb[0].mxu0
    %v7207 = vpop.f32.mrb[0].mxu0
    %v7208 = vadd.f32 %v7096, %v7207
    %v7209 = vpop.f32.mrb[0].mxu0
    %7210 = vmatprep.mubr.bf16.mxu0 0
    %7211 = vmatmul.mubr.bf16.gmra.mrb[0].mxu0 %v7087
    %v7212 = vpop.f32.mrb[0].mxu0
    %v7213 = vadd.f32 %v7096, %v7212
    %v7214 = vpop.f32.mrb[0].mxu0
    %v7215 = vpop.f32.mrb[0].mxu0
    %v7216 = vadd.f32 %v7096, %v7215
    %v7217 = vpop.f32.mrb[0].mxu0
    %7218 = vmatprep.mubr.bf16.mxu0 0
    %7219 = vmatmul.mubr.bf16.gmra.mrb[0].mxu0 %v7088
    %v7220 = vpop.f32.mrb[0].mxu0
    %v7221 = vadd.f32 %v7096, %v7220
    %v7222 = vpop.f32.mrb[0].mxu0
    %v7223 = vpop.f32.mrb[0].mxu0
    %v7224 = vadd.f32 %v7096, %v7223
    %v7225 = vpop.f32.mrb[0].mxu0
    %7226 = vmatprep.mubr.bf16.mxu0 0
    %7227 = vmatmul.mubr.bf16.gmra.mrb[0].mxu0 %v7089
    %v7228 = vpop.f32.mrb[0].mxu0
    %v7229 = vadd.f32 %v7096, %v7228
    %v7230 = vpop.f32.mrb[0].mxu0
    %v7231 = vpop.f32.mrb[0].mxu0
    %v7232 = vadd.f32 %v7096, %v7231
    %v7233 = vpop.f32.mrb[0].mxu0
    %7234 = vmatprep.mubr.bf16.mxu0 0
    %7235 = vmatmul.mubr.bf16.gmra.mrb[0].mxu0 %v7090
    %v7236 = vpop.f32.mrb[0].mxu0
    %v7237 = vadd.f32 %v7096, %v7236
    %v7238 = vpop.f32.mrb[0].mxu0
    %v7239 = vpop.f32.mrb[0].mxu0
    %v7240 = vadd.f32 %v7096, %v7239
    %v7241 = vpop.f32.mrb[0].mxu0
    %7242 = vdwg.mxu0
    %7243 = vrot.lane.b32.xlu0 %v4713, 96
    %v7244 = vpop.permute.xlu0 %7243
    %v7246 = vmul.f32 %v7181, %v7244
    %v7247 = vmul.f32 %v7184, %v7244
    %v7248 = vmul.f32 %v7189, %v7244
    %v7249 = vmul.f32 %v7192, %v7244
    %v7250 = vmul.f32 %v7197, %v7244
    %v7251 = vmul.f32 %v7200, %v7244
    %v7252 = vmul.f32 %v7205, %v7244
    %v7253 = vmul.f32 %v7208, %v7244
    %7254 = vrot.lane.b32.xlu0 %v4731, 96
    %v7255 = vpop.permute.xlu0 %7254
    %v7257 = vmul.f32 %v7213, %v7255
    %v7258 = vmul.f32 %v7216, %v7255
    %v7259 = vmul.f32 %v7221, %v7255
    %v7260 = vmul.f32 %v7224, %v7255
    %v7261 = vmul.f32 %v7229, %v7255
    %v7262 = vmul.f32 %v7232, %v7255
    %v7263 = vmul.f32 %v7237, %v7255
    %v7264 = vmul.f32 %v7240, %v7255
    %v7265 = vadd.f32 %v6509, %v7246
    %v7266 = vadd.f32 %v6510, %v7247
    %v7267 = vadd.f32 %v6511, %v7248
    %v7268 = vadd.f32 %v6512, %v7249
    %v7269 = vadd.f32 %v6513, %v7250
    %v7270 = vadd.f32 %v6514, %v7251
    %v7271 = vadd.f32 %v6515, %v7252
    %v7272 = vadd.f32 %v6516, %v7253
    %v7273 = vadd.f32 %v6517, %v7257
    %v7274 = vadd.f32 %v6518, %v7258
    %v7275 = vadd.f32 %v6519, %v7259
    %v7276 = vadd.f32 %v6520, %v7260
    %v7277 = vadd.f32 %v6521, %v7261
    %v7278 = vadd.f32 %v6522, %v7262
    %v7279 = vadd.f32 %v6523, %v7263
    %v7280 = vadd.f32 %v6524, %v7264
    %v7281 = vsel %vm714, %v7265, 0.0
    %7282 = vadd.xlane.f32.xlu0 %v7281
    %v7283 = vpop.xlane.xlu0 %7282
    %v7284 = vsel %vm714, %v7266, 0.0
    %7285 = vadd.xlane.f32.xlu0 %v7284
    %v7286 = vpop.xlane.xlu0 %7285
    %v7287 = vsel %vm714, %v7267, 0.0
    %7288 = vadd.xlane.f32.xlu0 %v7287
    %v7289 = vpop.xlane.xlu0 %7288
    %v7290 = vsel %vm714, %v7268, 0.0
    %7291 = vadd.xlane.f32.xlu0 %v7290
    %v7292 = vpop.xlane.xlu0 %7291
    %v7293 = vsel %vm714, %v7269, 0.0
    %7294 = vadd.xlane.f32.xlu0 %v7293
    %v7295 = vpop.xlane.xlu0 %7294
    %v7296 = vsel %vm714, %v7270, 0.0
    %7297 = vadd.xlane.f32.xlu0 %v7296
    %v7298 = vpop.xlane.xlu0 %7297
    %v7299 = vsel %vm714, %v7271, 0.0
    %7300 = vadd.xlane.f32.xlu0 %v7299
    %v7301 = vpop.xlane.xlu0 %7300
    %v7302 = vsel %vm714, %v7272, 0.0
    %7303 = vadd.xlane.f32.xlu0 %v7302
    %v7304 = vpop.xlane.xlu0 %7303
    %v7305 = vsel %vm714, %v7273, 0.0
    %7306 = vadd.xlane.f32.xlu0 %v7305
    %v7307 = vpop.xlane.xlu0 %7306
    %v7308 = vsel %vm714, %v7274, 0.0
    %7309 = vadd.xlane.f32.xlu0 %v7308
    %v7310 = vpop.xlane.xlu0 %7309
    %v7311 = vsel %vm714, %v7275, 0.0
    %7312 = vadd.xlane.f32.xlu0 %v7311
    %v7313 = vpop.xlane.xlu0 %7312
    %v7314 = vsel %vm714, %v7276, 0.0
    %7315 = vadd.xlane.f32.xlu0 %v7314
    %v7316 = vpop.xlane.xlu0 %7315
    %v7317 = vsel %vm714, %v7277, 0.0
    %7318 = vadd.xlane.f32.xlu0 %v7317
    %v7319 = vpop.xlane.xlu0 %7318
    %v7320 = vsel %vm714, %v7278, 0.0
    %7321 = vadd.xlane.f32.xlu0 %v7320
    %v7322 = vpop.xlane.xlu0 %7321
    %v7323 = vsel %vm714, %v7279, 0.0
    %7324 = vadd.xlane.f32.xlu0 %v7323
    %v7325 = vpop.xlane.xlu0 %7324
    %v7326 = vsel %vm714, %v7280, 0.0
    %7327 = vadd.xlane.f32.xlu0 %v7326
    %v7328 = vpop.xlane.xlu0 %7327
    %v7329 = vmul.f32 %v7283, %v1204
    %v7330 = vmul.f32 %v7286, %v1204
    %v7331 = vmul.f32 %v7289, %v1204
    %v7332 = vmul.f32 %v7292, %v1204
    %v7333 = vmul.f32 %v7295, %v1204
    %v7334 = vmul.f32 %v7298, %v1204
    %v7335 = vmul.f32 %v7301, %v1204
    %v7336 = vmul.f32 %v7304, %v1204
    %v7337 = vmul.f32 %v7307, %v1204
    %v7338 = vmul.f32 %v7310, %v1204
    %v7339 = vmul.f32 %v7313, %v1204
    %v7340 = vmul.f32 %v7316, %v1204
    %v7341 = vmul.f32 %v7319, %v1204
    %v7342 = vmul.f32 %v7322, %v1204
    %v7343 = vmul.f32 %v7325, %v1204
    %v7344 = vmul.f32 %v7328, %v1204
    %v7345 = vsub.f32 %v7265, %v7329
    %v7346 = vsub.f32 %v7266, %v7330
    %v7347 = vsub.f32 %v7267, %v7331
    %v7348 = vsub.f32 %v7268, %v7332
    %v7349 = vsub.f32 %v7269, %v7333
    %v7350 = vsub.f32 %v7270, %v7334
    %v7351 = vsub.f32 %v7271, %v7335
    %v7352 = vsub.f32 %v7272, %v7336
    %v7353 = vsub.f32 %v7273, %v7337
    %v7354 = vsub.f32 %v7274, %v7338
    %v7355 = vsub.f32 %v7275, %v7339
    %v7356 = vsub.f32 %v7276, %v7340
    %v7357 = vsub.f32 %v7277, %v7341
    %v7358 = vsub.f32 %v7278, %v7342
    %v7359 = vsub.f32 %v7279, %v7343
    %v7360 = vsub.f32 %v7280, %v7344
    %v7361 = vmul.f32 %v7345, %v7345
    %v7362 = vmul.f32 %v7346, %v7346
    %v7363 = vmul.f32 %v7347, %v7347
    %v7364 = vmul.f32 %v7348, %v7348
    %v7365 = vmul.f32 %v7349, %v7349
    %v7366 = vmul.f32 %v7350, %v7350
    %v7367 = vmul.f32 %v7351, %v7351
    %v7368 = vmul.f32 %v7352, %v7352
    %v7369 = vmul.f32 %v7353, %v7353
    %v7370 = vmul.f32 %v7354, %v7354
    %v7371 = vmul.f32 %v7355, %v7355
    %v7372 = vmul.f32 %v7356, %v7356
    %v7373 = vmul.f32 %v7357, %v7357
    %v7374 = vmul.f32 %v7358, %v7358
    %v7375 = vmul.f32 %v7359, %v7359
    %v7376 = vmul.f32 %v7360, %v7360
    %v7377 = vsel %vm714, %v7361, 0.0
    %7378 = vadd.xlane.f32.xlu0 %v7377
    %v7379 = vpop.xlane.xlu0 %7378
    %v7380 = vsel %vm714, %v7362, 0.0
    %7381 = vadd.xlane.f32.xlu0 %v7380
    %v7382 = vpop.xlane.xlu0 %7381
    %v7383 = vsel %vm714, %v7363, 0.0
    %7384 = vadd.xlane.f32.xlu0 %v7383
    %v7385 = vpop.xlane.xlu0 %7384
    %v7386 = vsel %vm714, %v7364, 0.0
    %7387 = vadd.xlane.f32.xlu0 %v7386
    %v7388 = vpop.xlane.xlu0 %7387
    %v7389 = vsel %vm714, %v7365, 0.0
    %7390 = vadd.xlane.f32.xlu0 %v7389
    %v7391 = vpop.xlane.xlu0 %7390
    %v7392 = vsel %vm714, %v7366, 0.0
    %7393 = vadd.xlane.f32.xlu0 %v7392
    %v7394 = vpop.xlane.xlu0 %7393
    %v7395 = vsel %vm714, %v7367, 0.0
    %7396 = vadd.xlane.f32.xlu0 %v7395
    %v7397 = vpop.xlane.xlu0 %7396
    %v7398 = vsel %vm714, %v7368, 0.0
    %7399 = vadd.xlane.f32.xlu0 %v7398
    %v7400 = vpop.xlane.xlu0 %7399
    %v7401 = vsel %vm714, %v7369, 0.0
    %7402 = vadd.xlane.f32.xlu0 %v7401
    %v7403 = vpop.xlane.xlu0 %7402
    %v7404 = vsel %vm714, %v7370, 0.0
    %7405 = vadd.xlane.f32.xlu0 %v7404
    %v7406 = vpop.xlane.xlu0 %7405
    %v7407 = vsel %vm714, %v7371, 0.0
    %7408 = vadd.xlane.f32.xlu0 %v7407
    %v7409 = vpop.xlane.xlu0 %7408
    %v7410 = vsel %vm714, %v7372, 0.0
    %7411 = vadd.xlane.f32.xlu0 %v7410
    %v7412 = vpop.xlane.xlu0 %7411
    %v7413 = vsel %vm714, %v7373, 0.0
    %7414 = vadd.xlane.f32.xlu0 %v7413
    %v7415 = vpop.xlane.xlu0 %7414
    %v7416 = vsel %vm714, %v7374, 0.0
    %7417 = vadd.xlane.f32.xlu0 %v7416
    %v7418 = vpop.xlane.xlu0 %7417
    %v7419 = vsel %vm714, %v7375, 0.0
    %7420 = vadd.xlane.f32.xlu0 %v7419
    %v7421 = vpop.xlane.xlu0 %7420
    %v7422 = vsel %vm714, %v7376, 0.0
    %7423 = vadd.xlane.f32.xlu0 %v7422
    %v7424 = vpop.xlane.xlu0 %7423
    %v7425 = vmul.f32 %v7379, %v1204
    %v7426 = vmul.f32 %v7382, %v1204
    %v7427 = vmul.f32 %v7385, %v1204
    %v7428 = vmul.f32 %v7388, %v1204
    %v7429 = vmul.f32 %v7391, %v1204
    %v7430 = vmul.f32 %v7394, %v1204
    %v7431 = vmul.f32 %v7397, %v1204
    %v7432 = vmul.f32 %v7400, %v1204
    %v7433 = vmul.f32 %v7403, %v1204
    %v7434 = vmul.f32 %v7406, %v1204
    %v7435 = vmul.f32 %v7409, %v1204
    %v7436 = vmul.f32 %v7412, %v1204
    %v7437 = vmul.f32 %v7415, %v1204
    %v7438 = vmul.f32 %v7418, %v1204
    %v7439 = vmul.f32 %v7421, %v1204
    %v7440 = vmul.f32 %v7424, %v1204
    %v7441 = vadd.f32 %v7425, 1e-06
    %v7442 = vadd.f32 %v7426, 1e-06
    %v7443 = vadd.f32 %v7427, 1e-06
    %v7444 = vadd.f32 %v7428, 1e-06
    %v7445 = vadd.f32 %v7429, 1e-06
    %v7446 = vadd.f32 %v7430, 1e-06
    %v7447 = vadd.f32 %v7431, 1e-06
    %v7448 = vadd.f32 %v7432, 1e-06
    %v7449 = vadd.f32 %v7433, 1e-06
    %v7450 = vadd.f32 %v7434, 1e-06
    %v7451 = vadd.f32 %v7435, 1e-06
    %v7452 = vadd.f32 %v7436, 1e-06
    %v7453 = vadd.f32 %v7437, 1e-06
    %v7454 = vadd.f32 %v7438, 1e-06
    %v7455 = vadd.f32 %v7439, 1e-06
    %v7456 = vadd.f32 %v7440, 1e-06
    %v7457 = vrsqrt.pop %v7441
    %v7458 = vrsqrt.pop %v7442
    %v7459 = vrsqrt.pop %v7443
    %v7460 = vrsqrt.pop %v7444
    %v7461 = vrsqrt.pop %v7445
    %v7462 = vrsqrt.pop %v7446
    %v7463 = vrsqrt.pop %v7447
    %v7464 = vrsqrt.pop %v7448
    %v7465 = vrsqrt.pop %v7449
    %v7466 = vrsqrt.pop %v7450
    %v7467 = vrsqrt.pop %v7451
    %v7468 = vrsqrt.pop %v7452
    %v7469 = vrsqrt.pop %v7453
    %v7470 = vrsqrt.pop %v7454
    %v7471 = vrsqrt.pop %v7455
    %v7472 = vrsqrt.pop %v7456
    %v7473 = vmul.f32 %v7345, %v7457
    %v7474 = vmul.f32 %v7346, %v7458
    %v7475 = vmul.f32 %v7347, %v7459
    %v7476 = vmul.f32 %v7348, %v7460
    %v7477 = vmul.f32 %v7349, %v7461
    %v7478 = vmul.f32 %v7350, %v7462
    %v7479 = vmul.f32 %v7351, %v7463
    %v7480 = vmul.f32 %v7352, %v7464
    %v7481 = vmul.f32 %v7353, %v7465
    %v7482 = vmul.f32 %v7354, %v7466
    %v7483 = vmul.f32 %v7355, %v7467
    %v7484 = vmul.f32 %v7356, %v7468
    %v7485 = vmul.f32 %v7357, %v7469
    %v7486 = vmul.f32 %v7358, %v7470
    %v7487 = vmul.f32 %v7359, %v7471
    %v7488 = vmul.f32 %v7360, %v7472
    %v7489 = vadd.f32 %v1152, 1.0
    %v7490 = vlaneseq
    %v7491 = vshrl.u32 %v7490, 7
    %v7492 = vsub.s32 0, %v7491
    %v7493 = vrot.slane %v7489, %v7492
    %v7494 = vmul.f32 %v7473, %v7493
    %v7495 = vmul.f32 %v7474, %v7493
    %v7496 = vmul.f32 %v7475, %v7493
    %v7497 = vmul.f32 %v7476, %v7493
    %v7498 = vmul.f32 %v7477, %v7493
    %v7499 = vmul.f32 %v7478, %v7493
    %v7500 = vmul.f32 %v7479, %v7493
    %v7501 = vmul.f32 %v7480, %v7493
    %v7502 = vlaneseq
    %v7503 = vshrl.u32 %v7502, 7
    %v7504 = vsub.s32 0, %v7503
    %v7505 = vrot.slane %v1152, %v7504
    %7507 = vrot.lane.b32.xlu0 %v7505, 96
    %v7508 = vpop.permute.xlu0 %7507
    %v7510 = vadd.f32 %v7494, %v7508
    %v7511 = vadd.f32 %v7495, %v7508
    %v7512 = vadd.f32 %v7496, %v7508
    %v7513 = vadd.f32 %v7497, %v7508
    %v7514 = vadd.f32 %v7498, %v7508
    %v7515 = vadd.f32 %v7499, %v7508
    %v7516 = vadd.f32 %v7500, %v7508
    %v7517 = vadd.f32 %v7501, %v7508
    %v7518 = vlaneseq
    %v7519 = vshrl.u32 %v7518, 7
    %v7520 = vsub.s32 1, %v7519
    %v7521 = vrot.slane %v7489, %v7520
    %v7522 = vmul.f32 %v7481, %v7521
    %v7523 = vmul.f32 %v7482, %v7521
    %v7524 = vmul.f32 %v7483, %v7521
    %v7525 = vmul.f32 %v7484, %v7521
    %v7526 = vmul.f32 %v7485, %v7521
    %v7527 = vmul.f32 %v7486, %v7521
    %v7528 = vmul.f32 %v7487, %v7521
    %v7529 = vmul.f32 %v7488, %v7521
    %v7530 = vlaneseq
    %v7531 = vshrl.u32 %v7530, 7
    %v7532 = vsub.s32 1, %v7531
    %v7533 = vrot.slane %v1152, %v7532
    %7535 = vrot.lane.b32.xlu0 %v7533, 96
    %v7536 = vpop.permute.xlu0 %7535
    %v7538 = vadd.f32 %v7522, %v7536
    %v7539 = vadd.f32 %v7523, %v7536
    %v7540 = vadd.f32 %v7524, %v7536
    %v7541 = vadd.f32 %v7525, %v7536
    %v7542 = vadd.f32 %v7526, %v7536
    %v7543 = vadd.f32 %v7527, %v7536
    %v7544 = vadd.f32 %v7528, %v7536
    %v7545 = vadd.f32 %v7529, %v7536
    %v7546 = vld [vmem:[%s91] sm:$0xf]
    %v7547 = vld [vmem:[%s91 + $0x4] sm:$0xf]
    %v7548 = vpack.c.bf16 %v7511, %v7510
    %v7549 = vpack.c.bf16 %v7513, %v7512
    %v7550 = vpack.c.bf16 %v7515, %v7514
    %v7551 = vpack.c.bf16 %v7517, %v7516
    %v7552 = vpack.c.bf16 %v7539, %v7538
    %v7553 = vpack.c.bf16 %v7541, %v7540
    %v7554 = vpack.c.bf16 %v7543, %v7542
    %v7555 = vpack.c.bf16 %v7545, %v7544
    %v7556 = vld [vmem:[%s93] sm:$0xff]
    %v7557 = vld [vmem:[%s93 + $0x8] sm:$0xff]
    %7559 = vset.pattern.permute.xlu0 0
    %7560 = vperm.xlu0 %7559, %v7556
    %v7561 = vpop.permute.xlu0 %7560
    %7564 = vset.pattern.permute.xlu0 0
    %7565 = vperm.xlu0 %7564, %v7557
    %v7566 = vpop.permute.xlu0 %7565
    %v7570 = vunpack.c.l.b16 %v7546
    %v7571 = vunpack.c.l.b16 %v7547
    %v7572 = vpack.c.b16 %v7571, %v7570
    %v7574 = vsel %vm714, %v7572, 0
    %v7577 = vsel %vm714, %v7548, 0
    %v7580 = vsel %vm714, %v7549, 0
    %v7583 = vsel %vm714, %v7550, 0
    %v7586 = vsel %vm714, %v7551, 0
    %v7589 = vsel %vm714, %v7552, 0
    %v7592 = vsel %vm714, %v7553, 0
    %v7595 = vsel %vm714, %v7554, 0
    %v7598 = vsel %vm714, %v7555, 0
    %7600 = vmatprep.subr.bf16.mxu0 0
    %7601 = vmatpush1.bf16.xpose.msra.mxu0 %v7577
    %7602 = vmatprep.subr.bf16.mxu0 0
    %7603 = vmatpush1.bf16.xpose.msra.mxu0 %v7580
    %7604 = vmatprep.subr.bf16.mxu0 0
    %7605 = vmatpush1.bf16.xpose.msra.mxu0 %v7583
    %7606 = vmatprep.subr.bf16.mxu0 0
    %7607 = vmatpush1.bf16.xpose.msra.mxu0 %v7586
    %7608 = vmatprep.subr.bf16.mxu0 0
    %7609 = vmatpush1.bf16.xpose.msra.mxu0 %v7589
    %7610 = vmatprep.subr.bf16.mxu0 0
    %7611 = vmatpush1.bf16.xpose.msra.mxu0 %v7592
    %7612 = vmatprep.subr.bf16.mxu0 0
    %7613 = vmatpush1.bf16.xpose.msra.mxu0 %v7595
    %7614 = vmatprep.subr.bf16.mxu0 0
    %7615 = vmatpush1.bf16.xpose.msra.mxu0 %v7598
    %7616 = vmatprep.subr.bf16.mxu0 0
    %7617 = vmatpush1.bf16.xpose.msra.mxu0 0
    %7618 = vmatprep.subr.bf16.mxu0 0
    %7619 = vmatpush1.bf16.xpose.msra.mxu0 0
    %7620 = vmatprep.subr.bf16.mxu0 0
    %7621 = vmatpush1.bf16.xpose.msra.mxu0 0
    %7622 = vmatprep.subr.bf16.mxu0 0
    %7623 = vmatpush1.bf16.xpose.msra.mxu0 0
    %7624 = vmatprep.subr.bf16.mxu0 0
    %7625 = vmatpush1.bf16.xpose.msra.mxu0 0
    %7626 = vmatprep.subr.bf16.mxu0 0
    %7627 = vmatpush1.bf16.xpose.msra.mxu0 0
    %7628 = vmatprep.subr.bf16.mxu0 0
    %7629 = vmatpush1.bf16.xpose.msra.mxu0 0
    %7630 = vmatprep.subr.bf16.mxu0 0
    %7631 = vmatpush1.bf16.xpose.msra.mxu0 0
    %7632 = vmatprep.mubr.bf16.mxu0 0
    %7633 = vmatmul.mubr.bf16.gmra.mrb[0].mxu0 %v7574
    %v7634 = vpop.f32.mrb[0].mxu0
    %v7635 = vadd.f32 %v7561, %v7634
    %v7636 = vpop.f32.mrb[0].mxu0
    %v7637 = vpop.f32.mrb[0].mxu0
    %v7638 = vadd.f32 %v7566, %v7637
    %v7639 = vpop.f32.mrb[0].mxu0
    %7640 = vdwg.mxu0
    %7641 = vst [vmem:[%s95] sm:$0xff] %v7635
    %7642 = vst [vmem:[%s95 + $0x8] sm:$0xff] %v7638
    // Predicated region
    $region202: #{mmdit_forward.1} parent=1 // pred_check
      _
    $region203: #{mmdit_forward.1} parent=1 // pred_check_branch
      %7644 = sbr.rel (0) target = $region205
    $region204: #{mmdit_forward.1} parent=1 // pred_region
      _
    $region205: #{mmdit_forward.1} parent=1 // pred_fallthru
      _
    // Predicated region
    $region206: #{mmdit_forward.1} parent=1 // pred_check
      _
    $region207: #{mmdit_forward.1} parent=1 // pred_check_branch
      %7646 = sbr.rel (0) target = $region209
    $region208: #{mmdit_forward.1} parent=1 // pred_region
      _
    $region209: #{mmdit_forward.1} parent=1 // pred_fallthru
      _
    %7647 = vsyncpa [#allocation3], 1
    %7648 = vsyncpa [#allocation5], 1

</llo_original>
